<compile_context>
chip_gen: v5e
topology: v5e:2x2
jax: 0.10.0
libtpu: 0.0.40
codegen_flags: <defaults>
</compile_context>

<pallas_src>
import functools

import jax
import jax.numpy as jnp
from jax.experimental import pallas as pl
from jax.experimental.pallas import tpu as pltpu


# ---------------------------------------------------------------------------
# Fused kernel: token embedding + embed LayerNorm + encoder stack + selection
# ---------------------------------------------------------------------------
def fused_dt_kernel(inp_ref, te_ref, bias_ref,
                    we_ref, lng_ref, lnb_ref,
                    wq_ref, bq_ref, wk_ref, bk_ref, wv_ref, bv_ref,
                    wo_ref, bo_ref, ln1g_ref, ln1b_ref,
                    w1_ref, b1_ref, w2_ref, b2_ref,
                    ln2g_ref, ln2b_ref,
                    out_ref,
                    *, n_layer, n_head, B, T, f_chunk):
    M = inp_ref.shape[0]          # B * 3T tokens (batch folded into rows)
    H = lng_ref.shape[-1]
    L = 3 * T
    BT = B * T
    hd = H // n_head
    F = w1_ref.shape[-1]
    scale = 1.0 / float(hd) ** 0.5

    def layer_norm(x, g, b):
        mu = jnp.mean(x, axis=-1, keepdims=True)
        var = jnp.mean((x - mu) ** 2, axis=-1, keepdims=True)
        return (x - mu) * jax.lax.rsqrt(var + 1e-5) * g + b

    # --- fused token embedding: one bf16 MXU pass over all B*3T tokens ------
    # we_ref rows = [w_return; w_state; w_action; b_return; b_state; b_action]
    # and each inp row carries its feature slot plus a one-hot bias selector.
    x = jnp.dot(inp_ref[...].astype(jnp.bfloat16), we_ref[...],
                preferred_element_type=jnp.float32)
    x = x + te_ref[...]                                    # time embedding
    x = layer_norm(x, lng_ref[...], lnb_ref[...])          # embed_ln (per token)

    # Pre-broadcast additive key-padding bias, f32, shape (B, L, L).
    neg_bias = bias_ref[...]

    for l in range(n_layer):
        # ---- multi-head self-attention (post-norm) -------------------------
        xb = x.astype(jnp.bfloat16)
        q = jnp.dot(xb, wq_ref[l], preferred_element_type=jnp.float32) + bq_ref[l]
        k = jnp.dot(xb, wk_ref[l], preferred_element_type=jnp.float32) + bk_ref[l]
        v = jnp.dot(xb, wv_ref[l], preferred_element_type=jnp.float32) + bv_ref[l]
        q = q * scale                                       # fold 1/sqrt(hd) once
        q3 = q.reshape(B, L, H).astype(jnp.bfloat16)
        k3 = k.reshape(B, L, H).astype(jnp.bfloat16)
        v3 = v.reshape(B, L, H).astype(jnp.bfloat16)

        attn = jnp.zeros((M, H), jnp.float32)
        for h in range(n_head):
            lo, hi = h * hd, (h + 1) * hd
            s = jnp.einsum('bqd,bkd->bqk', q3[:, :, lo:hi], k3[:, :, lo:hi],
                           preferred_element_type=jnp.float32)        # (B, L, L)
            s = s + neg_bias
            s = s - jnp.max(s, axis=-1, keepdims=True)
            p = jnp.exp(s)
            p = p * pl.reciprocal(jnp.sum(p, axis=-1, keepdims=True), approx=True)
            ctx = jnp.einsum('bqk,bkd->bqd',
                             p.astype(jnp.bfloat16), v3[:, :, lo:hi],
                             preferred_element_type=jnp.float32)      # (B, L, hd)
            # fold this head's context straight into the output projection
            attn = attn + jnp.dot(ctx.reshape(M, hd).astype(jnp.bfloat16),
                                  wo_ref[l, lo:hi, :],
                                  preferred_element_type=jnp.float32)
        x = layer_norm(x + attn + bo_ref[l], ln1g_ref[l], ln1b_ref[l])

        # ---- feed-forward, chunked over F so (M, F) never materializes -----
        xb2 = x.astype(jnp.bfloat16)
        ff = jnp.zeros((M, H), jnp.float32)
        for f0 in range(0, F, f_chunk):
            hmid = jnp.dot(xb2, w1_ref[l, :, f0:f0 + f_chunk],
                           preferred_element_type=jnp.float32) + b1_ref[l, :, f0:f0 + f_chunk]
            hmid = jnp.maximum(hmid, 0.0).astype(jnp.bfloat16)   # relu
            ff = ff + jnp.dot(hmid, w2_ref[l, f0:f0 + f_chunk, :],
                              preferred_element_type=jnp.float32)
        x = layer_norm(x + ff + b2_ref[l], ln2g_ref[l], ln2b_ref[l])

    # --- emit only the action-token rows (row 3*i + 2 of the interleave) ----
    rows = jax.lax.broadcasted_iota(jnp.int32, (BT, M), 0)
    cols = jax.lax.broadcasted_iota(jnp.int32, (BT, M), 1)
    sel = (cols == 3 * rows + 2).astype(jnp.float32)
    out_ref[...] = jnp.dot(sel, x, preferred_element_type=jnp.float32)


# ---------------------------------------------------------------------------
# Parameter init (deterministic, synthetic)
# ---------------------------------------------------------------------------
def init_params(key, *, state_dim, act_dim, hidden_dim, n_layer, ff_dim, max_ep_len):
    H, F = hidden_dim, ff_dim
    ks = jax.random.split(key, 10)

    def w(k, shape, scale=0.02):
        return (scale * jax.random.normal(k, shape)).astype(jnp.float32)

    # fused embedding weight rows:
    #   [w_return (1,H); w_state (S,H); w_action (A,H); b_return; b_state; b_action]
    w_embed = jnp.concatenate([
        w(ks[0], (1, H)),
        w(ks[1], (state_dim, H)),
        w(ks[2], (act_dim, H)),
        jnp.zeros((3, H), jnp.float32),          # the three projection biases
    ], axis=0)

    p = {
        "embed_timestep": w(ks[3], (max_ep_len, H)),
        "w_embed": w_embed.astype(jnp.bfloat16),
        "embed_ln_g": jnp.ones((1, H), jnp.float32),
        "embed_ln_b": jnp.zeros((1, H), jnp.float32),
        # encoder layers stacked along the layer axis (right-multiply convention)
        "wq": w(ks[4], (n_layer, H, H)).astype(jnp.bfloat16),
        "bq": jnp.zeros((n_layer, 1, H), jnp.float32),
        "wk": w(ks[5], (n_layer, H, H)).astype(jnp.bfloat16),
        "bk": jnp.zeros((n_layer, 1, H), jnp.float32),
        "wv": w(ks[6], (n_layer, H, H)).astype(jnp.bfloat16),
        "bv": jnp.zeros((n_layer, 1, H), jnp.float32),
        "wo": w(ks[7], (n_layer, H, H)).astype(jnp.bfloat16),
        "bo": jnp.zeros((n_layer, 1, H), jnp.float32),
        "ln1_g": jnp.ones((n_layer, 1, H), jnp.float32),
        "ln1_b": jnp.zeros((n_layer, 1, H), jnp.float32),
        "w1": w(ks[8], (n_layer, H, F)).astype(jnp.bfloat16),
        "b1": jnp.zeros((n_layer, 1, F), jnp.float32),
        "w2": w(ks[9], (n_layer, F, H)).astype(jnp.bfloat16),
        "b2": jnp.zeros((n_layer, 1, H), jnp.float32),
        "ln2_g": jnp.ones((n_layer, 1, H), jnp.float32),
        "ln2_b": jnp.zeros((n_layer, 1, H), jnp.float32),
    }
    return p


# ---------------------------------------------------------------------------
# Forward wrapper
# ---------------------------------------------------------------------------
def opponent_transformer_forward(params, states, actions, returns_to_go, timesteps,
                                 attention_mask=None, *, n_layer, n_head, f_chunk=512):
    B, T, S = states.shape
    A = actions.shape[-1]
    H = params["embed_ln_g"].shape[-1]
    F = params["w1"].shape[-1]
    L = 3 * T
    M = B * L
    BT = B * T
    C = 1 + S + A
    Cp = C + 3
    if F % f_chunk != 0:
        f_chunk = F
    assert H % n_head == 0

    if attention_mask is None:
        attention_mask = jnp.ones((B, T), jnp.float32)
    attention_mask = attention_mask.astype(jnp.float32)

    # glue (layout plumbing only): interleaved raw token features + one-hot
    # bias selectors, repeated time embeddings, pre-broadcast key-padding bias.
    time_emb = params["embed_timestep"][timesteps]                 # (B, T, H)
    te_rep = jnp.repeat(time_emb, 3, axis=1).reshape(M, H)         # (B*3T, H)
    mask3 = jnp.repeat(attention_mask, 3, axis=1)                  # (B, 3T)
    mask_bias = jnp.broadcast_to((1.0 - mask3)[:, None, :] * (-1e9),
                                 (B, L, L)).astype(jnp.float32)    # (B, 3T, 3T)

    tok = jnp.zeros((B, T, 3, Cp), jnp.float32)
    tok = tok.at[:, :, 0, 0:1].set(returns_to_go)                  # return token
    tok = tok.at[:, :, 1, 1:1 + S].set(states)                     # state token
    tok = tok.at[:, :, 2, 1 + S:1 + S + A].set(actions)            # action token
    tok = tok.at[:, :, 0, C + 0].set(1.0)                          # -> b_return
    tok = tok.at[:, :, 1, C + 1].set(1.0)                          # -> b_state
    tok = tok.at[:, :, 2, C + 2].set(1.0)                          # -> b_action
    inp = tok.reshape(M, Cp)

    def fs(shape):
        n = len(shape)
        return pl.BlockSpec(shape, lambda i: (0,) * n)

    out2d = pl.pallas_call(
        functools.partial(fused_dt_kernel, n_layer=n_layer, n_head=n_head,
                          B=B, T=T, f_chunk=f_chunk),
        out_shape=jax.ShapeDtypeStruct((BT, H), jnp.float32),
        grid=(1,),
        in_specs=[
            fs((M, Cp)), fs((M, H)), fs((B, L, L)),
            fs((Cp, H)), fs((1, H)), fs((1, H)),
            fs((n_layer, H, H)), fs((n_layer, 1, H)),     # q
            fs((n_layer, H, H)), fs((n_layer, 1, H)),     # k
            fs((n_layer, H, H)), fs((n_layer, 1, H)),     # v
            fs((n_layer, H, H)), fs((n_layer, 1, H)),     # out proj
            fs((n_layer, 1, H)), fs((n_layer, 1, H)),     # ln1
            fs((n_layer, H, F)), fs((n_layer, 1, F)),     # ffn1
            fs((n_layer, F, H)), fs((n_layer, 1, H)),     # ffn2
            fs((n_layer, 1, H)), fs((n_layer, 1, H)),     # ln2
        ],
        out_specs=fs((BT, H)),
        compiler_params=pltpu.CompilerParams(dimension_semantics=("arbitrary",)),
        # TODO(synk): when scaling H/F/n_layer, add a layer grid axis for the
        # weight stacks and set vmem_limit_bytes per TPU generation; at this
        # toy size everything (weights ~0.5 MiB bf16) fits default scoped VMEM.
    )(inp, te_rep, mask_bias,
      params["w_embed"], params["embed_ln_g"], params["embed_ln_b"],
      params["wq"], params["bq"], params["wk"], params["bk"],
      params["wv"], params["bv"], params["wo"], params["bo"],
      params["ln1_g"], params["ln1_b"],
      params["w1"], params["b1"], params["w2"], params["b2"],
      params["ln2_g"], params["ln2_b"])

    return {"embeddings": out2d.reshape(B, T, H)}


# ---------------------------------------------------------------------------
if __name__ == "__main__":
    B, T = 2, 8
    state_dim, act_dim = 11, 5
    hidden_dim = 32
    n_head, n_layer = 4, 2
    ff_dim = 2048          # nn.TransformerEncoderLayer default dim_feedforward
    max_ep_len = 4096

    key = jax.random.PRNGKey(0)
    kp, ksd, kad, krd, ktd = jax.random.split(key, 5)

    params = init_params(kp, state_dim=state_dim, act_dim=act_dim,
                         hidden_dim=hidden_dim, n_layer=n_layer,
                         ff_dim=ff_dim, max_ep_len=max_ep_len)

    states = jax.random.normal(ksd, (B, T, state_dim), jnp.float32)
    actions = jax.random.normal(kad, (B, T, act_dim), jnp.float32)
    returns_to_go = jax.random.normal(krd, (B, T, 1), jnp.float32)
    timesteps = jax.random.randint(ktd, (B, T), 0, max_ep_len, dtype=jnp.int32)

    out = opponent_transformer_forward(params, states, actions, returns_to_go,
                                       timesteps, n_layer=n_layer, n_head=n_head)
    emb = jax.block_until_ready(out["embeddings"])
    assert emb.shape == (B, T, hidden_dim)
    assert bool(jnp.all(jnp.isfinite(emb)))
    print("KERNEL_OK")
</pallas_src>

<mosaic_0001>
module attributes {stable_mosaic.version = 11 : i64} {
  func.func @fused_dt_kernel(%arg0: i32, %arg1: memref<48x20xf32, #tpu.memory_space<vmem>>, %arg2: memref<48x32xf32, #tpu.memory_space<vmem>>, %arg3: memref<2x24x24xf32, #tpu.memory_space<vmem>>, %arg4: memref<20x32xbf16, #tpu.memory_space<vmem>>, %arg5: memref<1x32xf32, #tpu.memory_space<vmem>>, %arg6: memref<1x32xf32, #tpu.memory_space<vmem>>, %arg7: memref<2x32x32xbf16, #tpu.memory_space<vmem>>, %arg8: memref<2x1x32xf32, #tpu.memory_space<vmem>>, %arg9: memref<2x32x32xbf16, #tpu.memory_space<vmem>>, %arg10: memref<2x1x32xf32, #tpu.memory_space<vmem>>, %arg11: memref<2x32x32xbf16, #tpu.memory_space<vmem>>, %arg12: memref<2x1x32xf32, #tpu.memory_space<vmem>>, %arg13: memref<2x32x32xbf16, #tpu.memory_space<vmem>>, %arg14: memref<2x1x32xf32, #tpu.memory_space<vmem>>, %arg15: memref<2x1x32xf32, #tpu.memory_space<vmem>>, %arg16: memref<2x1x32xf32, #tpu.memory_space<vmem>>, %arg17: memref<2x32x2048xbf16, #tpu.memory_space<vmem>>, %arg18: memref<2x1x2048xf32, #tpu.memory_space<vmem>>, %arg19: memref<2x2048x32xbf16, #tpu.memory_space<vmem>>, %arg20: memref<2x1x32xf32, #tpu.memory_space<vmem>>, %arg21: memref<2x1x32xf32, #tpu.memory_space<vmem>>, %arg22: memref<2x1x32xf32, #tpu.memory_space<vmem>>, %arg23: memref<16x32xf32, #tpu.memory_space<vmem>>) attributes {dimension_semantics = [#tpu.dimension_semantics<arbitrary>], iteration_bounds = array<i64: 1>, scalar_prefetch = 0 : i64, scratch_operands = 0 : i64, tpu.core_type = #tpu.core_type<tc>, window_params = [{pipeline_mode = #tpu.pipeline_mode<synchronous>, transform_indices = @transform_0, window_bounds = array<i64: 48, 20>}, {pipeline_mode = #tpu.pipeline_mode<synchronous>, transform_indices = @transform_1, window_bounds = array<i64: 48, 32>}, {pipeline_mode = #tpu.pipeline_mode<synchronous>, transform_indices = @transform_2, window_bounds = array<i64: 2, 24, 24>}, {pipeline_mode = #tpu.pipeline_mode<synchronous>, transform_indices = @transform_3, window_bounds = array<i64: 20, 32>}, {pipeline_mode = #tpu.pipeline_mode<synchronous>, transform_indices = @transform_4, window_bounds = array<i64: 1, 32>}, {pipeline_mode = #tpu.pipeline_mode<synchronous>, transform_indices = @transform_5, window_bounds = array<i64: 1, 32>}, {pipeline_mode = #tpu.pipeline_mode<synchronous>, transform_indices = @transform_6, window_bounds = array<i64: 2, 32, 32>}, {pipeline_mode = #tpu.pipeline_mode<synchronous>, transform_indices = @transform_7, window_bounds = array<i64: 2, 1, 32>}, {pipeline_mode = #tpu.pipeline_mode<synchronous>, transform_indices = @transform_8, window_bounds = array<i64: 2, 32, 32>}, {pipeline_mode = #tpu.pipeline_mode<synchronous>, transform_indices = @transform_9, window_bounds = array<i64: 2, 1, 32>}, {pipeline_mode = #tpu.pipeline_mode<synchronous>, transform_indices = @transform_10, window_bounds = array<i64: 2, 32, 32>}, {pipeline_mode = #tpu.pipeline_mode<synchronous>, transform_indices = @transform_11, window_bounds = array<i64: 2, 1, 32>}, {pipeline_mode = #tpu.pipeline_mode<synchronous>, transform_indices = @transform_12, window_bounds = array<i64: 2, 32, 32>}, {pipeline_mode = #tpu.pipeline_mode<synchronous>, transform_indices = @transform_13, window_bounds = array<i64: 2, 1, 32>}, {pipeline_mode = #tpu.pipeline_mode<synchronous>, transform_indices = @transform_14, window_bounds = array<i64: 2, 1, 32>}, {pipeline_mode = #tpu.pipeline_mode<synchronous>, transform_indices = @transform_15, window_bounds = array<i64: 2, 1, 32>}, {pipeline_mode = #tpu.pipeline_mode<synchronous>, transform_indices = @transform_16, window_bounds = array<i64: 2, 32, 2048>}, {pipeline_mode = #tpu.pipeline_mode<synchronous>, transform_indices = @transform_17, window_bounds = array<i64: 2, 1, 2048>}, {pipeline_mode = #tpu.pipeline_mode<synchronous>, transform_indices = @transform_18, window_bounds = array<i64: 2, 2048, 32>}, {pipeline_mode = #tpu.pipeline_mode<synchronous>, transform_indices = @transform_19, window_bounds = array<i64: 2, 1, 32>}, {pipeline_mode = #tpu.pipeline_mode<synchronous>, transform_indices = @transform_20, window_bounds = array<i64: 2, 1, 32>}, {pipeline_mode = #tpu.pipeline_mode<synchronous>, transform_indices = @transform_21, window_bounds = array<i64: 2, 1, 32>}, {pipeline_mode = #tpu.pipeline_mode<synchronous>, transform_indices = @transform_22, window_bounds = array<i64: 16, 32>}]} {
    %c0 = arith.constant 0 : index
    %c0_0 = arith.constant 0 : index
    %0 = vector.load %arg1[%c0, %c0_0] : memref<48x20xf32, #tpu.memory_space<vmem>>, vector<48x20xf32>
    %1 = arith.truncf %0 : vector<48x20xf32> to vector<48x20xbf16>
    %c0_1 = arith.constant 0 : index
    %c0_2 = arith.constant 0 : index
    %2 = vector.load %arg4[%c0_1, %c0_2] : memref<20x32xbf16, #tpu.memory_space<vmem>>, vector<20x32xbf16>
    %cst = arith.constant dense<0.000000e+00> : vector<48x32xf32>
    %3 = tpu.matmul %1, %2, %cst {dimension_numbers = #tpu.dot_dimension_numbers<[1], [0], [0], [1], [0, 0, 1, 1], [], []>} : vector<48x20xbf16>, vector<20x32xbf16>, vector<48x32xf32> -> vector<48x32xf32>
    %c0_3 = arith.constant 0 : index
    %c0_4 = arith.constant 0 : index
    %4 = vector.load %arg2[%c0_3, %c0_4] : memref<48x32xf32, #tpu.memory_space<vmem>>, vector<48x32xf32>
    %5 = arith.addf %3, %4 : vector<48x32xf32>
    %c0_5 = arith.constant 0 : index
    %c0_6 = arith.constant 0 : index
    %6 = vector.load %arg5[%c0_5, %c0_6] : memref<1x32xf32, #tpu.memory_space<vmem>>, vector<1x32xf32>
    %c0_7 = arith.constant 0 : index
    %c0_8 = arith.constant 0 : index
    %7 = vector.load %arg6[%c0_7, %c0_8] : memref<1x32xf32, #tpu.memory_space<vmem>>, vector<1x32xf32>
    %cst_9 = arith.constant dense<0.000000e+00> : vector<48xf32>
    %8 = vector.multi_reduction <add>, %5, %cst_9 [1] : vector<48x32xf32> to vector<48xf32>
    %9 = vector.shape_cast %8 : vector<48xf32> to vector<48x1xf32>
    %cst_10 = arith.constant 3.200000e+01 : f32
    %10 = vector.broadcast %cst_10 : f32 to vector<48x1xf32>
    %11 = arith.divf %9, %10 : vector<48x1xf32>
    %12 = vector.broadcast %11 : vector<48x1xf32> to vector<48x32xf32>
    %13 = arith.subf %5, %12 : vector<48x32xf32>
    %14 = arith.mulf %13, %13 : vector<48x32xf32>
    %cst_11 = arith.constant dense<0.000000e+00> : vector<48xf32>
    %15 = vector.multi_reduction <add>, %14, %cst_11 [1] : vector<48x32xf32> to vector<48xf32>
    %16 = vector.shape_cast %15 : vector<48xf32> to vector<48x1xf32>
    %cst_12 = arith.constant 3.200000e+01 : f32
    %17 = vector.broadcast %cst_12 : f32 to vector<48x1xf32>
    %18 = arith.divf %16, %17 : vector<48x1xf32>
    %19 = vector.broadcast %11 : vector<48x1xf32> to vector<48x32xf32>
    %20 = arith.subf %5, %19 : vector<48x32xf32>
    %cst_13 = arith.constant 9.99999974E-6 : f32
    %21 = vector.broadcast %cst_13 : f32 to vector<48x1xf32>
    %22 = arith.addf %18, %21 : vector<48x1xf32>
    %23 = math.rsqrt %22 : vector<48x1xf32>
    %24 = vector.broadcast %23 : vector<48x1xf32> to vector<48x32xf32>
    %25 = arith.mulf %20, %24 : vector<48x32xf32>
    %26 = vector.broadcast %6 : vector<1x32xf32> to vector<48x32xf32>
    %27 = arith.mulf %25, %26 : vector<48x32xf32>
    %28 = vector.broadcast %7 : vector<1x32xf32> to vector<48x32xf32>
    %29 = arith.addf %27, %28 : vector<48x32xf32>
    %c0_14 = arith.constant 0 : index
    %c0_15 = arith.constant 0 : index
    %c0_16 = arith.constant 0 : index
    %30 = vector.load %arg3[%c0_14, %c0_15, %c0_16] : memref<2x24x24xf32, #tpu.memory_space<vmem>>, vector<2x24x24xf32>
    %31 = arith.truncf %29 : vector<48x32xf32> to vector<48x32xbf16>
    %c0_17 = arith.constant 0 : index
    %c0_18 = arith.constant 0 : index
    %c0_19 = arith.constant 0 : index
    %32 = vector.load %arg7[%c0_17, %c0_18, %c0_19] : memref<2x32x32xbf16, #tpu.memory_space<vmem>>, vector<1x32x32xbf16>
    %33 = vector.shape_cast %32 : vector<1x32x32xbf16> to vector<32x32xbf16>
    %cst_20 = arith.constant dense<0.000000e+00> : vector<48x32xf32>
    %34 = tpu.matmul %31, %33, %cst_20 {dimension_numbers = #tpu.dot_dimension_numbers<[1], [0], [0], [1], [0, 0, 1, 1], [], []>} : vector<48x32xbf16>, vector<32x32xbf16>, vector<48x32xf32> -> vector<48x32xf32>
    %c0_21 = arith.constant 0 : index
    %c0_22 = arith.constant 0 : index
    %c0_23 = arith.constant 0 : index
    %35 = vector.load %arg8[%c0_21, %c0_22, %c0_23] : memref<2x1x32xf32, #tpu.memory_space<vmem>>, vector<1x1x32xf32>
    %36 = vector.shape_cast %35 : vector<1x1x32xf32> to vector<1x32xf32>
    %37 = vector.broadcast %36 : vector<1x32xf32> to vector<48x32xf32>
    %38 = arith.addf %34, %37 : vector<48x32xf32>
    %c0_24 = arith.constant 0 : index
    %c0_25 = arith.constant 0 : index
    %c0_26 = arith.constant 0 : index
    %39 = vector.load %arg9[%c0_24, %c0_25, %c0_26] : memref<2x32x32xbf16, #tpu.memory_space<vmem>>, vector<1x32x32xbf16>
    %40 = vector.shape_cast %39 : vector<1x32x32xbf16> to vector<32x32xbf16>
    %cst_27 = arith.constant dense<0.000000e+00> : vector<48x32xf32>
    %41 = tpu.matmul %31, %40, %cst_27 {dimension_numbers = #tpu.dot_dimension_numbers<[1], [0], [0], [1], [0, 0, 1, 1], [], []>} : vector<48x32xbf16>, vector<32x32xbf16>, vector<48x32xf32> -> vector<48x32xf32>
    %c0_28 = arith.constant 0 : index
    %c0_29 = arith.constant 0 : index
    %c0_30 = arith.constant 0 : index
    %42 = vector.load %arg10[%c0_28, %c0_29, %c0_30] : memref<2x1x32xf32, #tpu.memory_space<vmem>>, vector<1x1x32xf32>
    %43 = vector.shape_cast %42 : vector<1x1x32xf32> to vector<1x32xf32>
    %44 = vector.broadcast %43 : vector<1x32xf32> to vector<48x32xf32>
    %45 = arith.addf %41, %44 : vector<48x32xf32>
    %c0_31 = arith.constant 0 : index
    %c0_32 = arith.constant 0 : index
    %c0_33 = arith.constant 0 : index
    %46 = vector.load %arg11[%c0_31, %c0_32, %c0_33] : memref<2x32x32xbf16, #tpu.memory_space<vmem>>, vector<1x32x32xbf16>
    %47 = vector.shape_cast %46 : vector<1x32x32xbf16> to vector<32x32xbf16>
    %cst_34 = arith.constant dense<0.000000e+00> : vector<48x32xf32>
    %48 = tpu.matmul %31, %47, %cst_34 {dimension_numbers = #tpu.dot_dimension_numbers<[1], [0], [0], [1], [0, 0, 1, 1], [], []>} : vector<48x32xbf16>, vector<32x32xbf16>, vector<48x32xf32> -> vector<48x32xf32>
    %c0_35 = arith.constant 0 : index
    %c0_36 = arith.constant 0 : index
    %c0_37 = arith.constant 0 : index
    %49 = vector.load %arg12[%c0_35, %c0_36, %c0_37] : memref<2x1x32xf32, #tpu.memory_space<vmem>>, vector<1x1x32xf32>
    %50 = vector.shape_cast %49 : vector<1x1x32xf32> to vector<1x32xf32>
    %51 = vector.broadcast %50 : vector<1x32xf32> to vector<48x32xf32>
    %52 = arith.addf %48, %51 : vector<48x32xf32>
    %cst_38 = arith.constant 0.353553385 : f32
    %53 = vector.broadcast %cst_38 : f32 to vector<48x32xf32>
    %54 = arith.mulf %38, %53 : vector<48x32xf32>
    %55 = vector.shape_cast %54 : vector<48x32xf32> to vector<2x24x32xf32>
    %56 = arith.truncf %55 : vector<2x24x32xf32> to vector<2x24x32xbf16>
    %57 = vector.shape_cast %45 : vector<48x32xf32> to vector<2x24x32xf32>
    %58 = arith.truncf %57 : vector<2x24x32xf32> to vector<2x24x32xbf16>
    %59 = vector.shape_cast %52 : vector<48x32xf32> to vector<2x24x32xf32>
    %60 = arith.truncf %59 : vector<2x24x32xf32> to vector<2x24x32xbf16>
    %cst_39 = arith.constant 0.000000e+00 : f32
    %61 = vector.broadcast %cst_39 : f32 to vector<48x32xf32>
    %62 = vector.extract_strided_slice %56 {offsets = [0, 0, 0], sizes = [2, 24, 8], strides = [1, 1, 1]} : vector<2x24x32xbf16> to vector<2x24x8xbf16>
    %63 = vector.extract_strided_slice %58 {offsets = [0, 0, 0], sizes = [2, 24, 8], strides = [1, 1, 1]} : vector<2x24x32xbf16> to vector<2x24x8xbf16>
    "tpu.trace_start"() <{level = 10 : i32, message = "bqd,bkd->bqk"}> : () -> ()
    %cst_40 = arith.constant dense<0.000000e+00> : vector<2x24x24xf32>
    %64 = tpu.matmul %62, %63, %cst_40 {dimension_numbers = #tpu.dot_dimension_numbers<[2], [2], [1], [1], [0, 0, 0, 1, 1, 1], [0], [0]>} : vector<2x24x8xbf16>, vector<2x24x8xbf16>, vector<2x24x24xf32> -> vector<2x24x24xf32>
    "tpu.trace_stop"() : () -> ()
    %65 = arith.addf %64, %30 : vector<2x24x24xf32>
    %cst_41 = arith.constant dense<0xFF800000> : vector<2x24xf32>
    %66 = vector.multi_reduction <maximumf>, %65, %cst_41 [2] : vector<2x24x24xf32> to vector<2x24xf32>
    %67 = vector.shape_cast %66 : vector<2x24xf32> to vector<2x24x1xf32>
    %68 = vector.broadcast %67 : vector<2x24x1xf32> to vector<2x24x24xf32>
    %69 = arith.subf %65, %68 : vector<2x24x24xf32>
    %70 = math.exp %69 : vector<2x24x24xf32>
    %cst_42 = arith.constant dense<0.000000e+00> : vector<2x24xf32>
    %71 = vector.multi_reduction <add>, %70, %cst_42 [2] : vector<2x24x24xf32> to vector<2x24xf32>
    %72 = vector.shape_cast %71 : vector<2x24xf32> to vector<2x24x1xf32>
    %73 = tpu.reciprocal %72 {approx = true} : vector<2x24x1xf32> -> vector<2x24x1xf32>
    %74 = vector.broadcast %73 : vector<2x24x1xf32> to vector<2x24x24xf32>
    %75 = arith.mulf %70, %74 : vector<2x24x24xf32>
    %76 = arith.truncf %75 : vector<2x24x24xf32> to vector<2x24x24xbf16>
    %77 = vector.extract_strided_slice %60 {offsets = [0, 0, 0], sizes = [2, 24, 8], strides = [1, 1, 1]} : vector<2x24x32xbf16> to vector<2x24x8xbf16>
    "tpu.trace_start"() <{level = 10 : i32, message = "bqk,bkd->bqd"}> : () -> ()
    %cst_43 = arith.constant dense<0.000000e+00> : vector<2x24x8xf32>
    %78 = tpu.matmul %76, %77, %cst_43 {dimension_numbers = #tpu.dot_dimension_numbers<[2], [1], [1], [2], [0, 0, 0, 1, 1, 2], [0], [0]>} : vector<2x24x24xbf16>, vector<2x24x8xbf16>, vector<2x24x8xf32> -> vector<2x24x8xf32>
    "tpu.trace_stop"() : () -> ()
    %79 = vector.shape_cast %78 : vector<2x24x8xf32> to vector<48x8xf32>
    %80 = arith.truncf %79 : vector<48x8xf32> to vector<48x8xbf16>
    %c0_44 = arith.constant 0 : index
    %c0_45 = arith.constant 0 : index
    %c0_46 = arith.constant 0 : index
    %81 = vector.load %arg13[%c0_44, %c0_45, %c0_46] : memref<2x32x32xbf16, #tpu.memory_space<vmem>>, vector<1x8x32xbf16>
    %82 = vector.shape_cast %81 : vector<1x8x32xbf16> to vector<8x32xbf16>
    %cst_47 = arith.constant dense<0.000000e+00> : vector<48x32xf32>
    %83 = tpu.matmul %80, %82, %cst_47 {dimension_numbers = #tpu.dot_dimension_numbers<[1], [0], [0], [1], [0, 0, 1, 1], [], []>} : vector<48x8xbf16>, vector<8x32xbf16>, vector<48x32xf32> -> vector<48x32xf32>
    %84 = arith.addf %61, %83 : vector<48x32xf32>
    %85 = vector.extract_strided_slice %56 {offsets = [0, 0, 8], sizes = [2, 24, 8], strides = [1, 1, 1]} : vector<2x24x32xbf16> to vector<2x24x8xbf16>
    %86 = vector.extract_strided_slice %58 {offsets = [0, 0, 8], sizes = [2, 24, 8], strides = [1, 1, 1]} : vector<2x24x32xbf16> to vector<2x24x8xbf16>
    "tpu.trace_start"() <{level = 10 : i32, message = "bqd,bkd->bqk"}> : () -> ()
    %cst_48 = arith.constant dense<0.000000e+00> : vector<2x24x24xf32>
    %87 = tpu.matmul %85, %86, %cst_48 {dimension_numbers = #tpu.dot_dimension_numbers<[2], [2], [1], [1], [0, 0, 0, 1, 1, 1], [0], [0]>} : vector<2x24x8xbf16>, vector<2x24x8xbf16>, vector<2x24x24xf32> -> vector<2x24x24xf32>
    "tpu.trace_stop"() : () -> ()
    %88 = arith.addf %87, %30 : vector<2x24x24xf32>
    %cst_49 = arith.constant dense<0xFF800000> : vector<2x24xf32>
    %89 = vector.multi_reduction <maximumf>, %88, %cst_49 [2] : vector<2x24x24xf32> to vector<2x24xf32>
    %90 = vector.shape_cast %89 : vector<2x24xf32> to vector<2x24x1xf32>
    %91 = vector.broadcast %90 : vector<2x24x1xf32> to vector<2x24x24xf32>
    %92 = arith.subf %88, %91 : vector<2x24x24xf32>
    %93 = math.exp %92 : vector<2x24x24xf32>
    %cst_50 = arith.constant dense<0.000000e+00> : vector<2x24xf32>
    %94 = vector.multi_reduction <add>, %93, %cst_50 [2] : vector<2x24x24xf32> to vector<2x24xf32>
    %95 = vector.shape_cast %94 : vector<2x24xf32> to vector<2x24x1xf32>
    %96 = tpu.reciprocal %95 {approx = true} : vector<2x24x1xf32> -> vector<2x24x1xf32>
    %97 = vector.broadcast %96 : vector<2x24x1xf32> to vector<2x24x24xf32>
    %98 = arith.mulf %93, %97 : vector<2x24x24xf32>
    %99 = arith.truncf %98 : vector<2x24x24xf32> to vector<2x24x24xbf16>
    %100 = vector.extract_strided_slice %60 {offsets = [0, 0, 8], sizes = [2, 24, 8], strides = [1, 1, 1]} : vector<2x24x32xbf16> to vector<2x24x8xbf16>
    "tpu.trace_start"() <{level = 10 : i32, message = "bqk,bkd->bqd"}> : () -> ()
    %cst_51 = arith.constant dense<0.000000e+00> : vector<2x24x8xf32>
    %101 = tpu.matmul %99, %100, %cst_51 {dimension_numbers = #tpu.dot_dimension_numbers<[2], [1], [1], [2], [0, 0, 0, 1, 1, 2], [0], [0]>} : vector<2x24x24xbf16>, vector<2x24x8xbf16>, vector<2x24x8xf32> -> vector<2x24x8xf32>
    "tpu.trace_stop"() : () -> ()
    %102 = vector.shape_cast %101 : vector<2x24x8xf32> to vector<48x8xf32>
    %103 = arith.truncf %102 : vector<48x8xf32> to vector<48x8xbf16>
    %c0_52 = arith.constant 0 : index
    %c8 = arith.constant 8 : index
    %c0_53 = arith.constant 0 : index
    %104 = vector.load %arg13[%c0_52, %c8, %c0_53] : memref<2x32x32xbf16, #tpu.memory_space<vmem>>, vector<1x8x32xbf16>
    %105 = vector.shape_cast %104 : vector<1x8x32xbf16> to vector<8x32xbf16>
    %cst_54 = arith.constant dense<0.000000e+00> : vector<48x32xf32>
    %106 = tpu.matmul %103, %105, %cst_54 {dimension_numbers = #tpu.dot_dimension_numbers<[1], [0], [0], [1], [0, 0, 1, 1], [], []>} : vector<48x8xbf16>, vector<8x32xbf16>, vector<48x32xf32> -> vector<48x32xf32>
    %107 = arith.addf %84, %106 : vector<48x32xf32>
    %108 = vector.extract_strided_slice %56 {offsets = [0, 0, 16], sizes = [2, 24, 8], strides = [1, 1, 1]} : vector<2x24x32xbf16> to vector<2x24x8xbf16>
    %109 = vector.extract_strided_slice %58 {offsets = [0, 0, 16], sizes = [2, 24, 8], strides = [1, 1, 1]} : vector<2x24x32xbf16> to vector<2x24x8xbf16>
    "tpu.trace_start"() <{level = 10 : i32, message = "bqd,bkd->bqk"}> : () -> ()
    %cst_55 = arith.constant dense<0.000000e+00> : vector<2x24x24xf32>
    %110 = tpu.matmul %108, %109, %cst_55 {dimension_numbers = #tpu.dot_dimension_numbers<[2], [2], [1], [1], [0, 0, 0, 1, 1, 1], [0], [0]>} : vector<2x24x8xbf16>, vector<2x24x8xbf16>, vector<2x24x24xf32> -> vector<2x24x24xf32>
    "tpu.trace_stop"() : () -> ()
    %111 = arith.addf %110, %30 : vector<2x24x24xf32>
    %cst_56 = arith.constant dense<0xFF800000> : vector<2x24xf32>
    %112 = vector.multi_reduction <maximumf>, %111, %cst_56 [2] : vector<2x24x24xf32> to vector<2x24xf32>
    %113 = vector.shape_cast %112 : vector<2x24xf32> to vector<2x24x1xf32>
    %114 = vector.broadcast %113 : vector<2x24x1xf32> to vector<2x24x24xf32>
    %115 = arith.subf %111, %114 : vector<2x24x24xf32>
    %116 = math.exp %115 : vector<2x24x24xf32>
    %cst_57 = arith.constant dense<0.000000e+00> : vector<2x24xf32>
    %117 = vector.multi_reduction <add>, %116, %cst_57 [2] : vector<2x24x24xf32> to vector<2x24xf32>
    %118 = vector.shape_cast %117 : vector<2x24xf32> to vector<2x24x1xf32>
    %119 = tpu.reciprocal %118 {approx = true} : vector<2x24x1xf32> -> vector<2x24x1xf32>
    %120 = vector.broadcast %119 : vector<2x24x1xf32> to vector<2x24x24xf32>
    %121 = arith.mulf %116, %120 : vector<2x24x24xf32>
    %122 = arith.truncf %121 : vector<2x24x24xf32> to vector<2x24x24xbf16>
    %123 = vector.extract_strided_slice %60 {offsets = [0, 0, 16], sizes = [2, 24, 8], strides = [1, 1, 1]} : vector<2x24x32xbf16> to vector<2x24x8xbf16>
    "tpu.trace_start"() <{level = 10 : i32, message = "bqk,bkd->bqd"}> : () -> ()
    %cst_58 = arith.constant dense<0.000000e+00> : vector<2x24x8xf32>
    %124 = tpu.matmul %122, %123, %cst_58 {dimension_numbers = #tpu.dot_dimension_numbers<[2], [1], [1], [2], [0, 0, 0, 1, 1, 2], [0], [0]>} : vector<2x24x24xbf16>, vector<2x24x8xbf16>, vector<2x24x8xf32> -> vector<2x24x8xf32>
    "tpu.trace_stop"() : () -> ()
    %125 = vector.shape_cast %124 : vector<2x24x8xf32> to vector<48x8xf32>
    %126 = arith.truncf %125 : vector<48x8xf32> to vector<48x8xbf16>
    %c0_59 = arith.constant 0 : index
    %c16 = arith.constant 16 : index
    %c0_60 = arith.constant 0 : index
    %127 = vector.load %arg13[%c0_59, %c16, %c0_60] : memref<2x32x32xbf16, #tpu.memory_space<vmem>>, vector<1x8x32xbf16>
    %128 = vector.shape_cast %127 : vector<1x8x32xbf16> to vector<8x32xbf16>
    %cst_61 = arith.constant dense<0.000000e+00> : vector<48x32xf32>
    %129 = tpu.matmul %126, %128, %cst_61 {dimension_numbers = #tpu.dot_dimension_numbers<[1], [0], [0], [1], [0, 0, 1, 1], [], []>} : vector<48x8xbf16>, vector<8x32xbf16>, vector<48x32xf32> -> vector<48x32xf32>
    %130 = arith.addf %107, %129 : vector<48x32xf32>
    %131 = vector.extract_strided_slice %56 {offsets = [0, 0, 24], sizes = [2, 24, 8], strides = [1, 1, 1]} : vector<2x24x32xbf16> to vector<2x24x8xbf16>
    %132 = vector.extract_strided_slice %58 {offsets = [0, 0, 24], sizes = [2, 24, 8], strides = [1, 1, 1]} : vector<2x24x32xbf16> to vector<2x24x8xbf16>
    "tpu.trace_start"() <{level = 10 : i32, message = "bqd,bkd->bqk"}> : () -> ()
    %cst_62 = arith.constant dense<0.000000e+00> : vector<2x24x24xf32>
    %133 = tpu.matmul %131, %132, %cst_62 {dimension_numbers = #tpu.dot_dimension_numbers<[2], [2], [1], [1], [0, 0, 0, 1, 1, 1], [0], [0]>} : vector<2x24x8xbf16>, vector<2x24x8xbf16>, vector<2x24x24xf32> -> vector<2x24x24xf32>
    "tpu.trace_stop"() : () -> ()
    %134 = arith.addf %133, %30 : vector<2x24x24xf32>
    %cst_63 = arith.constant dense<0xFF800000> : vector<2x24xf32>
    %135 = vector.multi_reduction <maximumf>, %134, %cst_63 [2] : vector<2x24x24xf32> to vector<2x24xf32>
    %136 = vector.shape_cast %135 : vector<2x24xf32> to vector<2x24x1xf32>
    %137 = vector.broadcast %136 : vector<2x24x1xf32> to vector<2x24x24xf32>
    %138 = arith.subf %134, %137 : vector<2x24x24xf32>
    %139 = math.exp %138 : vector<2x24x24xf32>
    %cst_64 = arith.constant dense<0.000000e+00> : vector<2x24xf32>
    %140 = vector.multi_reduction <add>, %139, %cst_64 [2] : vector<2x24x24xf32> to vector<2x24xf32>
    %141 = vector.shape_cast %140 : vector<2x24xf32> to vector<2x24x1xf32>
    %142 = tpu.reciprocal %141 {approx = true} : vector<2x24x1xf32> -> vector<2x24x1xf32>
    %143 = vector.broadcast %142 : vector<2x24x1xf32> to vector<2x24x24xf32>
    %144 = arith.mulf %139, %143 : vector<2x24x24xf32>
    %145 = arith.truncf %144 : vector<2x24x24xf32> to vector<2x24x24xbf16>
    %146 = vector.extract_strided_slice %60 {offsets = [0, 0, 24], sizes = [2, 24, 8], strides = [1, 1, 1]} : vector<2x24x32xbf16> to vector<2x24x8xbf16>
    "tpu.trace_start"() <{level = 10 : i32, message = "bqk,bkd->bqd"}> : () -> ()
    %cst_65 = arith.constant dense<0.000000e+00> : vector<2x24x8xf32>
    %147 = tpu.matmul %145, %146, %cst_65 {dimension_numbers = #tpu.dot_dimension_numbers<[2], [1], [1], [2], [0, 0, 0, 1, 1, 2], [0], [0]>} : vector<2x24x24xbf16>, vector<2x24x8xbf16>, vector<2x24x8xf32> -> vector<2x24x8xf32>
    "tpu.trace_stop"() : () -> ()
    %148 = vector.shape_cast %147 : vector<2x24x8xf32> to vector<48x8xf32>
    %149 = arith.truncf %148 : vector<48x8xf32> to vector<48x8xbf16>
    %c0_66 = arith.constant 0 : index
    %c24 = arith.constant 24 : index
    %c0_67 = arith.constant 0 : index
    %150 = vector.load %arg13[%c0_66, %c24, %c0_67] : memref<2x32x32xbf16, #tpu.memory_space<vmem>>, vector<1x8x32xbf16>
    %151 = vector.shape_cast %150 : vector<1x8x32xbf16> to vector<8x32xbf16>
    %cst_68 = arith.constant dense<0.000000e+00> : vector<48x32xf32>
    %152 = tpu.matmul %149, %151, %cst_68 {dimension_numbers = #tpu.dot_dimension_numbers<[1], [0], [0], [1], [0, 0, 1, 1], [], []>} : vector<48x8xbf16>, vector<8x32xbf16>, vector<48x32xf32> -> vector<48x32xf32>
    %153 = arith.addf %130, %152 : vector<48x32xf32>
    %154 = arith.addf %29, %153 : vector<48x32xf32>
    %c0_69 = arith.constant 0 : index
    %c0_70 = arith.constant 0 : index
    %c0_71 = arith.constant 0 : index
    %155 = vector.load %arg14[%c0_69, %c0_70, %c0_71] : memref<2x1x32xf32, #tpu.memory_space<vmem>>, vector<1x1x32xf32>
    %156 = vector.shape_cast %155 : vector<1x1x32xf32> to vector<1x32xf32>
    %157 = vector.broadcast %156 : vector<1x32xf32> to vector<48x32xf32>
    %158 = arith.addf %154, %157 : vector<48x32xf32>
    %c0_72 = arith.constant 0 : index
    %c0_73 = arith.constant 0 : index
    %c0_74 = arith.constant 0 : index
    %159 = vector.load %arg15[%c0_72, %c0_73, %c0_74] : memref<2x1x32xf32, #tpu.memory_space<vmem>>, vector<1x1x32xf32>
    %160 = vector.shape_cast %159 : vector<1x1x32xf32> to vector<1x32xf32>
    %c0_75 = arith.constant 0 : index
    %c0_76 = arith.constant 0 : index
    %c0_77 = arith.constant 0 : index
    %161 = vector.load %arg16[%c0_75, %c0_76, %c0_77] : memref<2x1x32xf32, #tpu.memory_space<vmem>>, vector<1x1x32xf32>
    %162 = vector.shape_cast %161 : vector<1x1x32xf32> to vector<1x32xf32>
    %cst_78 = arith.constant dense<0.000000e+00> : vector<48xf32>
    %163 = vector.multi_reduction <add>, %158, %cst_78 [1] : vector<48x32xf32> to vector<48xf32>
    %164 = vector.shape_cast %163 : vector<48xf32> to vector<48x1xf32>
    %cst_79 = arith.constant 3.200000e+01 : f32
    %165 = vector.broadcast %cst_79 : f32 to vector<48x1xf32>
    %166 = arith.divf %164, %165 : vector<48x1xf32>
    %167 = vector.broadcast %166 : vector<48x1xf32> to vector<48x32xf32>
    %168 = arith.subf %158, %167 : vector<48x32xf32>
    %169 = arith.mulf %168, %168 : vector<48x32xf32>
    %cst_80 = arith.constant dense<0.000000e+00> : vector<48xf32>
    %170 = vector.multi_reduction <add>, %169, %cst_80 [1] : vector<48x32xf32> to vector<48xf32>
    %171 = vector.shape_cast %170 : vector<48xf32> to vector<48x1xf32>
    %cst_81 = arith.constant 3.200000e+01 : f32
    %172 = vector.broadcast %cst_81 : f32 to vector<48x1xf32>
    %173 = arith.divf %171, %172 : vector<48x1xf32>
    %174 = vector.broadcast %166 : vector<48x1xf32> to vector<48x32xf32>
    %175 = arith.subf %158, %174 : vector<48x32xf32>
    %cst_82 = arith.constant 9.99999974E-6 : f32
    %176 = vector.broadcast %cst_82 : f32 to vector<48x1xf32>
    %177 = arith.addf %173, %176 : vector<48x1xf32>
    %178 = math.rsqrt %177 : vector<48x1xf32>
    %179 = vector.broadcast %178 : vector<48x1xf32> to vector<48x32xf32>
    %180 = arith.mulf %175, %179 : vector<48x32xf32>
    %181 = vector.broadcast %160 : vector<1x32xf32> to vector<48x32xf32>
    %182 = arith.mulf %180, %181 : vector<48x32xf32>
    %183 = vector.broadcast %162 : vector<1x32xf32> to vector<48x32xf32>
    %184 = arith.addf %182, %183 : vector<48x32xf32>
    %185 = arith.truncf %184 : vector<48x32xf32> to vector<48x32xbf16>
    %cst_83 = arith.constant 0.000000e+00 : f32
    %186 = vector.broadcast %cst_83 : f32 to vector<48x32xf32>
    %c0_84 = arith.constant 0 : index
    %c0_85 = arith.constant 0 : index
    %c0_86 = arith.constant 0 : index
    %187 = vector.load %arg17[%c0_84, %c0_85, %c0_86] : memref<2x32x2048xbf16, #tpu.memory_space<vmem>>, vector<1x32x512xbf16>
    %188 = vector.shape_cast %187 : vector<1x32x512xbf16> to vector<32x512xbf16>
    %cst_87 = arith.constant dense<0.000000e+00> : vector<48x512xf32>
    %189 = tpu.matmul %185, %188, %cst_87 {dimension_numbers = #tpu.dot_dimension_numbers<[1], [0], [0], [1], [0, 0, 1, 1], [], []>} : vector<48x32xbf16>, vector<32x512xbf16>, vector<48x512xf32> -> vector<48x512xf32>
    %c0_88 = arith.constant 0 : index
    %c0_89 = arith.constant 0 : index
    %c0_90 = arith.constant 0 : index
    %190 = vector.load %arg18[%c0_88, %c0_89, %c0_90] : memref<2x1x2048xf32, #tpu.memory_space<vmem>>, vector<1x1x512xf32>
    %191 = vector.shape_cast %190 : vector<1x1x512xf32> to vector<1x512xf32>
    %192 = vector.broadcast %191 : vector<1x512xf32> to vector<48x512xf32>
    %193 = arith.addf %189, %192 : vector<48x512xf32>
    %cst_91 = arith.constant 0.000000e+00 : f32
    %194 = vector.broadcast %cst_91 : f32 to vector<48x512xf32>
    %195 = arith.maximumf %193, %194 : vector<48x512xf32>
    %196 = arith.truncf %195 : vector<48x512xf32> to vector<48x512xbf16>
    %c0_92 = arith.constant 0 : index
    %c0_93 = arith.constant 0 : index
    %c0_94 = arith.constant 0 : index
    %197 = vector.load %arg19[%c0_92, %c0_93, %c0_94] : memref<2x2048x32xbf16, #tpu.memory_space<vmem>>, vector<1x512x32xbf16>
    %198 = vector.shape_cast %197 : vector<1x512x32xbf16> to vector<512x32xbf16>
    %cst_95 = arith.constant dense<0.000000e+00> : vector<48x32xf32>
    %199 = tpu.matmul %196, %198, %cst_95 {dimension_numbers = #tpu.dot_dimension_numbers<[1], [0], [0], [1], [0, 0, 1, 1], [], []>} : vector<48x512xbf16>, vector<512x32xbf16>, vector<48x32xf32> -> vector<48x32xf32>
    %200 = arith.addf %186, %199 : vector<48x32xf32>
    %c0_96 = arith.constant 0 : index
    %c0_97 = arith.constant 0 : index
    %c512 = arith.constant 512 : index
    %201 = vector.load %arg17[%c0_96, %c0_97, %c512] : memref<2x32x2048xbf16, #tpu.memory_space<vmem>>, vector<1x32x512xbf16>
    %202 = vector.shape_cast %201 : vector<1x32x512xbf16> to vector<32x512xbf16>
    %cst_98 = arith.constant dense<0.000000e+00> : vector<48x512xf32>
    %203 = tpu.matmul %185, %202, %cst_98 {dimension_numbers = #tpu.dot_dimension_numbers<[1], [0], [0], [1], [0, 0, 1, 1], [], []>} : vector<48x32xbf16>, vector<32x512xbf16>, vector<48x512xf32> -> vector<48x512xf32>
    %c0_99 = arith.constant 0 : index
    %c0_100 = arith.constant 0 : index
    %c512_101 = arith.constant 512 : index
    %204 = vector.load %arg18[%c0_99, %c0_100, %c512_101] : memref<2x1x2048xf32, #tpu.memory_space<vmem>>, vector<1x1x512xf32>
    %205 = vector.shape_cast %204 : vector<1x1x512xf32> to vector<1x512xf32>
    %206 = vector.broadcast %205 : vector<1x512xf32> to vector<48x512xf32>
    %207 = arith.addf %203, %206 : vector<48x512xf32>
    %cst_102 = arith.constant 0.000000e+00 : f32
    %208 = vector.broadcast %cst_102 : f32 to vector<48x512xf32>
    %209 = arith.maximumf %207, %208 : vector<48x512xf32>
    %210 = arith.truncf %209 : vector<48x512xf32> to vector<48x512xbf16>
    %c0_103 = arith.constant 0 : index
    %c512_104 = arith.constant 512 : index
    %c0_105 = arith.constant 0 : index
    %211 = vector.load %arg19[%c0_103, %c512_104, %c0_105] : memref<2x2048x32xbf16, #tpu.memory_space<vmem>>, vector<1x512x32xbf16>
    %212 = vector.shape_cast %211 : vector<1x512x32xbf16> to vector<512x32xbf16>
    %cst_106 = arith.constant dense<0.000000e+00> : vector<48x32xf32>
    %213 = tpu.matmul %210, %212, %cst_106 {dimension_numbers = #tpu.dot_dimension_numbers<[1], [0], [0], [1], [0, 0, 1, 1], [], []>} : vector<48x512xbf16>, vector<512x32xbf16>, vector<48x32xf32> -> vector<48x32xf32>
    %214 = arith.addf %200, %213 : vector<48x32xf32>
    %c0_107 = arith.constant 0 : index
    %c0_108 = arith.constant 0 : index
    %c1024 = arith.constant 1024 : index
    %215 = vector.load %arg17[%c0_107, %c0_108, %c1024] : memref<2x32x2048xbf16, #tpu.memory_space<vmem>>, vector<1x32x512xbf16>
    %216 = vector.shape_cast %215 : vector<1x32x512xbf16> to vector<32x512xbf16>
    %cst_109 = arith.constant dense<0.000000e+00> : vector<48x512xf32>
    %217 = tpu.matmul %185, %216, %cst_109 {dimension_numbers = #tpu.dot_dimension_numbers<[1], [0], [0], [1], [0, 0, 1, 1], [], []>} : vector<48x32xbf16>, vector<32x512xbf16>, vector<48x512xf32> -> vector<48x512xf32>
    %c0_110 = arith.constant 0 : index
    %c0_111 = arith.constant 0 : index
    %c1024_112 = arith.constant 1024 : index
    %218 = vector.load %arg18[%c0_110, %c0_111, %c1024_112] : memref<2x1x2048xf32, #tpu.memory_space<vmem>>, vector<1x1x512xf32>
    %219 = vector.shape_cast %218 : vector<1x1x512xf32> to vector<1x512xf32>
    %220 = vector.broadcast %219 : vector<1x512xf32> to vector<48x512xf32>
    %221 = arith.addf %217, %220 : vector<48x512xf32>
    %cst_113 = arith.constant 0.000000e+00 : f32
    %222 = vector.broadcast %cst_113 : f32 to vector<48x512xf32>
    %223 = arith.maximumf %221, %222 : vector<48x512xf32>
    %224 = arith.truncf %223 : vector<48x512xf32> to vector<48x512xbf16>
    %c0_114 = arith.constant 0 : index
    %c1024_115 = arith.constant 1024 : index
    %c0_116 = arith.constant 0 : index
    %225 = vector.load %arg19[%c0_114, %c1024_115, %c0_116] : memref<2x2048x32xbf16, #tpu.memory_space<vmem>>, vector<1x512x32xbf16>
    %226 = vector.shape_cast %225 : vector<1x512x32xbf16> to vector<512x32xbf16>
    %cst_117 = arith.constant dense<0.000000e+00> : vector<48x32xf32>
    %227 = tpu.matmul %224, %226, %cst_117 {dimension_numbers = #tpu.dot_dimension_numbers<[1], [0], [0], [1], [0, 0, 1, 1], [], []>} : vector<48x512xbf16>, vector<512x32xbf16>, vector<48x32xf32> -> vector<48x32xf32>
    %228 = arith.addf %214, %227 : vector<48x32xf32>
    %c0_118 = arith.constant 0 : index
    %c0_119 = arith.constant 0 : index
    %c1536 = arith.constant 1536 : index
    %229 = vector.load %arg17[%c0_118, %c0_119, %c1536] : memref<2x32x2048xbf16, #tpu.memory_space<vmem>>, vector<1x32x512xbf16>
    %230 = vector.shape_cast %229 : vector<1x32x512xbf16> to vector<32x512xbf16>
    %cst_120 = arith.constant dense<0.000000e+00> : vector<48x512xf32>
    %231 = tpu.matmul %185, %230, %cst_120 {dimension_numbers = #tpu.dot_dimension_numbers<[1], [0], [0], [1], [0, 0, 1, 1], [], []>} : vector<48x32xbf16>, vector<32x512xbf16>, vector<48x512xf32> -> vector<48x512xf32>
    %c0_121 = arith.constant 0 : index
    %c0_122 = arith.constant 0 : index
    %c1536_123 = arith.constant 1536 : index
    %232 = vector.load %arg18[%c0_121, %c0_122, %c1536_123] : memref<2x1x2048xf32, #tpu.memory_space<vmem>>, vector<1x1x512xf32>
    %233 = vector.shape_cast %232 : vector<1x1x512xf32> to vector<1x512xf32>
    %234 = vector.broadcast %233 : vector<1x512xf32> to vector<48x512xf32>
    %235 = arith.addf %231, %234 : vector<48x512xf32>
    %cst_124 = arith.constant 0.000000e+00 : f32
    %236 = vector.broadcast %cst_124 : f32 to vector<48x512xf32>
    %237 = arith.maximumf %235, %236 : vector<48x512xf32>
    %238 = arith.truncf %237 : vector<48x512xf32> to vector<48x512xbf16>
    %c0_125 = arith.constant 0 : index
    %c1536_126 = arith.constant 1536 : index
    %c0_127 = arith.constant 0 : index
    %239 = vector.load %arg19[%c0_125, %c1536_126, %c0_127] : memref<2x2048x32xbf16, #tpu.memory_space<vmem>>, vector<1x512x32xbf16>
    %240 = vector.shape_cast %239 : vector<1x512x32xbf16> to vector<512x32xbf16>
    %cst_128 = arith.constant dense<0.000000e+00> : vector<48x32xf32>
    %241 = tpu.matmul %238, %240, %cst_128 {dimension_numbers = #tpu.dot_dimension_numbers<[1], [0], [0], [1], [0, 0, 1, 1], [], []>} : vector<48x512xbf16>, vector<512x32xbf16>, vector<48x32xf32> -> vector<48x32xf32>
    %242 = arith.addf %228, %241 : vector<48x32xf32>
    %243 = arith.addf %184, %242 : vector<48x32xf32>
    %c0_129 = arith.constant 0 : index
    %c0_130 = arith.constant 0 : index
    %c0_131 = arith.constant 0 : index
    %244 = vector.load %arg20[%c0_129, %c0_130, %c0_131] : memref<2x1x32xf32, #tpu.memory_space<vmem>>, vector<1x1x32xf32>
    %245 = vector.shape_cast %244 : vector<1x1x32xf32> to vector<1x32xf32>
    %246 = vector.broadcast %245 : vector<1x32xf32> to vector<48x32xf32>
    %247 = arith.addf %243, %246 : vector<48x32xf32>
    %c0_132 = arith.constant 0 : index
    %c0_133 = arith.constant 0 : index
    %c0_134 = arith.constant 0 : index
    %248 = vector.load %arg21[%c0_132, %c0_133, %c0_134] : memref<2x1x32xf32, #tpu.memory_space<vmem>>, vector<1x1x32xf32>
    %249 = vector.shape_cast %248 : vector<1x1x32xf32> to vector<1x32xf32>
    %c0_135 = arith.constant 0 : index
    %c0_136 = arith.constant 0 : index
    %c0_137 = arith.constant 0 : index
    %250 = vector.load %arg22[%c0_135, %c0_136, %c0_137] : memref<2x1x32xf32, #tpu.memory_space<vmem>>, vector<1x1x32xf32>
    %251 = vector.shape_cast %250 : vector<1x1x32xf32> to vector<1x32xf32>
    %cst_138 = arith.constant dense<0.000000e+00> : vector<48xf32>
    %252 = vector.multi_reduction <add>, %247, %cst_138 [1] : vector<48x32xf32> to vector<48xf32>
    %253 = vector.shape_cast %252 : vector<48xf32> to vector<48x1xf32>
    %cst_139 = arith.constant 3.200000e+01 : f32
    %254 = vector.broadcast %cst_139 : f32 to vector<48x1xf32>
    %255 = arith.divf %253, %254 : vector<48x1xf32>
    %256 = vector.broadcast %255 : vector<48x1xf32> to vector<48x32xf32>
    %257 = arith.subf %247, %256 : vector<48x32xf32>
    %258 = arith.mulf %257, %257 : vector<48x32xf32>
    %cst_140 = arith.constant dense<0.000000e+00> : vector<48xf32>
    %259 = vector.multi_reduction <add>, %258, %cst_140 [1] : vector<48x32xf32> to vector<48xf32>
    %260 = vector.shape_cast %259 : vector<48xf32> to vector<48x1xf32>
    %cst_141 = arith.constant 3.200000e+01 : f32
    %261 = vector.broadcast %cst_141 : f32 to vector<48x1xf32>
    %262 = arith.divf %260, %261 : vector<48x1xf32>
    %263 = vector.broadcast %255 : vector<48x1xf32> to vector<48x32xf32>
    %264 = arith.subf %247, %263 : vector<48x32xf32>
    %cst_142 = arith.constant 9.99999974E-6 : f32
    %265 = vector.broadcast %cst_142 : f32 to vector<48x1xf32>
    %266 = arith.addf %262, %265 : vector<48x1xf32>
    %267 = math.rsqrt %266 : vector<48x1xf32>
    %268 = vector.broadcast %267 : vector<48x1xf32> to vector<48x32xf32>
    %269 = arith.mulf %264, %268 : vector<48x32xf32>
    %270 = vector.broadcast %249 : vector<1x32xf32> to vector<48x32xf32>
    %271 = arith.mulf %269, %270 : vector<48x32xf32>
    %272 = vector.broadcast %251 : vector<1x32xf32> to vector<48x32xf32>
    %273 = arith.addf %271, %272 : vector<48x32xf32>
    %274 = arith.truncf %273 : vector<48x32xf32> to vector<48x32xbf16>
    %c1 = arith.constant 1 : index
    %c0_143 = arith.constant 0 : index
    %c0_144 = arith.constant 0 : index
    %275 = vector.load %arg7[%c1, %c0_143, %c0_144] : memref<2x32x32xbf16, #tpu.memory_space<vmem>>, vector<1x32x32xbf16>
    %276 = vector.shape_cast %275 : vector<1x32x32xbf16> to vector<32x32xbf16>
    %cst_145 = arith.constant dense<0.000000e+00> : vector<48x32xf32>
    %277 = tpu.matmul %274, %276, %cst_145 {dimension_numbers = #tpu.dot_dimension_numbers<[1], [0], [0], [1], [0, 0, 1, 1], [], []>} : vector<48x32xbf16>, vector<32x32xbf16>, vector<48x32xf32> -> vector<48x32xf32>
    %c1_146 = arith.constant 1 : index
    %c0_147 = arith.constant 0 : index
    %c0_148 = arith.constant 0 : index
    %278 = vector.load %arg8[%c1_146, %c0_147, %c0_148] : memref<2x1x32xf32, #tpu.memory_space<vmem>>, vector<1x1x32xf32>
    %279 = vector.shape_cast %278 : vector<1x1x32xf32> to vector<1x32xf32>
    %280 = vector.broadcast %279 : vector<1x32xf32> to vector<48x32xf32>
    %281 = arith.addf %277, %280 : vector<48x32xf32>
    %c1_149 = arith.constant 1 : index
    %c0_150 = arith.constant 0 : index
    %c0_151 = arith.constant 0 : index
    %282 = vector.load %arg9[%c1_149, %c0_150, %c0_151] : memref<2x32x32xbf16, #tpu.memory_space<vmem>>, vector<1x32x32xbf16>
    %283 = vector.shape_cast %282 : vector<1x32x32xbf16> to vector<32x32xbf16>
    %cst_152 = arith.constant dense<0.000000e+00> : vector<48x32xf32>
    %284 = tpu.matmul %274, %283, %cst_152 {dimension_numbers = #tpu.dot_dimension_numbers<[1], [0], [0], [1], [0, 0, 1, 1], [], []>} : vector<48x32xbf16>, vector<32x32xbf16>, vector<48x32xf32> -> vector<48x32xf32>
    %c1_153 = arith.constant 1 : index
    %c0_154 = arith.constant 0 : index
    %c0_155 = arith.constant 0 : index
    %285 = vector.load %arg10[%c1_153, %c0_154, %c0_155] : memref<2x1x32xf32, #tpu.memory_space<vmem>>, vector<1x1x32xf32>
    %286 = vector.shape_cast %285 : vector<1x1x32xf32> to vector<1x32xf32>
    %287 = vector.broadcast %286 : vector<1x32xf32> to vector<48x32xf32>
    %288 = arith.addf %284, %287 : vector<48x32xf32>
    %c1_156 = arith.constant 1 : index
    %c0_157 = arith.constant 0 : index
    %c0_158 = arith.constant 0 : index
    %289 = vector.load %arg11[%c1_156, %c0_157, %c0_158] : memref<2x32x32xbf16, #tpu.memory_space<vmem>>, vector<1x32x32xbf16>
    %290 = vector.shape_cast %289 : vector<1x32x32xbf16> to vector<32x32xbf16>
    %cst_159 = arith.constant dense<0.000000e+00> : vector<48x32xf32>
    %291 = tpu.matmul %274, %290, %cst_159 {dimension_numbers = #tpu.dot_dimension_numbers<[1], [0], [0], [1], [0, 0, 1, 1], [], []>} : vector<48x32xbf16>, vector<32x32xbf16>, vector<48x32xf32> -> vector<48x32xf32>
    %c1_160 = arith.constant 1 : index
    %c0_161 = arith.constant 0 : index
    %c0_162 = arith.constant 0 : index
    %292 = vector.load %arg12[%c1_160, %c0_161, %c0_162] : memref<2x1x32xf32, #tpu.memory_space<vmem>>, vector<1x1x32xf32>
    %293 = vector.shape_cast %292 : vector<1x1x32xf32> to vector<1x32xf32>
    %294 = vector.broadcast %293 : vector<1x32xf32> to vector<48x32xf32>
    %295 = arith.addf %291, %294 : vector<48x32xf32>
    %cst_163 = arith.constant 0.353553385 : f32
    %296 = vector.broadcast %cst_163 : f32 to vector<48x32xf32>
    %297 = arith.mulf %281, %296 : vector<48x32xf32>
    %298 = vector.shape_cast %297 : vector<48x32xf32> to vector<2x24x32xf32>
    %299 = arith.truncf %298 : vector<2x24x32xf32> to vector<2x24x32xbf16>
    %300 = vector.shape_cast %288 : vector<48x32xf32> to vector<2x24x32xf32>
    %301 = arith.truncf %300 : vector<2x24x32xf32> to vector<2x24x32xbf16>
    %302 = vector.shape_cast %295 : vector<48x32xf32> to vector<2x24x32xf32>
    %303 = arith.truncf %302 : vector<2x24x32xf32> to vector<2x24x32xbf16>
    %cst_164 = arith.constant 0.000000e+00 : f32
    %304 = vector.broadcast %cst_164 : f32 to vector<48x32xf32>
    %305 = vector.extract_strided_slice %299 {offsets = [0, 0, 0], sizes = [2, 24, 8], strides = [1, 1, 1]} : vector<2x24x32xbf16> to vector<2x24x8xbf16>
    %306 = vector.extract_strided_slice %301 {offsets = [0, 0, 0], sizes = [2, 24, 8], strides = [1, 1, 1]} : vector<2x24x32xbf16> to vector<2x24x8xbf16>
    "tpu.trace_start"() <{level = 10 : i32, message = "bqd,bkd->bqk"}> : () -> ()
    %cst_165 = arith.constant dense<0.000000e+00> : vector<2x24x24xf32>
    %307 = tpu.matmul %305, %306, %cst_165 {dimension_numbers = #tpu.dot_dimension_numbers<[2], [2], [1], [1], [0, 0, 0, 1, 1, 1], [0], [0]>} : vector<2x24x8xbf16>, vector<2x24x8xbf16>, vector<2x24x24xf32> -> vector<2x24x24xf32>
    "tpu.trace_stop"() : () -> ()
    %308 = arith.addf %307, %30 : vector<2x24x24xf32>
    %cst_166 = arith.constant dense<0xFF800000> : vector<2x24xf32>
    %309 = vector.multi_reduction <maximumf>, %308, %cst_166 [2] : vector<2x24x24xf32> to vector<2x24xf32>
    %310 = vector.shape_cast %309 : vector<2x24xf32> to vector<2x24x1xf32>
    %311 = vector.broadcast %310 : vector<2x24x1xf32> to vector<2x24x24xf32>
    %312 = arith.subf %308, %311 : vector<2x24x24xf32>
    %313 = math.exp %312 : vector<2x24x24xf32>
    %cst_167 = arith.constant dense<0.000000e+00> : vector<2x24xf32>
    %314 = vector.multi_reduction <add>, %313, %cst_167 [2] : vector<2x24x24xf32> to vector<2x24xf32>
    %315 = vector.shape_cast %314 : vector<2x24xf32> to vector<2x24x1xf32>
    %316 = tpu.reciprocal %315 {approx = true} : vector<2x24x1xf32> -> vector<2x24x1xf32>
    %317 = vector.broadcast %316 : vector<2x24x1xf32> to vector<2x24x24xf32>
    %318 = arith.mulf %313, %317 : vector<2x24x24xf32>
    %319 = arith.truncf %318 : vector<2x24x24xf32> to vector<2x24x24xbf16>
    %320 = vector.extract_strided_slice %303 {offsets = [0, 0, 0], sizes = [2, 24, 8], strides = [1, 1, 1]} : vector<2x24x32xbf16> to vector<2x24x8xbf16>
    "tpu.trace_start"() <{level = 10 : i32, message = "bqk,bkd->bqd"}> : () -> ()
    %cst_168 = arith.constant dense<0.000000e+00> : vector<2x24x8xf32>
    %321 = tpu.matmul %319, %320, %cst_168 {dimension_numbers = #tpu.dot_dimension_numbers<[2], [1], [1], [2], [0, 0, 0, 1, 1, 2], [0], [0]>} : vector<2x24x24xbf16>, vector<2x24x8xbf16>, vector<2x24x8xf32> -> vector<2x24x8xf32>
    "tpu.trace_stop"() : () -> ()
    %322 = vector.shape_cast %321 : vector<2x24x8xf32> to vector<48x8xf32>
    %323 = arith.truncf %322 : vector<48x8xf32> to vector<48x8xbf16>
    %c1_169 = arith.constant 1 : index
    %c0_170 = arith.constant 0 : index
    %c0_171 = arith.constant 0 : index
    %324 = vector.load %arg13[%c1_169, %c0_170, %c0_171] : memref<2x32x32xbf16, #tpu.memory_space<vmem>>, vector<1x8x32xbf16>
    %325 = vector.shape_cast %324 : vector<1x8x32xbf16> to vector<8x32xbf16>
    %cst_172 = arith.constant dense<0.000000e+00> : vector<48x32xf32>
    %326 = tpu.matmul %323, %325, %cst_172 {dimension_numbers = #tpu.dot_dimension_numbers<[1], [0], [0], [1], [0, 0, 1, 1], [], []>} : vector<48x8xbf16>, vector<8x32xbf16>, vector<48x32xf32> -> vector<48x32xf32>
    %327 = arith.addf %304, %326 : vector<48x32xf32>
    %328 = vector.extract_strided_slice %299 {offsets = [0, 0, 8], sizes = [2, 24, 8], strides = [1, 1, 1]} : vector<2x24x32xbf16> to vector<2x24x8xbf16>
    %329 = vector.extract_strided_slice %301 {offsets = [0, 0, 8], sizes = [2, 24, 8], strides = [1, 1, 1]} : vector<2x24x32xbf16> to vector<2x24x8xbf16>
    "tpu.trace_start"() <{level = 10 : i32, message = "bqd,bkd->bqk"}> : () -> ()
    %cst_173 = arith.constant dense<0.000000e+00> : vector<2x24x24xf32>
    %330 = tpu.matmul %328, %329, %cst_173 {dimension_numbers = #tpu.dot_dimension_numbers<[2], [2], [1], [1], [0, 0, 0, 1, 1, 1], [0], [0]>} : vector<2x24x8xbf16>, vector<2x24x8xbf16>, vector<2x24x24xf32> -> vector<2x24x24xf32>
    "tpu.trace_stop"() : () -> ()
    %331 = arith.addf %330, %30 : vector<2x24x24xf32>
    %cst_174 = arith.constant dense<0xFF800000> : vector<2x24xf32>
    %332 = vector.multi_reduction <maximumf>, %331, %cst_174 [2] : vector<2x24x24xf32> to vector<2x24xf32>
    %333 = vector.shape_cast %332 : vector<2x24xf32> to vector<2x24x1xf32>
    %334 = vector.broadcast %333 : vector<2x24x1xf32> to vector<2x24x24xf32>
    %335 = arith.subf %331, %334 : vector<2x24x24xf32>
    %336 = math.exp %335 : vector<2x24x24xf32>
    %cst_175 = arith.constant dense<0.000000e+00> : vector<2x24xf32>
    %337 = vector.multi_reduction <add>, %336, %cst_175 [2] : vector<2x24x24xf32> to vector<2x24xf32>
    %338 = vector.shape_cast %337 : vector<2x24xf32> to vector<2x24x1xf32>
    %339 = tpu.reciprocal %338 {approx = true} : vector<2x24x1xf32> -> vector<2x24x1xf32>
    %340 = vector.broadcast %339 : vector<2x24x1xf32> to vector<2x24x24xf32>
    %341 = arith.mulf %336, %340 : vector<2x24x24xf32>
    %342 = arith.truncf %341 : vector<2x24x24xf32> to vector<2x24x24xbf16>
    %343 = vector.extract_strided_slice %303 {offsets = [0, 0, 8], sizes = [2, 24, 8], strides = [1, 1, 1]} : vector<2x24x32xbf16> to vector<2x24x8xbf16>
    "tpu.trace_start"() <{level = 10 : i32, message = "bqk,bkd->bqd"}> : () -> ()
    %cst_176 = arith.constant dense<0.000000e+00> : vector<2x24x8xf32>
    %344 = tpu.matmul %342, %343, %cst_176 {dimension_numbers = #tpu.dot_dimension_numbers<[2], [1], [1], [2], [0, 0, 0, 1, 1, 2], [0], [0]>} : vector<2x24x24xbf16>, vector<2x24x8xbf16>, vector<2x24x8xf32> -> vector<2x24x8xf32>
    "tpu.trace_stop"() : () -> ()
    %345 = vector.shape_cast %344 : vector<2x24x8xf32> to vector<48x8xf32>
    %346 = arith.truncf %345 : vector<48x8xf32> to vector<48x8xbf16>
    %c1_177 = arith.constant 1 : index
    %c8_178 = arith.constant 8 : index
    %c0_179 = arith.constant 0 : index
    %347 = vector.load %arg13[%c1_177, %c8_178, %c0_179] : memref<2x32x32xbf16, #tpu.memory_space<vmem>>, vector<1x8x32xbf16>
    %348 = vector.shape_cast %347 : vector<1x8x32xbf16> to vector<8x32xbf16>
    %cst_180 = arith.constant dense<0.000000e+00> : vector<48x32xf32>
    %349 = tpu.matmul %346, %348, %cst_180 {dimension_numbers = #tpu.dot_dimension_numbers<[1], [0], [0], [1], [0, 0, 1, 1], [], []>} : vector<48x8xbf16>, vector<8x32xbf16>, vector<48x32xf32> -> vector<48x32xf32>
    %350 = arith.addf %327, %349 : vector<48x32xf32>
    %351 = vector.extract_strided_slice %299 {offsets = [0, 0, 16], sizes = [2, 24, 8], strides = [1, 1, 1]} : vector<2x24x32xbf16> to vector<2x24x8xbf16>
    %352 = vector.extract_strided_slice %301 {offsets = [0, 0, 16], sizes = [2, 24, 8], strides = [1, 1, 1]} : vector<2x24x32xbf16> to vector<2x24x8xbf16>
    "tpu.trace_start"() <{level = 10 : i32, message = "bqd,bkd->bqk"}> : () -> ()
    %cst_181 = arith.constant dense<0.000000e+00> : vector<2x24x24xf32>
    %353 = tpu.matmul %351, %352, %cst_181 {dimension_numbers = #tpu.dot_dimension_numbers<[2], [2], [1], [1], [0, 0, 0, 1, 1, 1], [0], [0]>} : vector<2x24x8xbf16>, vector<2x24x8xbf16>, vector<2x24x24xf32> -> vector<2x24x24xf32>
    "tpu.trace_stop"() : () -> ()
    %354 = arith.addf %353, %30 : vector<2x24x24xf32>
    %cst_182 = arith.constant dense<0xFF800000> : vector<2x24xf32>
    %355 = vector.multi_reduction <maximumf>, %354, %cst_182 [2] : vector<2x24x24xf32> to vector<2x24xf32>
    %356 = vector.shape_cast %355 : vector<2x24xf32> to vector<2x24x1xf32>
    %357 = vector.broadcast %356 : vector<2x24x1xf32> to vector<2x24x24xf32>
    %358 = arith.subf %354, %357 : vector<2x24x24xf32>
    %359 = math.exp %358 : vector<2x24x24xf32>
    %cst_183 = arith.constant dense<0.000000e+00> : vector<2x24xf32>
    %360 = vector.multi_reduction <add>, %359, %cst_183 [2] : vector<2x24x24xf32> to vector<2x24xf32>
    %361 = vector.shape_cast %360 : vector<2x24xf32> to vector<2x24x1xf32>
    %362 = tpu.reciprocal %361 {approx = true} : vector<2x24x1xf32> -> vector<2x24x1xf32>
    %363 = vector.broadcast %362 : vector<2x24x1xf32> to vector<2x24x24xf32>
    %364 = arith.mulf %359, %363 : vector<2x24x24xf32>
    %365 = arith.truncf %364 : vector<2x24x24xf32> to vector<2x24x24xbf16>
    %366 = vector.extract_strided_slice %303 {offsets = [0, 0, 16], sizes = [2, 24, 8], strides = [1, 1, 1]} : vector<2x24x32xbf16> to vector<2x24x8xbf16>
    "tpu.trace_start"() <{level = 10 : i32, message = "bqk,bkd->bqd"}> : () -> ()
    %cst_184 = arith.constant dense<0.000000e+00> : vector<2x24x8xf32>
    %367 = tpu.matmul %365, %366, %cst_184 {dimension_numbers = #tpu.dot_dimension_numbers<[2], [1], [1], [2], [0, 0, 0, 1, 1, 2], [0], [0]>} : vector<2x24x24xbf16>, vector<2x24x8xbf16>, vector<2x24x8xf32> -> vector<2x24x8xf32>
    "tpu.trace_stop"() : () -> ()
    %368 = vector.shape_cast %367 : vector<2x24x8xf32> to vector<48x8xf32>
    %369 = arith.truncf %368 : vector<48x8xf32> to vector<48x8xbf16>
    %c1_185 = arith.constant 1 : index
    %c16_186 = arith.constant 16 : index
    %c0_187 = arith.constant 0 : index
    %370 = vector.load %arg13[%c1_185, %c16_186, %c0_187] : memref<2x32x32xbf16, #tpu.memory_space<vmem>>, vector<1x8x32xbf16>
    %371 = vector.shape_cast %370 : vector<1x8x32xbf16> to vector<8x32xbf16>
    %cst_188 = arith.constant dense<0.000000e+00> : vector<48x32xf32>
    %372 = tpu.matmul %369, %371, %cst_188 {dimension_numbers = #tpu.dot_dimension_numbers<[1], [0], [0], [1], [0, 0, 1, 1], [], []>} : vector<48x8xbf16>, vector<8x32xbf16>, vector<48x32xf32> -> vector<48x32xf32>
    %373 = arith.addf %350, %372 : vector<48x32xf32>
    %374 = vector.extract_strided_slice %299 {offsets = [0, 0, 24], sizes = [2, 24, 8], strides = [1, 1, 1]} : vector<2x24x32xbf16> to vector<2x24x8xbf16>
    %375 = vector.extract_strided_slice %301 {offsets = [0, 0, 24], sizes = [2, 24, 8], strides = [1, 1, 1]} : vector<2x24x32xbf16> to vector<2x24x8xbf16>
    "tpu.trace_start"() <{level = 10 : i32, message = "bqd,bkd->bqk"}> : () -> ()
    %cst_189 = arith.constant dense<0.000000e+00> : vector<2x24x24xf32>
    %376 = tpu.matmul %374, %375, %cst_189 {dimension_numbers = #tpu.dot_dimension_numbers<[2], [2], [1], [1], [0, 0, 0, 1, 1, 1], [0], [0]>} : vector<2x24x8xbf16>, vector<2x24x8xbf16>, vector<2x24x24xf32> -> vector<2x24x24xf32>
    "tpu.trace_stop"() : () -> ()
    %377 = arith.addf %376, %30 : vector<2x24x24xf32>
    %cst_190 = arith.constant dense<0xFF800000> : vector<2x24xf32>
    %378 = vector.multi_reduction <maximumf>, %377, %cst_190 [2] : vector<2x24x24xf32> to vector<2x24xf32>
    %379 = vector.shape_cast %378 : vector<2x24xf32> to vector<2x24x1xf32>
    %380 = vector.broadcast %379 : vector<2x24x1xf32> to vector<2x24x24xf32>
    %381 = arith.subf %377, %380 : vector<2x24x24xf32>
    %382 = math.exp %381 : vector<2x24x24xf32>
    %cst_191 = arith.constant dense<0.000000e+00> : vector<2x24xf32>
    %383 = vector.multi_reduction <add>, %382, %cst_191 [2] : vector<2x24x24xf32> to vector<2x24xf32>
    %384 = vector.shape_cast %383 : vector<2x24xf32> to vector<2x24x1xf32>
    %385 = tpu.reciprocal %384 {approx = true} : vector<2x24x1xf32> -> vector<2x24x1xf32>
    %386 = vector.broadcast %385 : vector<2x24x1xf32> to vector<2x24x24xf32>
    %387 = arith.mulf %382, %386 : vector<2x24x24xf32>
    %388 = arith.truncf %387 : vector<2x24x24xf32> to vector<2x24x24xbf16>
    %389 = vector.extract_strided_slice %303 {offsets = [0, 0, 24], sizes = [2, 24, 8], strides = [1, 1, 1]} : vector<2x24x32xbf16> to vector<2x24x8xbf16>
    "tpu.trace_start"() <{level = 10 : i32, message = "bqk,bkd->bqd"}> : () -> ()
    %cst_192 = arith.constant dense<0.000000e+00> : vector<2x24x8xf32>
    %390 = tpu.matmul %388, %389, %cst_192 {dimension_numbers = #tpu.dot_dimension_numbers<[2], [1], [1], [2], [0, 0, 0, 1, 1, 2], [0], [0]>} : vector<2x24x24xbf16>, vector<2x24x8xbf16>, vector<2x24x8xf32> -> vector<2x24x8xf32>
    "tpu.trace_stop"() : () -> ()
    %391 = vector.shape_cast %390 : vector<2x24x8xf32> to vector<48x8xf32>
    %392 = arith.truncf %391 : vector<48x8xf32> to vector<48x8xbf16>
    %c1_193 = arith.constant 1 : index
    %c24_194 = arith.constant 24 : index
    %c0_195 = arith.constant 0 : index
    %393 = vector.load %arg13[%c1_193, %c24_194, %c0_195] : memref<2x32x32xbf16, #tpu.memory_space<vmem>>, vector<1x8x32xbf16>
    %394 = vector.shape_cast %393 : vector<1x8x32xbf16> to vector<8x32xbf16>
    %cst_196 = arith.constant dense<0.000000e+00> : vector<48x32xf32>
    %395 = tpu.matmul %392, %394, %cst_196 {dimension_numbers = #tpu.dot_dimension_numbers<[1], [0], [0], [1], [0, 0, 1, 1], [], []>} : vector<48x8xbf16>, vector<8x32xbf16>, vector<48x32xf32> -> vector<48x32xf32>
    %396 = arith.addf %373, %395 : vector<48x32xf32>
    %397 = arith.addf %273, %396 : vector<48x32xf32>
    %c1_197 = arith.constant 1 : index
    %c0_198 = arith.constant 0 : index
    %c0_199 = arith.constant 0 : index
    %398 = vector.load %arg14[%c1_197, %c0_198, %c0_199] : memref<2x1x32xf32, #tpu.memory_space<vmem>>, vector<1x1x32xf32>
    %399 = vector.shape_cast %398 : vector<1x1x32xf32> to vector<1x32xf32>
    %400 = vector.broadcast %399 : vector<1x32xf32> to vector<48x32xf32>
    %401 = arith.addf %397, %400 : vector<48x32xf32>
    %c1_200 = arith.constant 1 : index
    %c0_201 = arith.constant 0 : index
    %c0_202 = arith.constant 0 : index
    %402 = vector.load %arg15[%c1_200, %c0_201, %c0_202] : memref<2x1x32xf32, #tpu.memory_space<vmem>>, vector<1x1x32xf32>
    %403 = vector.shape_cast %402 : vector<1x1x32xf32> to vector<1x32xf32>
    %c1_203 = arith.constant 1 : index
    %c0_204 = arith.constant 0 : index
    %c0_205 = arith.constant 0 : index
    %404 = vector.load %arg16[%c1_203, %c0_204, %c0_205] : memref<2x1x32xf32, #tpu.memory_space<vmem>>, vector<1x1x32xf32>
    %405 = vector.shape_cast %404 : vector<1x1x32xf32> to vector<1x32xf32>
    %cst_206 = arith.constant dense<0.000000e+00> : vector<48xf32>
    %406 = vector.multi_reduction <add>, %401, %cst_206 [1] : vector<48x32xf32> to vector<48xf32>
    %407 = vector.shape_cast %406 : vector<48xf32> to vector<48x1xf32>
    %cst_207 = arith.constant 3.200000e+01 : f32
    %408 = vector.broadcast %cst_207 : f32 to vector<48x1xf32>
    %409 = arith.divf %407, %408 : vector<48x1xf32>
    %410 = vector.broadcast %409 : vector<48x1xf32> to vector<48x32xf32>
    %411 = arith.subf %401, %410 : vector<48x32xf32>
    %412 = arith.mulf %411, %411 : vector<48x32xf32>
    %cst_208 = arith.constant dense<0.000000e+00> : vector<48xf32>
    %413 = vector.multi_reduction <add>, %412, %cst_208 [1] : vector<48x32xf32> to vector<48xf32>
    %414 = vector.shape_cast %413 : vector<48xf32> to vector<48x1xf32>
    %cst_209 = arith.constant 3.200000e+01 : f32
    %415 = vector.broadcast %cst_209 : f32 to vector<48x1xf32>
    %416 = arith.divf %414, %415 : vector<48x1xf32>
    %417 = vector.broadcast %409 : vector<48x1xf32> to vector<48x32xf32>
    %418 = arith.subf %401, %417 : vector<48x32xf32>
    %cst_210 = arith.constant 9.99999974E-6 : f32
    %419 = vector.broadcast %cst_210 : f32 to vector<48x1xf32>
    %420 = arith.addf %416, %419 : vector<48x1xf32>
    %421 = math.rsqrt %420 : vector<48x1xf32>
    %422 = vector.broadcast %421 : vector<48x1xf32> to vector<48x32xf32>
    %423 = arith.mulf %418, %422 : vector<48x32xf32>
    %424 = vector.broadcast %403 : vector<1x32xf32> to vector<48x32xf32>
    %425 = arith.mulf %423, %424 : vector<48x32xf32>
    %426 = vector.broadcast %405 : vector<1x32xf32> to vector<48x32xf32>
    %427 = arith.addf %425, %426 : vector<48x32xf32>
    %428 = arith.truncf %427 : vector<48x32xf32> to vector<48x32xbf16>
    %cst_211 = arith.constant 0.000000e+00 : f32
    %429 = vector.broadcast %cst_211 : f32 to vector<48x32xf32>
    %c1_212 = arith.constant 1 : index
    %c0_213 = arith.constant 0 : index
    %c0_214 = arith.constant 0 : index
    %430 = vector.load %arg17[%c1_212, %c0_213, %c0_214] : memref<2x32x2048xbf16, #tpu.memory_space<vmem>>, vector<1x32x512xbf16>
    %431 = vector.shape_cast %430 : vector<1x32x512xbf16> to vector<32x512xbf16>
    %cst_215 = arith.constant dense<0.000000e+00> : vector<48x512xf32>
    %432 = tpu.matmul %428, %431, %cst_215 {dimension_numbers = #tpu.dot_dimension_numbers<[1], [0], [0], [1], [0, 0, 1, 1], [], []>} : vector<48x32xbf16>, vector<32x512xbf16>, vector<48x512xf32> -> vector<48x512xf32>
    %c1_216 = arith.constant 1 : index
    %c0_217 = arith.constant 0 : index
    %c0_218 = arith.constant 0 : index
    %433 = vector.load %arg18[%c1_216, %c0_217, %c0_218] : memref<2x1x2048xf32, #tpu.memory_space<vmem>>, vector<1x1x512xf32>
    %434 = vector.shape_cast %433 : vector<1x1x512xf32> to vector<1x512xf32>
    %435 = vector.broadcast %434 : vector<1x512xf32> to vector<48x512xf32>
    %436 = arith.addf %432, %435 : vector<48x512xf32>
    %cst_219 = arith.constant 0.000000e+00 : f32
    %437 = vector.broadcast %cst_219 : f32 to vector<48x512xf32>
    %438 = arith.maximumf %436, %437 : vector<48x512xf32>
    %439 = arith.truncf %438 : vector<48x512xf32> to vector<48x512xbf16>
    %c1_220 = arith.constant 1 : index
    %c0_221 = arith.constant 0 : index
    %c0_222 = arith.constant 0 : index
    %440 = vector.load %arg19[%c1_220, %c0_221, %c0_222] : memref<2x2048x32xbf16, #tpu.memory_space<vmem>>, vector<1x512x32xbf16>
    %441 = vector.shape_cast %440 : vector<1x512x32xbf16> to vector<512x32xbf16>
    %cst_223 = arith.constant dense<0.000000e+00> : vector<48x32xf32>
    %442 = tpu.matmul %439, %441, %cst_223 {dimension_numbers = #tpu.dot_dimension_numbers<[1], [0], [0], [1], [0, 0, 1, 1], [], []>} : vector<48x512xbf16>, vector<512x32xbf16>, vector<48x32xf32> -> vector<48x32xf32>
    %443 = arith.addf %429, %442 : vector<48x32xf32>
    %c1_224 = arith.constant 1 : index
    %c0_225 = arith.constant 0 : index
    %c512_226 = arith.constant 512 : index
    %444 = vector.load %arg17[%c1_224, %c0_225, %c512_226] : memref<2x32x2048xbf16, #tpu.memory_space<vmem>>, vector<1x32x512xbf16>
    %445 = vector.shape_cast %444 : vector<1x32x512xbf16> to vector<32x512xbf16>
    %cst_227 = arith.constant dense<0.000000e+00> : vector<48x512xf32>
    %446 = tpu.matmul %428, %445, %cst_227 {dimension_numbers = #tpu.dot_dimension_numbers<[1], [0], [0], [1], [0, 0, 1, 1], [], []>} : vector<48x32xbf16>, vector<32x512xbf16>, vector<48x512xf32> -> vector<48x512xf32>
    %c1_228 = arith.constant 1 : index
    %c0_229 = arith.constant 0 : index
    %c512_230 = arith.constant 512 : index
    %447 = vector.load %arg18[%c1_228, %c0_229, %c512_230] : memref<2x1x2048xf32, #tpu.memory_space<vmem>>, vector<1x1x512xf32>
    %448 = vector.shape_cast %447 : vector<1x1x512xf32> to vector<1x512xf32>
    %449 = vector.broadcast %448 : vector<1x512xf32> to vector<48x512xf32>
    %450 = arith.addf %446, %449 : vector<48x512xf32>
    %cst_231 = arith.constant 0.000000e+00 : f32
    %451 = vector.broadcast %cst_231 : f32 to vector<48x512xf32>
    %452 = arith.maximumf %450, %451 : vector<48x512xf32>
    %453 = arith.truncf %452 : vector<48x512xf32> to vector<48x512xbf16>
    %c1_232 = arith.constant 1 : index
    %c512_233 = arith.constant 512 : index
    %c0_234 = arith.constant 0 : index
    %454 = vector.load %arg19[%c1_232, %c512_233, %c0_234] : memref<2x2048x32xbf16, #tpu.memory_space<vmem>>, vector<1x512x32xbf16>
    %455 = vector.shape_cast %454 : vector<1x512x32xbf16> to vector<512x32xbf16>
    %cst_235 = arith.constant dense<0.000000e+00> : vector<48x32xf32>
    %456 = tpu.matmul %453, %455, %cst_235 {dimension_numbers = #tpu.dot_dimension_numbers<[1], [0], [0], [1], [0, 0, 1, 1], [], []>} : vector<48x512xbf16>, vector<512x32xbf16>, vector<48x32xf32> -> vector<48x32xf32>
    %457 = arith.addf %443, %456 : vector<48x32xf32>
    %c1_236 = arith.constant 1 : index
    %c0_237 = arith.constant 0 : index
    %c1024_238 = arith.constant 1024 : index
    %458 = vector.load %arg17[%c1_236, %c0_237, %c1024_238] : memref<2x32x2048xbf16, #tpu.memory_space<vmem>>, vector<1x32x512xbf16>
    %459 = vector.shape_cast %458 : vector<1x32x512xbf16> to vector<32x512xbf16>
    %cst_239 = arith.constant dense<0.000000e+00> : vector<48x512xf32>
    %460 = tpu.matmul %428, %459, %cst_239 {dimension_numbers = #tpu.dot_dimension_numbers<[1], [0], [0], [1], [0, 0, 1, 1], [], []>} : vector<48x32xbf16>, vector<32x512xbf16>, vector<48x512xf32> -> vector<48x512xf32>
    %c1_240 = arith.constant 1 : index
    %c0_241 = arith.constant 0 : index
    %c1024_242 = arith.constant 1024 : index
    %461 = vector.load %arg18[%c1_240, %c0_241, %c1024_242] : memref<2x1x2048xf32, #tpu.memory_space<vmem>>, vector<1x1x512xf32>
    %462 = vector.shape_cast %461 : vector<1x1x512xf32> to vector<1x512xf32>
    %463 = vector.broadcast %462 : vector<1x512xf32> to vector<48x512xf32>
    %464 = arith.addf %460, %463 : vector<48x512xf32>
    %cst_243 = arith.constant 0.000000e+00 : f32
    %465 = vector.broadcast %cst_243 : f32 to vector<48x512xf32>
    %466 = arith.maximumf %464, %465 : vector<48x512xf32>
    %467 = arith.truncf %466 : vector<48x512xf32> to vector<48x512xbf16>
    %c1_244 = arith.constant 1 : index
    %c1024_245 = arith.constant 1024 : index
    %c0_246 = arith.constant 0 : index
    %468 = vector.load %arg19[%c1_244, %c1024_245, %c0_246] : memref<2x2048x32xbf16, #tpu.memory_space<vmem>>, vector<1x512x32xbf16>
    %469 = vector.shape_cast %468 : vector<1x512x32xbf16> to vector<512x32xbf16>
    %cst_247 = arith.constant dense<0.000000e+00> : vector<48x32xf32>
    %470 = tpu.matmul %467, %469, %cst_247 {dimension_numbers = #tpu.dot_dimension_numbers<[1], [0], [0], [1], [0, 0, 1, 1], [], []>} : vector<48x512xbf16>, vector<512x32xbf16>, vector<48x32xf32> -> vector<48x32xf32>
    %471 = arith.addf %457, %470 : vector<48x32xf32>
    %c1_248 = arith.constant 1 : index
    %c0_249 = arith.constant 0 : index
    %c1536_250 = arith.constant 1536 : index
    %472 = vector.load %arg17[%c1_248, %c0_249, %c1536_250] : memref<2x32x2048xbf16, #tpu.memory_space<vmem>>, vector<1x32x512xbf16>
    %473 = vector.shape_cast %472 : vector<1x32x512xbf16> to vector<32x512xbf16>
    %cst_251 = arith.constant dense<0.000000e+00> : vector<48x512xf32>
    %474 = tpu.matmul %428, %473, %cst_251 {dimension_numbers = #tpu.dot_dimension_numbers<[1], [0], [0], [1], [0, 0, 1, 1], [], []>} : vector<48x32xbf16>, vector<32x512xbf16>, vector<48x512xf32> -> vector<48x512xf32>
    %c1_252 = arith.constant 1 : index
    %c0_253 = arith.constant 0 : index
    %c1536_254 = arith.constant 1536 : index
    %475 = vector.load %arg18[%c1_252, %c0_253, %c1536_254] : memref<2x1x2048xf32, #tpu.memory_space<vmem>>, vector<1x1x512xf32>
    %476 = vector.shape_cast %475 : vector<1x1x512xf32> to vector<1x512xf32>
    %477 = vector.broadcast %476 : vector<1x512xf32> to vector<48x512xf32>
    %478 = arith.addf %474, %477 : vector<48x512xf32>
    %cst_255 = arith.constant 0.000000e+00 : f32
    %479 = vector.broadcast %cst_255 : f32 to vector<48x512xf32>
    %480 = arith.maximumf %478, %479 : vector<48x512xf32>
    %481 = arith.truncf %480 : vector<48x512xf32> to vector<48x512xbf16>
    %c1_256 = arith.constant 1 : index
    %c1536_257 = arith.constant 1536 : index
    %c0_258 = arith.constant 0 : index
    %482 = vector.load %arg19[%c1_256, %c1536_257, %c0_258] : memref<2x2048x32xbf16, #tpu.memory_space<vmem>>, vector<1x512x32xbf16>
    %483 = vector.shape_cast %482 : vector<1x512x32xbf16> to vector<512x32xbf16>
    %cst_259 = arith.constant dense<0.000000e+00> : vector<48x32xf32>
    %484 = tpu.matmul %481, %483, %cst_259 {dimension_numbers = #tpu.dot_dimension_numbers<[1], [0], [0], [1], [0, 0, 1, 1], [], []>} : vector<48x512xbf16>, vector<512x32xbf16>, vector<48x32xf32> -> vector<48x32xf32>
    %485 = arith.addf %471, %484 : vector<48x32xf32>
    %486 = arith.addf %427, %485 : vector<48x32xf32>
    %c1_260 = arith.constant 1 : index
    %c0_261 = arith.constant 0 : index
    %c0_262 = arith.constant 0 : index
    %487 = vector.load %arg20[%c1_260, %c0_261, %c0_262] : memref<2x1x32xf32, #tpu.memory_space<vmem>>, vector<1x1x32xf32>
    %488 = vector.shape_cast %487 : vector<1x1x32xf32> to vector<1x32xf32>
    %489 = vector.broadcast %488 : vector<1x32xf32> to vector<48x32xf32>
    %490 = arith.addf %486, %489 : vector<48x32xf32>
    %c1_263 = arith.constant 1 : index
    %c0_264 = arith.constant 0 : index
    %c0_265 = arith.constant 0 : index
    %491 = vector.load %arg21[%c1_263, %c0_264, %c0_265] : memref<2x1x32xf32, #tpu.memory_space<vmem>>, vector<1x1x32xf32>
    %492 = vector.shape_cast %491 : vector<1x1x32xf32> to vector<1x32xf32>
    %c1_266 = arith.constant 1 : index
    %c0_267 = arith.constant 0 : index
    %c0_268 = arith.constant 0 : index
    %493 = vector.load %arg22[%c1_266, %c0_267, %c0_268] : memref<2x1x32xf32, #tpu.memory_space<vmem>>, vector<1x1x32xf32>
    %494 = vector.shape_cast %493 : vector<1x1x32xf32> to vector<1x32xf32>
    %cst_269 = arith.constant dense<0.000000e+00> : vector<48xf32>
    %495 = vector.multi_reduction <add>, %490, %cst_269 [1] : vector<48x32xf32> to vector<48xf32>
    %496 = vector.shape_cast %495 : vector<48xf32> to vector<48x1xf32>
    %cst_270 = arith.constant 3.200000e+01 : f32
    %497 = vector.broadcast %cst_270 : f32 to vector<48x1xf32>
    %498 = arith.divf %496, %497 : vector<48x1xf32>
    %499 = vector.broadcast %498 : vector<48x1xf32> to vector<48x32xf32>
    %500 = arith.subf %490, %499 : vector<48x32xf32>
    %501 = arith.mulf %500, %500 : vector<48x32xf32>
    %cst_271 = arith.constant dense<0.000000e+00> : vector<48xf32>
    %502 = vector.multi_reduction <add>, %501, %cst_271 [1] : vector<48x32xf32> to vector<48xf32>
    %503 = vector.shape_cast %502 : vector<48xf32> to vector<48x1xf32>
    %cst_272 = arith.constant 3.200000e+01 : f32
    %504 = vector.broadcast %cst_272 : f32 to vector<48x1xf32>
    %505 = arith.divf %503, %504 : vector<48x1xf32>
    %506 = vector.broadcast %498 : vector<48x1xf32> to vector<48x32xf32>
    %507 = arith.subf %490, %506 : vector<48x32xf32>
    %cst_273 = arith.constant 9.99999974E-6 : f32
    %508 = vector.broadcast %cst_273 : f32 to vector<48x1xf32>
    %509 = arith.addf %505, %508 : vector<48x1xf32>
    %510 = math.rsqrt %509 : vector<48x1xf32>
    %511 = vector.broadcast %510 : vector<48x1xf32> to vector<48x32xf32>
    %512 = arith.mulf %507, %511 : vector<48x32xf32>
    %513 = vector.broadcast %492 : vector<1x32xf32> to vector<48x32xf32>
    %514 = arith.mulf %512, %513 : vector<48x32xf32>
    %515 = vector.broadcast %494 : vector<1x32xf32> to vector<48x32xf32>
    %516 = arith.addf %514, %515 : vector<48x32xf32>
    %517 = tpu.iota {dimensions = array<i32: 0>} : vector<16x48xi32>
    %518 = tpu.iota {dimensions = array<i32: 1>} : vector<16x48xi32>
    %c3_i32 = arith.constant 3 : i32
    %519 = vector.broadcast %c3_i32 : i32 to vector<16x48xi32>
    %520 = arith.muli %519, %517 : vector<16x48xi32>
    %c2_i32 = arith.constant 2 : i32
    %521 = vector.broadcast %c2_i32 : i32 to vector<16x48xi32>
    %522 = arith.addi %520, %521 : vector<16x48xi32>
    %523 = arith.cmpi eq, %518, %522 : vector<16x48xi32>
    %524 = arith.extui %523 : vector<16x48xi1> to vector<16x48xi32>
    %525 = arith.sitofp %524 : vector<16x48xi32> to vector<16x48xf32>
    %cst_274 = arith.constant dense<0.000000e+00> : vector<16x32xf32>
    %526 = tpu.matmul %525, %516, %cst_274 {dimension_numbers = #tpu.dot_dimension_numbers<[1], [0], [0], [1], [0, 0, 1, 1], [], []>} : vector<16x48xf32>, vector<48x32xf32>, vector<16x32xf32> -> vector<16x32xf32>
    %c0_275 = arith.constant 0 : index
    %c0_276 = arith.constant 0 : index
    %527 = vector.load %arg23[%c0_275, %c0_276] : memref<16x32xf32, #tpu.memory_space<vmem>>, vector<16x32xf32>
    tpu.vector_store %arg23[%c0_275, %c0_276], %526 {strides = array<i32>} : memref<16x32xf32, #tpu.memory_space<vmem>>, vector<16x32xf32>,
    return
  }
  func.func @transform_0(%arg0: i32) -> (i32, i32) {
    %c0_i32 = arith.constant 0 : i32
    %c0_i32_0 = arith.constant 0 : i32
    %c0_i32_1 = arith.constant 0 : i32
    return %c0_i32, %c0_i32_0 : i32, i32
  }
  func.func @transform_1(%arg0: i32) -> (i32, i32) {
    %c0_i32 = arith.constant 0 : i32
    %c0_i32_0 = arith.constant 0 : i32
    %c0_i32_1 = arith.constant 0 : i32
    return %c0_i32, %c0_i32_0 : i32, i32
  }
  func.func @transform_2(%arg0: i32) -> (i32, i32, i32) {
    %c0_i32 = arith.constant 0 : i32
    %c0_i32_0 = arith.constant 0 : i32
    %c0_i32_1 = arith.constant 0 : i32
    %c0_i32_2 = arith.constant 0 : i32
    return %c0_i32, %c0_i32_0, %c0_i32_1 : i32, i32, i32
  }
  func.func @transform_3(%arg0: i32) -> (i32, i32) {
    %c0_i32 = arith.constant 0 : i32
    %c0_i32_0 = arith.constant 0 : i32
    %c0_i32_1 = arith.constant 0 : i32
    return %c0_i32, %c0_i32_0 : i32, i32
  }
  func.func @transform_4(%arg0: i32) -> (i32, i32) {
    %c0_i32 = arith.constant 0 : i32
    %c0_i32_0 = arith.constant 0 : i32
    %c0_i32_1 = arith.constant 0 : i32
    return %c0_i32, %c0_i32_0 : i32, i32
  }
  func.func @transform_5(%arg0: i32) -> (i32, i32) {
    %c0_i32 = arith.constant 0 : i32
    %c0_i32_0 = arith.constant 0 : i32
    %c0_i32_1 = arith.constant 0 : i32
    return %c0_i32, %c0_i32_0 : i32, i32
  }
  func.func @transform_6(%arg0: i32) -> (i32, i32, i32) {
    %c0_i32 = arith.constant 0 : i32
    %c0_i32_0 = arith.constant 0 : i32
    %c0_i32_1 = arith.constant 0 : i32
    %c0_i32_2 = arith.constant 0 : i32
    return %c0_i32, %c0_i32_0, %c0_i32_1 : i32, i32, i32
  }
  func.func @transform_7(%arg0: i32) -> (i32, i32, i32) {
    %c0_i32 = arith.constant 0 : i32
    %c0_i32_0 = arith.constant 0 : i32
    %c0_i32_1 = arith.constant 0 : i32
    %c0_i32_2 = arith.constant 0 : i32
    return %c0_i32, %c0_i32_0, %c0_i32_1 : i32, i32, i32
  }
  func.func @transform_8(%arg0: i32) -> (i32, i32, i32) {
    %c0_i32 = arith.constant 0 : i32
    %c0_i32_0 = arith.constant 0 : i32
    %c0_i32_1 = arith.constant 0 : i32
    %c0_i32_2 = arith.constant 0 : i32
    return %c0_i32, %c0_i32_0, %c0_i32_1 : i32, i32, i32
  }
  func.func @transform_9(%arg0: i32) -> (i32, i32, i32) {
    %c0_i32 = arith.constant 0 : i32
    %c0_i32_0 = arith.constant 0 : i32
    %c0_i32_1 = arith.constant 0 : i32
    %c0_i32_2 = arith.constant 0 : i32
    return %c0_i32, %c0_i32_0, %c0_i32_1 : i32, i32, i32
  }
  func.func @transform_10(%arg0: i32) -> (i32, i32, i32) {
    %c0_i32 = arith.constant 0 : i32
    %c0_i32_0 = arith.constant 0 : i32
    %c0_i32_1 = arith.constant 0 : i32
    %c0_i32_2 = arith.constant 0 : i32
    return %c0_i32, %c0_i32_0, %c0_i32_1 : i32, i32, i32
  }
  func.func @transform_11(%arg0: i32) -> (i32, i32, i32) {
    %c0_i32 = arith.constant 0 : i32
    %c0_i32_0 = arith.constant 0 : i32
    %c0_i32_1 = arith.constant 0 : i32
    %c0_i32_2 = arith.constant 0 : i32
    return %c0_i32, %c0_i32_0, %c0_i32_1 : i32, i32, i32
  }
  func.func @transform_12(%arg0: i32) -> (i32, i32, i32) {
    %c0_i32 = arith.constant 0 : i32
    %c0_i32_0 = arith.constant 0 : i32
    %c0_i32_1 = arith.constant 0 : i32
    %c0_i32_2 = arith.constant 0 : i32
    return %c0_i32, %c0_i32_0, %c0_i32_1 : i32, i32, i32
  }
  func.func @transform_13(%arg0: i32) -> (i32, i32, i32) {
    %c0_i32 = arith.constant 0 : i32
    %c0_i32_0 = arith.constant 0 : i32
    %c0_i32_1 = arith.constant 0 : i32
    %c0_i32_2 = arith.constant 0 : i32
    return %c0_i32, %c0_i32_0, %c0_i32_1 : i32, i32, i32
  }
  func.func @transform_14(%arg0: i32) -> (i32, i32, i32) {
    %c0_i32 = arith.constant 0 : i32
    %c0_i32_0 = arith.constant 0 : i32
    %c0_i32_1 = arith.constant 0 : i32
    %c0_i32_2 = arith.constant 0 : i32
    return %c0_i32, %c0_i32_0, %c0_i32_1 : i32, i32, i32
  }
  func.func @transform_15(%arg0: i32) -> (i32, i32, i32) {
    %c0_i32 = arith.constant 0 : i32
    %c0_i32_0 = arith.constant 0 : i32
    %c0_i32_1 = arith.constant 0 : i32
    %c0_i32_2 = arith.constant 0 : i32
    return %c0_i32, %c0_i32_0, %c0_i32_1 : i32, i32, i32
  }
  func.func @transform_16(%arg0: i32) -> (i32, i32, i32) {
    %c0_i32 = arith.constant 0 : i32
    %c0_i32_0 = arith.constant 0 : i32
    %c0_i32_1 = arith.constant 0 : i32
    %c0_i32_2 = arith.constant 0 : i32
    return %c0_i32, %c0_i32_0, %c0_i32_1 : i32, i32, i32
  }
  func.func @transform_17(%arg0: i32) -> (i32, i32, i32) {
    %c0_i32 = arith.constant 0 : i32
    %c0_i32_0 = arith.constant 0 : i32
    %c0_i32_1 = arith.constant 0 : i32
    %c0_i32_2 = arith.constant 0 : i32
    return %c0_i32, %c0_i32_0, %c0_i32_1 : i32, i32, i32
  }
  func.func @transform_18(%arg0: i32) -> (i32, i32, i32) {
    %c0_i32 = arith.constant 0 : i32
    %c0_i32_0 = arith.constant 0 : i32
    %c0_i32_1 = arith.constant 0 : i32
    %c0_i32_2 = arith.constant 0 : i32
    return %c0_i32, %c0_i32_0, %c0_i32_1 : i32, i32, i32
  }
  func.func @transform_19(%arg0: i32) -> (i32, i32, i32) {
    %c0_i32 = arith.constant 0 : i32
    %c0_i32_0 = arith.constant 0 : i32
    %c0_i32_1 = arith.constant 0 : i32
    %c0_i32_2 = arith.constant 0 : i32
    return %c0_i32, %c0_i32_0, %c0_i32_1 : i32, i32, i32
  }
  func.func @transform_20(%arg0: i32) -> (i32, i32, i32) {
    %c0_i32 = arith.constant 0 : i32
    %c0_i32_0 = arith.constant 0 : i32
    %c0_i32_1 = arith.constant 0 : i32
    %c0_i32_2 = arith.constant 0 : i32
    return %c0_i32, %c0_i32_0, %c0_i32_1 : i32, i32, i32
  }
  func.func @transform_21(%arg0: i32) -> (i32, i32, i32) {
    %c0_i32 = arith.constant 0 : i32
    %c0_i32_0 = arith.constant 0 : i32
    %c0_i32_1 = arith.constant 0 : i32
    %c0_i32_2 = arith.constant 0 : i32
    return %c0_i32, %c0_i32_0, %c0_i32_1 : i32, i32, i32
  }
  func.func @transform_22(%arg0: i32) -> (i32, i32) {
    %c0_i32 = arith.constant 0 : i32
    %c0_i32_0 = arith.constant 0 : i32
    %c0_i32_1 = arith.constant 0 : i32
    return %c0_i32, %c0_i32_0 : i32, i32
  }
}

</mosaic_0001>

<llo_original>
// kernel: tpu_custom_call.1
$region0: #{tpu_custom_call.1}
  #allocation0 [shape = 'u32[]', space=smem, size = 0x4, offset = 0x4, fixed_abs, tag = 'smem constant byte address 0x4 - core index']
  #allocation1 [shape = 'u32[72,128]{1,0:T(1,128)}', space=vmem, size = 0x9000, scoped, tag = 'internal scratch']
  %s0 = inlined_call_operand.vmem [shape: f32[48,20], index: 0, kind: input, shape index: {}]
  %s1 = inlined_call_operand.vmem [shape: f32[48,32], index: 1, kind: input, shape index: {}]
  %s2 = inlined_call_operand.vmem [shape: f32[2,24,24], index: 2, kind: input, shape index: {}]
  %s3 = inlined_call_operand.vmem [shape: bf16[20,32], index: 3, kind: input, shape index: {}]
  %s4 = inlined_call_operand.vmem [shape: f32[1,32], index: 4, kind: input, shape index: {}]
  %s5 = inlined_call_operand.vmem [shape: f32[1,32], index: 5, kind: input, shape index: {}]
  %s6 = inlined_call_operand.vmem [shape: bf16[2,32,32], index: 6, kind: input, shape index: {}]
  %s7 = inlined_call_operand.vmem [shape: f32[2,1,32], index: 7, kind: input, shape index: {}]
  %s8 = inlined_call_operand.vmem [shape: bf16[2,32,32], index: 8, kind: input, shape index: {}]
  %s9 = inlined_call_operand.vmem [shape: f32[2,1,32], index: 9, kind: input, shape index: {}]
  %s10 = inlined_call_operand.vmem [shape: bf16[2,32,32], index: 10, kind: input, shape index: {}]
  %s11 = inlined_call_operand.vmem [shape: f32[2,1,32], index: 11, kind: input, shape index: {}]
  %s12 = inlined_call_operand.vmem [shape: bf16[2,32,32], index: 12, kind: input, shape index: {}]
  %s13 = inlined_call_operand.vmem [shape: f32[2,1,32], index: 13, kind: input, shape index: {}]
  %s14 = inlined_call_operand.vmem [shape: f32[2,1,32], index: 14, kind: input, shape index: {}]
  %s15 = inlined_call_operand.vmem [shape: f32[2,1,32], index: 15, kind: input, shape index: {}]
  %s16 = inlined_call_operand.vmem [shape: bf16[2,32,2048], index: 16, kind: input, shape index: {}]
  %s17 = inlined_call_operand.vmem [shape: f32[2,1,2048], index: 17, kind: input, shape index: {}]
  %s18 = inlined_call_operand.vmem [shape: bf16[2,2048,32], index: 18, kind: input, shape index: {}]
  %s19 = inlined_call_operand.vmem [shape: f32[2,1,32], index: 19, kind: input, shape index: {}]
  %s20 = inlined_call_operand.vmem [shape: f32[2,1,32], index: 20, kind: input, shape index: {}]
  %s21 = inlined_call_operand.vmem [shape: f32[2,1,32], index: 21, kind: input, shape index: {}]
  %s22 = inlined_call_operand.hbm [shape: f32[16,32], index: 22, kind: output, shape index: {}]
  %s23 = sld [smem:[#allocation0]]
  $region98: #{tpu_custom_call.1} parent=0
    _
  %s25 = ssub.s32 1, %s23
  %s26 = scalar_select 0, %s25, %s23
  $region1: #{tpu_custom_call.1} parent=0
    #allocation2 [shape = 'u8[8192]{0}', space=vmem, size = 0x2000, scoped, tag = 'output window, operand 0, single buffered']
    #allocation3 [shape = 's32[1]{0}', space=sflag, size = 0x4, scoped, tag = 'scoped memory for tpu_custom_call.1']
    %27 = vsyncpa [#allocation3], 0
    // Predicated region
    $region2: #{tpu_custom_call.1} parent=1 // pred_check
      _
    $region3: #{tpu_custom_call.1} parent=1 // pred_check_branch
      %29 = sbr.rel (0) target = $region5
    $region4: #{tpu_custom_call.1} parent=1 // pred_region
      _
    $region5: #{tpu_custom_call.1} parent=1 // pred_fallthru
      _
    // Predicated region
    $region6: #{tpu_custom_call.1} parent=1 // pred_check
      _
    $region7: #{tpu_custom_call.1} parent=1 // pred_check_branch
      %31 = sbr.rel (0) target = $region9
    $region8: #{tpu_custom_call.1} parent=1 // pred_region
      _
    $region9: #{tpu_custom_call.1} parent=1 // pred_fallthru
      _
    // Predicated region
    $region10: #{tpu_custom_call.1} parent=1 // pred_check
      _
    $region11: #{tpu_custom_call.1} parent=1 // pred_check_branch
      %33 = sbr.rel (0) target = $region13
    $region12: #{tpu_custom_call.1} parent=1 // pred_region
      _
    $region13: #{tpu_custom_call.1} parent=1 // pred_fallthru
      _
    // Predicated region
    $region14: #{tpu_custom_call.1} parent=1 // pred_check
      _
    $region15: #{tpu_custom_call.1} parent=1 // pred_check_branch
      %35 = sbr.rel (0) target = $region17
    $region16: #{tpu_custom_call.1} parent=1 // pred_region
      _
    $region17: #{tpu_custom_call.1} parent=1 // pred_fallthru
      _
    // Predicated region
    $region18: #{tpu_custom_call.1} parent=1 // pred_check
      _
    $region19: #{tpu_custom_call.1} parent=1 // pred_check_branch
      %37 = sbr.rel (0) target = $region21
    $region20: #{tpu_custom_call.1} parent=1 // pred_region
      _
    $region21: #{tpu_custom_call.1} parent=1 // pred_fallthru
      _
    // Predicated region
    $region22: #{tpu_custom_call.1} parent=1 // pred_check
      _
    $region23: #{tpu_custom_call.1} parent=1 // pred_check_branch
      %39 = sbr.rel (0) target = $region25
    $region24: #{tpu_custom_call.1} parent=1 // pred_region
      _
    $region25: #{tpu_custom_call.1} parent=1 // pred_fallthru
      _
    // Predicated region
    $region26: #{tpu_custom_call.1} parent=1 // pred_check
      _
    $region27: #{tpu_custom_call.1} parent=1 // pred_check_branch
      %41 = sbr.rel (0) target = $region29
    $region28: #{tpu_custom_call.1} parent=1 // pred_region
      _
    $region29: #{tpu_custom_call.1} parent=1 // pred_fallthru
      _
    // Predicated region
    $region30: #{tpu_custom_call.1} parent=1 // pred_check
      _
    $region31: #{tpu_custom_call.1} parent=1 // pred_check_branch
      %43 = sbr.rel (0) target = $region33
    $region32: #{tpu_custom_call.1} parent=1 // pred_region
      _
    $region33: #{tpu_custom_call.1} parent=1 // pred_fallthru
      _
    // Predicated region
    $region34: #{tpu_custom_call.1} parent=1 // pred_check
      _
    $region35: #{tpu_custom_call.1} parent=1 // pred_check_branch
      %45 = sbr.rel (0) target = $region37
    $region36: #{tpu_custom_call.1} parent=1 // pred_region
      _
    $region37: #{tpu_custom_call.1} parent=1 // pred_fallthru
      _
    // Predicated region
    $region38: #{tpu_custom_call.1} parent=1 // pred_check
      _
    $region39: #{tpu_custom_call.1} parent=1 // pred_check_branch
      %47 = sbr.rel (0) target = $region41
    $region40: #{tpu_custom_call.1} parent=1 // pred_region
      _
    $region41: #{tpu_custom_call.1} parent=1 // pred_fallthru
      _
    // Predicated region
    $region42: #{tpu_custom_call.1} parent=1 // pred_check
      _
    $region43: #{tpu_custom_call.1} parent=1 // pred_check_branch
      %49 = sbr.rel (0) target = $region45
    $region44: #{tpu_custom_call.1} parent=1 // pred_region
      _
    $region45: #{tpu_custom_call.1} parent=1 // pred_fallthru
      _
    // Predicated region
    $region46: #{tpu_custom_call.1} parent=1 // pred_check
      _
    $region47: #{tpu_custom_call.1} parent=1 // pred_check_branch
      %51 = sbr.rel (0) target = $region49
    $region48: #{tpu_custom_call.1} parent=1 // pred_region
      _
    $region49: #{tpu_custom_call.1} parent=1 // pred_fallthru
      _
    // Predicated region
    $region50: #{tpu_custom_call.1} parent=1 // pred_check
      _
    $region51: #{tpu_custom_call.1} parent=1 // pred_check_branch
      %53 = sbr.rel (0) target = $region53
    $region52: #{tpu_custom_call.1} parent=1 // pred_region
      _
    $region53: #{tpu_custom_call.1} parent=1 // pred_fallthru
      _
    // Predicated region
    $region54: #{tpu_custom_call.1} parent=1 // pred_check
      _
    $region55: #{tpu_custom_call.1} parent=1 // pred_check_branch
      %55 = sbr.rel (0) target = $region57
    $region56: #{tpu_custom_call.1} parent=1 // pred_region
      _
    $region57: #{tpu_custom_call.1} parent=1 // pred_fallthru
      _
    // Predicated region
    $region58: #{tpu_custom_call.1} parent=1 // pred_check
      _
    $region59: #{tpu_custom_call.1} parent=1 // pred_check_branch
      %57 = sbr.rel (0) target = $region61
    $region60: #{tpu_custom_call.1} parent=1 // pred_region
      _
    $region61: #{tpu_custom_call.1} parent=1 // pred_fallthru
      _
    // Predicated region
    $region62: #{tpu_custom_call.1} parent=1 // pred_check
      _
    $region63: #{tpu_custom_call.1} parent=1 // pred_check_branch
      %59 = sbr.rel (0) target = $region65
    $region64: #{tpu_custom_call.1} parent=1 // pred_region
      _
    $region65: #{tpu_custom_call.1} parent=1 // pred_fallthru
      _
    // Predicated region
    $region66: #{tpu_custom_call.1} parent=1 // pred_check
      _
    $region67: #{tpu_custom_call.1} parent=1 // pred_check_branch
      %61 = sbr.rel (0) target = $region69
    $region68: #{tpu_custom_call.1} parent=1 // pred_region
      _
    $region69: #{tpu_custom_call.1} parent=1 // pred_fallthru
      _
    // Predicated region
    $region70: #{tpu_custom_call.1} parent=1 // pred_check
      _
    $region71: #{tpu_custom_call.1} parent=1 // pred_check_branch
      %63 = sbr.rel (0) target = $region73
    $region72: #{tpu_custom_call.1} parent=1 // pred_region
      _
    $region73: #{tpu_custom_call.1} parent=1 // pred_fallthru
      _
    // Predicated region
    $region74: #{tpu_custom_call.1} parent=1 // pred_check
      _
    $region75: #{tpu_custom_call.1} parent=1 // pred_check_branch
      %65 = sbr.rel (0) target = $region77
    $region76: #{tpu_custom_call.1} parent=1 // pred_region
      _
    $region77: #{tpu_custom_call.1} parent=1 // pred_fallthru
      _
    // Predicated region
    $region78: #{tpu_custom_call.1} parent=1 // pred_check
      _
    $region79: #{tpu_custom_call.1} parent=1 // pred_check_branch
      %67 = sbr.rel (0) target = $region81
    $region80: #{tpu_custom_call.1} parent=1 // pred_region
      _
    $region81: #{tpu_custom_call.1} parent=1 // pred_fallthru
      _
    // Predicated region
    $region82: #{tpu_custom_call.1} parent=1 // pred_check
      _
    $region83: #{tpu_custom_call.1} parent=1 // pred_check_branch
      %69 = sbr.rel (0) target = $region85
    $region84: #{tpu_custom_call.1} parent=1 // pred_region
      _
    $region85: #{tpu_custom_call.1} parent=1 // pred_fallthru
      _
    // Predicated region
    $region86: #{tpu_custom_call.1} parent=1 // pred_check
      _
    $region87: #{tpu_custom_call.1} parent=1 // pred_check_branch
      %71 = sbr.rel (0) target = $region89
    $region88: #{tpu_custom_call.1} parent=1 // pred_region
      _
    $region89: #{tpu_custom_call.1} parent=1 // pred_fallthru
      _
    %v73 = vld [vmem:[%s0] sm:$0xff]
    %v74 = vld [vmem:[%s0 + $0x8] sm:$0xff]
    %v75 = vld [vmem:[%s0 + $0x10] sm:$0xff]
    %v76 = vld [vmem:[%s0 + $0x18] sm:$0xff]
    %v77 = vld [vmem:[%s0 + $0x20] sm:$0xff]
    %v78 = vld [vmem:[%s0 + $0x28] sm:$0xff]
    %v79 = vpack.c.bf16 %v74, %v73
    %v80 = vpack.c.bf16 %v76, %v75
    %v81 = vpack.c.bf16 %v78, %v77
    %v82 = vld [vmem:[%s3] sm:$0xf]
    %v83 = vld [vmem:[%s3 + $0x4] sm:$0xf]
    %v84 = vld [vmem:[%s3 + $0x8] sm:$0x3]
    %v85 = vld [vmem:[%s1] sm:$0xff]
    %v86 = vld [vmem:[%s1 + $0x8] sm:$0xff]
    %v87 = vld [vmem:[%s1 + $0x10] sm:$0xff]
    %v88 = vld [vmem:[%s1 + $0x18] sm:$0xff]
    %v89 = vld [vmem:[%s1 + $0x20] sm:$0xff]
    %v90 = vld [vmem:[%s1 + $0x28] sm:$0xff]
    %v94 = vunpack.c.l.b16 %v82
    %v95 = vunpack.c.l.b16 %v83
    %v96 = vunpack.c.l.b16 %v84
    %v97 = vpack.c.b16 %v95, %v94
    %v98 = vpack.c.b16 %v96, %v96
    %vm100 = vcmask 162816
    %v102 = vsel %vm100, %v79, 0
    %v105 = vsel %vm100, %v80, 0
    %v108 = vsel %vm100, %v81, 0
    %vm110 = vcmask 1041408
    %v112 = vsel %vm110, %v98, 0
    %114 = vmatpush.bf16.msra.mxu0 0
    %115 = vmatpush.bf16.msra.mxu0 0
    %116 = vmatpush.bf16.msra.mxu0 0
    %117 = vmatpush.bf16.msra.mxu0 0
    %118 = vmatpush.bf16.msra.mxu0 0
    %119 = vmatpush.bf16.msra.mxu0 0
    %120 = vmatpush.bf16.msra.mxu0 %v112
    %121 = vmatpush.bf16.msra.mxu0 %v97
    %122 = vmatmul.bf16.gmra.mxu0 %v102
    %v123 = vpop.f32.mrf.mxu0
    %v124 = vadd.f32 %v85, %v123
    %v125 = vpop.f32.mrf.mxu0
    %v126 = vadd.f32 %v86, %v125
    %127 = vmatmul.bf16.gmra.mxu0 %v105
    %v128 = vpop.f32.mrf.mxu0
    %v129 = vadd.f32 %v87, %v128
    %v130 = vpop.f32.mrf.mxu0
    %v131 = vadd.f32 %v88, %v130
    %132 = vmatmul.bf16.gmra.mxu0 %v108
    %v133 = vpop.f32.mrf.mxu0
    %v134 = vadd.f32 %v89, %v133
    %v135 = vpop.f32.mrf.mxu0
    %v136 = vadd.f32 %v90, %v135
    %137 = vdwg.mxu0
    %v138 = vld [vmem:[%s4] sm:$0x1]
    %v139 = vld [vmem:[%s5] sm:$0x1]
    %vm140 = vcmask 261120
    %v141 = vsel %vm140, %v124, 0.0
    %142 = vadd.xlane.f32.xlu0 %v141
    %v143 = vpop.xlane.xlu0 %142
    %v144 = vsel %vm140, %v126, 0.0
    %145 = vadd.xlane.f32.xlu0 %v144
    %v146 = vpop.xlane.xlu0 %145
    %v147 = vsel %vm140, %v129, 0.0
    %148 = vadd.xlane.f32.xlu0 %v147
    %v149 = vpop.xlane.xlu0 %148
    %v150 = vsel %vm140, %v131, 0.0
    %151 = vadd.xlane.f32.xlu0 %v150
    %v152 = vpop.xlane.xlu0 %151
    %v153 = vsel %vm140, %v134, 0.0
    %154 = vadd.xlane.f32.xlu0 %v153
    %v155 = vpop.xlane.xlu0 %154
    %v156 = vsel %vm140, %v136, 0.0
    %157 = vadd.xlane.f32.xlu0 %v156
    %v158 = vpop.xlane.xlu0 %157
    %v159 = vrcp.pop 32.0
    %v160 = vmul.f32 32.0, %v159
    %v161 = vsub.f32 1.0, %v160
    %v162 = vmul.f32 %v159, %v161
    %v163 = vadd.f32 %v159, %v162
    %vm164 = vweird.f32 %v159
    %v165 = vsel %vm164, %v159, %v163
    %v166 = vmul.f32 %v143, %v165
    %v167 = vmul.f32 %v146, %v165
    %v168 = vmul.f32 %v149, %v165
    %v169 = vmul.f32 %v152, %v165
    %v170 = vmul.f32 %v155, %v165
    %v171 = vmul.f32 %v158, %v165
    %v172 = vsub.f32 %v124, %v166
    %v173 = vsub.f32 %v126, %v167
    %v174 = vsub.f32 %v129, %v168
    %v175 = vsub.f32 %v131, %v169
    %v176 = vsub.f32 %v134, %v170
    %v177 = vsub.f32 %v136, %v171
    %v178 = vmul.f32 %v172, %v172
    %v179 = vmul.f32 %v173, %v173
    %v180 = vmul.f32 %v174, %v174
    %v181 = vmul.f32 %v175, %v175
    %v182 = vmul.f32 %v176, %v176
    %v183 = vmul.f32 %v177, %v177
    %v184 = vsel %vm140, %v178, 0.0
    %185 = vadd.xlane.f32.xlu0 %v184
    %v186 = vpop.xlane.xlu0 %185
    %v187 = vsel %vm140, %v179, 0.0
    %188 = vadd.xlane.f32.xlu0 %v187
    %v189 = vpop.xlane.xlu0 %188
    %v190 = vsel %vm140, %v180, 0.0
    %191 = vadd.xlane.f32.xlu0 %v190
    %v192 = vpop.xlane.xlu0 %191
    %v193 = vsel %vm140, %v181, 0.0
    %194 = vadd.xlane.f32.xlu0 %v193
    %v195 = vpop.xlane.xlu0 %194
    %v196 = vsel %vm140, %v182, 0.0
    %197 = vadd.xlane.f32.xlu0 %v196
    %v198 = vpop.xlane.xlu0 %197
    %v199 = vsel %vm140, %v183, 0.0
    %200 = vadd.xlane.f32.xlu0 %v199
    %v201 = vpop.xlane.xlu0 %200
    %v202 = vmul.f32 %v186, %v165
    %v203 = vmul.f32 %v189, %v165
    %v204 = vmul.f32 %v192, %v165
    %v205 = vmul.f32 %v195, %v165
    %v206 = vmul.f32 %v198, %v165
    %v207 = vmul.f32 %v201, %v165
    %v208 = vadd.f32 %v202, 1e-05
    %v209 = vadd.f32 %v203, 1e-05
    %v210 = vadd.f32 %v204, 1e-05
    %v211 = vadd.f32 %v205, 1e-05
    %v212 = vadd.f32 %v206, 1e-05
    %v213 = vadd.f32 %v207, 1e-05
    %v214 = vrsqrt.pop %v208
    %v215 = vmul.f32 %v214, %v208
    %v216 = vmul.f32 %v215, %v214
    %v217 = vmul.f32 0.5, %v216
    %v218 = vsub.f32 1.5, %v217
    %v219 = vmul.f32 %v214, %v218
    %vm220 = vweird.f32 %v208
    %vm221 = vweird.f32 %v214
    %vm222 = vmor %vm220, %vm221
    %v223 = vsel %vm222, %v214, %v219
    %v224 = vrsqrt.pop %v209
    %v225 = vmul.f32 %v224, %v209
    %v226 = vmul.f32 %v225, %v224
    %v227 = vmul.f32 0.5, %v226
    %v228 = vsub.f32 1.5, %v227
    %v229 = vmul.f32 %v224, %v228
    %vm230 = vweird.f32 %v209
    %vm231 = vweird.f32 %v224
    %vm232 = vmor %vm230, %vm231
    %v233 = vsel %vm232, %v224, %v229
    %v234 = vrsqrt.pop %v210
    %v235 = vmul.f32 %v234, %v210
    %v236 = vmul.f32 %v235, %v234
    %v237 = vmul.f32 0.5, %v236
    %v238 = vsub.f32 1.5, %v237
    %v239 = vmul.f32 %v234, %v238
    %vm240 = vweird.f32 %v210
    %vm241 = vweird.f32 %v234
    %vm242 = vmor %vm240, %vm241
    %v243 = vsel %vm242, %v234, %v239
    %v244 = vrsqrt.pop %v211
    %v245 = vmul.f32 %v244, %v211
    %v246 = vmul.f32 %v245, %v244
    %v247 = vmul.f32 0.5, %v246
    %v248 = vsub.f32 1.5, %v247
    %v249 = vmul.f32 %v244, %v248
    %vm250 = vweird.f32 %v211
    %vm251 = vweird.f32 %v244
    %vm252 = vmor %vm250, %vm251
    %v253 = vsel %vm252, %v244, %v249
    %v254 = vrsqrt.pop %v212
    %v255 = vmul.f32 %v254, %v212
    %v256 = vmul.f32 %v255, %v254
    %v257 = vmul.f32 0.5, %v256
    %v258 = vsub.f32 1.5, %v257
    %v259 = vmul.f32 %v254, %v258
    %vm260 = vweird.f32 %v212
    %vm261 = vweird.f32 %v254
    %vm262 = vmor %vm260, %vm261
    %v263 = vsel %vm262, %v254, %v259
    %v264 = vrsqrt.pop %v213
    %v265 = vmul.f32 %v264, %v213
    %v266 = vmul.f32 %v265, %v264
    %v267 = vmul.f32 0.5, %v266
    %v268 = vsub.f32 1.5, %v267
    %v269 = vmul.f32 %v264, %v268
    %vm270 = vweird.f32 %v213
    %vm271 = vweird.f32 %v264
    %vm272 = vmor %vm270, %vm271
    %v273 = vsel %vm272, %v264, %v269
    %v274 = vmul.f32 %v172, %v223
    %v275 = vmul.f32 %v173, %v233
    %v276 = vmul.f32 %v174, %v243
    %v277 = vmul.f32 %v175, %v253
    %v278 = vmul.f32 %v176, %v263
    %v279 = vmul.f32 %v177, %v273
    %v281 = vperm.slane %v138, 0
    %v283 = vmul.f32 %v274, %v281
    %v284 = vmul.f32 %v275, %v281
    %v285 = vmul.f32 %v276, %v281
    %v286 = vmul.f32 %v277, %v281
    %v287 = vmul.f32 %v278, %v281
    %v288 = vmul.f32 %v279, %v281
    %v290 = vperm.slane %v139, 0
    %v292 = vadd.f32 %v283, %v290
    %v293 = vadd.f32 %v284, %v290
    %v294 = vadd.f32 %v285, %v290
    %v295 = vadd.f32 %v286, %v290
    %v296 = vadd.f32 %v287, %v290
    %v297 = vadd.f32 %v288, %v290
    %v298 = vld [vmem:[%s2] sm:$0xff]
    %v299 = vld [vmem:[%s2 + $0x8] sm:$0xff]
    %v300 = vld [vmem:[%s2 + $0x10] sm:$0xff]
    %v301 = vld [vmem:[%s2 + $0x18] sm:$0xff]
    %v302 = vld [vmem:[%s2 + $0x20] sm:$0xff]
    %v303 = vld [vmem:[%s2 + $0x28] sm:$0xff]
    %v304 = vpack.c.bf16 %v293, %v292
    %v305 = vpack.c.bf16 %v295, %v294
    %v306 = vpack.c.bf16 %v297, %v296
    %v307 = vld [vmem:[%s6] sm:$0xf]
    %v308 = vld [vmem:[%s6 + $0x4] sm:$0xf]
    %v309 = vld [vmem:[%s6 + $0x8] sm:$0xf]
    %v310 = vld [vmem:[%s6 + $0xc] sm:$0xf]
    %v311 = vld [vmem:[%s7] sm:$0x1]
    %v313 = vperm.slane %v311, 0
    %v319 = vunpack.c.l.b16 %v307
    %v320 = vunpack.c.l.b16 %v308
    %v321 = vunpack.c.l.b16 %v309
    %v322 = vunpack.c.l.b16 %v310
    %v323 = vpack.c.b16 %v320, %v319
    %v324 = vpack.c.b16 %v322, %v321
    %v328 = vsel %vm140, %v304, 0
    %v331 = vsel %vm140, %v305, 0
    %v334 = vsel %vm140, %v306, 0
    %336 = vmatpush.bf16.msra.mxu0 0
    %337 = vmatpush.bf16.msra.mxu0 0
    %338 = vmatpush.bf16.msra.mxu0 0
    %339 = vmatpush.bf16.msra.mxu0 0
    %340 = vmatpush.bf16.msra.mxu0 0
    %341 = vmatpush.bf16.msra.mxu0 0
    %342 = vmatpush.bf16.msra.mxu0 %v324
    %343 = vmatpush.bf16.msra.mxu0 %v323
    %344 = vmatmul.bf16.gmra.mxu0 %v328
    %v345 = vpop.f32.mrf.mxu0
    %v346 = vadd.f32 %v313, %v345
    %v347 = vpop.f32.mrf.mxu0
    %v348 = vadd.f32 %v313, %v347
    %349 = vmatmul.bf16.gmra.mxu0 %v331
    %v350 = vpop.f32.mrf.mxu0
    %v351 = vadd.f32 %v313, %v350
    %v352 = vpop.f32.mrf.mxu0
    %v353 = vadd.f32 %v313, %v352
    %354 = vmatmul.bf16.gmra.mxu0 %v334
    %v355 = vpop.f32.mrf.mxu0
    %v356 = vadd.f32 %v313, %v355
    %v357 = vpop.f32.mrf.mxu0
    %v358 = vadd.f32 %v313, %v357
    %359 = vdwg.mxu0
    %v360 = vld [vmem:[%s8] sm:$0xf]
    %v361 = vld [vmem:[%s8 + $0x4] sm:$0xf]
    %v362 = vld [vmem:[%s8 + $0x8] sm:$0xf]
    %v363 = vld [vmem:[%s8 + $0xc] sm:$0xf]
    %v364 = vld [vmem:[%s9] sm:$0x1]
    %v366 = vperm.slane %v364, 0
    %v372 = vunpack.c.l.b16 %v360
    %v373 = vunpack.c.l.b16 %v361
    %v374 = vunpack.c.l.b16 %v362
    %v375 = vunpack.c.l.b16 %v363
    %v376 = vpack.c.b16 %v373, %v372
    %v377 = vpack.c.b16 %v375, %v374
    %380 = vmatpush.bf16.msra.mxu0 0
    %381 = vmatpush.bf16.msra.mxu0 0
    %382 = vmatpush.bf16.msra.mxu0 0
    %383 = vmatpush.bf16.msra.mxu0 0
    %384 = vmatpush.bf16.msra.mxu0 0
    %385 = vmatpush.bf16.msra.mxu0 0
    %386 = vmatpush.bf16.msra.mxu0 %v377
    %387 = vmatpush.bf16.msra.mxu0 %v376
    %388 = vmatmul.bf16.gmra.mxu0 %v328
    %v389 = vpop.f32.mrf.mxu0
    %v390 = vadd.f32 %v366, %v389
    %v391 = vpop.f32.mrf.mxu0
    %v392 = vadd.f32 %v366, %v391
    %393 = vmatmul.bf16.gmra.mxu0 %v331
    %v394 = vpop.f32.mrf.mxu0
    %v395 = vadd.f32 %v366, %v394
    %v396 = vpop.f32.mrf.mxu0
    %v397 = vadd.f32 %v366, %v396
    %398 = vmatmul.bf16.gmra.mxu0 %v334
    %v399 = vpop.f32.mrf.mxu0
    %v400 = vadd.f32 %v366, %v399
    %v401 = vpop.f32.mrf.mxu0
    %v402 = vadd.f32 %v366, %v401
    %403 = vdwg.mxu0
    %v404 = vld [vmem:[%s10] sm:$0xf]
    %v405 = vld [vmem:[%s10 + $0x4] sm:$0xf]
    %v406 = vld [vmem:[%s10 + $0x8] sm:$0xf]
    %v407 = vld [vmem:[%s10 + $0xc] sm:$0xf]
    %v408 = vld [vmem:[%s11] sm:$0x1]
    %v410 = vperm.slane %v408, 0
    %v416 = vunpack.c.l.b16 %v404
    %v417 = vunpack.c.l.b16 %v405
    %v418 = vunpack.c.l.b16 %v406
    %v419 = vunpack.c.l.b16 %v407
    %v420 = vpack.c.b16 %v417, %v416
    %v421 = vpack.c.b16 %v419, %v418
    %424 = vmatpush.bf16.msra.mxu0 0
    %425 = vmatpush.bf16.msra.mxu0 0
    %426 = vmatpush.bf16.msra.mxu0 0
    %427 = vmatpush.bf16.msra.mxu0 0
    %428 = vmatpush.bf16.msra.mxu0 0
    %429 = vmatpush.bf16.msra.mxu0 0
    %430 = vmatpush.bf16.msra.mxu0 %v421
    %431 = vmatpush.bf16.msra.mxu0 %v420
    %432 = vmatmul.bf16.gmra.mxu0 %v328
    %v433 = vpop.f32.mrf.mxu0
    %v434 = vadd.f32 %v410, %v433
    %v435 = vpop.f32.mrf.mxu0
    %v436 = vadd.f32 %v410, %v435
    %437 = vmatmul.bf16.gmra.mxu0 %v331
    %v438 = vpop.f32.mrf.mxu0
    %v439 = vadd.f32 %v410, %v438
    %v440 = vpop.f32.mrf.mxu0
    %v441 = vadd.f32 %v410, %v440
    %442 = vmatmul.bf16.gmra.mxu0 %v334
    %v443 = vpop.f32.mrf.mxu0
    %v444 = vadd.f32 %v410, %v443
    %v445 = vpop.f32.mrf.mxu0
    %v446 = vadd.f32 %v410, %v445
    %447 = vdwg.mxu0
    %v448 = vmul.f32 %v346, 0.35355338
    %v449 = vmul.f32 %v348, 0.35355338
    %v450 = vmul.f32 %v351, 0.35355338
    %v451 = vmul.f32 %v353, 0.35355338
    %v452 = vmul.f32 %v356, 0.35355338
    %v453 = vmul.f32 %v358, 0.35355338
    %v454 = vpack.c.bf16 %v448, %v448
    %v455 = vpack.c.bf16 %v449, %v449
    %v456 = vpack.c.bf16 %v450, %v450
    %v457 = vpack.c.bf16 %v451, %v451
    %v458 = vpack.c.bf16 %v452, %v452
    %v459 = vpack.c.bf16 %v453, %v453
    %v460 = vpack.c.bf16 %v390, %v390
    %v461 = vpack.c.bf16 %v392, %v392
    %v462 = vpack.c.bf16 %v395, %v395
    %v463 = vpack.c.bf16 %v397, %v397
    %v464 = vpack.c.bf16 %v400, %v400
    %v465 = vpack.c.bf16 %v402, %v402
    %v466 = vpack.c.bf16 %v434, %v434
    %v467 = vpack.c.bf16 %v436, %v436
    %v468 = vpack.c.bf16 %v439, %v439
    %v469 = vpack.c.bf16 %v441, %v441
    %v470 = vpack.c.bf16 %v444, %v444
    %v471 = vpack.c.bf16 %v446, %v446
    %v475 = vunpack.c.l.b16 %v454
    %v476 = vunpack.c.l.b16 %v455
    %v477 = vunpack.c.l.b16 %v456
    %v478 = vpack.c.b16 %v476, %v475
    %v479 = vpack.c.b16 %v477, %v477
    %v483 = vunpack.c.l.b16 %v460
    %v484 = vunpack.c.l.b16 %v461
    %v485 = vunpack.c.l.b16 %v462
    %v486 = vpack.c.b16 %v484, %v483
    %v487 = vpack.c.b16 %v485, %v485
    %vm488 = vcmask 64512
    %v490 = vsel %vm488, %v478, 0
    %v493 = vsel %vm488, %v479, 0
    %v496 = vsel %vm488, %v486, 0
    %v499 = vsel %vm488, %v487, 0
    %501 = vmatpush.bf16.xpose.msra.mxu0 0
    %502 = vmatpush.bf16.xpose.msra.mxu0 0
    %503 = vmatpush.bf16.xpose.msra.mxu0 0
    %504 = vmatpush.bf16.xpose.msra.mxu0 0
    %505 = vmatpush.bf16.xpose.msra.mxu0 0
    %506 = vmatpush.bf16.xpose.msra.mxu0 0
    %507 = vmatpush.bf16.xpose.msra.mxu0 %v499
    %508 = vmatpush.bf16.xpose.msra.mxu0 %v496
    %509 = vmatmul.bf16.gmra.mxu0 %v490
    %v510 = vpop.f32.mrf.mxu0
    %v511 = vadd.f32 %v298, %v510
    %v512 = vpop.f32.mrf.mxu0
    %v513 = vadd.f32 %v299, %v512
    %514 = vmatmul.bf16.gmra.mxu0 %v493
    %v515 = vpop.f32.mrf.mxu0
    %v516 = vadd.f32 %v300, %v515
    %v517 = vpop.f32.mrf.mxu0
    %518 = vdwg.mxu0
    %v522 = vunpack.c.l.b16 %v457
    %v523 = vunpack.c.l.b16 %v458
    %v524 = vunpack.c.l.b16 %v459
    %v525 = vpack.c.b16 %v523, %v522
    %v526 = vpack.c.b16 %v524, %v524
    %v530 = vunpack.c.l.b16 %v463
    %v531 = vunpack.c.l.b16 %v464
    %v532 = vunpack.c.l.b16 %v465
    %v533 = vpack.c.b16 %v531, %v530
    %v534 = vpack.c.b16 %v532, %v532
    %v536 = vsel %vm488, %v525, 0
    %v539 = vsel %vm488, %v526, 0
    %v542 = vsel %vm488, %v533, 0
    %v545 = vsel %vm488, %v534, 0
    %547 = vmatpush.bf16.xpose.msra.mxu0 0
    %548 = vmatpush.bf16.xpose.msra.mxu0 0
    %549 = vmatpush.bf16.xpose.msra.mxu0 0
    %550 = vmatpush.bf16.xpose.msra.mxu0 0
    %551 = vmatpush.bf16.xpose.msra.mxu0 0
    %552 = vmatpush.bf16.xpose.msra.mxu0 0
    %553 = vmatpush.bf16.xpose.msra.mxu0 %v545
    %554 = vmatpush.bf16.xpose.msra.mxu0 %v542
    %555 = vmatmul.bf16.gmra.mxu0 %v536
    %v556 = vpop.f32.mrf.mxu0
    %v557 = vadd.f32 %v301, %v556
    %v558 = vpop.f32.mrf.mxu0
    %v559 = vadd.f32 %v302, %v558
    %560 = vmatmul.bf16.gmra.mxu0 %v539
    %v561 = vpop.f32.mrf.mxu0
    %v562 = vadd.f32 %v303, %v561
    %v563 = vpop.f32.mrf.mxu0
    %564 = vdwg.mxu0
    %vm565 = vcmask 195584
    %v566 = vsel %vm565, %v511, -inf
    %567 = vmax.xlane.f32.xlu0 %v566
    %v568 = vpop.xlane.xlu0 %567
    %v569 = vsel %vm565, %v513, -inf
    %570 = vmax.xlane.f32.xlu0 %v569
    %v571 = vpop.xlane.xlu0 %570
    %v572 = vsel %vm565, %v516, -inf
    %573 = vmax.xlane.f32.xlu0 %v572
    %v574 = vpop.xlane.xlu0 %573
    %v575 = vsel %vm565, %v557, -inf
    %576 = vmax.xlane.f32.xlu0 %v575
    %v577 = vpop.xlane.xlu0 %576
    %v578 = vsel %vm565, %v559, -inf
    %579 = vmax.xlane.f32.xlu0 %v578
    %v580 = vpop.xlane.xlu0 %579
    %v581 = vsel %vm565, %v562, -inf
    %582 = vmax.xlane.f32.xlu0 %v581
    %v583 = vpop.xlane.xlu0 %582
    %v584 = vsub.f32 %v511, %v568
    %v585 = vsub.f32 %v513, %v571
    %v586 = vsub.f32 %v516, %v574
    %v587 = vsub.f32 %v557, %v577
    %v588 = vsub.f32 %v559, %v580
    %v589 = vsub.f32 %v562, %v583
    %v590 = vmul.f32 %v584, 1.442695
    %v591 = vpow.pop %v590
    %v592 = vmul.f32 %v585, 1.442695
    %v593 = vpow.pop %v592
    %v594 = vmul.f32 %v586, 1.442695
    %v595 = vpow.pop %v594
    %v596 = vmul.f32 %v587, 1.442695
    %v597 = vpow.pop %v596
    %v598 = vmul.f32 %v588, 1.442695
    %v599 = vpow.pop %v598
    %v600 = vmul.f32 %v589, 1.442695
    %v601 = vpow.pop %v600
    %v602 = vsel %vm565, %v591, 0.0
    %603 = vadd.xlane.f32.xlu0 %v602
    %v604 = vpop.xlane.xlu0 %603
    %v605 = vsel %vm565, %v593, 0.0
    %606 = vadd.xlane.f32.xlu0 %v605
    %v607 = vpop.xlane.xlu0 %606
    %v608 = vsel %vm565, %v595, 0.0
    %609 = vadd.xlane.f32.xlu0 %v608
    %v610 = vpop.xlane.xlu0 %609
    %v611 = vsel %vm565, %v597, 0.0
    %612 = vadd.xlane.f32.xlu0 %v611
    %v613 = vpop.xlane.xlu0 %612
    %v614 = vsel %vm565, %v599, 0.0
    %615 = vadd.xlane.f32.xlu0 %v614
    %v616 = vpop.xlane.xlu0 %615
    %v617 = vsel %vm565, %v601, 0.0
    %618 = vadd.xlane.f32.xlu0 %v617
    %v619 = vpop.xlane.xlu0 %618
    %v620 = vrcp.pop %v604
    %v621 = vrcp.pop %v607
    %v622 = vrcp.pop %v610
    %v623 = vrcp.pop %v613
    %v624 = vrcp.pop %v616
    %v625 = vrcp.pop %v619
    %v626 = vmul.f32 %v591, %v620
    %v627 = vmul.f32 %v593, %v621
    %v628 = vmul.f32 %v595, %v622
    %v629 = vmul.f32 %v597, %v623
    %v630 = vmul.f32 %v599, %v624
    %v631 = vmul.f32 %v601, %v625
    %v632 = vpack.c.bf16 %v626, %v626
    %v633 = vpack.c.bf16 %v627, %v627
    %v634 = vpack.c.bf16 %v628, %v628
    %v635 = vpack.c.bf16 %v629, %v629
    %v636 = vpack.c.bf16 %v630, %v630
    %v637 = vpack.c.bf16 %v631, %v631
    %v641 = vunpack.c.l.b16 %v632
    %v642 = vunpack.c.l.b16 %v633
    %v643 = vunpack.c.l.b16 %v634
    %v644 = vpack.c.b16 %v642, %v641
    %v645 = vpack.c.b16 %v643, %v643
    %v649 = vunpack.c.l.b16 %v466
    %v650 = vunpack.c.l.b16 %v467
    %v651 = vunpack.c.l.b16 %v468
    %v652 = vpack.c.b16 %v650, %v649
    %v653 = vpack.c.b16 %v651, %v651
    %v656 = vsel %vm565, %v644, 0
    %v659 = vsel %vm565, %v645, 0
    %vm661 = vcmask 1043456
    %v663 = vsel %vm661, %v653, 0
    %665 = vmatpush.bf16.msra.mxu0 0
    %666 = vmatpush.bf16.msra.mxu0 0
    %667 = vmatpush.bf16.msra.mxu0 0
    %668 = vmatpush.bf16.msra.mxu0 0
    %669 = vmatpush.bf16.msra.mxu0 0
    %670 = vmatpush.bf16.msra.mxu0 0
    %671 = vmatpush.bf16.msra.mxu0 %v663
    %672 = vmatpush.bf16.msra.mxu0 %v652
    %673 = vmatmul.bf16.gmra.mxu0 %v656
    %v674 = vpop.f32.mrf.mxu0
    %v675 = vadd.f32 0.0, %v674
    %v676 = vpop.f32.mrf.mxu0
    %v677 = vadd.f32 0.0, %v676
    %678 = vmatmul.bf16.gmra.mxu0 %v659
    %v679 = vpop.f32.mrf.mxu0
    %v680 = vadd.f32 0.0, %v679
    %v681 = vpop.f32.mrf.mxu0
    %682 = vdwg.mxu0
    %v686 = vunpack.c.l.b16 %v635
    %v687 = vunpack.c.l.b16 %v636
    %v688 = vunpack.c.l.b16 %v637
    %v689 = vpack.c.b16 %v687, %v686
    %v690 = vpack.c.b16 %v688, %v688
    %v694 = vunpack.c.l.b16 %v469
    %v695 = vunpack.c.l.b16 %v470
    %v696 = vunpack.c.l.b16 %v471
    %v697 = vpack.c.b16 %v695, %v694
    %v698 = vpack.c.b16 %v696, %v696
    %v701 = vsel %vm565, %v689, 0
    %v704 = vsel %vm565, %v690, 0
    %v707 = vsel %vm661, %v698, 0
    %709 = vmatpush.bf16.msra.mxu0 0
    %710 = vmatpush.bf16.msra.mxu0 0
    %711 = vmatpush.bf16.msra.mxu0 0
    %712 = vmatpush.bf16.msra.mxu0 0
    %713 = vmatpush.bf16.msra.mxu0 0
    %714 = vmatpush.bf16.msra.mxu0 0
    %715 = vmatpush.bf16.msra.mxu0 %v707
    %716 = vmatpush.bf16.msra.mxu0 %v697
    %717 = vmatmul.bf16.gmra.mxu0 %v701
    %v718 = vpop.f32.mrf.mxu0
    %v719 = vadd.f32 0.0, %v718
    %v720 = vpop.f32.mrf.mxu0
    %v721 = vadd.f32 0.0, %v720
    %722 = vmatmul.bf16.gmra.mxu0 %v704
    %v723 = vpop.f32.mrf.mxu0
    %v724 = vadd.f32 0.0, %v723
    %v725 = vpop.f32.mrf.mxu0
    %726 = vdwg.mxu0
    %v727 = vpack.c.bf16 %v677, %v675
    %v728 = vpack.c.bf16 %v719, %v680
    %v729 = vpack.c.bf16 %v724, %v721
    %v730 = vld [vmem:[%s12] sm:$0xf]
    %731 = vrot.lane.b32.xlu0 %v478, 120
    %v732 = vpop.permute.xlu0 %731
    %733 = vrot.lane.b32.xlu0 %v479, 120
    %v734 = vpop.permute.xlu0 %733
    %735 = vrot.lane.b32.xlu0 %v486, 120
    %v736 = vpop.permute.xlu0 %735
    %737 = vrot.lane.b32.xlu0 %v487, 120
    %v738 = vpop.permute.xlu0 %737
    %v740 = vsel %vm488, %v732, 0
    %v743 = vsel %vm488, %v734, 0
    %v746 = vsel %vm488, %v736, 0
    %v749 = vsel %vm488, %v738, 0
    %751 = vmatpush.bf16.xpose.msra.mxu0 0
    %752 = vmatpush.bf16.xpose.msra.mxu0 0
    %753 = vmatpush.bf16.xpose.msra.mxu0 0
    %754 = vmatpush.bf16.xpose.msra.mxu0 0
    %755 = vmatpush.bf16.xpose.msra.mxu0 0
    %756 = vmatpush.bf16.xpose.msra.mxu0 0
    %757 = vmatpush.bf16.xpose.msra.mxu0 %v749
    %758 = vmatpush.bf16.xpose.msra.mxu0 %v746
    %759 = vmatmul.bf16.gmra.mxu0 %v740
    %v760 = vpop.f32.mrf.mxu0
    %v761 = vadd.f32 %v298, %v760
    %v762 = vpop.f32.mrf.mxu0
    %v763 = vadd.f32 %v299, %v762
    %764 = vmatmul.bf16.gmra.mxu0 %v743
    %v765 = vpop.f32.mrf.mxu0
    %v766 = vadd.f32 %v300, %v765
    %v767 = vpop.f32.mrf.mxu0
    %768 = vdwg.mxu0
    %769 = vrot.lane.b32.xlu0 %v525, 120
    %v770 = vpop.permute.xlu0 %769
    %771 = vrot.lane.b32.xlu0 %v526, 120
    %v772 = vpop.permute.xlu0 %771
    %773 = vrot.lane.b32.xlu0 %v533, 120
    %v774 = vpop.permute.xlu0 %773
    %775 = vrot.lane.b32.xlu0 %v534, 120
    %v776 = vpop.permute.xlu0 %775
    %v778 = vsel %vm488, %v770, 0
    %v781 = vsel %vm488, %v772, 0
    %v784 = vsel %vm488, %v774, 0
    %v787 = vsel %vm488, %v776, 0
    %789 = vmatpush.bf16.xpose.msra.mxu0 0
    %790 = vmatpush.bf16.xpose.msra.mxu0 0
    %791 = vmatpush.bf16.xpose.msra.mxu0 0
    %792 = vmatpush.bf16.xpose.msra.mxu0 0
    %793 = vmatpush.bf16.xpose.msra.mxu0 0
    %794 = vmatpush.bf16.xpose.msra.mxu0 0
    %795 = vmatpush.bf16.xpose.msra.mxu0 %v787
    %796 = vmatpush.bf16.xpose.msra.mxu0 %v784
    %797 = vmatmul.bf16.gmra.mxu0 %v778
    %v798 = vpop.f32.mrf.mxu0
    %v799 = vadd.f32 %v301, %v798
    %v800 = vpop.f32.mrf.mxu0
    %v801 = vadd.f32 %v302, %v800
    %802 = vmatmul.bf16.gmra.mxu0 %v781
    %v803 = vpop.f32.mrf.mxu0
    %v804 = vadd.f32 %v303, %v803
    %v805 = vpop.f32.mrf.mxu0
    %806 = vdwg.mxu0
    %v807 = vsel %vm565, %v761, -inf
    %808 = vmax.xlane.f32.xlu0 %v807
    %v809 = vpop.xlane.xlu0 %808
    %v810 = vsel %vm565, %v763, -inf
    %811 = vmax.xlane.f32.xlu0 %v810
    %v812 = vpop.xlane.xlu0 %811
    %v813 = vsel %vm565, %v766, -inf
    %814 = vmax.xlane.f32.xlu0 %v813
    %v815 = vpop.xlane.xlu0 %814
    %v816 = vsel %vm565, %v799, -inf
    %817 = vmax.xlane.f32.xlu0 %v816
    %v818 = vpop.xlane.xlu0 %817
    %v819 = vsel %vm565, %v801, -inf
    %820 = vmax.xlane.f32.xlu0 %v819
    %v821 = vpop.xlane.xlu0 %820
    %v822 = vsel %vm565, %v804, -inf
    %823 = vmax.xlane.f32.xlu0 %v822
    %v824 = vpop.xlane.xlu0 %823
    %v825 = vsub.f32 %v761, %v809
    %v826 = vsub.f32 %v763, %v812
    %v827 = vsub.f32 %v766, %v815
    %v828 = vsub.f32 %v799, %v818
    %v829 = vsub.f32 %v801, %v821
    %v830 = vsub.f32 %v804, %v824
    %v831 = vmul.f32 %v825, 1.442695
    %v832 = vpow.pop %v831
    %v833 = vmul.f32 %v826, 1.442695
    %v834 = vpow.pop %v833
    %v835 = vmul.f32 %v827, 1.442695
    %v836 = vpow.pop %v835
    %v837 = vmul.f32 %v828, 1.442695
    %v838 = vpow.pop %v837
    %v839 = vmul.f32 %v829, 1.442695
    %v840 = vpow.pop %v839
    %v841 = vmul.f32 %v830, 1.442695
    %v842 = vpow.pop %v841
    %v843 = vsel %vm565, %v832, 0.0
    %844 = vadd.xlane.f32.xlu0 %v843
    %v845 = vpop.xlane.xlu0 %844
    %v846 = vsel %vm565, %v834, 0.0
    %847 = vadd.xlane.f32.xlu0 %v846
    %v848 = vpop.xlane.xlu0 %847
    %v849 = vsel %vm565, %v836, 0.0
    %850 = vadd.xlane.f32.xlu0 %v849
    %v851 = vpop.xlane.xlu0 %850
    %v852 = vsel %vm565, %v838, 0.0
    %853 = vadd.xlane.f32.xlu0 %v852
    %v854 = vpop.xlane.xlu0 %853
    %v855 = vsel %vm565, %v840, 0.0
    %856 = vadd.xlane.f32.xlu0 %v855
    %v857 = vpop.xlane.xlu0 %856
    %v858 = vsel %vm565, %v842, 0.0
    %859 = vadd.xlane.f32.xlu0 %v858
    %v860 = vpop.xlane.xlu0 %859
    %v861 = vrcp.pop %v845
    %v862 = vrcp.pop %v848
    %v863 = vrcp.pop %v851
    %v864 = vrcp.pop %v854
    %v865 = vrcp.pop %v857
    %v866 = vrcp.pop %v860
    %v867 = vmul.f32 %v832, %v861
    %v868 = vmul.f32 %v834, %v862
    %v869 = vmul.f32 %v836, %v863
    %v870 = vmul.f32 %v838, %v864
    %v871 = vmul.f32 %v840, %v865
    %v872 = vmul.f32 %v842, %v866
    %v873 = vpack.c.bf16 %v867, %v867
    %v874 = vpack.c.bf16 %v868, %v868
    %v875 = vpack.c.bf16 %v869, %v869
    %v876 = vpack.c.bf16 %v870, %v870
    %v877 = vpack.c.bf16 %v871, %v871
    %v878 = vpack.c.bf16 %v872, %v872
    %v882 = vunpack.c.l.b16 %v873
    %v883 = vunpack.c.l.b16 %v874
    %v884 = vunpack.c.l.b16 %v875
    %v885 = vpack.c.b16 %v883, %v882
    %v886 = vpack.c.b16 %v884, %v884
    %887 = vrot.lane.b32.xlu0 %v652, 120
    %v888 = vpop.permute.xlu0 %887
    %889 = vrot.lane.b32.xlu0 %v653, 120
    %v890 = vpop.permute.xlu0 %889
    %v893 = vsel %vm565, %v885, 0
    %v896 = vsel %vm565, %v886, 0
    %v899 = vsel %vm661, %v890, 0
    %901 = vmatpush.bf16.msra.mxu0 0
    %902 = vmatpush.bf16.msra.mxu0 0
    %903 = vmatpush.bf16.msra.mxu0 0
    %904 = vmatpush.bf16.msra.mxu0 0
    %905 = vmatpush.bf16.msra.mxu0 0
    %906 = vmatpush.bf16.msra.mxu0 0
    %907 = vmatpush.bf16.msra.mxu0 %v899
    %908 = vmatpush.bf16.msra.mxu0 %v888
    %909 = vmatmul.bf16.gmra.mxu0 %v893
    %v910 = vpop.f32.mrf.mxu0
    %v911 = vadd.f32 0.0, %v910
    %v912 = vpop.f32.mrf.mxu0
    %v913 = vadd.f32 0.0, %v912
    %914 = vmatmul.bf16.gmra.mxu0 %v896
    %v915 = vpop.f32.mrf.mxu0
    %v916 = vadd.f32 0.0, %v915
    %v917 = vpop.f32.mrf.mxu0
    %918 = vdwg.mxu0
    %v922 = vunpack.c.l.b16 %v876
    %v923 = vunpack.c.l.b16 %v877
    %v924 = vunpack.c.l.b16 %v878
    %v925 = vpack.c.b16 %v923, %v922
    %v926 = vpack.c.b16 %v924, %v924
    %927 = vrot.lane.b32.xlu0 %v697, 120
    %v928 = vpop.permute.xlu0 %927
    %929 = vrot.lane.b32.xlu0 %v698, 120
    %v930 = vpop.permute.xlu0 %929
    %v933 = vsel %vm565, %v925, 0
    %v936 = vsel %vm565, %v926, 0
    %v939 = vsel %vm661, %v930, 0
    %941 = vmatpush.bf16.msra.mxu0 0
    %942 = vmatpush.bf16.msra.mxu0 0
    %943 = vmatpush.bf16.msra.mxu0 0
    %944 = vmatpush.bf16.msra.mxu0 0
    %945 = vmatpush.bf16.msra.mxu0 0
    %946 = vmatpush.bf16.msra.mxu0 0
    %947 = vmatpush.bf16.msra.mxu0 %v939
    %948 = vmatpush.bf16.msra.mxu0 %v928
    %949 = vmatmul.bf16.gmra.mxu0 %v933
    %v950 = vpop.f32.mrf.mxu0
    %v951 = vadd.f32 0.0, %v950
    %v952 = vpop.f32.mrf.mxu0
    %v953 = vadd.f32 0.0, %v952
    %954 = vmatmul.bf16.gmra.mxu0 %v936
    %v955 = vpop.f32.mrf.mxu0
    %v956 = vadd.f32 0.0, %v955
    %v957 = vpop.f32.mrf.mxu0
    %958 = vdwg.mxu0
    %v959 = vpack.c.bf16 %v913, %v911
    %v960 = vpack.c.bf16 %v951, %v916
    %v961 = vpack.c.bf16 %v956, %v953
    %v962 = vld [vmem:[%s12 + $0x4] sm:$0xf]
    %v964 = vsel %vm488, %v959, 0
    %v967 = vsel %vm488, %v960, 0
    %v970 = vsel %vm488, %v961, 0
    %v973 = vsel %vm661, %v962, 0
    %975 = vmatpush.bf16.msra.mxu0 0
    %976 = vmatpush.bf16.msra.mxu0 0
    %977 = vmatpush.bf16.msra.mxu0 0
    %978 = vmatpush.bf16.msra.mxu0 0
    %979 = vmatpush.bf16.msra.mxu0 0
    %980 = vmatpush.bf16.msra.mxu0 0
    %981 = vmatpush.bf16.msra.mxu0 0
    %982 = vmatpush.bf16.msra.mxu0 %v973
    %983 = vmatmul.bf16.gmra.mxu0 %v964
    %v984 = vpop.f32.mrf.mxu0
    %v985 = vadd.f32 0.0, %v984
    %v986 = vpop.f32.mrf.mxu0
    %v987 = vadd.f32 0.0, %v986
    %988 = vmatmul.bf16.gmra.mxu0 %v967
    %v989 = vpop.f32.mrf.mxu0
    %v990 = vadd.f32 0.0, %v989
    %v991 = vpop.f32.mrf.mxu0
    %v992 = vadd.f32 0.0, %v991
    %993 = vmatmul.bf16.gmra.mxu0 %v970
    %v994 = vpop.f32.mrf.mxu0
    %v995 = vadd.f32 0.0, %v994
    %v996 = vpop.f32.mrf.mxu0
    %v997 = vadd.f32 0.0, %v996
    %998 = vdwg.mxu0
    %v1000 = vsel %vm488, %v727, 0
    %v1003 = vsel %vm488, %v728, 0
    %v1006 = vsel %vm488, %v729, 0
    %v1009 = vsel %vm661, %v730, 0
    %1011 = vmatpush.bf16.msra.mxu0 0
    %1012 = vmatpush.bf16.msra.mxu0 0
    %1013 = vmatpush.bf16.msra.mxu0 0
    %1014 = vmatpush.bf16.msra.mxu0 0
    %1015 = vmatpush.bf16.msra.mxu0 0
    %1016 = vmatpush.bf16.msra.mxu0 0
    %1017 = vmatpush.bf16.msra.mxu0 0
    %1018 = vmatpush.bf16.msra.mxu0 %v1009
    %1019 = vmatmul.bf16.gmra.mxu0 %v1000
    %v1020 = vpop.f32.mrf.mxu0
    %v1021 = vadd.f32 %v985, %v1020
    %v1022 = vpop.f32.mrf.mxu0
    %v1023 = vadd.f32 %v987, %v1022
    %1024 = vmatmul.bf16.gmra.mxu0 %v1003
    %v1025 = vpop.f32.mrf.mxu0
    %v1026 = vadd.f32 %v990, %v1025
    %v1027 = vpop.f32.mrf.mxu0
    %v1028 = vadd.f32 %v992, %v1027
    %1029 = vmatmul.bf16.gmra.mxu0 %v1006
    %v1030 = vpop.f32.mrf.mxu0
    %v1031 = vadd.f32 %v995, %v1030
    %v1032 = vpop.f32.mrf.mxu0
    %v1033 = vadd.f32 %v997, %v1032
    %1034 = vdwg.mxu0
    %1035 = vrot.lane.b32.xlu0 %v478, 112
    %v1036 = vpop.permute.xlu0 %1035
    %1037 = vrot.lane.b32.xlu0 %v479, 112
    %v1038 = vpop.permute.xlu0 %1037
    %1039 = vrot.lane.b32.xlu0 %v486, 112
    %v1040 = vpop.permute.xlu0 %1039
    %1041 = vrot.lane.b32.xlu0 %v487, 112
    %v1042 = vpop.permute.xlu0 %1041
    %v1044 = vsel %vm488, %v1036, 0
    %v1047 = vsel %vm488, %v1038, 0
    %v1050 = vsel %vm488, %v1040, 0
    %v1053 = vsel %vm488, %v1042, 0
    %1055 = vmatpush.bf16.xpose.msra.mxu0 0
    %1056 = vmatpush.bf16.xpose.msra.mxu0 0
    %1057 = vmatpush.bf16.xpose.msra.mxu0 0
    %1058 = vmatpush.bf16.xpose.msra.mxu0 0
    %1059 = vmatpush.bf16.xpose.msra.mxu0 0
    %1060 = vmatpush.bf16.xpose.msra.mxu0 0
    %1061 = vmatpush.bf16.xpose.msra.mxu0 %v1053
    %1062 = vmatpush.bf16.xpose.msra.mxu0 %v1050
    %1063 = vmatmul.bf16.gmra.mxu0 %v1044
    %v1064 = vpop.f32.mrf.mxu0
    %v1065 = vadd.f32 %v298, %v1064
    %v1066 = vpop.f32.mrf.mxu0
    %v1067 = vadd.f32 %v299, %v1066
    %1068 = vmatmul.bf16.gmra.mxu0 %v1047
    %v1069 = vpop.f32.mrf.mxu0
    %v1070 = vadd.f32 %v300, %v1069
    %v1071 = vpop.f32.mrf.mxu0
    %1072 = vdwg.mxu0
    %1073 = vrot.lane.b32.xlu0 %v525, 112
    %v1074 = vpop.permute.xlu0 %1073
    %1075 = vrot.lane.b32.xlu0 %v526, 112
    %v1076 = vpop.permute.xlu0 %1075
    %1077 = vrot.lane.b32.xlu0 %v533, 112
    %v1078 = vpop.permute.xlu0 %1077
    %1079 = vrot.lane.b32.xlu0 %v534, 112
    %v1080 = vpop.permute.xlu0 %1079
    %v1082 = vsel %vm488, %v1074, 0
    %v1085 = vsel %vm488, %v1076, 0
    %v1088 = vsel %vm488, %v1078, 0
    %v1091 = vsel %vm488, %v1080, 0
    %1093 = vmatpush.bf16.xpose.msra.mxu0 0
    %1094 = vmatpush.bf16.xpose.msra.mxu0 0
    %1095 = vmatpush.bf16.xpose.msra.mxu0 0
    %1096 = vmatpush.bf16.xpose.msra.mxu0 0
    %1097 = vmatpush.bf16.xpose.msra.mxu0 0
    %1098 = vmatpush.bf16.xpose.msra.mxu0 0
    %1099 = vmatpush.bf16.xpose.msra.mxu0 %v1091
    %1100 = vmatpush.bf16.xpose.msra.mxu0 %v1088
    %1101 = vmatmul.bf16.gmra.mxu0 %v1082
    %v1102 = vpop.f32.mrf.mxu0
    %v1103 = vadd.f32 %v301, %v1102
    %v1104 = vpop.f32.mrf.mxu0
    %v1105 = vadd.f32 %v302, %v1104
    %1106 = vmatmul.bf16.gmra.mxu0 %v1085
    %v1107 = vpop.f32.mrf.mxu0
    %v1108 = vadd.f32 %v303, %v1107
    %v1109 = vpop.f32.mrf.mxu0
    %1110 = vdwg.mxu0
    %v1111 = vsel %vm565, %v1065, -inf
    %1112 = vmax.xlane.f32.xlu0 %v1111
    %v1113 = vpop.xlane.xlu0 %1112
    %v1114 = vsel %vm565, %v1067, -inf
    %1115 = vmax.xlane.f32.xlu0 %v1114
    %v1116 = vpop.xlane.xlu0 %1115
    %v1117 = vsel %vm565, %v1070, -inf
    %1118 = vmax.xlane.f32.xlu0 %v1117
    %v1119 = vpop.xlane.xlu0 %1118
    %v1120 = vsel %vm565, %v1103, -inf
    %1121 = vmax.xlane.f32.xlu0 %v1120
    %v1122 = vpop.xlane.xlu0 %1121
    %v1123 = vsel %vm565, %v1105, -inf
    %1124 = vmax.xlane.f32.xlu0 %v1123
    %v1125 = vpop.xlane.xlu0 %1124
    %v1126 = vsel %vm565, %v1108, -inf
    %1127 = vmax.xlane.f32.xlu0 %v1126
    %v1128 = vpop.xlane.xlu0 %1127
    %v1129 = vsub.f32 %v1065, %v1113
    %v1130 = vsub.f32 %v1067, %v1116
    %v1131 = vsub.f32 %v1070, %v1119
    %v1132 = vsub.f32 %v1103, %v1122
    %v1133 = vsub.f32 %v1105, %v1125
    %v1134 = vsub.f32 %v1108, %v1128
    %v1135 = vmul.f32 %v1129, 1.442695
    %v1136 = vpow.pop %v1135
    %v1137 = vmul.f32 %v1130, 1.442695
    %v1138 = vpow.pop %v1137
    %v1139 = vmul.f32 %v1131, 1.442695
    %v1140 = vpow.pop %v1139
    %v1141 = vmul.f32 %v1132, 1.442695
    %v1142 = vpow.pop %v1141
    %v1143 = vmul.f32 %v1133, 1.442695
    %v1144 = vpow.pop %v1143
    %v1145 = vmul.f32 %v1134, 1.442695
    %v1146 = vpow.pop %v1145
    %v1147 = vsel %vm565, %v1136, 0.0
    %1148 = vadd.xlane.f32.xlu0 %v1147
    %v1149 = vpop.xlane.xlu0 %1148
    %v1150 = vsel %vm565, %v1138, 0.0
    %1151 = vadd.xlane.f32.xlu0 %v1150
    %v1152 = vpop.xlane.xlu0 %1151
    %v1153 = vsel %vm565, %v1140, 0.0
    %1154 = vadd.xlane.f32.xlu0 %v1153
    %v1155 = vpop.xlane.xlu0 %1154
    %v1156 = vsel %vm565, %v1142, 0.0
    %1157 = vadd.xlane.f32.xlu0 %v1156
    %v1158 = vpop.xlane.xlu0 %1157
    %v1159 = vsel %vm565, %v1144, 0.0
    %1160 = vadd.xlane.f32.xlu0 %v1159
    %v1161 = vpop.xlane.xlu0 %1160
    %v1162 = vsel %vm565, %v1146, 0.0
    %1163 = vadd.xlane.f32.xlu0 %v1162
    %v1164 = vpop.xlane.xlu0 %1163
    %v1165 = vrcp.pop %v1149
    %v1166 = vrcp.pop %v1152
    %v1167 = vrcp.pop %v1155
    %v1168 = vrcp.pop %v1158
    %v1169 = vrcp.pop %v1161
    %v1170 = vrcp.pop %v1164
    %v1171 = vmul.f32 %v1136, %v1165
    %v1172 = vmul.f32 %v1138, %v1166
    %v1173 = vmul.f32 %v1140, %v1167
    %v1174 = vmul.f32 %v1142, %v1168
    %v1175 = vmul.f32 %v1144, %v1169
    %v1176 = vmul.f32 %v1146, %v1170
    %v1177 = vpack.c.bf16 %v1171, %v1171
    %v1178 = vpack.c.bf16 %v1172, %v1172
    %v1179 = vpack.c.bf16 %v1173, %v1173
    %v1180 = vpack.c.bf16 %v1174, %v1174
    %v1181 = vpack.c.bf16 %v1175, %v1175
    %v1182 = vpack.c.bf16 %v1176, %v1176
    %v1186 = vunpack.c.l.b16 %v1177
    %v1187 = vunpack.c.l.b16 %v1178
    %v1188 = vunpack.c.l.b16 %v1179
    %v1189 = vpack.c.b16 %v1187, %v1186
    %v1190 = vpack.c.b16 %v1188, %v1188
    %1191 = vrot.lane.b32.xlu0 %v652, 112
    %v1192 = vpop.permute.xlu0 %1191
    %1193 = vrot.lane.b32.xlu0 %v653, 112
    %v1194 = vpop.permute.xlu0 %1193
    %v1197 = vsel %vm565, %v1189, 0
    %v1200 = vsel %vm565, %v1190, 0
    %v1203 = vsel %vm661, %v1194, 0
    %1205 = vmatpush.bf16.msra.mxu0 0
    %1206 = vmatpush.bf16.msra.mxu0 0
    %1207 = vmatpush.bf16.msra.mxu0 0
    %1208 = vmatpush.bf16.msra.mxu0 0
    %1209 = vmatpush.bf16.msra.mxu0 0
    %1210 = vmatpush.bf16.msra.mxu0 0
    %1211 = vmatpush.bf16.msra.mxu0 %v1203
    %1212 = vmatpush.bf16.msra.mxu0 %v1192
    %1213 = vmatmul.bf16.gmra.mxu0 %v1197
    %v1214 = vpop.f32.mrf.mxu0
    %v1215 = vadd.f32 0.0, %v1214
    %v1216 = vpop.f32.mrf.mxu0
    %v1217 = vadd.f32 0.0, %v1216
    %1218 = vmatmul.bf16.gmra.mxu0 %v1200
    %v1219 = vpop.f32.mrf.mxu0
    %v1220 = vadd.f32 0.0, %v1219
    %v1221 = vpop.f32.mrf.mxu0
    %1222 = vdwg.mxu0
    %v1226 = vunpack.c.l.b16 %v1180
    %v1227 = vunpack.c.l.b16 %v1181
    %v1228 = vunpack.c.l.b16 %v1182
    %v1229 = vpack.c.b16 %v1227, %v1226
    %v1230 = vpack.c.b16 %v1228, %v1228
    %1231 = vrot.lane.b32.xlu0 %v697, 112
    %v1232 = vpop.permute.xlu0 %1231
    %1233 = vrot.lane.b32.xlu0 %v698, 112
    %v1234 = vpop.permute.xlu0 %1233
    %v1237 = vsel %vm565, %v1229, 0
    %v1240 = vsel %vm565, %v1230, 0
    %v1243 = vsel %vm661, %v1234, 0
    %1245 = vmatpush.bf16.msra.mxu0 0
    %1246 = vmatpush.bf16.msra.mxu0 0
    %1247 = vmatpush.bf16.msra.mxu0 0
    %1248 = vmatpush.bf16.msra.mxu0 0
    %1249 = vmatpush.bf16.msra.mxu0 0
    %1250 = vmatpush.bf16.msra.mxu0 0
    %1251 = vmatpush.bf16.msra.mxu0 %v1243
    %1252 = vmatpush.bf16.msra.mxu0 %v1232
    %1253 = vmatmul.bf16.gmra.mxu0 %v1237
    %v1254 = vpop.f32.mrf.mxu0
    %v1255 = vadd.f32 0.0, %v1254
    %v1256 = vpop.f32.mrf.mxu0
    %v1257 = vadd.f32 0.0, %v1256
    %1258 = vmatmul.bf16.gmra.mxu0 %v1240
    %v1259 = vpop.f32.mrf.mxu0
    %v1260 = vadd.f32 0.0, %v1259
    %v1261 = vpop.f32.mrf.mxu0
    %1262 = vdwg.mxu0
    %v1263 = vpack.c.bf16 %v1217, %v1215
    %v1264 = vpack.c.bf16 %v1255, %v1220
    %v1265 = vpack.c.bf16 %v1260, %v1257
    %v1266 = vld [vmem:[%s12 + $0x8] sm:$0xf]
    %v1268 = vsel %vm488, %v1263, 0
    %v1271 = vsel %vm488, %v1264, 0
    %v1274 = vsel %vm488, %v1265, 0
    %v1277 = vsel %vm661, %v1266, 0
    %1279 = vmatpush.bf16.msra.mxu0 0
    %1280 = vmatpush.bf16.msra.mxu0 0
    %1281 = vmatpush.bf16.msra.mxu0 0
    %1282 = vmatpush.bf16.msra.mxu0 0
    %1283 = vmatpush.bf16.msra.mxu0 0
    %1284 = vmatpush.bf16.msra.mxu0 0
    %1285 = vmatpush.bf16.msra.mxu0 0
    %1286 = vmatpush.bf16.msra.mxu0 %v1277
    %1287 = vmatmul.bf16.gmra.mxu0 %v1268
    %v1288 = vpop.f32.mrf.mxu0
    %v1289 = vadd.f32 0.0, %v1288
    %v1290 = vpop.f32.mrf.mxu0
    %v1291 = vadd.f32 0.0, %v1290
    %1292 = vmatmul.bf16.gmra.mxu0 %v1271
    %v1293 = vpop.f32.mrf.mxu0
    %v1294 = vadd.f32 0.0, %v1293
    %v1295 = vpop.f32.mrf.mxu0
    %v1296 = vadd.f32 0.0, %v1295
    %1297 = vmatmul.bf16.gmra.mxu0 %v1274
    %v1298 = vpop.f32.mrf.mxu0
    %v1299 = vadd.f32 0.0, %v1298
    %v1300 = vpop.f32.mrf.mxu0
    %v1301 = vadd.f32 0.0, %v1300
    %1302 = vdwg.mxu0
    %v1303 = vadd.f32 %v1021, %v1289
    %v1304 = vadd.f32 %v1023, %v1291
    %v1305 = vadd.f32 %v1026, %v1294
    %v1306 = vadd.f32 %v1028, %v1296
    %v1307 = vadd.f32 %v1031, %v1299
    %v1308 = vadd.f32 %v1033, %v1301
    %1309 = vrot.lane.b32.xlu0 %v478, 104
    %v1310 = vpop.permute.xlu0 %1309
    %1311 = vrot.lane.b32.xlu0 %v479, 104
    %v1312 = vpop.permute.xlu0 %1311
    %1313 = vrot.lane.b32.xlu0 %v486, 104
    %v1314 = vpop.permute.xlu0 %1313
    %1315 = vrot.lane.b32.xlu0 %v487, 104
    %v1316 = vpop.permute.xlu0 %1315
    %v1318 = vsel %vm488, %v1310, 0
    %v1321 = vsel %vm488, %v1312, 0
    %v1324 = vsel %vm488, %v1314, 0
    %v1327 = vsel %vm488, %v1316, 0
    %1329 = vmatpush.bf16.xpose.msra.mxu0 0
    %1330 = vmatpush.bf16.xpose.msra.mxu0 0
    %1331 = vmatpush.bf16.xpose.msra.mxu0 0
    %1332 = vmatpush.bf16.xpose.msra.mxu0 0
    %1333 = vmatpush.bf16.xpose.msra.mxu0 0
    %1334 = vmatpush.bf16.xpose.msra.mxu0 0
    %1335 = vmatpush.bf16.xpose.msra.mxu0 %v1327
    %1336 = vmatpush.bf16.xpose.msra.mxu0 %v1324
    %1337 = vmatmul.bf16.gmra.mxu0 %v1318
    %v1338 = vpop.f32.mrf.mxu0
    %v1339 = vadd.f32 %v298, %v1338
    %v1340 = vpop.f32.mrf.mxu0
    %v1341 = vadd.f32 %v299, %v1340
    %1342 = vmatmul.bf16.gmra.mxu0 %v1321
    %v1343 = vpop.f32.mrf.mxu0
    %v1344 = vadd.f32 %v300, %v1343
    %v1345 = vpop.f32.mrf.mxu0
    %1346 = vdwg.mxu0
    %1347 = vrot.lane.b32.xlu0 %v525, 104
    %v1348 = vpop.permute.xlu0 %1347
    %1349 = vrot.lane.b32.xlu0 %v526, 104
    %v1350 = vpop.permute.xlu0 %1349
    %1351 = vrot.lane.b32.xlu0 %v533, 104
    %v1352 = vpop.permute.xlu0 %1351
    %1353 = vrot.lane.b32.xlu0 %v534, 104
    %v1354 = vpop.permute.xlu0 %1353
    %v1356 = vsel %vm488, %v1348, 0
    %v1359 = vsel %vm488, %v1350, 0
    %v1362 = vsel %vm488, %v1352, 0
    %v1365 = vsel %vm488, %v1354, 0
    %1367 = vmatpush.bf16.xpose.msra.mxu0 0
    %1368 = vmatpush.bf16.xpose.msra.mxu0 0
    %1369 = vmatpush.bf16.xpose.msra.mxu0 0
    %1370 = vmatpush.bf16.xpose.msra.mxu0 0
    %1371 = vmatpush.bf16.xpose.msra.mxu0 0
    %1372 = vmatpush.bf16.xpose.msra.mxu0 0
    %1373 = vmatpush.bf16.xpose.msra.mxu0 %v1365
    %1374 = vmatpush.bf16.xpose.msra.mxu0 %v1362
    %1375 = vmatmul.bf16.gmra.mxu0 %v1356
    %v1376 = vpop.f32.mrf.mxu0
    %v1377 = vadd.f32 %v301, %v1376
    %v1378 = vpop.f32.mrf.mxu0
    %v1379 = vadd.f32 %v302, %v1378
    %1380 = vmatmul.bf16.gmra.mxu0 %v1359
    %v1381 = vpop.f32.mrf.mxu0
    %v1382 = vadd.f32 %v303, %v1381
    %v1383 = vpop.f32.mrf.mxu0
    %1384 = vdwg.mxu0
    %v1385 = vsel %vm565, %v1339, -inf
    %1386 = vmax.xlane.f32.xlu0 %v1385
    %v1387 = vpop.xlane.xlu0 %1386
    %v1388 = vsel %vm565, %v1341, -inf
    %1389 = vmax.xlane.f32.xlu0 %v1388
    %v1390 = vpop.xlane.xlu0 %1389
    %v1391 = vsel %vm565, %v1344, -inf
    %1392 = vmax.xlane.f32.xlu0 %v1391
    %v1393 = vpop.xlane.xlu0 %1392
    %v1394 = vsel %vm565, %v1377, -inf
    %1395 = vmax.xlane.f32.xlu0 %v1394
    %v1396 = vpop.xlane.xlu0 %1395
    %v1397 = vsel %vm565, %v1379, -inf
    %1398 = vmax.xlane.f32.xlu0 %v1397
    %v1399 = vpop.xlane.xlu0 %1398
    %v1400 = vsel %vm565, %v1382, -inf
    %1401 = vmax.xlane.f32.xlu0 %v1400
    %v1402 = vpop.xlane.xlu0 %1401
    %v1403 = vsub.f32 %v1339, %v1387
    %v1404 = vsub.f32 %v1341, %v1390
    %v1405 = vsub.f32 %v1344, %v1393
    %v1406 = vsub.f32 %v1377, %v1396
    %v1407 = vsub.f32 %v1379, %v1399
    %v1408 = vsub.f32 %v1382, %v1402
    %v1409 = vmul.f32 %v1403, 1.442695
    %v1410 = vpow.pop %v1409
    %v1411 = vmul.f32 %v1404, 1.442695
    %v1412 = vpow.pop %v1411
    %v1413 = vmul.f32 %v1405, 1.442695
    %v1414 = vpow.pop %v1413
    %v1415 = vmul.f32 %v1406, 1.442695
    %v1416 = vpow.pop %v1415
    %v1417 = vmul.f32 %v1407, 1.442695
    %v1418 = vpow.pop %v1417
    %v1419 = vmul.f32 %v1408, 1.442695
    %v1420 = vpow.pop %v1419
    %v1421 = vsel %vm565, %v1410, 0.0
    %1422 = vadd.xlane.f32.xlu0 %v1421
    %v1423 = vpop.xlane.xlu0 %1422
    %v1424 = vsel %vm565, %v1412, 0.0
    %1425 = vadd.xlane.f32.xlu0 %v1424
    %v1426 = vpop.xlane.xlu0 %1425
    %v1427 = vsel %vm565, %v1414, 0.0
    %1428 = vadd.xlane.f32.xlu0 %v1427
    %v1429 = vpop.xlane.xlu0 %1428
    %v1430 = vsel %vm565, %v1416, 0.0
    %1431 = vadd.xlane.f32.xlu0 %v1430
    %v1432 = vpop.xlane.xlu0 %1431
    %v1433 = vsel %vm565, %v1418, 0.0
    %1434 = vadd.xlane.f32.xlu0 %v1433
    %v1435 = vpop.xlane.xlu0 %1434
    %v1436 = vsel %vm565, %v1420, 0.0
    %1437 = vadd.xlane.f32.xlu0 %v1436
    %v1438 = vpop.xlane.xlu0 %1437
    %v1439 = vrcp.pop %v1423
    %v1440 = vrcp.pop %v1426
    %v1441 = vrcp.pop %v1429
    %v1442 = vrcp.pop %v1432
    %v1443 = vrcp.pop %v1435
    %v1444 = vrcp.pop %v1438
    %v1445 = vmul.f32 %v1410, %v1439
    %v1446 = vmul.f32 %v1412, %v1440
    %v1447 = vmul.f32 %v1414, %v1441
    %v1448 = vmul.f32 %v1416, %v1442
    %v1449 = vmul.f32 %v1418, %v1443
    %v1450 = vmul.f32 %v1420, %v1444
    %v1451 = vpack.c.bf16 %v1445, %v1445
    %v1452 = vpack.c.bf16 %v1446, %v1446
    %v1453 = vpack.c.bf16 %v1447, %v1447
    %v1454 = vpack.c.bf16 %v1448, %v1448
    %v1455 = vpack.c.bf16 %v1449, %v1449
    %v1456 = vpack.c.bf16 %v1450, %v1450
    %v1460 = vunpack.c.l.b16 %v1451
    %v1461 = vunpack.c.l.b16 %v1452
    %v1462 = vunpack.c.l.b16 %v1453
    %v1463 = vpack.c.b16 %v1461, %v1460
    %v1464 = vpack.c.b16 %v1462, %v1462
    %1465 = vrot.lane.b32.xlu0 %v652, 104
    %v1466 = vpop.permute.xlu0 %1465
    %1467 = vrot.lane.b32.xlu0 %v653, 104
    %v1468 = vpop.permute.xlu0 %1467
    %v1471 = vsel %vm565, %v1463, 0
    %v1474 = vsel %vm565, %v1464, 0
    %v1477 = vsel %vm661, %v1468, 0
    %1479 = vmatpush.bf16.msra.mxu0 0
    %1480 = vmatpush.bf16.msra.mxu0 0
    %1481 = vmatpush.bf16.msra.mxu0 0
    %1482 = vmatpush.bf16.msra.mxu0 0
    %1483 = vmatpush.bf16.msra.mxu0 0
    %1484 = vmatpush.bf16.msra.mxu0 0
    %1485 = vmatpush.bf16.msra.mxu0 %v1477
    %1486 = vmatpush.bf16.msra.mxu0 %v1466
    %1487 = vmatmul.bf16.gmra.mxu0 %v1471
    %v1488 = vpop.f32.mrf.mxu0
    %v1489 = vadd.f32 0.0, %v1488
    %v1490 = vpop.f32.mrf.mxu0
    %v1491 = vadd.f32 0.0, %v1490
    %1492 = vmatmul.bf16.gmra.mxu0 %v1474
    %v1493 = vpop.f32.mrf.mxu0
    %v1494 = vadd.f32 0.0, %v1493
    %v1495 = vpop.f32.mrf.mxu0
    %1496 = vdwg.mxu0
    %v1500 = vunpack.c.l.b16 %v1454
    %v1501 = vunpack.c.l.b16 %v1455
    %v1502 = vunpack.c.l.b16 %v1456
    %v1503 = vpack.c.b16 %v1501, %v1500
    %v1504 = vpack.c.b16 %v1502, %v1502
    %1505 = vrot.lane.b32.xlu0 %v697, 104
    %v1506 = vpop.permute.xlu0 %1505
    %1507 = vrot.lane.b32.xlu0 %v698, 104
    %v1508 = vpop.permute.xlu0 %1507
    %v1511 = vsel %vm565, %v1503, 0
    %v1514 = vsel %vm565, %v1504, 0
    %v1517 = vsel %vm661, %v1508, 0
    %1519 = vmatpush.bf16.msra.mxu0 0
    %1520 = vmatpush.bf16.msra.mxu0 0
    %1521 = vmatpush.bf16.msra.mxu0 0
    %1522 = vmatpush.bf16.msra.mxu0 0
    %1523 = vmatpush.bf16.msra.mxu0 0
    %1524 = vmatpush.bf16.msra.mxu0 0
    %1525 = vmatpush.bf16.msra.mxu0 %v1517
    %1526 = vmatpush.bf16.msra.mxu0 %v1506
    %1527 = vmatmul.bf16.gmra.mxu0 %v1511
    %v1528 = vpop.f32.mrf.mxu0
    %v1529 = vadd.f32 0.0, %v1528
    %v1530 = vpop.f32.mrf.mxu0
    %v1531 = vadd.f32 0.0, %v1530
    %1532 = vmatmul.bf16.gmra.mxu0 %v1514
    %v1533 = vpop.f32.mrf.mxu0
    %v1534 = vadd.f32 0.0, %v1533
    %v1535 = vpop.f32.mrf.mxu0
    %1536 = vdwg.mxu0
    %v1537 = vpack.c.bf16 %v1491, %v1489
    %v1538 = vpack.c.bf16 %v1529, %v1494
    %v1539 = vpack.c.bf16 %v1534, %v1531
    %v1540 = vld [vmem:[%s12 + $0xc] sm:$0xf]
    %v1542 = vsel %vm488, %v1537, 0
    %v1545 = vsel %vm488, %v1538, 0
    %v1548 = vsel %vm488, %v1539, 0
    %v1551 = vsel %vm661, %v1540, 0
    %1553 = vmatpush.bf16.msra.mxu0 0
    %1554 = vmatpush.bf16.msra.mxu0 0
    %1555 = vmatpush.bf16.msra.mxu0 0
    %1556 = vmatpush.bf16.msra.mxu0 0
    %1557 = vmatpush.bf16.msra.mxu0 0
    %1558 = vmatpush.bf16.msra.mxu0 0
    %1559 = vmatpush.bf16.msra.mxu0 0
    %1560 = vmatpush.bf16.msra.mxu0 %v1551
    %1561 = vmatmul.bf16.gmra.mxu0 %v1542
    %v1562 = vpop.f32.mrf.mxu0
    %v1563 = vadd.f32 0.0, %v1562
    %v1564 = vpop.f32.mrf.mxu0
    %v1565 = vadd.f32 0.0, %v1564
    %1566 = vmatmul.bf16.gmra.mxu0 %v1545
    %v1567 = vpop.f32.mrf.mxu0
    %v1568 = vadd.f32 0.0, %v1567
    %v1569 = vpop.f32.mrf.mxu0
    %v1570 = vadd.f32 0.0, %v1569
    %1571 = vmatmul.bf16.gmra.mxu0 %v1548
    %v1572 = vpop.f32.mrf.mxu0
    %v1573 = vadd.f32 0.0, %v1572
    %v1574 = vpop.f32.mrf.mxu0
    %v1575 = vadd.f32 0.0, %v1574
    %1576 = vdwg.mxu0
    %v1577 = vadd.f32 %v1303, %v1563
    %v1578 = vadd.f32 %v1304, %v1565
    %v1579 = vadd.f32 %v1305, %v1568
    %v1580 = vadd.f32 %v1306, %v1570
    %v1581 = vadd.f32 %v1307, %v1573
    %v1582 = vadd.f32 %v1308, %v1575
    %v1583 = vadd.f32 %v292, %v1577
    %v1584 = vadd.f32 %v293, %v1578
    %v1585 = vadd.f32 %v294, %v1579
    %v1586 = vadd.f32 %v295, %v1580
    %v1587 = vadd.f32 %v296, %v1581
    %v1588 = vadd.f32 %v297, %v1582
    %v1589 = vld [vmem:[%s13] sm:$0x1]
    %v1591 = vperm.slane %v1589, 0
    %v1593 = vadd.f32 %v1583, %v1591
    %v1594 = vadd.f32 %v1584, %v1591
    %v1595 = vadd.f32 %v1585, %v1591
    %v1596 = vadd.f32 %v1586, %v1591
    %v1597 = vadd.f32 %v1587, %v1591
    %v1598 = vadd.f32 %v1588, %v1591
    %v1599 = vld [vmem:[%s14] sm:$0x1]
    %v1600 = vld [vmem:[%s15] sm:$0x1]
    %v1601 = vsel %vm140, %v1593, 0.0
    %1602 = vadd.xlane.f32.xlu0 %v1601
    %v1603 = vpop.xlane.xlu0 %1602
    %v1604 = vsel %vm140, %v1594, 0.0
    %1605 = vadd.xlane.f32.xlu0 %v1604
    %v1606 = vpop.xlane.xlu0 %1605
    %v1607 = vsel %vm140, %v1595, 0.0
    %1608 = vadd.xlane.f32.xlu0 %v1607
    %v1609 = vpop.xlane.xlu0 %1608
    %v1610 = vsel %vm140, %v1596, 0.0
    %1611 = vadd.xlane.f32.xlu0 %v1610
    %v1612 = vpop.xlane.xlu0 %1611
    %v1613 = vsel %vm140, %v1597, 0.0
    %1614 = vadd.xlane.f32.xlu0 %v1613
    %v1615 = vpop.xlane.xlu0 %1614
    %v1616 = vsel %vm140, %v1598, 0.0
    %1617 = vadd.xlane.f32.xlu0 %v1616
    %v1618 = vpop.xlane.xlu0 %1617
    %v1619 = vmul.f32 %v1603, %v165
    %v1620 = vmul.f32 %v1606, %v165
    %v1621 = vmul.f32 %v1609, %v165
    %v1622 = vmul.f32 %v1612, %v165
    %v1623 = vmul.f32 %v1615, %v165
    %v1624 = vmul.f32 %v1618, %v165
    %v1625 = vsub.f32 %v1593, %v1619
    %v1626 = vsub.f32 %v1594, %v1620
    %v1627 = vsub.f32 %v1595, %v1621
    %v1628 = vsub.f32 %v1596, %v1622
    %v1629 = vsub.f32 %v1597, %v1623
    %v1630 = vsub.f32 %v1598, %v1624
    %v1631 = vmul.f32 %v1625, %v1625
    %v1632 = vmul.f32 %v1626, %v1626
    %v1633 = vmul.f32 %v1627, %v1627
    %v1634 = vmul.f32 %v1628, %v1628
    %v1635 = vmul.f32 %v1629, %v1629
    %v1636 = vmul.f32 %v1630, %v1630
    %v1637 = vsel %vm140, %v1631, 0.0
    %1638 = vadd.xlane.f32.xlu0 %v1637
    %v1639 = vpop.xlane.xlu0 %1638
    %v1640 = vsel %vm140, %v1632, 0.0
    %1641 = vadd.xlane.f32.xlu0 %v1640
    %v1642 = vpop.xlane.xlu0 %1641
    %v1643 = vsel %vm140, %v1633, 0.0
    %1644 = vadd.xlane.f32.xlu0 %v1643
    %v1645 = vpop.xlane.xlu0 %1644
    %v1646 = vsel %vm140, %v1634, 0.0
    %1647 = vadd.xlane.f32.xlu0 %v1646
    %v1648 = vpop.xlane.xlu0 %1647
    %v1649 = vsel %vm140, %v1635, 0.0
    %1650 = vadd.xlane.f32.xlu0 %v1649
    %v1651 = vpop.xlane.xlu0 %1650
    %v1652 = vsel %vm140, %v1636, 0.0
    %1653 = vadd.xlane.f32.xlu0 %v1652
    %v1654 = vpop.xlane.xlu0 %1653
    %v1655 = vmul.f32 %v1639, %v165
    %v1656 = vmul.f32 %v1642, %v165
    %v1657 = vmul.f32 %v1645, %v165
    %v1658 = vmul.f32 %v1648, %v165
    %v1659 = vmul.f32 %v1651, %v165
    %v1660 = vmul.f32 %v1654, %v165
    %v1661 = vadd.f32 %v1655, 1e-05
    %v1662 = vadd.f32 %v1656, 1e-05
    %v1663 = vadd.f32 %v1657, 1e-05
    %v1664 = vadd.f32 %v1658, 1e-05
    %v1665 = vadd.f32 %v1659, 1e-05
    %v1666 = vadd.f32 %v1660, 1e-05
    %v1667 = vrsqrt.pop %v1661
    %v1668 = vmul.f32 %v1667, %v1661
    %v1669 = vmul.f32 %v1668, %v1667
    %v1670 = vmul.f32 0.5, %v1669
    %v1671 = vsub.f32 1.5, %v1670
    %v1672 = vmul.f32 %v1667, %v1671
    %vm1673 = vweird.f32 %v1661
    %vm1674 = vweird.f32 %v1667
    %vm1675 = vmor %vm1673, %vm1674
    %v1676 = vsel %vm1675, %v1667, %v1672
    %v1677 = vrsqrt.pop %v1662
    %v1678 = vmul.f32 %v1677, %v1662
    %v1679 = vmul.f32 %v1678, %v1677
    %v1680 = vmul.f32 0.5, %v1679
    %v1681 = vsub.f32 1.5, %v1680
    %v1682 = vmul.f32 %v1677, %v1681
    %vm1683 = vweird.f32 %v1662
    %vm1684 = vweird.f32 %v1677
    %vm1685 = vmor %vm1683, %vm1684
    %v1686 = vsel %vm1685, %v1677, %v1682
    %v1687 = vrsqrt.pop %v1663
    %v1688 = vmul.f32 %v1687, %v1663
    %v1689 = vmul.f32 %v1688, %v1687
    %v1690 = vmul.f32 0.5, %v1689
    %v1691 = vsub.f32 1.5, %v1690
    %v1692 = vmul.f32 %v1687, %v1691
    %vm1693 = vweird.f32 %v1663
    %vm1694 = vweird.f32 %v1687
    %vm1695 = vmor %vm1693, %vm1694
    %v1696 = vsel %vm1695, %v1687, %v1692
    %v1697 = vrsqrt.pop %v1664
    %v1698 = vmul.f32 %v1697, %v1664
    %v1699 = vmul.f32 %v1698, %v1697
    %v1700 = vmul.f32 0.5, %v1699
    %v1701 = vsub.f32 1.5, %v1700
    %v1702 = vmul.f32 %v1697, %v1701
    %vm1703 = vweird.f32 %v1664
    %vm1704 = vweird.f32 %v1697
    %vm1705 = vmor %vm1703, %vm1704
    %v1706 = vsel %vm1705, %v1697, %v1702
    %v1707 = vrsqrt.pop %v1665
    %v1708 = vmul.f32 %v1707, %v1665
    %v1709 = vmul.f32 %v1708, %v1707
    %v1710 = vmul.f32 0.5, %v1709
    %v1711 = vsub.f32 1.5, %v1710
    %v1712 = vmul.f32 %v1707, %v1711
    %vm1713 = vweird.f32 %v1665
    %vm1714 = vweird.f32 %v1707
    %vm1715 = vmor %vm1713, %vm1714
    %v1716 = vsel %vm1715, %v1707, %v1712
    %v1717 = vrsqrt.pop %v1666
    %v1718 = vmul.f32 %v1717, %v1666
    %v1719 = vmul.f32 %v1718, %v1717
    %v1720 = vmul.f32 0.5, %v1719
    %v1721 = vsub.f32 1.5, %v1720
    %v1722 = vmul.f32 %v1717, %v1721
    %vm1723 = vweird.f32 %v1666
    %vm1724 = vweird.f32 %v1717
    %vm1725 = vmor %vm1723, %vm1724
    %v1726 = vsel %vm1725, %v1717, %v1722
    %v1727 = vmul.f32 %v1625, %v1676
    %v1728 = vmul.f32 %v1626, %v1686
    %v1729 = vmul.f32 %v1627, %v1696
    %v1730 = vmul.f32 %v1628, %v1706
    %v1731 = vmul.f32 %v1629, %v1716
    %v1732 = vmul.f32 %v1630, %v1726
    %v1734 = vperm.slane %v1599, 0
    %v1736 = vmul.f32 %v1727, %v1734
    %v1737 = vmul.f32 %v1728, %v1734
    %v1738 = vmul.f32 %v1729, %v1734
    %v1739 = vmul.f32 %v1730, %v1734
    %v1740 = vmul.f32 %v1731, %v1734
    %v1741 = vmul.f32 %v1732, %v1734
    %v1743 = vperm.slane %v1600, 0
    %v1745 = vadd.f32 %v1736, %v1743
    %v1746 = vadd.f32 %v1737, %v1743
    %v1747 = vadd.f32 %v1738, %v1743
    %v1748 = vadd.f32 %v1739, %v1743
    %v1749 = vadd.f32 %v1740, %v1743
    %v1750 = vadd.f32 %v1741, %v1743
    %v1751 = vpack.c.bf16 %v1746, %v1745
    %v1752 = vpack.c.bf16 %v1748, %v1747
    %v1753 = vpack.c.bf16 %v1750, %v1749
    %v1754 = vld [vmem:[%s16] sm:$0xff]
    %v1755 = vld [vmem:[%s16 + $0x8] sm:$0xff]
    %v1756 = vld [vmem:[%s16 + $0x40] sm:$0xff]
    %v1757 = vld [vmem:[%s16 + $0x48] sm:$0xff]
    %v1758 = vld [vmem:[%s16 + $0x80] sm:$0xff]
    %v1759 = vld [vmem:[%s16 + $0x88] sm:$0xff]
    %v1760 = vld [vmem:[%s16 + $0xc0] sm:$0xff]
    %v1761 = vld [vmem:[%s16 + $0xc8] sm:$0xff]
    %v1762 = vld [vmem:[%s17] sm:$0xf]
    %v1764 = vperm.slane %v1762, 0
    %v1765 = vperm.slane %v1762, 1
    %v1766 = vperm.slane %v1762, 2
    %v1767 = vperm.slane %v1762, 3
    %v1780 = vunpack.c.l.b16 %v1754
    %v1781 = vunpack.c.h.b16 %v1754
    %v1782 = vunpack.c.l.b16 %v1755
    %v1783 = vunpack.c.h.b16 %v1755
    %v1784 = vunpack.c.l.b16 %v1756
    %v1785 = vunpack.c.h.b16 %v1756
    %v1786 = vunpack.c.l.b16 %v1757
    %v1787 = vunpack.c.h.b16 %v1757
    %v1788 = vunpack.c.l.b16 %v1758
    %v1789 = vunpack.c.h.b16 %v1758
    %v1790 = vunpack.c.l.b16 %v1759
    %v1791 = vunpack.c.h.b16 %v1759
    %v1792 = vunpack.c.l.b16 %v1760
    %v1793 = vunpack.c.h.b16 %v1760
    %v1794 = vunpack.c.l.b16 %v1761
    %v1795 = vunpack.c.h.b16 %v1761
    %v1796 = vpack.c.b16 %v1784, %v1780
    %v1797 = vpack.c.b16 %v1785, %v1781
    %v1798 = vpack.c.b16 %v1786, %v1782
    %v1799 = vpack.c.b16 %v1787, %v1783
    %v1800 = vpack.c.b16 %v1792, %v1788
    %v1801 = vpack.c.b16 %v1793, %v1789
    %v1802 = vpack.c.b16 %v1794, %v1790
    %v1803 = vpack.c.b16 %v1795, %v1791
    %v1813 = vsel %vm140, %v1751, 0
    %v1816 = vsel %vm140, %v1752, 0
    %v1819 = vsel %vm140, %v1753, 0
    %1821 = vmatpush.bf16.msra.mxu0 0
    %1822 = vmatpush.bf16.msra.mxu0 0
    %1823 = vmatpush.bf16.msra.mxu0 0
    %1824 = vmatpush.bf16.msra.mxu0 0
    %1825 = vmatpush.bf16.msra.mxu0 0
    %1826 = vmatpush.bf16.msra.mxu0 0
    %1827 = vmatpush.bf16.msra.mxu0 %v1800
    %1828 = vmatpush.bf16.msra.mxu0 %v1796
    %1829 = vmatmul.bf16.gmra.mxu0 %v1813
    %v1830 = vpop.f32.mrf.mxu0
    %v1831 = vadd.f32 %v1764, %v1830
    %v1832 = vpop.f32.mrf.mxu0
    %v1833 = vadd.f32 %v1764, %v1832
    %1834 = vmatmul.bf16.gmra.mxu0 %v1816
    %v1835 = vpop.f32.mrf.mxu0
    %v1836 = vadd.f32 %v1764, %v1835
    %v1837 = vpop.f32.mrf.mxu0
    %v1838 = vadd.f32 %v1764, %v1837
    %1839 = vmatmul.bf16.gmra.mxu0 %v1819
    %v1840 = vpop.f32.mrf.mxu0
    %v1841 = vadd.f32 %v1764, %v1840
    %v1842 = vpop.f32.mrf.mxu0
    %v1843 = vadd.f32 %v1764, %v1842
    %1844 = vdwg.mxu0
    %1845 = vmatpush.bf16.msra.mxu0 0
    %1846 = vmatpush.bf16.msra.mxu0 0
    %1847 = vmatpush.bf16.msra.mxu0 0
    %1848 = vmatpush.bf16.msra.mxu0 0
    %1849 = vmatpush.bf16.msra.mxu0 0
    %1850 = vmatpush.bf16.msra.mxu0 0
    %1851 = vmatpush.bf16.msra.mxu0 %v1801
    %1852 = vmatpush.bf16.msra.mxu0 %v1797
    %1853 = vmatmul.bf16.gmra.mxu0 %v1813
    %v1854 = vpop.f32.mrf.mxu0
    %v1855 = vadd.f32 %v1765, %v1854
    %v1856 = vpop.f32.mrf.mxu0
    %v1857 = vadd.f32 %v1765, %v1856
    %1858 = vmatmul.bf16.gmra.mxu0 %v1816
    %v1859 = vpop.f32.mrf.mxu0
    %v1860 = vadd.f32 %v1765, %v1859
    %v1861 = vpop.f32.mrf.mxu0
    %v1862 = vadd.f32 %v1765, %v1861
    %1863 = vmatmul.bf16.gmra.mxu0 %v1819
    %v1864 = vpop.f32.mrf.mxu0
    %v1865 = vadd.f32 %v1765, %v1864
    %v1866 = vpop.f32.mrf.mxu0
    %v1867 = vadd.f32 %v1765, %v1866
    %1868 = vdwg.mxu0
    %1869 = vmatpush.bf16.msra.mxu0 0
    %1870 = vmatpush.bf16.msra.mxu0 0
    %1871 = vmatpush.bf16.msra.mxu0 0
    %1872 = vmatpush.bf16.msra.mxu0 0
    %1873 = vmatpush.bf16.msra.mxu0 0
    %1874 = vmatpush.bf16.msra.mxu0 0
    %1875 = vmatpush.bf16.msra.mxu0 %v1802
    %1876 = vmatpush.bf16.msra.mxu0 %v1798
    %1877 = vmatmul.bf16.gmra.mxu0 %v1813
    %v1878 = vpop.f32.mrf.mxu0
    %v1879 = vadd.f32 %v1766, %v1878
    %v1880 = vpop.f32.mrf.mxu0
    %v1881 = vadd.f32 %v1766, %v1880
    %1882 = vmatmul.bf16.gmra.mxu0 %v1816
    %v1883 = vpop.f32.mrf.mxu0
    %v1884 = vadd.f32 %v1766, %v1883
    %v1885 = vpop.f32.mrf.mxu0
    %v1886 = vadd.f32 %v1766, %v1885
    %1887 = vmatmul.bf16.gmra.mxu0 %v1819
    %v1888 = vpop.f32.mrf.mxu0
    %v1889 = vadd.f32 %v1766, %v1888
    %v1890 = vpop.f32.mrf.mxu0
    %v1891 = vadd.f32 %v1766, %v1890
    %1892 = vdwg.mxu0
    %1893 = vmatpush.bf16.msra.mxu0 0
    %1894 = vmatpush.bf16.msra.mxu0 0
    %1895 = vmatpush.bf16.msra.mxu0 0
    %1896 = vmatpush.bf16.msra.mxu0 0
    %1897 = vmatpush.bf16.msra.mxu0 0
    %1898 = vmatpush.bf16.msra.mxu0 0
    %1899 = vmatpush.bf16.msra.mxu0 %v1803
    %1900 = vmatpush.bf16.msra.mxu0 %v1799
    %1901 = vmatmul.bf16.gmra.mxu0 %v1813
    %v1902 = vpop.f32.mrf.mxu0
    %v1903 = vadd.f32 %v1767, %v1902
    %v1904 = vpop.f32.mrf.mxu0
    %v1905 = vadd.f32 %v1767, %v1904
    %1906 = vmatmul.bf16.gmra.mxu0 %v1816
    %v1907 = vpop.f32.mrf.mxu0
    %v1908 = vadd.f32 %v1767, %v1907
    %v1909 = vpop.f32.mrf.mxu0
    %v1910 = vadd.f32 %v1767, %v1909
    %1911 = vmatmul.bf16.gmra.mxu0 %v1819
    %v1912 = vpop.f32.mrf.mxu0
    %v1913 = vadd.f32 %v1767, %v1912
    %v1914 = vpop.f32.mrf.mxu0
    %v1915 = vadd.f32 %v1767, %v1914
    %1916 = vdwg.mxu0
    %v1917 = vmax.f32 %v1831, 0.0
    %v1918 = vmax.f32 %v1855, 0.0
    %v1919 = vmax.f32 %v1879, 0.0
    %v1920 = vmax.f32 %v1903, 0.0
    %v1921 = vmax.f32 %v1833, 0.0
    %v1922 = vmax.f32 %v1857, 0.0
    %v1923 = vmax.f32 %v1881, 0.0
    %v1924 = vmax.f32 %v1905, 0.0
    %v1925 = vmax.f32 %v1836, 0.0
    %v1926 = vmax.f32 %v1860, 0.0
    %v1927 = vmax.f32 %v1884, 0.0
    %v1928 = vmax.f32 %v1908, 0.0
    %v1929 = vmax.f32 %v1838, 0.0
    %v1930 = vmax.f32 %v1862, 0.0
    %v1931 = vmax.f32 %v1886, 0.0
    %v1932 = vmax.f32 %v1910, 0.0
    %v1933 = vmax.f32 %v1841, 0.0
    %v1934 = vmax.f32 %v1865, 0.0
    %v1935 = vmax.f32 %v1889, 0.0
    %v1936 = vmax.f32 %v1913, 0.0
    %v1937 = vmax.f32 %v1843, 0.0
    %v1938 = vmax.f32 %v1867, 0.0
    %v1939 = vmax.f32 %v1891, 0.0
    %v1940 = vmax.f32 %v1915, 0.0
    %v1941 = vpack.c.bf16 %v1921, %v1917
    %v1942 = vpack.c.bf16 %v1922, %v1918
    %v1943 = vpack.c.bf16 %v1923, %v1919
    %v1944 = vpack.c.bf16 %v1924, %v1920
    %v1945 = vpack.c.bf16 %v1929, %v1925
    %v1946 = vpack.c.bf16 %v1930, %v1926
    %v1947 = vpack.c.bf16 %v1931, %v1927
    %v1948 = vpack.c.bf16 %v1932, %v1928
    %v1949 = vpack.c.bf16 %v1937, %v1933
    %v1950 = vpack.c.bf16 %v1938, %v1934
    %v1951 = vpack.c.bf16 %v1939, %v1935
    %v1952 = vpack.c.bf16 %v1940, %v1936
    %v1953 = vld [vmem:[%s18] sm:$0xf]
    %v1954 = vld [vmem:[%s18 + $0x4] sm:$0xf]
    %v1955 = vld [vmem:[%s18 + $0x8] sm:$0xf]
    %v1956 = vld [vmem:[%s18 + $0xc] sm:$0xf]
    %v1957 = vld [vmem:[%s18 + $0x10] sm:$0xf]
    %v1958 = vld [vmem:[%s18 + $0x14] sm:$0xf]
    %v1959 = vld [vmem:[%s18 + $0x18] sm:$0xf]
    %v1960 = vld [vmem:[%s18 + $0x1c] sm:$0xf]
    %v1961 = vld [vmem:[%s18 + $0x20] sm:$0xf]
    %v1962 = vld [vmem:[%s18 + $0x24] sm:$0xf]
    %v1963 = vld [vmem:[%s18 + $0x28] sm:$0xf]
    %v1964 = vld [vmem:[%s18 + $0x2c] sm:$0xf]
    %v1965 = vld [vmem:[%s18 + $0x30] sm:$0xf]
    %v1966 = vld [vmem:[%s18 + $0x34] sm:$0xf]
    %v1967 = vld [vmem:[%s18 + $0x38] sm:$0xf]
    %v1968 = vld [vmem:[%s18 + $0x3c] sm:$0xf]
    %v1969 = vld [vmem:[%s18 + $0x40] sm:$0xf]
    %v1970 = vld [vmem:[%s18 + $0x44] sm:$0xf]
    %v1971 = vld [vmem:[%s18 + $0x48] sm:$0xf]
    %v1972 = vld [vmem:[%s18 + $0x4c] sm:$0xf]
    %v1973 = vld [vmem:[%s18 + $0x50] sm:$0xf]
    %v1974 = vld [vmem:[%s18 + $0x54] sm:$0xf]
    %v1975 = vld [vmem:[%s18 + $0x58] sm:$0xf]
    %v1976 = vld [vmem:[%s18 + $0x5c] sm:$0xf]
    %v1977 = vld [vmem:[%s18 + $0x60] sm:$0xf]
    %v1978 = vld [vmem:[%s18 + $0x64] sm:$0xf]
    %v1979 = vld [vmem:[%s18 + $0x68] sm:$0xf]
    %v1980 = vld [vmem:[%s18 + $0x6c] sm:$0xf]
    %v1981 = vld [vmem:[%s18 + $0x70] sm:$0xf]
    %v1982 = vld [vmem:[%s18 + $0x74] sm:$0xf]
    %v1983 = vld [vmem:[%s18 + $0x78] sm:$0xf]
    %v1984 = vld [vmem:[%s18 + $0x7c] sm:$0xf]
    %v1985 = vld [vmem:[%s18 + $0x80] sm:$0xf]
    %v1986 = vld [vmem:[%s18 + $0x84] sm:$0xf]
    %v1987 = vld [vmem:[%s18 + $0x88] sm:$0xf]
    %v1988 = vld [vmem:[%s18 + $0x8c] sm:$0xf]
    %v1989 = vld [vmem:[%s18 + $0x90] sm:$0xf]
    %v1990 = vld [vmem:[%s18 + $0x94] sm:$0xf]
    %v1991 = vld [vmem:[%s18 + $0x98] sm:$0xf]
    %v1992 = vld [vmem:[%s18 + $0x9c] sm:$0xf]
    %v1993 = vld [vmem:[%s18 + $0xa0] sm:$0xf]
    %v1994 = vld [vmem:[%s18 + $0xa4] sm:$0xf]
    %v1995 = vld [vmem:[%s18 + $0xa8] sm:$0xf]
    %v1996 = vld [vmem:[%s18 + $0xac] sm:$0xf]
    %v1997 = vld [vmem:[%s18 + $0xb0] sm:$0xf]
    %v1998 = vld [vmem:[%s18 + $0xb4] sm:$0xf]
    %v1999 = vld [vmem:[%s18 + $0xb8] sm:$0xf]
    %v2000 = vld [vmem:[%s18 + $0xbc] sm:$0xf]
    %v2001 = vld [vmem:[%s18 + $0xc0] sm:$0xf]
    %v2002 = vld [vmem:[%s18 + $0xc4] sm:$0xf]
    %v2003 = vld [vmem:[%s18 + $0xc8] sm:$0xf]
    %v2004 = vld [vmem:[%s18 + $0xcc] sm:$0xf]
    %v2005 = vld [vmem:[%s18 + $0xd0] sm:$0xf]
    %v2006 = vld [vmem:[%s18 + $0xd4] sm:$0xf]
    %v2007 = vld [vmem:[%s18 + $0xd8] sm:$0xf]
    %v2008 = vld [vmem:[%s18 + $0xdc] sm:$0xf]
    %v2009 = vld [vmem:[%s18 + $0xe0] sm:$0xf]
    %v2010 = vld [vmem:[%s18 + $0xe4] sm:$0xf]
    %v2011 = vld [vmem:[%s18 + $0xe8] sm:$0xf]
    %v2012 = vld [vmem:[%s18 + $0xec] sm:$0xf]
    %v2013 = vld [vmem:[%s18 + $0xf0] sm:$0xf]
    %v2014 = vld [vmem:[%s18 + $0xf4] sm:$0xf]
    %v2015 = vld [vmem:[%s18 + $0xf8] sm:$0xf]
    %v2016 = vld [vmem:[%s18 + $0xfc] sm:$0xf]
    %v2017 = vld [vmem:[%s16 + $0x10] sm:$0xff]
    %v2018 = vld [vmem:[%s16 + $0x18] sm:$0xff]
    %v2019 = vld [vmem:[%s16 + $0x50] sm:$0xff]
    %v2020 = vld [vmem:[%s16 + $0x58] sm:$0xff]
    %v2021 = vld [vmem:[%s16 + $0x90] sm:$0xff]
    %v2022 = vld [vmem:[%s16 + $0x98] sm:$0xff]
    %v2023 = vld [vmem:[%s16 + $0xd0] sm:$0xff]
    %v2024 = vld [vmem:[%s16 + $0xd8] sm:$0xff]
    %v2025 = vld [vmem:[%s17 + $0x4] sm:$0xf]
    %v2027 = vperm.slane %v2025, 0
    %v2028 = vperm.slane %v2025, 1
    %v2029 = vperm.slane %v2025, 2
    %v2030 = vperm.slane %v2025, 3
    %v2043 = vunpack.c.l.b16 %v2017
    %v2044 = vunpack.c.h.b16 %v2017
    %v2045 = vunpack.c.l.b16 %v2018
    %v2046 = vunpack.c.h.b16 %v2018
    %v2047 = vunpack.c.l.b16 %v2019
    %v2048 = vunpack.c.h.b16 %v2019
    %v2049 = vunpack.c.l.b16 %v2020
    %v2050 = vunpack.c.h.b16 %v2020
    %v2051 = vunpack.c.l.b16 %v2021
    %v2052 = vunpack.c.h.b16 %v2021
    %v2053 = vunpack.c.l.b16 %v2022
    %v2054 = vunpack.c.h.b16 %v2022
    %v2055 = vunpack.c.l.b16 %v2023
    %v2056 = vunpack.c.h.b16 %v2023
    %v2057 = vunpack.c.l.b16 %v2024
    %v2058 = vunpack.c.h.b16 %v2024
    %v2059 = vpack.c.b16 %v2047, %v2043
    %v2060 = vpack.c.b16 %v2048, %v2044
    %v2061 = vpack.c.b16 %v2049, %v2045
    %v2062 = vpack.c.b16 %v2050, %v2046
    %v2063 = vpack.c.b16 %v2055, %v2051
    %v2064 = vpack.c.b16 %v2056, %v2052
    %v2065 = vpack.c.b16 %v2057, %v2053
    %v2066 = vpack.c.b16 %v2058, %v2054
    %2075 = vmatpush.bf16.msra.mxu0 0
    %2076 = vmatpush.bf16.msra.mxu0 0
    %2077 = vmatpush.bf16.msra.mxu0 0
    %2078 = vmatpush.bf16.msra.mxu0 0
    %2079 = vmatpush.bf16.msra.mxu0 0
    %2080 = vmatpush.bf16.msra.mxu0 0
    %2081 = vmatpush.bf16.msra.mxu0 %v2063
    %2082 = vmatpush.bf16.msra.mxu0 %v2059
    %2083 = vmatmul.bf16.gmra.mxu0 %v1813
    %v2084 = vpop.f32.mrf.mxu0
    %v2085 = vadd.f32 %v2027, %v2084
    %v2086 = vpop.f32.mrf.mxu0
    %v2087 = vadd.f32 %v2027, %v2086
    %2088 = vmatmul.bf16.gmra.mxu0 %v1816
    %v2089 = vpop.f32.mrf.mxu0
    %v2090 = vadd.f32 %v2027, %v2089
    %v2091 = vpop.f32.mrf.mxu0
    %v2092 = vadd.f32 %v2027, %v2091
    %2093 = vmatmul.bf16.gmra.mxu0 %v1819
    %v2094 = vpop.f32.mrf.mxu0
    %v2095 = vadd.f32 %v2027, %v2094
    %v2096 = vpop.f32.mrf.mxu0
    %v2097 = vadd.f32 %v2027, %v2096
    %2098 = vdwg.mxu0
    %2099 = vmatpush.bf16.msra.mxu0 0
    %2100 = vmatpush.bf16.msra.mxu0 0
    %2101 = vmatpush.bf16.msra.mxu0 0
    %2102 = vmatpush.bf16.msra.mxu0 0
    %2103 = vmatpush.bf16.msra.mxu0 0
    %2104 = vmatpush.bf16.msra.mxu0 0
    %2105 = vmatpush.bf16.msra.mxu0 %v2064
    %2106 = vmatpush.bf16.msra.mxu0 %v2060
    %2107 = vmatmul.bf16.gmra.mxu0 %v1813
    %v2108 = vpop.f32.mrf.mxu0
    %v2109 = vadd.f32 %v2028, %v2108
    %v2110 = vpop.f32.mrf.mxu0
    %v2111 = vadd.f32 %v2028, %v2110
    %2112 = vmatmul.bf16.gmra.mxu0 %v1816
    %v2113 = vpop.f32.mrf.mxu0
    %v2114 = vadd.f32 %v2028, %v2113
    %v2115 = vpop.f32.mrf.mxu0
    %v2116 = vadd.f32 %v2028, %v2115
    %2117 = vmatmul.bf16.gmra.mxu0 %v1819
    %v2118 = vpop.f32.mrf.mxu0
    %v2119 = vadd.f32 %v2028, %v2118
    %v2120 = vpop.f32.mrf.mxu0
    %v2121 = vadd.f32 %v2028, %v2120
    %2122 = vdwg.mxu0
    %2123 = vmatpush.bf16.msra.mxu0 0
    %2124 = vmatpush.bf16.msra.mxu0 0
    %2125 = vmatpush.bf16.msra.mxu0 0
    %2126 = vmatpush.bf16.msra.mxu0 0
    %2127 = vmatpush.bf16.msra.mxu0 0
    %2128 = vmatpush.bf16.msra.mxu0 0
    %2129 = vmatpush.bf16.msra.mxu0 %v2065
    %2130 = vmatpush.bf16.msra.mxu0 %v2061
    %2131 = vmatmul.bf16.gmra.mxu0 %v1813
    %v2132 = vpop.f32.mrf.mxu0
    %v2133 = vadd.f32 %v2029, %v2132
    %v2134 = vpop.f32.mrf.mxu0
    %v2135 = vadd.f32 %v2029, %v2134
    %2136 = vmatmul.bf16.gmra.mxu0 %v1816
    %v2137 = vpop.f32.mrf.mxu0
    %v2138 = vadd.f32 %v2029, %v2137
    %v2139 = vpop.f32.mrf.mxu0
    %v2140 = vadd.f32 %v2029, %v2139
    %2141 = vmatmul.bf16.gmra.mxu0 %v1819
    %v2142 = vpop.f32.mrf.mxu0
    %v2143 = vadd.f32 %v2029, %v2142
    %v2144 = vpop.f32.mrf.mxu0
    %v2145 = vadd.f32 %v2029, %v2144
    %2146 = vdwg.mxu0
    %2147 = vmatpush.bf16.msra.mxu0 0
    %2148 = vmatpush.bf16.msra.mxu0 0
    %2149 = vmatpush.bf16.msra.mxu0 0
    %2150 = vmatpush.bf16.msra.mxu0 0
    %2151 = vmatpush.bf16.msra.mxu0 0
    %2152 = vmatpush.bf16.msra.mxu0 0
    %2153 = vmatpush.bf16.msra.mxu0 %v2066
    %2154 = vmatpush.bf16.msra.mxu0 %v2062
    %2155 = vmatmul.bf16.gmra.mxu0 %v1813
    %v2156 = vpop.f32.mrf.mxu0
    %v2157 = vadd.f32 %v2030, %v2156
    %v2158 = vpop.f32.mrf.mxu0
    %v2159 = vadd.f32 %v2030, %v2158
    %2160 = vmatmul.bf16.gmra.mxu0 %v1816
    %v2161 = vpop.f32.mrf.mxu0
    %v2162 = vadd.f32 %v2030, %v2161
    %v2163 = vpop.f32.mrf.mxu0
    %v2164 = vadd.f32 %v2030, %v2163
    %2165 = vmatmul.bf16.gmra.mxu0 %v1819
    %v2166 = vpop.f32.mrf.mxu0
    %v2167 = vadd.f32 %v2030, %v2166
    %v2168 = vpop.f32.mrf.mxu0
    %v2169 = vadd.f32 %v2030, %v2168
    %2170 = vdwg.mxu0
    %v2171 = vmax.f32 %v2085, 0.0
    %v2172 = vmax.f32 %v2109, 0.0
    %v2173 = vmax.f32 %v2133, 0.0
    %v2174 = vmax.f32 %v2157, 0.0
    %v2175 = vmax.f32 %v2087, 0.0
    %v2176 = vmax.f32 %v2111, 0.0
    %v2177 = vmax.f32 %v2135, 0.0
    %v2178 = vmax.f32 %v2159, 0.0
    %v2179 = vmax.f32 %v2090, 0.0
    %v2180 = vmax.f32 %v2114, 0.0
    %v2181 = vmax.f32 %v2138, 0.0
    %v2182 = vmax.f32 %v2162, 0.0
    %v2183 = vmax.f32 %v2092, 0.0
    %v2184 = vmax.f32 %v2116, 0.0
    %v2185 = vmax.f32 %v2140, 0.0
    %v2186 = vmax.f32 %v2164, 0.0
    %v2187 = vmax.f32 %v2095, 0.0
    %v2188 = vmax.f32 %v2119, 0.0
    %v2189 = vmax.f32 %v2143, 0.0
    %v2190 = vmax.f32 %v2167, 0.0
    %v2191 = vmax.f32 %v2097, 0.0
    %v2192 = vmax.f32 %v2121, 0.0
    %v2193 = vmax.f32 %v2145, 0.0
    %v2194 = vmax.f32 %v2169, 0.0
    %v2195 = vpack.c.bf16 %v2175, %v2171
    %v2196 = vpack.c.bf16 %v2176, %v2172
    %v2197 = vpack.c.bf16 %v2177, %v2173
    %v2198 = vpack.c.bf16 %v2178, %v2174
    %v2199 = vpack.c.bf16 %v2183, %v2179
    %v2200 = vpack.c.bf16 %v2184, %v2180
    %v2201 = vpack.c.bf16 %v2185, %v2181
    %v2202 = vpack.c.bf16 %v2186, %v2182
    %v2203 = vpack.c.bf16 %v2191, %v2187
    %v2204 = vpack.c.bf16 %v2192, %v2188
    %v2205 = vpack.c.bf16 %v2193, %v2189
    %v2206 = vpack.c.bf16 %v2194, %v2190
    %v2207 = vld [vmem:[%s18 + $0x100] sm:$0xf]
    %v2208 = vld [vmem:[%s18 + $0x104] sm:$0xf]
    %v2209 = vld [vmem:[%s18 + $0x108] sm:$0xf]
    %v2210 = vld [vmem:[%s18 + $0x10c] sm:$0xf]
    %v2211 = vld [vmem:[%s18 + $0x110] sm:$0xf]
    %v2212 = vld [vmem:[%s18 + $0x114] sm:$0xf]
    %v2213 = vld [vmem:[%s18 + $0x118] sm:$0xf]
    %v2214 = vld [vmem:[%s18 + $0x11c] sm:$0xf]
    %v2215 = vld [vmem:[%s18 + $0x120] sm:$0xf]
    %v2216 = vld [vmem:[%s18 + $0x124] sm:$0xf]
    %v2217 = vld [vmem:[%s18 + $0x128] sm:$0xf]
    %v2218 = vld [vmem:[%s18 + $0x12c] sm:$0xf]
    %v2219 = vld [vmem:[%s18 + $0x130] sm:$0xf]
    %v2220 = vld [vmem:[%s18 + $0x134] sm:$0xf]
    %v2221 = vld [vmem:[%s18 + $0x138] sm:$0xf]
    %v2222 = vld [vmem:[%s18 + $0x13c] sm:$0xf]
    %v2223 = vld [vmem:[%s18 + $0x140] sm:$0xf]
    %v2224 = vld [vmem:[%s18 + $0x144] sm:$0xf]
    %v2225 = vld [vmem:[%s18 + $0x148] sm:$0xf]
    %v2226 = vld [vmem:[%s18 + $0x14c] sm:$0xf]
    %v2227 = vld [vmem:[%s18 + $0x150] sm:$0xf]
    %v2228 = vld [vmem:[%s18 + $0x154] sm:$0xf]
    %v2229 = vld [vmem:[%s18 + $0x158] sm:$0xf]
    %v2230 = vld [vmem:[%s18 + $0x15c] sm:$0xf]
    %v2231 = vld [vmem:[%s18 + $0x160] sm:$0xf]
    %v2232 = vld [vmem:[%s18 + $0x164] sm:$0xf]
    %v2233 = vld [vmem:[%s18 + $0x168] sm:$0xf]
    %v2234 = vld [vmem:[%s18 + $0x16c] sm:$0xf]
    %v2235 = vld [vmem:[%s18 + $0x170] sm:$0xf]
    %v2236 = vld [vmem:[%s18 + $0x174] sm:$0xf]
    %v2237 = vld [vmem:[%s18 + $0x178] sm:$0xf]
    %v2238 = vld [vmem:[%s18 + $0x17c] sm:$0xf]
    %v2239 = vld [vmem:[%s18 + $0x180] sm:$0xf]
    %v2240 = vld [vmem:[%s18 + $0x184] sm:$0xf]
    %v2241 = vld [vmem:[%s18 + $0x188] sm:$0xf]
    %v2242 = vld [vmem:[%s18 + $0x18c] sm:$0xf]
    %v2243 = vld [vmem:[%s18 + $0x190] sm:$0xf]
    %v2244 = vld [vmem:[%s18 + $0x194] sm:$0xf]
    %v2245 = vld [vmem:[%s18 + $0x198] sm:$0xf]
    %v2246 = vld [vmem:[%s18 + $0x19c] sm:$0xf]
    %v2247 = vld [vmem:[%s18 + $0x1a0] sm:$0xf]
    %v2248 = vld [vmem:[%s18 + $0x1a4] sm:$0xf]
    %v2249 = vld [vmem:[%s18 + $0x1a8] sm:$0xf]
    %v2250 = vld [vmem:[%s18 + $0x1ac] sm:$0xf]
    %v2251 = vld [vmem:[%s18 + $0x1b0] sm:$0xf]
    %v2252 = vld [vmem:[%s18 + $0x1b4] sm:$0xf]
    %v2253 = vld [vmem:[%s18 + $0x1b8] sm:$0xf]
    %v2254 = vld [vmem:[%s18 + $0x1bc] sm:$0xf]
    %v2255 = vld [vmem:[%s18 + $0x1c0] sm:$0xf]
    %v2256 = vld [vmem:[%s18 + $0x1c4] sm:$0xf]
    %v2257 = vld [vmem:[%s18 + $0x1c8] sm:$0xf]
    %v2258 = vld [vmem:[%s18 + $0x1cc] sm:$0xf]
    %v2259 = vld [vmem:[%s18 + $0x1d0] sm:$0xf]
    %v2260 = vld [vmem:[%s18 + $0x1d4] sm:$0xf]
    %v2261 = vld [vmem:[%s18 + $0x1d8] sm:$0xf]
    %v2262 = vld [vmem:[%s18 + $0x1dc] sm:$0xf]
    %v2263 = vld [vmem:[%s18 + $0x1e0] sm:$0xf]
    %v2264 = vld [vmem:[%s18 + $0x1e4] sm:$0xf]
    %v2265 = vld [vmem:[%s18 + $0x1e8] sm:$0xf]
    %v2266 = vld [vmem:[%s18 + $0x1ec] sm:$0xf]
    %v2267 = vld [vmem:[%s18 + $0x1f0] sm:$0xf]
    %v2268 = vld [vmem:[%s18 + $0x1f4] sm:$0xf]
    %v2269 = vld [vmem:[%s18 + $0x1f8] sm:$0xf]
    %v2270 = vld [vmem:[%s18 + $0x1fc] sm:$0xf]
    %v2335 = vunpack.c.l.b16 %v2207
    %v2336 = vunpack.c.l.b16 %v2208
    %v2337 = vunpack.c.l.b16 %v2209
    %v2338 = vunpack.c.l.b16 %v2210
    %v2339 = vunpack.c.l.b16 %v2211
    %v2340 = vunpack.c.l.b16 %v2212
    %v2341 = vunpack.c.l.b16 %v2213
    %v2342 = vunpack.c.l.b16 %v2214
    %v2343 = vunpack.c.l.b16 %v2215
    %v2344 = vunpack.c.l.b16 %v2216
    %v2345 = vunpack.c.l.b16 %v2217
    %v2346 = vunpack.c.l.b16 %v2218
    %v2347 = vunpack.c.l.b16 %v2219
    %v2348 = vunpack.c.l.b16 %v2220
    %v2349 = vunpack.c.l.b16 %v2221
    %v2350 = vunpack.c.l.b16 %v2222
    %v2351 = vunpack.c.l.b16 %v2223
    %v2352 = vunpack.c.l.b16 %v2224
    %v2353 = vunpack.c.l.b16 %v2225
    %v2354 = vunpack.c.l.b16 %v2226
    %v2355 = vunpack.c.l.b16 %v2227
    %v2356 = vunpack.c.l.b16 %v2228
    %v2357 = vunpack.c.l.b16 %v2229
    %v2358 = vunpack.c.l.b16 %v2230
    %v2359 = vunpack.c.l.b16 %v2231
    %v2360 = vunpack.c.l.b16 %v2232
    %v2361 = vunpack.c.l.b16 %v2233
    %v2362 = vunpack.c.l.b16 %v2234
    %v2363 = vunpack.c.l.b16 %v2235
    %v2364 = vunpack.c.l.b16 %v2236
    %v2365 = vunpack.c.l.b16 %v2237
    %v2366 = vunpack.c.l.b16 %v2238
    %v2367 = vunpack.c.l.b16 %v2239
    %v2368 = vunpack.c.l.b16 %v2240
    %v2369 = vunpack.c.l.b16 %v2241
    %v2370 = vunpack.c.l.b16 %v2242
    %v2371 = vunpack.c.l.b16 %v2243
    %v2372 = vunpack.c.l.b16 %v2244
    %v2373 = vunpack.c.l.b16 %v2245
    %v2374 = vunpack.c.l.b16 %v2246
    %v2375 = vunpack.c.l.b16 %v2247
    %v2376 = vunpack.c.l.b16 %v2248
    %v2377 = vunpack.c.l.b16 %v2249
    %v2378 = vunpack.c.l.b16 %v2250
    %v2379 = vunpack.c.l.b16 %v2251
    %v2380 = vunpack.c.l.b16 %v2252
    %v2381 = vunpack.c.l.b16 %v2253
    %v2382 = vunpack.c.l.b16 %v2254
    %v2383 = vunpack.c.l.b16 %v2255
    %v2384 = vunpack.c.l.b16 %v2256
    %v2385 = vunpack.c.l.b16 %v2257
    %v2386 = vunpack.c.l.b16 %v2258
    %v2387 = vunpack.c.l.b16 %v2259
    %v2388 = vunpack.c.l.b16 %v2260
    %v2389 = vunpack.c.l.b16 %v2261
    %v2390 = vunpack.c.l.b16 %v2262
    %v2391 = vunpack.c.l.b16 %v2263
    %v2392 = vunpack.c.l.b16 %v2264
    %v2393 = vunpack.c.l.b16 %v2265
    %v2394 = vunpack.c.l.b16 %v2266
    %v2395 = vunpack.c.l.b16 %v2267
    %v2396 = vunpack.c.l.b16 %v2268
    %v2397 = vunpack.c.l.b16 %v2269
    %v2398 = vunpack.c.l.b16 %v2270
    %v2399 = vpack.c.b16 %v2336, %v2335
    %v2400 = vpack.c.b16 %v2338, %v2337
    %v2401 = vpack.c.b16 %v2340, %v2339
    %v2402 = vpack.c.b16 %v2342, %v2341
    %v2403 = vpack.c.b16 %v2344, %v2343
    %v2404 = vpack.c.b16 %v2346, %v2345
    %v2405 = vpack.c.b16 %v2348, %v2347
    %v2406 = vpack.c.b16 %v2350, %v2349
    %v2407 = vpack.c.b16 %v2352, %v2351
    %v2408 = vpack.c.b16 %v2354, %v2353
    %v2409 = vpack.c.b16 %v2356, %v2355
    %v2410 = vpack.c.b16 %v2358, %v2357
    %v2411 = vpack.c.b16 %v2360, %v2359
    %v2412 = vpack.c.b16 %v2362, %v2361
    %v2413 = vpack.c.b16 %v2364, %v2363
    %v2414 = vpack.c.b16 %v2366, %v2365
    %v2415 = vpack.c.b16 %v2368, %v2367
    %v2416 = vpack.c.b16 %v2370, %v2369
    %v2417 = vpack.c.b16 %v2372, %v2371
    %v2418 = vpack.c.b16 %v2374, %v2373
    %v2419 = vpack.c.b16 %v2376, %v2375
    %v2420 = vpack.c.b16 %v2378, %v2377
    %v2421 = vpack.c.b16 %v2380, %v2379
    %v2422 = vpack.c.b16 %v2382, %v2381
    %v2423 = vpack.c.b16 %v2384, %v2383
    %v2424 = vpack.c.b16 %v2386, %v2385
    %v2425 = vpack.c.b16 %v2388, %v2387
    %v2426 = vpack.c.b16 %v2390, %v2389
    %v2427 = vpack.c.b16 %v2392, %v2391
    %v2428 = vpack.c.b16 %v2394, %v2393
    %v2429 = vpack.c.b16 %v2396, %v2395
    %v2430 = vpack.c.b16 %v2398, %v2397
    %2463 = vmatpush.bf16.msra.mxu0 %v2406
    %2464 = vmatpush.bf16.msra.mxu0 %v2405
    %2465 = vmatpush.bf16.msra.mxu0 %v2404
    %2466 = vmatpush.bf16.msra.mxu0 %v2403
    %2467 = vmatpush.bf16.msra.mxu0 %v2402
    %2468 = vmatpush.bf16.msra.mxu0 %v2401
    %2469 = vmatpush.bf16.msra.mxu0 %v2400
    %2470 = vmatpush.bf16.msra.mxu0 %v2399
    %2471 = vmatmul.bf16.gmra.mxu0 %v2195
    %v2472 = vpop.f32.mrf.mxu0
    %v2473 = vadd.f32 0.0, %v2472
    %v2474 = vpop.f32.mrf.mxu0
    %v2475 = vadd.f32 0.0, %v2474
    %2476 = vmatmul.bf16.gmra.mxu0 %v2199
    %v2477 = vpop.f32.mrf.mxu0
    %v2478 = vadd.f32 0.0, %v2477
    %v2479 = vpop.f32.mrf.mxu0
    %v2480 = vadd.f32 0.0, %v2479
    %2481 = vmatmul.bf16.gmra.mxu0 %v2203
    %v2482 = vpop.f32.mrf.mxu0
    %v2483 = vadd.f32 0.0, %v2482
    %v2484 = vpop.f32.mrf.mxu0
    %v2485 = vadd.f32 0.0, %v2484
    %2486 = vdwg.mxu0
    %2487 = vmatpush.bf16.msra.mxu0 %v2414
    %2488 = vmatpush.bf16.msra.mxu0 %v2413
    %2489 = vmatpush.bf16.msra.mxu0 %v2412
    %2490 = vmatpush.bf16.msra.mxu0 %v2411
    %2491 = vmatpush.bf16.msra.mxu0 %v2410
    %2492 = vmatpush.bf16.msra.mxu0 %v2409
    %2493 = vmatpush.bf16.msra.mxu0 %v2408
    %2494 = vmatpush.bf16.msra.mxu0 %v2407
    %2495 = vmatmul.bf16.gmra.mxu0 %v2196
    %v2496 = vpop.f32.mrf.mxu0
    %v2497 = vadd.f32 %v2473, %v2496
    %v2498 = vpop.f32.mrf.mxu0
    %v2499 = vadd.f32 %v2475, %v2498
    %2500 = vmatmul.bf16.gmra.mxu0 %v2200
    %v2501 = vpop.f32.mrf.mxu0
    %v2502 = vadd.f32 %v2478, %v2501
    %v2503 = vpop.f32.mrf.mxu0
    %v2504 = vadd.f32 %v2480, %v2503
    %2505 = vmatmul.bf16.gmra.mxu0 %v2204
    %v2506 = vpop.f32.mrf.mxu0
    %v2507 = vadd.f32 %v2483, %v2506
    %v2508 = vpop.f32.mrf.mxu0
    %v2509 = vadd.f32 %v2485, %v2508
    %2510 = vdwg.mxu0
    %2511 = vmatpush.bf16.msra.mxu0 %v2422
    %2512 = vmatpush.bf16.msra.mxu0 %v2421
    %2513 = vmatpush.bf16.msra.mxu0 %v2420
    %2514 = vmatpush.bf16.msra.mxu0 %v2419
    %2515 = vmatpush.bf16.msra.mxu0 %v2418
    %2516 = vmatpush.bf16.msra.mxu0 %v2417
    %2517 = vmatpush.bf16.msra.mxu0 %v2416
    %2518 = vmatpush.bf16.msra.mxu0 %v2415
    %2519 = vmatmul.bf16.gmra.mxu0 %v2197
    %v2520 = vpop.f32.mrf.mxu0
    %v2521 = vadd.f32 %v2497, %v2520
    %v2522 = vpop.f32.mrf.mxu0
    %v2523 = vadd.f32 %v2499, %v2522
    %2524 = vmatmul.bf16.gmra.mxu0 %v2201
    %v2525 = vpop.f32.mrf.mxu0
    %v2526 = vadd.f32 %v2502, %v2525
    %v2527 = vpop.f32.mrf.mxu0
    %v2528 = vadd.f32 %v2504, %v2527
    %2529 = vmatmul.bf16.gmra.mxu0 %v2205
    %v2530 = vpop.f32.mrf.mxu0
    %v2531 = vadd.f32 %v2507, %v2530
    %v2532 = vpop.f32.mrf.mxu0
    %v2533 = vadd.f32 %v2509, %v2532
    %2534 = vdwg.mxu0
    %2535 = vmatpush.bf16.msra.mxu0 %v2430
    %2536 = vmatpush.bf16.msra.mxu0 %v2429
    %2537 = vmatpush.bf16.msra.mxu0 %v2428
    %2538 = vmatpush.bf16.msra.mxu0 %v2427
    %2539 = vmatpush.bf16.msra.mxu0 %v2426
    %2540 = vmatpush.bf16.msra.mxu0 %v2425
    %2541 = vmatpush.bf16.msra.mxu0 %v2424
    %2542 = vmatpush.bf16.msra.mxu0 %v2423
    %2543 = vmatmul.bf16.gmra.mxu0 %v2198
    %v2544 = vpop.f32.mrf.mxu0
    %v2545 = vadd.f32 %v2521, %v2544
    %v2546 = vpop.f32.mrf.mxu0
    %v2547 = vadd.f32 %v2523, %v2546
    %2548 = vmatmul.bf16.gmra.mxu0 %v2202
    %v2549 = vpop.f32.mrf.mxu0
    %v2550 = vadd.f32 %v2526, %v2549
    %v2551 = vpop.f32.mrf.mxu0
    %v2552 = vadd.f32 %v2528, %v2551
    %2553 = vmatmul.bf16.gmra.mxu0 %v2206
    %v2554 = vpop.f32.mrf.mxu0
    %v2555 = vadd.f32 %v2531, %v2554
    %v2556 = vpop.f32.mrf.mxu0
    %v2557 = vadd.f32 %v2533, %v2556
    %2558 = vdwg.mxu0
    %v2623 = vunpack.c.l.b16 %v1953
    %v2624 = vunpack.c.l.b16 %v1954
    %v2625 = vunpack.c.l.b16 %v1955
    %v2626 = vunpack.c.l.b16 %v1956
    %v2627 = vunpack.c.l.b16 %v1957
    %v2628 = vunpack.c.l.b16 %v1958
    %v2629 = vunpack.c.l.b16 %v1959
    %v2630 = vunpack.c.l.b16 %v1960
    %v2631 = vunpack.c.l.b16 %v1961
    %v2632 = vunpack.c.l.b16 %v1962
    %v2633 = vunpack.c.l.b16 %v1963
    %v2634 = vunpack.c.l.b16 %v1964
    %v2635 = vunpack.c.l.b16 %v1965
    %v2636 = vunpack.c.l.b16 %v1966
    %v2637 = vunpack.c.l.b16 %v1967
    %v2638 = vunpack.c.l.b16 %v1968
    %v2639 = vunpack.c.l.b16 %v1969
    %v2640 = vunpack.c.l.b16 %v1970
    %v2641 = vunpack.c.l.b16 %v1971
    %v2642 = vunpack.c.l.b16 %v1972
    %v2643 = vunpack.c.l.b16 %v1973
    %v2644 = vunpack.c.l.b16 %v1974
    %v2645 = vunpack.c.l.b16 %v1975
    %v2646 = vunpack.c.l.b16 %v1976
    %v2647 = vunpack.c.l.b16 %v1977
    %v2648 = vunpack.c.l.b16 %v1978
    %v2649 = vunpack.c.l.b16 %v1979
    %v2650 = vunpack.c.l.b16 %v1980
    %v2651 = vunpack.c.l.b16 %v1981
    %v2652 = vunpack.c.l.b16 %v1982
    %v2653 = vunpack.c.l.b16 %v1983
    %v2654 = vunpack.c.l.b16 %v1984
    %v2655 = vunpack.c.l.b16 %v1985
    %v2656 = vunpack.c.l.b16 %v1986
    %v2657 = vunpack.c.l.b16 %v1987
    %v2658 = vunpack.c.l.b16 %v1988
    %v2659 = vunpack.c.l.b16 %v1989
    %v2660 = vunpack.c.l.b16 %v1990
    %v2661 = vunpack.c.l.b16 %v1991
    %v2662 = vunpack.c.l.b16 %v1992
    %v2663 = vunpack.c.l.b16 %v1993
    %v2664 = vunpack.c.l.b16 %v1994
    %v2665 = vunpack.c.l.b16 %v1995
    %v2666 = vunpack.c.l.b16 %v1996
    %v2667 = vunpack.c.l.b16 %v1997
    %v2668 = vunpack.c.l.b16 %v1998
    %v2669 = vunpack.c.l.b16 %v1999
    %v2670 = vunpack.c.l.b16 %v2000
    %v2671 = vunpack.c.l.b16 %v2001
    %v2672 = vunpack.c.l.b16 %v2002
    %v2673 = vunpack.c.l.b16 %v2003
    %v2674 = vunpack.c.l.b16 %v2004
    %v2675 = vunpack.c.l.b16 %v2005
    %v2676 = vunpack.c.l.b16 %v2006
    %v2677 = vunpack.c.l.b16 %v2007
    %v2678 = vunpack.c.l.b16 %v2008
    %v2679 = vunpack.c.l.b16 %v2009
    %v2680 = vunpack.c.l.b16 %v2010
    %v2681 = vunpack.c.l.b16 %v2011
    %v2682 = vunpack.c.l.b16 %v2012
    %v2683 = vunpack.c.l.b16 %v2013
    %v2684 = vunpack.c.l.b16 %v2014
    %v2685 = vunpack.c.l.b16 %v2015
    %v2686 = vunpack.c.l.b16 %v2016
    %v2687 = vpack.c.b16 %v2624, %v2623
    %v2688 = vpack.c.b16 %v2626, %v2625
    %v2689 = vpack.c.b16 %v2628, %v2627
    %v2690 = vpack.c.b16 %v2630, %v2629
    %v2691 = vpack.c.b16 %v2632, %v2631
    %v2692 = vpack.c.b16 %v2634, %v2633
    %v2693 = vpack.c.b16 %v2636, %v2635
    %v2694 = vpack.c.b16 %v2638, %v2637
    %v2695 = vpack.c.b16 %v2640, %v2639
    %v2696 = vpack.c.b16 %v2642, %v2641
    %v2697 = vpack.c.b16 %v2644, %v2643
    %v2698 = vpack.c.b16 %v2646, %v2645
    %v2699 = vpack.c.b16 %v2648, %v2647
    %v2700 = vpack.c.b16 %v2650, %v2649
    %v2701 = vpack.c.b16 %v2652, %v2651
    %v2702 = vpack.c.b16 %v2654, %v2653
    %v2703 = vpack.c.b16 %v2656, %v2655
    %v2704 = vpack.c.b16 %v2658, %v2657
    %v2705 = vpack.c.b16 %v2660, %v2659
    %v2706 = vpack.c.b16 %v2662, %v2661
    %v2707 = vpack.c.b16 %v2664, %v2663
    %v2708 = vpack.c.b16 %v2666, %v2665
    %v2709 = vpack.c.b16 %v2668, %v2667
    %v2710 = vpack.c.b16 %v2670, %v2669
    %v2711 = vpack.c.b16 %v2672, %v2671
    %v2712 = vpack.c.b16 %v2674, %v2673
    %v2713 = vpack.c.b16 %v2676, %v2675
    %v2714 = vpack.c.b16 %v2678, %v2677
    %v2715 = vpack.c.b16 %v2680, %v2679
    %v2716 = vpack.c.b16 %v2682, %v2681
    %v2717 = vpack.c.b16 %v2684, %v2683
    %v2718 = vpack.c.b16 %v2686, %v2685
    %2751 = vmatpush.bf16.msra.mxu0 %v2694
    %2752 = vmatpush.bf16.msra.mxu0 %v2693
    %2753 = vmatpush.bf16.msra.mxu0 %v2692
    %2754 = vmatpush.bf16.msra.mxu0 %v2691
    %2755 = vmatpush.bf16.msra.mxu0 %v2690
    %2756 = vmatpush.bf16.msra.mxu0 %v2689
    %2757 = vmatpush.bf16.msra.mxu0 %v2688
    %2758 = vmatpush.bf16.msra.mxu0 %v2687
    %2759 = vmatmul.bf16.gmra.mxu0 %v1941
    %v2760 = vpop.f32.mrf.mxu0
    %v2761 = vadd.f32 %v2545, %v2760
    %v2762 = vpop.f32.mrf.mxu0
    %v2763 = vadd.f32 %v2547, %v2762
    %2764 = vmatmul.bf16.gmra.mxu0 %v1945
    %v2765 = vpop.f32.mrf.mxu0
    %v2766 = vadd.f32 %v2550, %v2765
    %v2767 = vpop.f32.mrf.mxu0
    %v2768 = vadd.f32 %v2552, %v2767
    %2769 = vmatmul.bf16.gmra.mxu0 %v1949
    %v2770 = vpop.f32.mrf.mxu0
    %v2771 = vadd.f32 %v2555, %v2770
    %v2772 = vpop.f32.mrf.mxu0
    %v2773 = vadd.f32 %v2557, %v2772
    %2774 = vdwg.mxu0
    %2775 = vmatpush.bf16.msra.mxu0 %v2702
    %2776 = vmatpush.bf16.msra.mxu0 %v2701
    %2777 = vmatpush.bf16.msra.mxu0 %v2700
    %2778 = vmatpush.bf16.msra.mxu0 %v2699
    %2779 = vmatpush.bf16.msra.mxu0 %v2698
    %2780 = vmatpush.bf16.msra.mxu0 %v2697
    %2781 = vmatpush.bf16.msra.mxu0 %v2696
    %2782 = vmatpush.bf16.msra.mxu0 %v2695
    %2783 = vmatmul.bf16.gmra.mxu0 %v1942
    %v2784 = vpop.f32.mrf.mxu0
    %v2785 = vadd.f32 %v2761, %v2784
    %v2786 = vpop.f32.mrf.mxu0
    %v2787 = vadd.f32 %v2763, %v2786
    %2788 = vmatmul.bf16.gmra.mxu0 %v1946
    %v2789 = vpop.f32.mrf.mxu0
    %v2790 = vadd.f32 %v2766, %v2789
    %v2791 = vpop.f32.mrf.mxu0
    %v2792 = vadd.f32 %v2768, %v2791
    %2793 = vmatmul.bf16.gmra.mxu0 %v1950
    %v2794 = vpop.f32.mrf.mxu0
    %v2795 = vadd.f32 %v2771, %v2794
    %v2796 = vpop.f32.mrf.mxu0
    %v2797 = vadd.f32 %v2773, %v2796
    %2798 = vdwg.mxu0
    %2799 = vmatpush.bf16.msra.mxu0 %v2710
    %2800 = vmatpush.bf16.msra.mxu0 %v2709
    %2801 = vmatpush.bf16.msra.mxu0 %v2708
    %2802 = vmatpush.bf16.msra.mxu0 %v2707
    %2803 = vmatpush.bf16.msra.mxu0 %v2706
    %2804 = vmatpush.bf16.msra.mxu0 %v2705
    %2805 = vmatpush.bf16.msra.mxu0 %v2704
    %2806 = vmatpush.bf16.msra.mxu0 %v2703
    %2807 = vmatmul.bf16.gmra.mxu0 %v1943
    %v2808 = vpop.f32.mrf.mxu0
    %v2809 = vadd.f32 %v2785, %v2808
    %v2810 = vpop.f32.mrf.mxu0
    %v2811 = vadd.f32 %v2787, %v2810
    %2812 = vmatmul.bf16.gmra.mxu0 %v1947
    %v2813 = vpop.f32.mrf.mxu0
    %v2814 = vadd.f32 %v2790, %v2813
    %v2815 = vpop.f32.mrf.mxu0
    %v2816 = vadd.f32 %v2792, %v2815
    %2817 = vmatmul.bf16.gmra.mxu0 %v1951
    %v2818 = vpop.f32.mrf.mxu0
    %v2819 = vadd.f32 %v2795, %v2818
    %v2820 = vpop.f32.mrf.mxu0
    %v2821 = vadd.f32 %v2797, %v2820
    %2822 = vdwg.mxu0
    %2823 = vmatpush.bf16.msra.mxu0 %v2718
    %2824 = vmatpush.bf16.msra.mxu0 %v2717
    %2825 = vmatpush.bf16.msra.mxu0 %v2716
    %2826 = vmatpush.bf16.msra.mxu0 %v2715
    %2827 = vmatpush.bf16.msra.mxu0 %v2714
    %2828 = vmatpush.bf16.msra.mxu0 %v2713
    %2829 = vmatpush.bf16.msra.mxu0 %v2712
    %2830 = vmatpush.bf16.msra.mxu0 %v2711
    %2831 = vmatmul.bf16.gmra.mxu0 %v1944
    %v2832 = vpop.f32.mrf.mxu0
    %v2833 = vadd.f32 %v2809, %v2832
    %v2834 = vpop.f32.mrf.mxu0
    %v2835 = vadd.f32 %v2811, %v2834
    %2836 = vmatmul.bf16.gmra.mxu0 %v1948
    %v2837 = vpop.f32.mrf.mxu0
    %v2838 = vadd.f32 %v2814, %v2837
    %v2839 = vpop.f32.mrf.mxu0
    %v2840 = vadd.f32 %v2816, %v2839
    %2841 = vmatmul.bf16.gmra.mxu0 %v1952
    %v2842 = vpop.f32.mrf.mxu0
    %v2843 = vadd.f32 %v2819, %v2842
    %v2844 = vpop.f32.mrf.mxu0
    %v2845 = vadd.f32 %v2821, %v2844
    %2846 = vdwg.mxu0
    %v2847 = vld [vmem:[%s16 + $0x20] sm:$0xff]
    %v2848 = vld [vmem:[%s16 + $0x28] sm:$0xff]
    %v2849 = vld [vmem:[%s16 + $0x60] sm:$0xff]
    %v2850 = vld [vmem:[%s16 + $0x68] sm:$0xff]
    %v2851 = vld [vmem:[%s16 + $0xa0] sm:$0xff]
    %v2852 = vld [vmem:[%s16 + $0xa8] sm:$0xff]
    %v2853 = vld [vmem:[%s16 + $0xe0] sm:$0xff]
    %v2854 = vld [vmem:[%s16 + $0xe8] sm:$0xff]
    %v2855 = vld [vmem:[%s17 + $0x8] sm:$0xf]
    %v2857 = vperm.slane %v2855, 0
    %v2858 = vperm.slane %v2855, 1
    %v2859 = vperm.slane %v2855, 2
    %v2860 = vperm.slane %v2855, 3
    %v2873 = vunpack.c.l.b16 %v2847
    %v2874 = vunpack.c.h.b16 %v2847
    %v2875 = vunpack.c.l.b16 %v2848
    %v2876 = vunpack.c.h.b16 %v2848
    %v2877 = vunpack.c.l.b16 %v2849
    %v2878 = vunpack.c.h.b16 %v2849
    %v2879 = vunpack.c.l.b16 %v2850
    %v2880 = vunpack.c.h.b16 %v2850
    %v2881 = vunpack.c.l.b16 %v2851
    %v2882 = vunpack.c.h.b16 %v2851
    %v2883 = vunpack.c.l.b16 %v2852
    %v2884 = vunpack.c.h.b16 %v2852
    %v2885 = vunpack.c.l.b16 %v2853
    %v2886 = vunpack.c.h.b16 %v2853
    %v2887 = vunpack.c.l.b16 %v2854
    %v2888 = vunpack.c.h.b16 %v2854
    %v2889 = vpack.c.b16 %v2877, %v2873
    %v2890 = vpack.c.b16 %v2878, %v2874
    %v2891 = vpack.c.b16 %v2879, %v2875
    %v2892 = vpack.c.b16 %v2880, %v2876
    %v2893 = vpack.c.b16 %v2885, %v2881
    %v2894 = vpack.c.b16 %v2886, %v2882
    %v2895 = vpack.c.b16 %v2887, %v2883
    %v2896 = vpack.c.b16 %v2888, %v2884
    %2905 = vmatpush.bf16.msra.mxu0 0
    %2906 = vmatpush.bf16.msra.mxu0 0
    %2907 = vmatpush.bf16.msra.mxu0 0
    %2908 = vmatpush.bf16.msra.mxu0 0
    %2909 = vmatpush.bf16.msra.mxu0 0
    %2910 = vmatpush.bf16.msra.mxu0 0
    %2911 = vmatpush.bf16.msra.mxu0 %v2893
    %2912 = vmatpush.bf16.msra.mxu0 %v2889
    %2913 = vmatmul.bf16.gmra.mxu0 %v1813
    %v2914 = vpop.f32.mrf.mxu0
    %v2915 = vadd.f32 %v2857, %v2914
    %v2916 = vpop.f32.mrf.mxu0
    %v2917 = vadd.f32 %v2857, %v2916
    %2918 = vmatmul.bf16.gmra.mxu0 %v1816
    %v2919 = vpop.f32.mrf.mxu0
    %v2920 = vadd.f32 %v2857, %v2919
    %v2921 = vpop.f32.mrf.mxu0
    %v2922 = vadd.f32 %v2857, %v2921
    %2923 = vmatmul.bf16.gmra.mxu0 %v1819
    %v2924 = vpop.f32.mrf.mxu0
    %v2925 = vadd.f32 %v2857, %v2924
    %v2926 = vpop.f32.mrf.mxu0
    %v2927 = vadd.f32 %v2857, %v2926
    %2928 = vdwg.mxu0
    %2929 = vmatpush.bf16.msra.mxu0 0
    %2930 = vmatpush.bf16.msra.mxu0 0
    %2931 = vmatpush.bf16.msra.mxu0 0
    %2932 = vmatpush.bf16.msra.mxu0 0
    %2933 = vmatpush.bf16.msra.mxu0 0
    %2934 = vmatpush.bf16.msra.mxu0 0
    %2935 = vmatpush.bf16.msra.mxu0 %v2894
    %2936 = vmatpush.bf16.msra.mxu0 %v2890
    %2937 = vmatmul.bf16.gmra.mxu0 %v1813
    %v2938 = vpop.f32.mrf.mxu0
    %v2939 = vadd.f32 %v2858, %v2938
    %v2940 = vpop.f32.mrf.mxu0
    %v2941 = vadd.f32 %v2858, %v2940
    %2942 = vmatmul.bf16.gmra.mxu0 %v1816
    %v2943 = vpop.f32.mrf.mxu0
    %v2944 = vadd.f32 %v2858, %v2943
    %v2945 = vpop.f32.mrf.mxu0
    %v2946 = vadd.f32 %v2858, %v2945
    %2947 = vmatmul.bf16.gmra.mxu0 %v1819
    %v2948 = vpop.f32.mrf.mxu0
    %v2949 = vadd.f32 %v2858, %v2948
    %v2950 = vpop.f32.mrf.mxu0
    %v2951 = vadd.f32 %v2858, %v2950
    %2952 = vdwg.mxu0
    %2953 = vmatpush.bf16.msra.mxu0 0
    %2954 = vmatpush.bf16.msra.mxu0 0
    %2955 = vmatpush.bf16.msra.mxu0 0
    %2956 = vmatpush.bf16.msra.mxu0 0
    %2957 = vmatpush.bf16.msra.mxu0 0
    %2958 = vmatpush.bf16.msra.mxu0 0
    %2959 = vmatpush.bf16.msra.mxu0 %v2895
    %2960 = vmatpush.bf16.msra.mxu0 %v2891
    %2961 = vmatmul.bf16.gmra.mxu0 %v1813
    %v2962 = vpop.f32.mrf.mxu0
    %v2963 = vadd.f32 %v2859, %v2962
    %v2964 = vpop.f32.mrf.mxu0
    %v2965 = vadd.f32 %v2859, %v2964
    %2966 = vmatmul.bf16.gmra.mxu0 %v1816
    %v2967 = vpop.f32.mrf.mxu0
    %v2968 = vadd.f32 %v2859, %v2967
    %v2969 = vpop.f32.mrf.mxu0
    %v2970 = vadd.f32 %v2859, %v2969
    %2971 = vmatmul.bf16.gmra.mxu0 %v1819
    %v2972 = vpop.f32.mrf.mxu0
    %v2973 = vadd.f32 %v2859, %v2972
    %v2974 = vpop.f32.mrf.mxu0
    %v2975 = vadd.f32 %v2859, %v2974
    %2976 = vdwg.mxu0
    %2977 = vmatpush.bf16.msra.mxu0 0
    %2978 = vmatpush.bf16.msra.mxu0 0
    %2979 = vmatpush.bf16.msra.mxu0 0
    %2980 = vmatpush.bf16.msra.mxu0 0
    %2981 = vmatpush.bf16.msra.mxu0 0
    %2982 = vmatpush.bf16.msra.mxu0 0
    %2983 = vmatpush.bf16.msra.mxu0 %v2896
    %2984 = vmatpush.bf16.msra.mxu0 %v2892
    %2985 = vmatmul.bf16.gmra.mxu0 %v1813
    %v2986 = vpop.f32.mrf.mxu0
    %v2987 = vadd.f32 %v2860, %v2986
    %v2988 = vpop.f32.mrf.mxu0
    %v2989 = vadd.f32 %v2860, %v2988
    %2990 = vmatmul.bf16.gmra.mxu0 %v1816
    %v2991 = vpop.f32.mrf.mxu0
    %v2992 = vadd.f32 %v2860, %v2991
    %v2993 = vpop.f32.mrf.mxu0
    %v2994 = vadd.f32 %v2860, %v2993
    %2995 = vmatmul.bf16.gmra.mxu0 %v1819
    %v2996 = vpop.f32.mrf.mxu0
    %v2997 = vadd.f32 %v2860, %v2996
    %v2998 = vpop.f32.mrf.mxu0
    %v2999 = vadd.f32 %v2860, %v2998
    %3000 = vdwg.mxu0
    %v3001 = vmax.f32 %v2915, 0.0
    %v3002 = vmax.f32 %v2939, 0.0
    %v3003 = vmax.f32 %v2963, 0.0
    %v3004 = vmax.f32 %v2987, 0.0
    %v3005 = vmax.f32 %v2917, 0.0
    %v3006 = vmax.f32 %v2941, 0.0
    %v3007 = vmax.f32 %v2965, 0.0
    %v3008 = vmax.f32 %v2989, 0.0
    %v3009 = vmax.f32 %v2920, 0.0
    %v3010 = vmax.f32 %v2944, 0.0
    %v3011 = vmax.f32 %v2968, 0.0
    %v3012 = vmax.f32 %v2992, 0.0
    %v3013 = vmax.f32 %v2922, 0.0
    %v3014 = vmax.f32 %v2946, 0.0
    %v3015 = vmax.f32 %v2970, 0.0
    %v3016 = vmax.f32 %v2994, 0.0
    %v3017 = vmax.f32 %v2925, 0.0
    %v3018 = vmax.f32 %v2949, 0.0
    %v3019 = vmax.f32 %v2973, 0.0
    %v3020 = vmax.f32 %v2997, 0.0
    %v3021 = vmax.f32 %v2927, 0.0
    %v3022 = vmax.f32 %v2951, 0.0
    %v3023 = vmax.f32 %v2975, 0.0
    %v3024 = vmax.f32 %v2999, 0.0
    %v3025 = vpack.c.bf16 %v3005, %v3001
    %v3026 = vpack.c.bf16 %v3006, %v3002
    %v3027 = vpack.c.bf16 %v3007, %v3003
    %v3028 = vpack.c.bf16 %v3008, %v3004
    %v3029 = vpack.c.bf16 %v3013, %v3009
    %v3030 = vpack.c.bf16 %v3014, %v3010
    %v3031 = vpack.c.bf16 %v3015, %v3011
    %v3032 = vpack.c.bf16 %v3016, %v3012
    %v3033 = vpack.c.bf16 %v3021, %v3017
    %v3034 = vpack.c.bf16 %v3022, %v3018
    %v3035 = vpack.c.bf16 %v3023, %v3019
    %v3036 = vpack.c.bf16 %v3024, %v3020
    %v3037 = vld [vmem:[%s18 + $0x200] sm:$0xf]
    %v3038 = vld [vmem:[%s18 + $0x204] sm:$0xf]
    %v3039 = vld [vmem:[%s18 + $0x208] sm:$0xf]
    %v3040 = vld [vmem:[%s18 + $0x20c] sm:$0xf]
    %v3041 = vld [vmem:[%s18 + $0x210] sm:$0xf]
    %v3042 = vld [vmem:[%s18 + $0x214] sm:$0xf]
    %v3043 = vld [vmem:[%s18 + $0x218] sm:$0xf]
    %v3044 = vld [vmem:[%s18 + $0x21c] sm:$0xf]
    %v3045 = vld [vmem:[%s18 + $0x220] sm:$0xf]
    %v3046 = vld [vmem:[%s18 + $0x224] sm:$0xf]
    %v3047 = vld [vmem:[%s18 + $0x228] sm:$0xf]
    %v3048 = vld [vmem:[%s18 + $0x22c] sm:$0xf]
    %v3049 = vld [vmem:[%s18 + $0x230] sm:$0xf]
    %v3050 = vld [vmem:[%s18 + $0x234] sm:$0xf]
    %v3051 = vld [vmem:[%s18 + $0x238] sm:$0xf]
    %v3052 = vld [vmem:[%s18 + $0x23c] sm:$0xf]
    %v3053 = vld [vmem:[%s18 + $0x240] sm:$0xf]
    %v3054 = vld [vmem:[%s18 + $0x244] sm:$0xf]
    %v3055 = vld [vmem:[%s18 + $0x248] sm:$0xf]
    %v3056 = vld [vmem:[%s18 + $0x24c] sm:$0xf]
    %v3057 = vld [vmem:[%s18 + $0x250] sm:$0xf]
    %v3058 = vld [vmem:[%s18 + $0x254] sm:$0xf]
    %v3059 = vld [vmem:[%s18 + $0x258] sm:$0xf]
    %v3060 = vld [vmem:[%s18 + $0x25c] sm:$0xf]
    %v3061 = vld [vmem:[%s18 + $0x260] sm:$0xf]
    %v3062 = vld [vmem:[%s18 + $0x264] sm:$0xf]
    %v3063 = vld [vmem:[%s18 + $0x268] sm:$0xf]
    %v3064 = vld [vmem:[%s18 + $0x26c] sm:$0xf]
    %v3065 = vld [vmem:[%s18 + $0x270] sm:$0xf]
    %v3066 = vld [vmem:[%s18 + $0x274] sm:$0xf]
    %v3067 = vld [vmem:[%s18 + $0x278] sm:$0xf]
    %v3068 = vld [vmem:[%s18 + $0x27c] sm:$0xf]
    %v3069 = vld [vmem:[%s18 + $0x280] sm:$0xf]
    %v3070 = vld [vmem:[%s18 + $0x284] sm:$0xf]
    %v3071 = vld [vmem:[%s18 + $0x288] sm:$0xf]
    %v3072 = vld [vmem:[%s18 + $0x28c] sm:$0xf]
    %v3073 = vld [vmem:[%s18 + $0x290] sm:$0xf]
    %v3074 = vld [vmem:[%s18 + $0x294] sm:$0xf]
    %v3075 = vld [vmem:[%s18 + $0x298] sm:$0xf]
    %v3076 = vld [vmem:[%s18 + $0x29c] sm:$0xf]
    %v3077 = vld [vmem:[%s18 + $0x2a0] sm:$0xf]
    %v3078 = vld [vmem:[%s18 + $0x2a4] sm:$0xf]
    %v3079 = vld [vmem:[%s18 + $0x2a8] sm:$0xf]
    %v3080 = vld [vmem:[%s18 + $0x2ac] sm:$0xf]
    %v3081 = vld [vmem:[%s18 + $0x2b0] sm:$0xf]
    %v3082 = vld [vmem:[%s18 + $0x2b4] sm:$0xf]
    %v3083 = vld [vmem:[%s18 + $0x2b8] sm:$0xf]
    %v3084 = vld [vmem:[%s18 + $0x2bc] sm:$0xf]
    %v3085 = vld [vmem:[%s18 + $0x2c0] sm:$0xf]
    %v3086 = vld [vmem:[%s18 + $0x2c4] sm:$0xf]
    %v3087 = vld [vmem:[%s18 + $0x2c8] sm:$0xf]
    %v3088 = vld [vmem:[%s18 + $0x2cc] sm:$0xf]
    %v3089 = vld [vmem:[%s18 + $0x2d0] sm:$0xf]
    %v3090 = vld [vmem:[%s18 + $0x2d4] sm:$0xf]
    %v3091 = vld [vmem:[%s18 + $0x2d8] sm:$0xf]
    %v3092 = vld [vmem:[%s18 + $0x2dc] sm:$0xf]
    %v3093 = vld [vmem:[%s18 + $0x2e0] sm:$0xf]
    %v3094 = vld [vmem:[%s18 + $0x2e4] sm:$0xf]
    %v3095 = vld [vmem:[%s18 + $0x2e8] sm:$0xf]
    %v3096 = vld [vmem:[%s18 + $0x2ec] sm:$0xf]
    %v3097 = vld [vmem:[%s18 + $0x2f0] sm:$0xf]
    %v3098 = vld [vmem:[%s18 + $0x2f4] sm:$0xf]
    %v3099 = vld [vmem:[%s18 + $0x2f8] sm:$0xf]
    %v3100 = vld [vmem:[%s18 + $0x2fc] sm:$0xf]
    %v3165 = vunpack.c.l.b16 %v3037
    %v3166 = vunpack.c.l.b16 %v3038
    %v3167 = vunpack.c.l.b16 %v3039
    %v3168 = vunpack.c.l.b16 %v3040
    %v3169 = vunpack.c.l.b16 %v3041
    %v3170 = vunpack.c.l.b16 %v3042
    %v3171 = vunpack.c.l.b16 %v3043
    %v3172 = vunpack.c.l.b16 %v3044
    %v3173 = vunpack.c.l.b16 %v3045
    %v3174 = vunpack.c.l.b16 %v3046
    %v3175 = vunpack.c.l.b16 %v3047
    %v3176 = vunpack.c.l.b16 %v3048
    %v3177 = vunpack.c.l.b16 %v3049
    %v3178 = vunpack.c.l.b16 %v3050
    %v3179 = vunpack.c.l.b16 %v3051
    %v3180 = vunpack.c.l.b16 %v3052
    %v3181 = vunpack.c.l.b16 %v3053
    %v3182 = vunpack.c.l.b16 %v3054
    %v3183 = vunpack.c.l.b16 %v3055
    %v3184 = vunpack.c.l.b16 %v3056
    %v3185 = vunpack.c.l.b16 %v3057
    %v3186 = vunpack.c.l.b16 %v3058
    %v3187 = vunpack.c.l.b16 %v3059
    %v3188 = vunpack.c.l.b16 %v3060
    %v3189 = vunpack.c.l.b16 %v3061
    %v3190 = vunpack.c.l.b16 %v3062
    %v3191 = vunpack.c.l.b16 %v3063
    %v3192 = vunpack.c.l.b16 %v3064
    %v3193 = vunpack.c.l.b16 %v3065
    %v3194 = vunpack.c.l.b16 %v3066
    %v3195 = vunpack.c.l.b16 %v3067
    %v3196 = vunpack.c.l.b16 %v3068
    %v3197 = vunpack.c.l.b16 %v3069
    %v3198 = vunpack.c.l.b16 %v3070
    %v3199 = vunpack.c.l.b16 %v3071
    %v3200 = vunpack.c.l.b16 %v3072
    %v3201 = vunpack.c.l.b16 %v3073
    %v3202 = vunpack.c.l.b16 %v3074
    %v3203 = vunpack.c.l.b16 %v3075
    %v3204 = vunpack.c.l.b16 %v3076
    %v3205 = vunpack.c.l.b16 %v3077
    %v3206 = vunpack.c.l.b16 %v3078
    %v3207 = vunpack.c.l.b16 %v3079
    %v3208 = vunpack.c.l.b16 %v3080
    %v3209 = vunpack.c.l.b16 %v3081
    %v3210 = vunpack.c.l.b16 %v3082
    %v3211 = vunpack.c.l.b16 %v3083
    %v3212 = vunpack.c.l.b16 %v3084
    %v3213 = vunpack.c.l.b16 %v3085
    %v3214 = vunpack.c.l.b16 %v3086
    %v3215 = vunpack.c.l.b16 %v3087
    %v3216 = vunpack.c.l.b16 %v3088
    %v3217 = vunpack.c.l.b16 %v3089
    %v3218 = vunpack.c.l.b16 %v3090
    %v3219 = vunpack.c.l.b16 %v3091
    %v3220 = vunpack.c.l.b16 %v3092
    %v3221 = vunpack.c.l.b16 %v3093
    %v3222 = vunpack.c.l.b16 %v3094
    %v3223 = vunpack.c.l.b16 %v3095
    %v3224 = vunpack.c.l.b16 %v3096
    %v3225 = vunpack.c.l.b16 %v3097
    %v3226 = vunpack.c.l.b16 %v3098
    %v3227 = vunpack.c.l.b16 %v3099
    %v3228 = vunpack.c.l.b16 %v3100
    %v3229 = vpack.c.b16 %v3166, %v3165
    %v3230 = vpack.c.b16 %v3168, %v3167
    %v3231 = vpack.c.b16 %v3170, %v3169
    %v3232 = vpack.c.b16 %v3172, %v3171
    %v3233 = vpack.c.b16 %v3174, %v3173
    %v3234 = vpack.c.b16 %v3176, %v3175
    %v3235 = vpack.c.b16 %v3178, %v3177
    %v3236 = vpack.c.b16 %v3180, %v3179
    %v3237 = vpack.c.b16 %v3182, %v3181
    %v3238 = vpack.c.b16 %v3184, %v3183
    %v3239 = vpack.c.b16 %v3186, %v3185
    %v3240 = vpack.c.b16 %v3188, %v3187
    %v3241 = vpack.c.b16 %v3190, %v3189
    %v3242 = vpack.c.b16 %v3192, %v3191
    %v3243 = vpack.c.b16 %v3194, %v3193
    %v3244 = vpack.c.b16 %v3196, %v3195
    %v3245 = vpack.c.b16 %v3198, %v3197
    %v3246 = vpack.c.b16 %v3200, %v3199
    %v3247 = vpack.c.b16 %v3202, %v3201
    %v3248 = vpack.c.b16 %v3204, %v3203
    %v3249 = vpack.c.b16 %v3206, %v3205
    %v3250 = vpack.c.b16 %v3208, %v3207
    %v3251 = vpack.c.b16 %v3210, %v3209
    %v3252 = vpack.c.b16 %v3212, %v3211
    %v3253 = vpack.c.b16 %v3214, %v3213
    %v3254 = vpack.c.b16 %v3216, %v3215
    %v3255 = vpack.c.b16 %v3218, %v3217
    %v3256 = vpack.c.b16 %v3220, %v3219
    %v3257 = vpack.c.b16 %v3222, %v3221
    %v3258 = vpack.c.b16 %v3224, %v3223
    %v3259 = vpack.c.b16 %v3226, %v3225
    %v3260 = vpack.c.b16 %v3228, %v3227
    %3293 = vmatpush.bf16.msra.mxu0 %v3236
    %3294 = vmatpush.bf16.msra.mxu0 %v3235
    %3295 = vmatpush.bf16.msra.mxu0 %v3234
    %3296 = vmatpush.bf16.msra.mxu0 %v3233
    %3297 = vmatpush.bf16.msra.mxu0 %v3232
    %3298 = vmatpush.bf16.msra.mxu0 %v3231
    %3299 = vmatpush.bf16.msra.mxu0 %v3230
    %3300 = vmatpush.bf16.msra.mxu0 %v3229
    %3301 = vmatmul.bf16.gmra.mxu0 %v3025
    %v3302 = vpop.f32.mrf.mxu0
    %v3303 = vadd.f32 0.0, %v3302
    %v3304 = vpop.f32.mrf.mxu0
    %v3305 = vadd.f32 0.0, %v3304
    %3306 = vmatmul.bf16.gmra.mxu0 %v3029
    %v3307 = vpop.f32.mrf.mxu0
    %v3308 = vadd.f32 0.0, %v3307
    %v3309 = vpop.f32.mrf.mxu0
    %v3310 = vadd.f32 0.0, %v3309
    %3311 = vmatmul.bf16.gmra.mxu0 %v3033
    %v3312 = vpop.f32.mrf.mxu0
    %v3313 = vadd.f32 0.0, %v3312
    %v3314 = vpop.f32.mrf.mxu0
    %v3315 = vadd.f32 0.0, %v3314
    %3316 = vdwg.mxu0
    %3317 = vmatpush.bf16.msra.mxu0 %v3244
    %3318 = vmatpush.bf16.msra.mxu0 %v3243
    %3319 = vmatpush.bf16.msra.mxu0 %v3242
    %3320 = vmatpush.bf16.msra.mxu0 %v3241
    %3321 = vmatpush.bf16.msra.mxu0 %v3240
    %3322 = vmatpush.bf16.msra.mxu0 %v3239
    %3323 = vmatpush.bf16.msra.mxu0 %v3238
    %3324 = vmatpush.bf16.msra.mxu0 %v3237
    %3325 = vmatmul.bf16.gmra.mxu0 %v3026
    %v3326 = vpop.f32.mrf.mxu0
    %v3327 = vadd.f32 %v3303, %v3326
    %v3328 = vpop.f32.mrf.mxu0
    %v3329 = vadd.f32 %v3305, %v3328
    %3330 = vmatmul.bf16.gmra.mxu0 %v3030
    %v3331 = vpop.f32.mrf.mxu0
    %v3332 = vadd.f32 %v3308, %v3331
    %v3333 = vpop.f32.mrf.mxu0
    %v3334 = vadd.f32 %v3310, %v3333
    %3335 = vmatmul.bf16.gmra.mxu0 %v3034
    %v3336 = vpop.f32.mrf.mxu0
    %v3337 = vadd.f32 %v3313, %v3336
    %v3338 = vpop.f32.mrf.mxu0
    %v3339 = vadd.f32 %v3315, %v3338
    %3340 = vdwg.mxu0
    %3341 = vmatpush.bf16.msra.mxu0 %v3252
    %3342 = vmatpush.bf16.msra.mxu0 %v3251
    %3343 = vmatpush.bf16.msra.mxu0 %v3250
    %3344 = vmatpush.bf16.msra.mxu0 %v3249
    %3345 = vmatpush.bf16.msra.mxu0 %v3248
    %3346 = vmatpush.bf16.msra.mxu0 %v3247
    %3347 = vmatpush.bf16.msra.mxu0 %v3246
    %3348 = vmatpush.bf16.msra.mxu0 %v3245
    %3349 = vmatmul.bf16.gmra.mxu0 %v3027
    %v3350 = vpop.f32.mrf.mxu0
    %v3351 = vadd.f32 %v3327, %v3350
    %v3352 = vpop.f32.mrf.mxu0
    %v3353 = vadd.f32 %v3329, %v3352
    %3354 = vmatmul.bf16.gmra.mxu0 %v3031
    %v3355 = vpop.f32.mrf.mxu0
    %v3356 = vadd.f32 %v3332, %v3355
    %v3357 = vpop.f32.mrf.mxu0
    %v3358 = vadd.f32 %v3334, %v3357
    %3359 = vmatmul.bf16.gmra.mxu0 %v3035
    %v3360 = vpop.f32.mrf.mxu0
    %v3361 = vadd.f32 %v3337, %v3360
    %v3362 = vpop.f32.mrf.mxu0
    %v3363 = vadd.f32 %v3339, %v3362
    %3364 = vdwg.mxu0
    %3365 = vmatpush.bf16.msra.mxu0 %v3260
    %3366 = vmatpush.bf16.msra.mxu0 %v3259
    %3367 = vmatpush.bf16.msra.mxu0 %v3258
    %3368 = vmatpush.bf16.msra.mxu0 %v3257
    %3369 = vmatpush.bf16.msra.mxu0 %v3256
    %3370 = vmatpush.bf16.msra.mxu0 %v3255
    %3371 = vmatpush.bf16.msra.mxu0 %v3254
    %3372 = vmatpush.bf16.msra.mxu0 %v3253
    %3373 = vmatmul.bf16.gmra.mxu0 %v3028
    %v3374 = vpop.f32.mrf.mxu0
    %v3375 = vadd.f32 %v3351, %v3374
    %v3376 = vpop.f32.mrf.mxu0
    %v3377 = vadd.f32 %v3353, %v3376
    %3378 = vmatmul.bf16.gmra.mxu0 %v3032
    %v3379 = vpop.f32.mrf.mxu0
    %v3380 = vadd.f32 %v3356, %v3379
    %v3381 = vpop.f32.mrf.mxu0
    %v3382 = vadd.f32 %v3358, %v3381
    %3383 = vmatmul.bf16.gmra.mxu0 %v3036
    %v3384 = vpop.f32.mrf.mxu0
    %v3385 = vadd.f32 %v3361, %v3384
    %v3386 = vpop.f32.mrf.mxu0
    %v3387 = vadd.f32 %v3363, %v3386
    %3388 = vdwg.mxu0
    %v3389 = vadd.f32 %v2833, %v3375
    %v3390 = vadd.f32 %v2835, %v3377
    %v3391 = vadd.f32 %v2838, %v3380
    %v3392 = vadd.f32 %v2840, %v3382
    %v3393 = vadd.f32 %v2843, %v3385
    %v3394 = vadd.f32 %v2845, %v3387
    %v3395 = vld [vmem:[%s16 + $0x30] sm:$0xff]
    %v3396 = vld [vmem:[%s16 + $0x38] sm:$0xff]
    %v3397 = vld [vmem:[%s16 + $0x70] sm:$0xff]
    %v3398 = vld [vmem:[%s16 + $0x78] sm:$0xff]
    %v3399 = vld [vmem:[%s16 + $0xb0] sm:$0xff]
    %v3400 = vld [vmem:[%s16 + $0xb8] sm:$0xff]
    %v3401 = vld [vmem:[%s16 + $0xf0] sm:$0xff]
    %v3402 = vld [vmem:[%s16 + $0xf8] sm:$0xff]
    %v3403 = vld [vmem:[%s17 + $0xc] sm:$0xf]
    %v3405 = vperm.slane %v3403, 0
    %v3406 = vperm.slane %v3403, 1
    %v3407 = vperm.slane %v3403, 2
    %v3408 = vperm.slane %v3403, 3
    %v3421 = vunpack.c.l.b16 %v3395
    %v3422 = vunpack.c.h.b16 %v3395
    %v3423 = vunpack.c.l.b16 %v3396
    %v3424 = vunpack.c.h.b16 %v3396
    %v3425 = vunpack.c.l.b16 %v3397
    %v3426 = vunpack.c.h.b16 %v3397
    %v3427 = vunpack.c.l.b16 %v3398
    %v3428 = vunpack.c.h.b16 %v3398
    %v3429 = vunpack.c.l.b16 %v3399
    %v3430 = vunpack.c.h.b16 %v3399
    %v3431 = vunpack.c.l.b16 %v3400
    %v3432 = vunpack.c.h.b16 %v3400
    %v3433 = vunpack.c.l.b16 %v3401
    %v3434 = vunpack.c.h.b16 %v3401
    %v3435 = vunpack.c.l.b16 %v3402
    %v3436 = vunpack.c.h.b16 %v3402
    %v3437 = vpack.c.b16 %v3425, %v3421
    %v3438 = vpack.c.b16 %v3426, %v3422
    %v3439 = vpack.c.b16 %v3427, %v3423
    %v3440 = vpack.c.b16 %v3428, %v3424
    %v3441 = vpack.c.b16 %v3433, %v3429
    %v3442 = vpack.c.b16 %v3434, %v3430
    %v3443 = vpack.c.b16 %v3435, %v3431
    %v3444 = vpack.c.b16 %v3436, %v3432
    %3453 = vmatpush.bf16.msra.mxu0 0
    %3454 = vmatpush.bf16.msra.mxu0 0
    %3455 = vmatpush.bf16.msra.mxu0 0
    %3456 = vmatpush.bf16.msra.mxu0 0
    %3457 = vmatpush.bf16.msra.mxu0 0
    %3458 = vmatpush.bf16.msra.mxu0 0
    %3459 = vmatpush.bf16.msra.mxu0 %v3441
    %3460 = vmatpush.bf16.msra.mxu0 %v3437
    %3461 = vmatmul.bf16.gmra.mxu0 %v1813
    %v3462 = vpop.f32.mrf.mxu0
    %v3463 = vadd.f32 %v3405, %v3462
    %v3464 = vpop.f32.mrf.mxu0
    %v3465 = vadd.f32 %v3405, %v3464
    %3466 = vmatmul.bf16.gmra.mxu0 %v1816
    %v3467 = vpop.f32.mrf.mxu0
    %v3468 = vadd.f32 %v3405, %v3467
    %v3469 = vpop.f32.mrf.mxu0
    %v3470 = vadd.f32 %v3405, %v3469
    %3471 = vmatmul.bf16.gmra.mxu0 %v1819
    %v3472 = vpop.f32.mrf.mxu0
    %v3473 = vadd.f32 %v3405, %v3472
    %v3474 = vpop.f32.mrf.mxu0
    %v3475 = vadd.f32 %v3405, %v3474
    %3476 = vdwg.mxu0
    %3477 = vmatpush.bf16.msra.mxu0 0
    %3478 = vmatpush.bf16.msra.mxu0 0
    %3479 = vmatpush.bf16.msra.mxu0 0
    %3480 = vmatpush.bf16.msra.mxu0 0
    %3481 = vmatpush.bf16.msra.mxu0 0
    %3482 = vmatpush.bf16.msra.mxu0 0
    %3483 = vmatpush.bf16.msra.mxu0 %v3442
    %3484 = vmatpush.bf16.msra.mxu0 %v3438
    %3485 = vmatmul.bf16.gmra.mxu0 %v1813
    %v3486 = vpop.f32.mrf.mxu0
    %v3487 = vadd.f32 %v3406, %v3486
    %v3488 = vpop.f32.mrf.mxu0
    %v3489 = vadd.f32 %v3406, %v3488
    %3490 = vmatmul.bf16.gmra.mxu0 %v1816
    %v3491 = vpop.f32.mrf.mxu0
    %v3492 = vadd.f32 %v3406, %v3491
    %v3493 = vpop.f32.mrf.mxu0
    %v3494 = vadd.f32 %v3406, %v3493
    %3495 = vmatmul.bf16.gmra.mxu0 %v1819
    %v3496 = vpop.f32.mrf.mxu0
    %v3497 = vadd.f32 %v3406, %v3496
    %v3498 = vpop.f32.mrf.mxu0
    %v3499 = vadd.f32 %v3406, %v3498
    %3500 = vdwg.mxu0
    %3501 = vmatpush.bf16.msra.mxu0 0
    %3502 = vmatpush.bf16.msra.mxu0 0
    %3503 = vmatpush.bf16.msra.mxu0 0
    %3504 = vmatpush.bf16.msra.mxu0 0
    %3505 = vmatpush.bf16.msra.mxu0 0
    %3506 = vmatpush.bf16.msra.mxu0 0
    %3507 = vmatpush.bf16.msra.mxu0 %v3443
    %3508 = vmatpush.bf16.msra.mxu0 %v3439
    %3509 = vmatmul.bf16.gmra.mxu0 %v1813
    %v3510 = vpop.f32.mrf.mxu0
    %v3511 = vadd.f32 %v3407, %v3510
    %v3512 = vpop.f32.mrf.mxu0
    %v3513 = vadd.f32 %v3407, %v3512
    %3514 = vmatmul.bf16.gmra.mxu0 %v1816
    %v3515 = vpop.f32.mrf.mxu0
    %v3516 = vadd.f32 %v3407, %v3515
    %v3517 = vpop.f32.mrf.mxu0
    %v3518 = vadd.f32 %v3407, %v3517
    %3519 = vmatmul.bf16.gmra.mxu0 %v1819
    %v3520 = vpop.f32.mrf.mxu0
    %v3521 = vadd.f32 %v3407, %v3520
    %v3522 = vpop.f32.mrf.mxu0
    %v3523 = vadd.f32 %v3407, %v3522
    %3524 = vdwg.mxu0
    %3525 = vmatpush.bf16.msra.mxu0 0
    %3526 = vmatpush.bf16.msra.mxu0 0
    %3527 = vmatpush.bf16.msra.mxu0 0
    %3528 = vmatpush.bf16.msra.mxu0 0
    %3529 = vmatpush.bf16.msra.mxu0 0
    %3530 = vmatpush.bf16.msra.mxu0 0
    %3531 = vmatpush.bf16.msra.mxu0 %v3444
    %3532 = vmatpush.bf16.msra.mxu0 %v3440
    %3533 = vmatmul.bf16.gmra.mxu0 %v1813
    %v3534 = vpop.f32.mrf.mxu0
    %v3535 = vadd.f32 %v3408, %v3534
    %v3536 = vpop.f32.mrf.mxu0
    %v3537 = vadd.f32 %v3408, %v3536
    %3538 = vmatmul.bf16.gmra.mxu0 %v1816
    %v3539 = vpop.f32.mrf.mxu0
    %v3540 = vadd.f32 %v3408, %v3539
    %v3541 = vpop.f32.mrf.mxu0
    %v3542 = vadd.f32 %v3408, %v3541
    %3543 = vmatmul.bf16.gmra.mxu0 %v1819
    %v3544 = vpop.f32.mrf.mxu0
    %v3545 = vadd.f32 %v3408, %v3544
    %v3546 = vpop.f32.mrf.mxu0
    %v3547 = vadd.f32 %v3408, %v3546
    %3548 = vdwg.mxu0
    %v3549 = vmax.f32 %v3463, 0.0
    %v3550 = vmax.f32 %v3487, 0.0
    %v3551 = vmax.f32 %v3511, 0.0
    %v3552 = vmax.f32 %v3535, 0.0
    %v3553 = vmax.f32 %v3465, 0.0
    %v3554 = vmax.f32 %v3489, 0.0
    %v3555 = vmax.f32 %v3513, 0.0
    %v3556 = vmax.f32 %v3537, 0.0
    %v3557 = vmax.f32 %v3468, 0.0
    %v3558 = vmax.f32 %v3492, 0.0
    %v3559 = vmax.f32 %v3516, 0.0
    %v3560 = vmax.f32 %v3540, 0.0
    %v3561 = vmax.f32 %v3470, 0.0
    %v3562 = vmax.f32 %v3494, 0.0
    %v3563 = vmax.f32 %v3518, 0.0
    %v3564 = vmax.f32 %v3542, 0.0
    %v3565 = vmax.f32 %v3473, 0.0
    %v3566 = vmax.f32 %v3497, 0.0
    %v3567 = vmax.f32 %v3521, 0.0
    %v3568 = vmax.f32 %v3545, 0.0
    %v3569 = vmax.f32 %v3475, 0.0
    %v3570 = vmax.f32 %v3499, 0.0
    %v3571 = vmax.f32 %v3523, 0.0
    %v3572 = vmax.f32 %v3547, 0.0
    %v3573 = vpack.c.bf16 %v3553, %v3549
    %v3574 = vpack.c.bf16 %v3554, %v3550
    %v3575 = vpack.c.bf16 %v3555, %v3551
    %v3576 = vpack.c.bf16 %v3556, %v3552
    %v3577 = vpack.c.bf16 %v3561, %v3557
    %v3578 = vpack.c.bf16 %v3562, %v3558
    %v3579 = vpack.c.bf16 %v3563, %v3559
    %v3580 = vpack.c.bf16 %v3564, %v3560
    %v3581 = vpack.c.bf16 %v3569, %v3565
    %v3582 = vpack.c.bf16 %v3570, %v3566
    %v3583 = vpack.c.bf16 %v3571, %v3567
    %v3584 = vpack.c.bf16 %v3572, %v3568
    %v3585 = vld [vmem:[%s18 + $0x300] sm:$0xf]
    %v3586 = vld [vmem:[%s18 + $0x304] sm:$0xf]
    %v3587 = vld [vmem:[%s18 + $0x308] sm:$0xf]
    %v3588 = vld [vmem:[%s18 + $0x30c] sm:$0xf]
    %v3589 = vld [vmem:[%s18 + $0x310] sm:$0xf]
    %v3590 = vld [vmem:[%s18 + $0x314] sm:$0xf]
    %v3591 = vld [vmem:[%s18 + $0x318] sm:$0xf]
    %v3592 = vld [vmem:[%s18 + $0x31c] sm:$0xf]
    %v3593 = vld [vmem:[%s18 + $0x320] sm:$0xf]
    %v3594 = vld [vmem:[%s18 + $0x324] sm:$0xf]
    %v3595 = vld [vmem:[%s18 + $0x328] sm:$0xf]
    %v3596 = vld [vmem:[%s18 + $0x32c] sm:$0xf]
    %v3597 = vld [vmem:[%s18 + $0x330] sm:$0xf]
    %v3598 = vld [vmem:[%s18 + $0x334] sm:$0xf]
    %v3599 = vld [vmem:[%s18 + $0x338] sm:$0xf]
    %v3600 = vld [vmem:[%s18 + $0x33c] sm:$0xf]
    %v3601 = vld [vmem:[%s18 + $0x340] sm:$0xf]
    %v3602 = vld [vmem:[%s18 + $0x344] sm:$0xf]
    %v3603 = vld [vmem:[%s18 + $0x348] sm:$0xf]
    %v3604 = vld [vmem:[%s18 + $0x34c] sm:$0xf]
    %v3605 = vld [vmem:[%s18 + $0x350] sm:$0xf]
    %v3606 = vld [vmem:[%s18 + $0x354] sm:$0xf]
    %v3607 = vld [vmem:[%s18 + $0x358] sm:$0xf]
    %v3608 = vld [vmem:[%s18 + $0x35c] sm:$0xf]
    %v3609 = vld [vmem:[%s18 + $0x360] sm:$0xf]
    %v3610 = vld [vmem:[%s18 + $0x364] sm:$0xf]
    %v3611 = vld [vmem:[%s18 + $0x368] sm:$0xf]
    %v3612 = vld [vmem:[%s18 + $0x36c] sm:$0xf]
    %v3613 = vld [vmem:[%s18 + $0x370] sm:$0xf]
    %v3614 = vld [vmem:[%s18 + $0x374] sm:$0xf]
    %v3615 = vld [vmem:[%s18 + $0x378] sm:$0xf]
    %v3616 = vld [vmem:[%s18 + $0x37c] sm:$0xf]
    %v3617 = vld [vmem:[%s18 + $0x380] sm:$0xf]
    %v3618 = vld [vmem:[%s18 + $0x384] sm:$0xf]
    %v3619 = vld [vmem:[%s18 + $0x388] sm:$0xf]
    %v3620 = vld [vmem:[%s18 + $0x38c] sm:$0xf]
    %v3621 = vld [vmem:[%s18 + $0x390] sm:$0xf]
    %v3622 = vld [vmem:[%s18 + $0x394] sm:$0xf]
    %v3623 = vld [vmem:[%s18 + $0x398] sm:$0xf]
    %v3624 = vld [vmem:[%s18 + $0x39c] sm:$0xf]
    %v3625 = vld [vmem:[%s18 + $0x3a0] sm:$0xf]
    %v3626 = vld [vmem:[%s18 + $0x3a4] sm:$0xf]
    %v3627 = vld [vmem:[%s18 + $0x3a8] sm:$0xf]
    %v3628 = vld [vmem:[%s18 + $0x3ac] sm:$0xf]
    %v3629 = vld [vmem:[%s18 + $0x3b0] sm:$0xf]
    %v3630 = vld [vmem:[%s18 + $0x3b4] sm:$0xf]
    %v3631 = vld [vmem:[%s18 + $0x3b8] sm:$0xf]
    %v3632 = vld [vmem:[%s18 + $0x3bc] sm:$0xf]
    %v3633 = vld [vmem:[%s18 + $0x3c0] sm:$0xf]
    %v3634 = vld [vmem:[%s18 + $0x3c4] sm:$0xf]
    %v3635 = vld [vmem:[%s18 + $0x3c8] sm:$0xf]
    %v3636 = vld [vmem:[%s18 + $0x3cc] sm:$0xf]
    %v3637 = vld [vmem:[%s18 + $0x3d0] sm:$0xf]
    %v3638 = vld [vmem:[%s18 + $0x3d4] sm:$0xf]
    %v3639 = vld [vmem:[%s18 + $0x3d8] sm:$0xf]
    %v3640 = vld [vmem:[%s18 + $0x3dc] sm:$0xf]
    %v3641 = vld [vmem:[%s18 + $0x3e0] sm:$0xf]
    %v3642 = vld [vmem:[%s18 + $0x3e4] sm:$0xf]
    %v3643 = vld [vmem:[%s18 + $0x3e8] sm:$0xf]
    %v3644 = vld [vmem:[%s18 + $0x3ec] sm:$0xf]
    %v3645 = vld [vmem:[%s18 + $0x3f0] sm:$0xf]
    %v3646 = vld [vmem:[%s18 + $0x3f4] sm:$0xf]
    %v3647 = vld [vmem:[%s18 + $0x3f8] sm:$0xf]
    %v3648 = vld [vmem:[%s18 + $0x3fc] sm:$0xf]
    %v3713 = vunpack.c.l.b16 %v3585
    %v3714 = vunpack.c.l.b16 %v3586
    %v3715 = vunpack.c.l.b16 %v3587
    %v3716 = vunpack.c.l.b16 %v3588
    %v3717 = vunpack.c.l.b16 %v3589
    %v3718 = vunpack.c.l.b16 %v3590
    %v3719 = vunpack.c.l.b16 %v3591
    %v3720 = vunpack.c.l.b16 %v3592
    %v3721 = vunpack.c.l.b16 %v3593
    %v3722 = vunpack.c.l.b16 %v3594
    %v3723 = vunpack.c.l.b16 %v3595
    %v3724 = vunpack.c.l.b16 %v3596
    %v3725 = vunpack.c.l.b16 %v3597
    %v3726 = vunpack.c.l.b16 %v3598
    %v3727 = vunpack.c.l.b16 %v3599
    %v3728 = vunpack.c.l.b16 %v3600
    %v3729 = vunpack.c.l.b16 %v3601
    %v3730 = vunpack.c.l.b16 %v3602
    %v3731 = vunpack.c.l.b16 %v3603
    %v3732 = vunpack.c.l.b16 %v3604
    %v3733 = vunpack.c.l.b16 %v3605
    %v3734 = vunpack.c.l.b16 %v3606
    %v3735 = vunpack.c.l.b16 %v3607
    %v3736 = vunpack.c.l.b16 %v3608
    %v3737 = vunpack.c.l.b16 %v3609
    %v3738 = vunpack.c.l.b16 %v3610
    %v3739 = vunpack.c.l.b16 %v3611
    %v3740 = vunpack.c.l.b16 %v3612
    %v3741 = vunpack.c.l.b16 %v3613
    %v3742 = vunpack.c.l.b16 %v3614
    %v3743 = vunpack.c.l.b16 %v3615
    %v3744 = vunpack.c.l.b16 %v3616
    %v3745 = vunpack.c.l.b16 %v3617
    %v3746 = vunpack.c.l.b16 %v3618
    %v3747 = vunpack.c.l.b16 %v3619
    %v3748 = vunpack.c.l.b16 %v3620
    %v3749 = vunpack.c.l.b16 %v3621
    %v3750 = vunpack.c.l.b16 %v3622
    %v3751 = vunpack.c.l.b16 %v3623
    %v3752 = vunpack.c.l.b16 %v3624
    %v3753 = vunpack.c.l.b16 %v3625
    %v3754 = vunpack.c.l.b16 %v3626
    %v3755 = vunpack.c.l.b16 %v3627
    %v3756 = vunpack.c.l.b16 %v3628
    %v3757 = vunpack.c.l.b16 %v3629
    %v3758 = vunpack.c.l.b16 %v3630
    %v3759 = vunpack.c.l.b16 %v3631
    %v3760 = vunpack.c.l.b16 %v3632
    %v3761 = vunpack.c.l.b16 %v3633
    %v3762 = vunpack.c.l.b16 %v3634
    %v3763 = vunpack.c.l.b16 %v3635
    %v3764 = vunpack.c.l.b16 %v3636
    %v3765 = vunpack.c.l.b16 %v3637
    %v3766 = vunpack.c.l.b16 %v3638
    %v3767 = vunpack.c.l.b16 %v3639
    %v3768 = vunpack.c.l.b16 %v3640
    %v3769 = vunpack.c.l.b16 %v3641
    %v3770 = vunpack.c.l.b16 %v3642
    %v3771 = vunpack.c.l.b16 %v3643
    %v3772 = vunpack.c.l.b16 %v3644
    %v3773 = vunpack.c.l.b16 %v3645
    %v3774 = vunpack.c.l.b16 %v3646
    %v3775 = vunpack.c.l.b16 %v3647
    %v3776 = vunpack.c.l.b16 %v3648
    %v3777 = vpack.c.b16 %v3714, %v3713
    %v3778 = vpack.c.b16 %v3716, %v3715
    %v3779 = vpack.c.b16 %v3718, %v3717
    %v3780 = vpack.c.b16 %v3720, %v3719
    %v3781 = vpack.c.b16 %v3722, %v3721
    %v3782 = vpack.c.b16 %v3724, %v3723
    %v3783 = vpack.c.b16 %v3726, %v3725
    %v3784 = vpack.c.b16 %v3728, %v3727
    %v3785 = vpack.c.b16 %v3730, %v3729
    %v3786 = vpack.c.b16 %v3732, %v3731
    %v3787 = vpack.c.b16 %v3734, %v3733
    %v3788 = vpack.c.b16 %v3736, %v3735
    %v3789 = vpack.c.b16 %v3738, %v3737
    %v3790 = vpack.c.b16 %v3740, %v3739
    %v3791 = vpack.c.b16 %v3742, %v3741
    %v3792 = vpack.c.b16 %v3744, %v3743
    %v3793 = vpack.c.b16 %v3746, %v3745
    %v3794 = vpack.c.b16 %v3748, %v3747
    %v3795 = vpack.c.b16 %v3750, %v3749
    %v3796 = vpack.c.b16 %v3752, %v3751
    %v3797 = vpack.c.b16 %v3754, %v3753
    %v3798 = vpack.c.b16 %v3756, %v3755
    %v3799 = vpack.c.b16 %v3758, %v3757
    %v3800 = vpack.c.b16 %v3760, %v3759
    %v3801 = vpack.c.b16 %v3762, %v3761
    %v3802 = vpack.c.b16 %v3764, %v3763
    %v3803 = vpack.c.b16 %v3766, %v3765
    %v3804 = vpack.c.b16 %v3768, %v3767
    %v3805 = vpack.c.b16 %v3770, %v3769
    %v3806 = vpack.c.b16 %v3772, %v3771
    %v3807 = vpack.c.b16 %v3774, %v3773
    %v3808 = vpack.c.b16 %v3776, %v3775
    %3841 = vmatpush.bf16.msra.mxu0 %v3784
    %3842 = vmatpush.bf16.msra.mxu0 %v3783
    %3843 = vmatpush.bf16.msra.mxu0 %v3782
    %3844 = vmatpush.bf16.msra.mxu0 %v3781
    %3845 = vmatpush.bf16.msra.mxu0 %v3780
    %3846 = vmatpush.bf16.msra.mxu0 %v3779
    %3847 = vmatpush.bf16.msra.mxu0 %v3778
    %3848 = vmatpush.bf16.msra.mxu0 %v3777
    %3849 = vmatmul.bf16.gmra.mxu0 %v3573
    %v3850 = vpop.f32.mrf.mxu0
    %v3851 = vadd.f32 0.0, %v3850
    %v3852 = vpop.f32.mrf.mxu0
    %v3853 = vadd.f32 0.0, %v3852
    %3854 = vmatmul.bf16.gmra.mxu0 %v3577
    %v3855 = vpop.f32.mrf.mxu0
    %v3856 = vadd.f32 0.0, %v3855
    %v3857 = vpop.f32.mrf.mxu0
    %v3858 = vadd.f32 0.0, %v3857
    %3859 = vmatmul.bf16.gmra.mxu0 %v3581
    %v3860 = vpop.f32.mrf.mxu0
    %v3861 = vadd.f32 0.0, %v3860
    %v3862 = vpop.f32.mrf.mxu0
    %v3863 = vadd.f32 0.0, %v3862
    %3864 = vdwg.mxu0
    %3865 = vmatpush.bf16.msra.mxu0 %v3792
    %3866 = vmatpush.bf16.msra.mxu0 %v3791
    %3867 = vmatpush.bf16.msra.mxu0 %v3790
    %3868 = vmatpush.bf16.msra.mxu0 %v3789
    %3869 = vmatpush.bf16.msra.mxu0 %v3788
    %3870 = vmatpush.bf16.msra.mxu0 %v3787
    %3871 = vmatpush.bf16.msra.mxu0 %v3786
    %3872 = vmatpush.bf16.msra.mxu0 %v3785
    %3873 = vmatmul.bf16.gmra.mxu0 %v3574
    %v3874 = vpop.f32.mrf.mxu0
    %v3875 = vadd.f32 %v3851, %v3874
    %v3876 = vpop.f32.mrf.mxu0
    %v3877 = vadd.f32 %v3853, %v3876
    %3878 = vmatmul.bf16.gmra.mxu0 %v3578
    %v3879 = vpop.f32.mrf.mxu0
    %v3880 = vadd.f32 %v3856, %v3879
    %v3881 = vpop.f32.mrf.mxu0
    %v3882 = vadd.f32 %v3858, %v3881
    %3883 = vmatmul.bf16.gmra.mxu0 %v3582
    %v3884 = vpop.f32.mrf.mxu0
    %v3885 = vadd.f32 %v3861, %v3884
    %v3886 = vpop.f32.mrf.mxu0
    %v3887 = vadd.f32 %v3863, %v3886
    %3888 = vdwg.mxu0
    %3889 = vmatpush.bf16.msra.mxu0 %v3800
    %3890 = vmatpush.bf16.msra.mxu0 %v3799
    %3891 = vmatpush.bf16.msra.mxu0 %v3798
    %3892 = vmatpush.bf16.msra.mxu0 %v3797
    %3893 = vmatpush.bf16.msra.mxu0 %v3796
    %3894 = vmatpush.bf16.msra.mxu0 %v3795
    %3895 = vmatpush.bf16.msra.mxu0 %v3794
    %3896 = vmatpush.bf16.msra.mxu0 %v3793
    %3897 = vmatmul.bf16.gmra.mxu0 %v3575
    %v3898 = vpop.f32.mrf.mxu0
    %v3899 = vadd.f32 %v3875, %v3898
    %v3900 = vpop.f32.mrf.mxu0
    %v3901 = vadd.f32 %v3877, %v3900
    %3902 = vmatmul.bf16.gmra.mxu0 %v3579
    %v3903 = vpop.f32.mrf.mxu0
    %v3904 = vadd.f32 %v3880, %v3903
    %v3905 = vpop.f32.mrf.mxu0
    %v3906 = vadd.f32 %v3882, %v3905
    %3907 = vmatmul.bf16.gmra.mxu0 %v3583
    %v3908 = vpop.f32.mrf.mxu0
    %v3909 = vadd.f32 %v3885, %v3908
    %v3910 = vpop.f32.mrf.mxu0
    %v3911 = vadd.f32 %v3887, %v3910
    %3912 = vdwg.mxu0
    %3913 = vmatpush.bf16.msra.mxu0 %v3808
    %3914 = vmatpush.bf16.msra.mxu0 %v3807
    %3915 = vmatpush.bf16.msra.mxu0 %v3806
    %3916 = vmatpush.bf16.msra.mxu0 %v3805
    %3917 = vmatpush.bf16.msra.mxu0 %v3804
    %3918 = vmatpush.bf16.msra.mxu0 %v3803
    %3919 = vmatpush.bf16.msra.mxu0 %v3802
    %3920 = vmatpush.bf16.msra.mxu0 %v3801
    %3921 = vmatmul.bf16.gmra.mxu0 %v3576
    %v3922 = vpop.f32.mrf.mxu0
    %v3923 = vadd.f32 %v3899, %v3922
    %v3924 = vpop.f32.mrf.mxu0
    %v3925 = vadd.f32 %v3901, %v3924
    %3926 = vmatmul.bf16.gmra.mxu0 %v3580
    %v3927 = vpop.f32.mrf.mxu0
    %v3928 = vadd.f32 %v3904, %v3927
    %v3929 = vpop.f32.mrf.mxu0
    %v3930 = vadd.f32 %v3906, %v3929
    %3931 = vmatmul.bf16.gmra.mxu0 %v3584
    %v3932 = vpop.f32.mrf.mxu0
    %v3933 = vadd.f32 %v3909, %v3932
    %v3934 = vpop.f32.mrf.mxu0
    %v3935 = vadd.f32 %v3911, %v3934
    %3936 = vdwg.mxu0
    %v3937 = vadd.f32 %v3389, %v3923
    %v3938 = vadd.f32 %v3390, %v3925
    %v3939 = vadd.f32 %v3391, %v3928
    %v3940 = vadd.f32 %v3392, %v3930
    %v3941 = vadd.f32 %v3393, %v3933
    %v3942 = vadd.f32 %v3394, %v3935
    %v3943 = vadd.f32 %v1745, %v3937
    %v3944 = vadd.f32 %v1746, %v3938
    %v3945 = vadd.f32 %v1747, %v3939
    %v3946 = vadd.f32 %v1748, %v3940
    %v3947 = vadd.f32 %v1749, %v3941
    %v3948 = vadd.f32 %v1750, %v3942
    %v3949 = vld [vmem:[%s19] sm:$0x1]
    %v3951 = vperm.slane %v3949, 0
    %v3953 = vadd.f32 %v3943, %v3951
    %v3954 = vadd.f32 %v3944, %v3951
    %v3955 = vadd.f32 %v3945, %v3951
    %v3956 = vadd.f32 %v3946, %v3951
    %v3957 = vadd.f32 %v3947, %v3951
    %v3958 = vadd.f32 %v3948, %v3951
    %v3959 = vld [vmem:[%s20] sm:$0x1]
    %v3960 = vld [vmem:[%s21] sm:$0x1]
    %v3961 = vsel %vm140, %v3953, 0.0
    %3962 = vadd.xlane.f32.xlu0 %v3961
    %v3963 = vpop.xlane.xlu0 %3962
    %v3964 = vsel %vm140, %v3954, 0.0
    %3965 = vadd.xlane.f32.xlu0 %v3964
    %v3966 = vpop.xlane.xlu0 %3965
    %v3967 = vsel %vm140, %v3955, 0.0
    %3968 = vadd.xlane.f32.xlu0 %v3967
    %v3969 = vpop.xlane.xlu0 %3968
    %v3970 = vsel %vm140, %v3956, 0.0
    %3971 = vadd.xlane.f32.xlu0 %v3970
    %v3972 = vpop.xlane.xlu0 %3971
    %v3973 = vsel %vm140, %v3957, 0.0
    %3974 = vadd.xlane.f32.xlu0 %v3973
    %v3975 = vpop.xlane.xlu0 %3974
    %v3976 = vsel %vm140, %v3958, 0.0
    %3977 = vadd.xlane.f32.xlu0 %v3976
    %v3978 = vpop.xlane.xlu0 %3977
    %v3979 = vmul.f32 %v3963, %v165
    %v3980 = vmul.f32 %v3966, %v165
    %v3981 = vmul.f32 %v3969, %v165
    %v3982 = vmul.f32 %v3972, %v165
    %v3983 = vmul.f32 %v3975, %v165
    %v3984 = vmul.f32 %v3978, %v165
    %v3985 = vsub.f32 %v3953, %v3979
    %v3986 = vsub.f32 %v3954, %v3980
    %v3987 = vsub.f32 %v3955, %v3981
    %v3988 = vsub.f32 %v3956, %v3982
    %v3989 = vsub.f32 %v3957, %v3983
    %v3990 = vsub.f32 %v3958, %v3984
    %v3991 = vmul.f32 %v3985, %v3985
    %v3992 = vmul.f32 %v3986, %v3986
    %v3993 = vmul.f32 %v3987, %v3987
    %v3994 = vmul.f32 %v3988, %v3988
    %v3995 = vmul.f32 %v3989, %v3989
    %v3996 = vmul.f32 %v3990, %v3990
    %v3997 = vsel %vm140, %v3991, 0.0
    %3998 = vadd.xlane.f32.xlu0 %v3997
    %v3999 = vpop.xlane.xlu0 %3998
    %v4000 = vsel %vm140, %v3992, 0.0
    %4001 = vadd.xlane.f32.xlu0 %v4000
    %v4002 = vpop.xlane.xlu0 %4001
    %v4003 = vsel %vm140, %v3993, 0.0
    %4004 = vadd.xlane.f32.xlu0 %v4003
    %v4005 = vpop.xlane.xlu0 %4004
    %v4006 = vsel %vm140, %v3994, 0.0
    %4007 = vadd.xlane.f32.xlu0 %v4006
    %v4008 = vpop.xlane.xlu0 %4007
    %v4009 = vsel %vm140, %v3995, 0.0
    %4010 = vadd.xlane.f32.xlu0 %v4009
    %v4011 = vpop.xlane.xlu0 %4010
    %v4012 = vsel %vm140, %v3996, 0.0
    %4013 = vadd.xlane.f32.xlu0 %v4012
    %v4014 = vpop.xlane.xlu0 %4013
    %v4015 = vmul.f32 %v3999, %v165
    %v4016 = vmul.f32 %v4002, %v165
    %v4017 = vmul.f32 %v4005, %v165
    %v4018 = vmul.f32 %v4008, %v165
    %v4019 = vmul.f32 %v4011, %v165
    %v4020 = vmul.f32 %v4014, %v165
    %v4021 = vadd.f32 %v4015, 1e-05
    %v4022 = vadd.f32 %v4016, 1e-05
    %v4023 = vadd.f32 %v4017, 1e-05
    %v4024 = vadd.f32 %v4018, 1e-05
    %v4025 = vadd.f32 %v4019, 1e-05
    %v4026 = vadd.f32 %v4020, 1e-05
    %v4027 = vrsqrt.pop %v4021
    %v4028 = vmul.f32 %v4027, %v4021
    %v4029 = vmul.f32 %v4028, %v4027
    %v4030 = vmul.f32 0.5, %v4029
    %v4031 = vsub.f32 1.5, %v4030
    %v4032 = vmul.f32 %v4027, %v4031
    %vm4033 = vweird.f32 %v4021
    %vm4034 = vweird.f32 %v4027
    %vm4035 = vmor %vm4033, %vm4034
    %v4036 = vsel %vm4035, %v4027, %v4032
    %v4037 = vrsqrt.pop %v4022
    %v4038 = vmul.f32 %v4037, %v4022
    %v4039 = vmul.f32 %v4038, %v4037
    %v4040 = vmul.f32 0.5, %v4039
    %v4041 = vsub.f32 1.5, %v4040
    %v4042 = vmul.f32 %v4037, %v4041
    %vm4043 = vweird.f32 %v4022
    %vm4044 = vweird.f32 %v4037
    %vm4045 = vmor %vm4043, %vm4044
    %v4046 = vsel %vm4045, %v4037, %v4042
    %v4047 = vrsqrt.pop %v4023
    %v4048 = vmul.f32 %v4047, %v4023
    %v4049 = vmul.f32 %v4048, %v4047
    %v4050 = vmul.f32 0.5, %v4049
    %v4051 = vsub.f32 1.5, %v4050
    %v4052 = vmul.f32 %v4047, %v4051
    %vm4053 = vweird.f32 %v4023
    %vm4054 = vweird.f32 %v4047
    %vm4055 = vmor %vm4053, %vm4054
    %v4056 = vsel %vm4055, %v4047, %v4052
    %v4057 = vrsqrt.pop %v4024
    %v4058 = vmul.f32 %v4057, %v4024
    %v4059 = vmul.f32 %v4058, %v4057
    %v4060 = vmul.f32 0.5, %v4059
    %v4061 = vsub.f32 1.5, %v4060
    %v4062 = vmul.f32 %v4057, %v4061
    %vm4063 = vweird.f32 %v4024
    %vm4064 = vweird.f32 %v4057
    %vm4065 = vmor %vm4063, %vm4064
    %v4066 = vsel %vm4065, %v4057, %v4062
    %v4067 = vrsqrt.pop %v4025
    %v4068 = vmul.f32 %v4067, %v4025
    %v4069 = vmul.f32 %v4068, %v4067
    %v4070 = vmul.f32 0.5, %v4069
    %v4071 = vsub.f32 1.5, %v4070
    %v4072 = vmul.f32 %v4067, %v4071
    %vm4073 = vweird.f32 %v4025
    %vm4074 = vweird.f32 %v4067
    %vm4075 = vmor %vm4073, %vm4074
    %v4076 = vsel %vm4075, %v4067, %v4072
    %v4077 = vrsqrt.pop %v4026
    %v4078 = vmul.f32 %v4077, %v4026
    %v4079 = vmul.f32 %v4078, %v4077
    %v4080 = vmul.f32 0.5, %v4079
    %v4081 = vsub.f32 1.5, %v4080
    %v4082 = vmul.f32 %v4077, %v4081
    %vm4083 = vweird.f32 %v4026
    %vm4084 = vweird.f32 %v4077
    %vm4085 = vmor %vm4083, %vm4084
    %v4086 = vsel %vm4085, %v4077, %v4082
    %v4087 = vmul.f32 %v3985, %v4036
    %v4088 = vmul.f32 %v3986, %v4046
    %v4089 = vmul.f32 %v3987, %v4056
    %v4090 = vmul.f32 %v3988, %v4066
    %v4091 = vmul.f32 %v3989, %v4076
    %v4092 = vmul.f32 %v3990, %v4086
    %v4094 = vperm.slane %v3959, 0
    %v4096 = vmul.f32 %v4087, %v4094
    %v4097 = vmul.f32 %v4088, %v4094
    %v4098 = vmul.f32 %v4089, %v4094
    %v4099 = vmul.f32 %v4090, %v4094
    %v4100 = vmul.f32 %v4091, %v4094
    %v4101 = vmul.f32 %v4092, %v4094
    %v4103 = vperm.slane %v3960, 0
    %v4105 = vadd.f32 %v4096, %v4103
    %v4106 = vadd.f32 %v4097, %v4103
    %v4107 = vadd.f32 %v4098, %v4103
    %v4108 = vadd.f32 %v4099, %v4103
    %v4109 = vadd.f32 %v4100, %v4103
    %v4110 = vadd.f32 %v4101, %v4103
    %v4111 = vpack.c.bf16 %v4106, %v4105
    %v4112 = vpack.c.bf16 %v4108, %v4107
    %v4113 = vpack.c.bf16 %v4110, %v4109
    %s4114 = scalar_lea.vmem %s6, 16
    %v4115 = vld [vmem:[%s4114] sm:$0xf]
    %v4116 = vld [vmem:[%s4114 + $0x4] sm:$0xf]
    %v4117 = vld [vmem:[%s4114 + $0x8] sm:$0xf]
    %v4118 = vld [vmem:[%s4114 + $0xc] sm:$0xf]
    %s4119 = scalar_lea.vmem %s7, 1
    %v4120 = vld [vmem:[%s4119] sm:$0x1]
    %v4122 = vperm.slane %v4120, 0
    %v4128 = vunpack.c.l.b16 %v4115
    %v4129 = vunpack.c.l.b16 %v4116
    %v4130 = vunpack.c.l.b16 %v4117
    %v4131 = vunpack.c.l.b16 %v4118
    %v4132 = vpack.c.b16 %v4129, %v4128
    %v4133 = vpack.c.b16 %v4131, %v4130
    %v4137 = vsel %vm140, %v4111, 0
    %v4140 = vsel %vm140, %v4112, 0
    %v4143 = vsel %vm140, %v4113, 0
    %4145 = vmatpush.bf16.msra.mxu0 0
    %4146 = vmatpush.bf16.msra.mxu0 0
    %4147 = vmatpush.bf16.msra.mxu0 0
    %4148 = vmatpush.bf16.msra.mxu0 0
    %4149 = vmatpush.bf16.msra.mxu0 0
    %4150 = vmatpush.bf16.msra.mxu0 0
    %4151 = vmatpush.bf16.msra.mxu0 %v4133
    %4152 = vmatpush.bf16.msra.mxu0 %v4132
    %4153 = vmatmul.bf16.gmra.mxu0 %v4137
    %v4154 = vpop.f32.mrf.mxu0
    %v4155 = vadd.f32 %v4122, %v4154
    %v4156 = vpop.f32.mrf.mxu0
    %v4157 = vadd.f32 %v4122, %v4156
    %4158 = vmatmul.bf16.gmra.mxu0 %v4140
    %v4159 = vpop.f32.mrf.mxu0
    %v4160 = vadd.f32 %v4122, %v4159
    %v4161 = vpop.f32.mrf.mxu0
    %v4162 = vadd.f32 %v4122, %v4161
    %4163 = vmatmul.bf16.gmra.mxu0 %v4143
    %v4164 = vpop.f32.mrf.mxu0
    %v4165 = vadd.f32 %v4122, %v4164
    %v4166 = vpop.f32.mrf.mxu0
    %v4167 = vadd.f32 %v4122, %v4166
    %4168 = vdwg.mxu0
    %s4169 = scalar_lea.vmem %s8, 16
    %v4170 = vld [vmem:[%s4169] sm:$0xf]
    %v4171 = vld [vmem:[%s4169 + $0x4] sm:$0xf]
    %v4172 = vld [vmem:[%s4169 + $0x8] sm:$0xf]
    %v4173 = vld [vmem:[%s4169 + $0xc] sm:$0xf]
    %s4174 = scalar_lea.vmem %s9, 1
    %v4175 = vld [vmem:[%s4174] sm:$0x1]
    %v4177 = vperm.slane %v4175, 0
    %v4183 = vunpack.c.l.b16 %v4170
    %v4184 = vunpack.c.l.b16 %v4171
    %v4185 = vunpack.c.l.b16 %v4172
    %v4186 = vunpack.c.l.b16 %v4173
    %v4187 = vpack.c.b16 %v4184, %v4183
    %v4188 = vpack.c.b16 %v4186, %v4185
    %4191 = vmatpush.bf16.msra.mxu0 0
    %4192 = vmatpush.bf16.msra.mxu0 0
    %4193 = vmatpush.bf16.msra.mxu0 0
    %4194 = vmatpush.bf16.msra.mxu0 0
    %4195 = vmatpush.bf16.msra.mxu0 0
    %4196 = vmatpush.bf16.msra.mxu0 0
    %4197 = vmatpush.bf16.msra.mxu0 %v4188
    %4198 = vmatpush.bf16.msra.mxu0 %v4187
    %4199 = vmatmul.bf16.gmra.mxu0 %v4137
    %v4200 = vpop.f32.mrf.mxu0
    %v4201 = vadd.f32 %v4177, %v4200
    %v4202 = vpop.f32.mrf.mxu0
    %v4203 = vadd.f32 %v4177, %v4202
    %4204 = vmatmul.bf16.gmra.mxu0 %v4140
    %v4205 = vpop.f32.mrf.mxu0
    %v4206 = vadd.f32 %v4177, %v4205
    %v4207 = vpop.f32.mrf.mxu0
    %v4208 = vadd.f32 %v4177, %v4207
    %4209 = vmatmul.bf16.gmra.mxu0 %v4143
    %v4210 = vpop.f32.mrf.mxu0
    %v4211 = vadd.f32 %v4177, %v4210
    %v4212 = vpop.f32.mrf.mxu0
    %v4213 = vadd.f32 %v4177, %v4212
    %4214 = vdwg.mxu0
    %s4215 = scalar_lea.vmem %s10, 16
    %v4216 = vld [vmem:[%s4215] sm:$0xf]
    %v4217 = vld [vmem:[%s4215 + $0x4] sm:$0xf]
    %v4218 = vld [vmem:[%s4215 + $0x8] sm:$0xf]
    %v4219 = vld [vmem:[%s4215 + $0xc] sm:$0xf]
    %s4220 = scalar_lea.vmem %s11, 1
    %v4221 = vld [vmem:[%s4220] sm:$0x1]
    %v4223 = vperm.slane %v4221, 0
    %v4229 = vunpack.c.l.b16 %v4216
    %v4230 = vunpack.c.l.b16 %v4217
    %v4231 = vunpack.c.l.b16 %v4218
    %v4232 = vunpack.c.l.b16 %v4219
    %v4233 = vpack.c.b16 %v4230, %v4229
    %v4234 = vpack.c.b16 %v4232, %v4231
    %4237 = vmatpush.bf16.msra.mxu0 0
    %4238 = vmatpush.bf16.msra.mxu0 0
    %4239 = vmatpush.bf16.msra.mxu0 0
    %4240 = vmatpush.bf16.msra.mxu0 0
    %4241 = vmatpush.bf16.msra.mxu0 0
    %4242 = vmatpush.bf16.msra.mxu0 0
    %4243 = vmatpush.bf16.msra.mxu0 %v4234
    %4244 = vmatpush.bf16.msra.mxu0 %v4233
    %4245 = vmatmul.bf16.gmra.mxu0 %v4137
    %v4246 = vpop.f32.mrf.mxu0
    %v4247 = vadd.f32 %v4223, %v4246
    %v4248 = vpop.f32.mrf.mxu0
    %v4249 = vadd.f32 %v4223, %v4248
    %4250 = vmatmul.bf16.gmra.mxu0 %v4140
    %v4251 = vpop.f32.mrf.mxu0
    %v4252 = vadd.f32 %v4223, %v4251
    %v4253 = vpop.f32.mrf.mxu0
    %v4254 = vadd.f32 %v4223, %v4253
    %4255 = vmatmul.bf16.gmra.mxu0 %v4143
    %v4256 = vpop.f32.mrf.mxu0
    %v4257 = vadd.f32 %v4223, %v4256
    %v4258 = vpop.f32.mrf.mxu0
    %v4259 = vadd.f32 %v4223, %v4258
    %4260 = vdwg.mxu0
    %v4261 = vmul.f32 %v4155, 0.35355338
    %v4262 = vmul.f32 %v4157, 0.35355338
    %v4263 = vmul.f32 %v4160, 0.35355338
    %v4264 = vmul.f32 %v4162, 0.35355338
    %v4265 = vmul.f32 %v4165, 0.35355338
    %v4266 = vmul.f32 %v4167, 0.35355338
    %v4267 = vpack.c.bf16 %v4261, %v4261
    %v4268 = vpack.c.bf16 %v4262, %v4262
    %v4269 = vpack.c.bf16 %v4263, %v4263
    %v4270 = vpack.c.bf16 %v4264, %v4264
    %v4271 = vpack.c.bf16 %v4265, %v4265
    %v4272 = vpack.c.bf16 %v4266, %v4266
    %v4273 = vpack.c.bf16 %v4201, %v4201
    %v4274 = vpack.c.bf16 %v4203, %v4203
    %v4275 = vpack.c.bf16 %v4206, %v4206
    %v4276 = vpack.c.bf16 %v4208, %v4208
    %v4277 = vpack.c.bf16 %v4211, %v4211
    %v4278 = vpack.c.bf16 %v4213, %v4213
    %v4279 = vpack.c.bf16 %v4247, %v4247
    %v4280 = vpack.c.bf16 %v4249, %v4249
    %v4281 = vpack.c.bf16 %v4252, %v4252
    %v4282 = vpack.c.bf16 %v4254, %v4254
    %v4283 = vpack.c.bf16 %v4257, %v4257
    %v4284 = vpack.c.bf16 %v4259, %v4259
    %v4288 = vunpack.c.l.b16 %v4267
    %v4289 = vunpack.c.l.b16 %v4268
    %v4290 = vunpack.c.l.b16 %v4269
    %v4291 = vpack.c.b16 %v4289, %v4288
    %v4292 = vpack.c.b16 %v4290, %v4290
    %v4296 = vunpack.c.l.b16 %v4273
    %v4297 = vunpack.c.l.b16 %v4274
    %v4298 = vunpack.c.l.b16 %v4275
    %v4299 = vpack.c.b16 %v4297, %v4296
    %v4300 = vpack.c.b16 %v4298, %v4298
    %v4302 = vsel %vm488, %v4291, 0
    %v4305 = vsel %vm488, %v4292, 0
    %v4308 = vsel %vm488, %v4299, 0
    %v4311 = vsel %vm488, %v4300, 0
    %4313 = vmatpush.bf16.xpose.msra.mxu0 0
    %4314 = vmatpush.bf16.xpose.msra.mxu0 0
    %4315 = vmatpush.bf16.xpose.msra.mxu0 0
    %4316 = vmatpush.bf16.xpose.msra.mxu0 0
    %4317 = vmatpush.bf16.xpose.msra.mxu0 0
    %4318 = vmatpush.bf16.xpose.msra.mxu0 0
    %4319 = vmatpush.bf16.xpose.msra.mxu0 %v4311
    %4320 = vmatpush.bf16.xpose.msra.mxu0 %v4308
    %4321 = vmatmul.bf16.gmra.mxu0 %v4302
    %v4322 = vpop.f32.mrf.mxu0
    %v4323 = vadd.f32 %v298, %v4322
    %v4324 = vpop.f32.mrf.mxu0
    %v4325 = vadd.f32 %v299, %v4324
    %4326 = vmatmul.bf16.gmra.mxu0 %v4305
    %v4327 = vpop.f32.mrf.mxu0
    %v4328 = vadd.f32 %v300, %v4327
    %v4329 = vpop.f32.mrf.mxu0
    %4330 = vdwg.mxu0
    %v4334 = vunpack.c.l.b16 %v4270
    %v4335 = vunpack.c.l.b16 %v4271
    %v4336 = vunpack.c.l.b16 %v4272
    %v4337 = vpack.c.b16 %v4335, %v4334
    %v4338 = vpack.c.b16 %v4336, %v4336
    %v4342 = vunpack.c.l.b16 %v4276
    %v4343 = vunpack.c.l.b16 %v4277
    %v4344 = vunpack.c.l.b16 %v4278
    %v4345 = vpack.c.b16 %v4343, %v4342
    %v4346 = vpack.c.b16 %v4344, %v4344
    %v4348 = vsel %vm488, %v4337, 0
    %v4351 = vsel %vm488, %v4338, 0
    %v4354 = vsel %vm488, %v4345, 0
    %v4357 = vsel %vm488, %v4346, 0
    %4359 = vmatpush.bf16.xpose.msra.mxu0 0
    %4360 = vmatpush.bf16.xpose.msra.mxu0 0
    %4361 = vmatpush.bf16.xpose.msra.mxu0 0
    %4362 = vmatpush.bf16.xpose.msra.mxu0 0
    %4363 = vmatpush.bf16.xpose.msra.mxu0 0
    %4364 = vmatpush.bf16.xpose.msra.mxu0 0
    %4365 = vmatpush.bf16.xpose.msra.mxu0 %v4357
    %4366 = vmatpush.bf16.xpose.msra.mxu0 %v4354
    %4367 = vmatmul.bf16.gmra.mxu0 %v4348
    %v4368 = vpop.f32.mrf.mxu0
    %v4369 = vadd.f32 %v301, %v4368
    %v4370 = vpop.f32.mrf.mxu0
    %v4371 = vadd.f32 %v302, %v4370
    %4372 = vmatmul.bf16.gmra.mxu0 %v4351
    %v4373 = vpop.f32.mrf.mxu0
    %v4374 = vadd.f32 %v303, %v4373
    %v4375 = vpop.f32.mrf.mxu0
    %4376 = vdwg.mxu0
    %v4377 = vsel %vm565, %v4323, -inf
    %4378 = vmax.xlane.f32.xlu0 %v4377
    %v4379 = vpop.xlane.xlu0 %4378
    %v4380 = vsel %vm565, %v4325, -inf
    %4381 = vmax.xlane.f32.xlu0 %v4380
    %v4382 = vpop.xlane.xlu0 %4381
    %v4383 = vsel %vm565, %v4328, -inf
    %4384 = vmax.xlane.f32.xlu0 %v4383
    %v4385 = vpop.xlane.xlu0 %4384
    %v4386 = vsel %vm565, %v4369, -inf
    %4387 = vmax.xlane.f32.xlu0 %v4386
    %v4388 = vpop.xlane.xlu0 %4387
    %v4389 = vsel %vm565, %v4371, -inf
    %4390 = vmax.xlane.f32.xlu0 %v4389
    %v4391 = vpop.xlane.xlu0 %4390
    %v4392 = vsel %vm565, %v4374, -inf
    %4393 = vmax.xlane.f32.xlu0 %v4392
    %v4394 = vpop.xlane.xlu0 %4393
    %v4395 = vsub.f32 %v4323, %v4379
    %v4396 = vsub.f32 %v4325, %v4382
    %v4397 = vsub.f32 %v4328, %v4385
    %v4398 = vsub.f32 %v4369, %v4388
    %v4399 = vsub.f32 %v4371, %v4391
    %v4400 = vsub.f32 %v4374, %v4394
    %v4401 = vmul.f32 %v4395, 1.442695
    %v4402 = vpow.pop %v4401
    %v4403 = vmul.f32 %v4396, 1.442695
    %v4404 = vpow.pop %v4403
    %v4405 = vmul.f32 %v4397, 1.442695
    %v4406 = vpow.pop %v4405
    %v4407 = vmul.f32 %v4398, 1.442695
    %v4408 = vpow.pop %v4407
    %v4409 = vmul.f32 %v4399, 1.442695
    %v4410 = vpow.pop %v4409
    %v4411 = vmul.f32 %v4400, 1.442695
    %v4412 = vpow.pop %v4411
    %v4413 = vsel %vm565, %v4402, 0.0
    %4414 = vadd.xlane.f32.xlu0 %v4413
    %v4415 = vpop.xlane.xlu0 %4414
    %v4416 = vsel %vm565, %v4404, 0.0
    %4417 = vadd.xlane.f32.xlu0 %v4416
    %v4418 = vpop.xlane.xlu0 %4417
    %v4419 = vsel %vm565, %v4406, 0.0
    %4420 = vadd.xlane.f32.xlu0 %v4419
    %v4421 = vpop.xlane.xlu0 %4420
    %v4422 = vsel %vm565, %v4408, 0.0
    %4423 = vadd.xlane.f32.xlu0 %v4422
    %v4424 = vpop.xlane.xlu0 %4423
    %v4425 = vsel %vm565, %v4410, 0.0
    %4426 = vadd.xlane.f32.xlu0 %v4425
    %v4427 = vpop.xlane.xlu0 %4426
    %v4428 = vsel %vm565, %v4412, 0.0
    %4429 = vadd.xlane.f32.xlu0 %v4428
    %v4430 = vpop.xlane.xlu0 %4429
    %v4431 = vrcp.pop %v4415
    %v4432 = vrcp.pop %v4418
    %v4433 = vrcp.pop %v4421
    %v4434 = vrcp.pop %v4424
    %v4435 = vrcp.pop %v4427
    %v4436 = vrcp.pop %v4430
    %v4437 = vmul.f32 %v4402, %v4431
    %v4438 = vmul.f32 %v4404, %v4432
    %v4439 = vmul.f32 %v4406, %v4433
    %v4440 = vmul.f32 %v4408, %v4434
    %v4441 = vmul.f32 %v4410, %v4435
    %v4442 = vmul.f32 %v4412, %v4436
    %v4443 = vpack.c.bf16 %v4437, %v4437
    %v4444 = vpack.c.bf16 %v4438, %v4438
    %v4445 = vpack.c.bf16 %v4439, %v4439
    %v4446 = vpack.c.bf16 %v4440, %v4440
    %v4447 = vpack.c.bf16 %v4441, %v4441
    %v4448 = vpack.c.bf16 %v4442, %v4442
    %v4452 = vunpack.c.l.b16 %v4443
    %v4453 = vunpack.c.l.b16 %v4444
    %v4454 = vunpack.c.l.b16 %v4445
    %v4455 = vpack.c.b16 %v4453, %v4452
    %v4456 = vpack.c.b16 %v4454, %v4454
    %v4460 = vunpack.c.l.b16 %v4279
    %v4461 = vunpack.c.l.b16 %v4280
    %v4462 = vunpack.c.l.b16 %v4281
    %v4463 = vpack.c.b16 %v4461, %v4460
    %v4464 = vpack.c.b16 %v4462, %v4462
    %v4467 = vsel %vm565, %v4455, 0
    %v4470 = vsel %vm565, %v4456, 0
    %v4473 = vsel %vm661, %v4464, 0
    %4475 = vmatpush.bf16.msra.mxu0 0
    %4476 = vmatpush.bf16.msra.mxu0 0
    %4477 = vmatpush.bf16.msra.mxu0 0
    %4478 = vmatpush.bf16.msra.mxu0 0
    %4479 = vmatpush.bf16.msra.mxu0 0
    %4480 = vmatpush.bf16.msra.mxu0 0
    %4481 = vmatpush.bf16.msra.mxu0 %v4473
    %4482 = vmatpush.bf16.msra.mxu0 %v4463
    %4483 = vmatmul.bf16.gmra.mxu0 %v4467
    %v4484 = vpop.f32.mrf.mxu0
    %v4485 = vadd.f32 0.0, %v4484
    %v4486 = vpop.f32.mrf.mxu0
    %v4487 = vadd.f32 0.0, %v4486
    %4488 = vmatmul.bf16.gmra.mxu0 %v4470
    %v4489 = vpop.f32.mrf.mxu0
    %v4490 = vadd.f32 0.0, %v4489
    %v4491 = vpop.f32.mrf.mxu0
    %4492 = vdwg.mxu0
    %v4496 = vunpack.c.l.b16 %v4446
    %v4497 = vunpack.c.l.b16 %v4447
    %v4498 = vunpack.c.l.b16 %v4448
    %v4499 = vpack.c.b16 %v4497, %v4496
    %v4500 = vpack.c.b16 %v4498, %v4498
    %v4504 = vunpack.c.l.b16 %v4282
    %v4505 = vunpack.c.l.b16 %v4283
    %v4506 = vunpack.c.l.b16 %v4284
    %v4507 = vpack.c.b16 %v4505, %v4504
    %v4508 = vpack.c.b16 %v4506, %v4506
    %v4511 = vsel %vm565, %v4499, 0
    %v4514 = vsel %vm565, %v4500, 0
    %v4517 = vsel %vm661, %v4508, 0
    %4519 = vmatpush.bf16.msra.mxu0 0
    %4520 = vmatpush.bf16.msra.mxu0 0
    %4521 = vmatpush.bf16.msra.mxu0 0
    %4522 = vmatpush.bf16.msra.mxu0 0
    %4523 = vmatpush.bf16.msra.mxu0 0
    %4524 = vmatpush.bf16.msra.mxu0 0
    %4525 = vmatpush.bf16.msra.mxu0 %v4517
    %4526 = vmatpush.bf16.msra.mxu0 %v4507
    %4527 = vmatmul.bf16.gmra.mxu0 %v4511
    %v4528 = vpop.f32.mrf.mxu0
    %v4529 = vadd.f32 0.0, %v4528
    %v4530 = vpop.f32.mrf.mxu0
    %v4531 = vadd.f32 0.0, %v4530
    %4532 = vmatmul.bf16.gmra.mxu0 %v4514
    %v4533 = vpop.f32.mrf.mxu0
    %v4534 = vadd.f32 0.0, %v4533
    %v4535 = vpop.f32.mrf.mxu0
    %4536 = vdwg.mxu0
    %v4537 = vpack.c.bf16 %v4487, %v4485
    %v4538 = vpack.c.bf16 %v4529, %v4490
    %v4539 = vpack.c.bf16 %v4534, %v4531
    %s4540 = scalar_lea.vmem %s12, 16
    %v4541 = vld [vmem:[%s4540] sm:$0xf]
    %4542 = vrot.lane.b32.xlu0 %v4291, 120
    %v4543 = vpop.permute.xlu0 %4542
    %4544 = vrot.lane.b32.xlu0 %v4292, 120
    %v4545 = vpop.permute.xlu0 %4544
    %4546 = vrot.lane.b32.xlu0 %v4299, 120
    %v4547 = vpop.permute.xlu0 %4546
    %4548 = vrot.lane.b32.xlu0 %v4300, 120
    %v4549 = vpop.permute.xlu0 %4548
    %v4551 = vsel %vm488, %v4543, 0
    %v4554 = vsel %vm488, %v4545, 0
    %v4557 = vsel %vm488, %v4547, 0
    %v4560 = vsel %vm488, %v4549, 0
    %4562 = vmatpush.bf16.xpose.msra.mxu0 0
    %4563 = vmatpush.bf16.xpose.msra.mxu0 0
    %4564 = vmatpush.bf16.xpose.msra.mxu0 0
    %4565 = vmatpush.bf16.xpose.msra.mxu0 0
    %4566 = vmatpush.bf16.xpose.msra.mxu0 0
    %4567 = vmatpush.bf16.xpose.msra.mxu0 0
    %4568 = vmatpush.bf16.xpose.msra.mxu0 %v4560
    %4569 = vmatpush.bf16.xpose.msra.mxu0 %v4557
    %4570 = vmatmul.bf16.gmra.mxu0 %v4551
    %v4571 = vpop.f32.mrf.mxu0
    %v4572 = vadd.f32 %v298, %v4571
    %v4573 = vpop.f32.mrf.mxu0
    %v4574 = vadd.f32 %v299, %v4573
    %4575 = vmatmul.bf16.gmra.mxu0 %v4554
    %v4576 = vpop.f32.mrf.mxu0
    %v4577 = vadd.f32 %v300, %v4576
    %v4578 = vpop.f32.mrf.mxu0
    %4579 = vdwg.mxu0
    %4580 = vrot.lane.b32.xlu0 %v4337, 120
    %v4581 = vpop.permute.xlu0 %4580
    %4582 = vrot.lane.b32.xlu0 %v4338, 120
    %v4583 = vpop.permute.xlu0 %4582
    %4584 = vrot.lane.b32.xlu0 %v4345, 120
    %v4585 = vpop.permute.xlu0 %4584
    %4586 = vrot.lane.b32.xlu0 %v4346, 120
    %v4587 = vpop.permute.xlu0 %4586
    %v4589 = vsel %vm488, %v4581, 0
    %v4592 = vsel %vm488, %v4583, 0
    %v4595 = vsel %vm488, %v4585, 0
    %v4598 = vsel %vm488, %v4587, 0
    %4600 = vmatpush.bf16.xpose.msra.mxu0 0
    %4601 = vmatpush.bf16.xpose.msra.mxu0 0
    %4602 = vmatpush.bf16.xpose.msra.mxu0 0
    %4603 = vmatpush.bf16.xpose.msra.mxu0 0
    %4604 = vmatpush.bf16.xpose.msra.mxu0 0
    %4605 = vmatpush.bf16.xpose.msra.mxu0 0
    %4606 = vmatpush.bf16.xpose.msra.mxu0 %v4598
    %4607 = vmatpush.bf16.xpose.msra.mxu0 %v4595
    %4608 = vmatmul.bf16.gmra.mxu0 %v4589
    %v4609 = vpop.f32.mrf.mxu0
    %v4610 = vadd.f32 %v301, %v4609
    %v4611 = vpop.f32.mrf.mxu0
    %v4612 = vadd.f32 %v302, %v4611
    %4613 = vmatmul.bf16.gmra.mxu0 %v4592
    %v4614 = vpop.f32.mrf.mxu0
    %v4615 = vadd.f32 %v303, %v4614
    %v4616 = vpop.f32.mrf.mxu0
    %4617 = vdwg.mxu0
    %v4618 = vsel %vm565, %v4572, -inf
    %4619 = vmax.xlane.f32.xlu0 %v4618
    %v4620 = vpop.xlane.xlu0 %4619
    %v4621 = vsel %vm565, %v4574, -inf
    %4622 = vmax.xlane.f32.xlu0 %v4621
    %v4623 = vpop.xlane.xlu0 %4622
    %v4624 = vsel %vm565, %v4577, -inf
    %4625 = vmax.xlane.f32.xlu0 %v4624
    %v4626 = vpop.xlane.xlu0 %4625
    %v4627 = vsel %vm565, %v4610, -inf
    %4628 = vmax.xlane.f32.xlu0 %v4627
    %v4629 = vpop.xlane.xlu0 %4628
    %v4630 = vsel %vm565, %v4612, -inf
    %4631 = vmax.xlane.f32.xlu0 %v4630
    %v4632 = vpop.xlane.xlu0 %4631
    %v4633 = vsel %vm565, %v4615, -inf
    %4634 = vmax.xlane.f32.xlu0 %v4633
    %v4635 = vpop.xlane.xlu0 %4634
    %v4636 = vsub.f32 %v4572, %v4620
    %v4637 = vsub.f32 %v4574, %v4623
    %v4638 = vsub.f32 %v4577, %v4626
    %v4639 = vsub.f32 %v4610, %v4629
    %v4640 = vsub.f32 %v4612, %v4632
    %v4641 = vsub.f32 %v4615, %v4635
    %v4642 = vmul.f32 %v4636, 1.442695
    %v4643 = vpow.pop %v4642
    %v4644 = vmul.f32 %v4637, 1.442695
    %v4645 = vpow.pop %v4644
    %v4646 = vmul.f32 %v4638, 1.442695
    %v4647 = vpow.pop %v4646
    %v4648 = vmul.f32 %v4639, 1.442695
    %v4649 = vpow.pop %v4648
    %v4650 = vmul.f32 %v4640, 1.442695
    %v4651 = vpow.pop %v4650
    %v4652 = vmul.f32 %v4641, 1.442695
    %v4653 = vpow.pop %v4652
    %v4654 = vsel %vm565, %v4643, 0.0
    %4655 = vadd.xlane.f32.xlu0 %v4654
    %v4656 = vpop.xlane.xlu0 %4655
    %v4657 = vsel %vm565, %v4645, 0.0
    %4658 = vadd.xlane.f32.xlu0 %v4657
    %v4659 = vpop.xlane.xlu0 %4658
    %v4660 = vsel %vm565, %v4647, 0.0
    %4661 = vadd.xlane.f32.xlu0 %v4660
    %v4662 = vpop.xlane.xlu0 %4661
    %v4663 = vsel %vm565, %v4649, 0.0
    %4664 = vadd.xlane.f32.xlu0 %v4663
    %v4665 = vpop.xlane.xlu0 %4664
    %v4666 = vsel %vm565, %v4651, 0.0
    %4667 = vadd.xlane.f32.xlu0 %v4666
    %v4668 = vpop.xlane.xlu0 %4667
    %v4669 = vsel %vm565, %v4653, 0.0
    %4670 = vadd.xlane.f32.xlu0 %v4669
    %v4671 = vpop.xlane.xlu0 %4670
    %v4672 = vrcp.pop %v4656
    %v4673 = vrcp.pop %v4659
    %v4674 = vrcp.pop %v4662
    %v4675 = vrcp.pop %v4665
    %v4676 = vrcp.pop %v4668
    %v4677 = vrcp.pop %v4671
    %v4678 = vmul.f32 %v4643, %v4672
    %v4679 = vmul.f32 %v4645, %v4673
    %v4680 = vmul.f32 %v4647, %v4674
    %v4681 = vmul.f32 %v4649, %v4675
    %v4682 = vmul.f32 %v4651, %v4676
    %v4683 = vmul.f32 %v4653, %v4677
    %v4684 = vpack.c.bf16 %v4678, %v4678
    %v4685 = vpack.c.bf16 %v4679, %v4679
    %v4686 = vpack.c.bf16 %v4680, %v4680
    %v4687 = vpack.c.bf16 %v4681, %v4681
    %v4688 = vpack.c.bf16 %v4682, %v4682
    %v4689 = vpack.c.bf16 %v4683, %v4683
    %v4693 = vunpack.c.l.b16 %v4684
    %v4694 = vunpack.c.l.b16 %v4685
    %v4695 = vunpack.c.l.b16 %v4686
    %v4696 = vpack.c.b16 %v4694, %v4693
    %v4697 = vpack.c.b16 %v4695, %v4695
    %4698 = vrot.lane.b32.xlu0 %v4463, 120
    %v4699 = vpop.permute.xlu0 %4698
    %4700 = vrot.lane.b32.xlu0 %v4464, 120
    %v4701 = vpop.permute.xlu0 %4700
    %v4704 = vsel %vm565, %v4696, 0
    %v4707 = vsel %vm565, %v4697, 0
    %v4710 = vsel %vm661, %v4701, 0
    %4712 = vmatpush.bf16.msra.mxu0 0
    %4713 = vmatpush.bf16.msra.mxu0 0
    %4714 = vmatpush.bf16.msra.mxu0 0
    %4715 = vmatpush.bf16.msra.mxu0 0
    %4716 = vmatpush.bf16.msra.mxu0 0
    %4717 = vmatpush.bf16.msra.mxu0 0
    %4718 = vmatpush.bf16.msra.mxu0 %v4710
    %4719 = vmatpush.bf16.msra.mxu0 %v4699
    %4720 = vmatmul.bf16.gmra.mxu0 %v4704
    %v4721 = vpop.f32.mrf.mxu0
    %v4722 = vadd.f32 0.0, %v4721
    %v4723 = vpop.f32.mrf.mxu0
    %v4724 = vadd.f32 0.0, %v4723
    %4725 = vmatmul.bf16.gmra.mxu0 %v4707
    %v4726 = vpop.f32.mrf.mxu0
    %v4727 = vadd.f32 0.0, %v4726
    %v4728 = vpop.f32.mrf.mxu0
    %4729 = vdwg.mxu0
    %v4733 = vunpack.c.l.b16 %v4687
    %v4734 = vunpack.c.l.b16 %v4688
    %v4735 = vunpack.c.l.b16 %v4689
    %v4736 = vpack.c.b16 %v4734, %v4733
    %v4737 = vpack.c.b16 %v4735, %v4735
    %4738 = vrot.lane.b32.xlu0 %v4507, 120
    %v4739 = vpop.permute.xlu0 %4738
    %4740 = vrot.lane.b32.xlu0 %v4508, 120
    %v4741 = vpop.permute.xlu0 %4740
    %v4744 = vsel %vm565, %v4736, 0
    %v4747 = vsel %vm565, %v4737, 0
    %v4750 = vsel %vm661, %v4741, 0
    %4752 = vmatpush.bf16.msra.mxu0 0
    %4753 = vmatpush.bf16.msra.mxu0 0
    %4754 = vmatpush.bf16.msra.mxu0 0
    %4755 = vmatpush.bf16.msra.mxu0 0
    %4756 = vmatpush.bf16.msra.mxu0 0
    %4757 = vmatpush.bf16.msra.mxu0 0
    %4758 = vmatpush.bf16.msra.mxu0 %v4750
    %4759 = vmatpush.bf16.msra.mxu0 %v4739
    %4760 = vmatmul.bf16.gmra.mxu0 %v4744
    %v4761 = vpop.f32.mrf.mxu0
    %v4762 = vadd.f32 0.0, %v4761
    %v4763 = vpop.f32.mrf.mxu0
    %v4764 = vadd.f32 0.0, %v4763
    %4765 = vmatmul.bf16.gmra.mxu0 %v4747
    %v4766 = vpop.f32.mrf.mxu0
    %v4767 = vadd.f32 0.0, %v4766
    %v4768 = vpop.f32.mrf.mxu0
    %4769 = vdwg.mxu0
    %v4770 = vpack.c.bf16 %v4724, %v4722
    %v4771 = vpack.c.bf16 %v4762, %v4727
    %v4772 = vpack.c.bf16 %v4767, %v4764
    %v4773 = vld [vmem:[%s4540 + $0x4] sm:$0xf]
    %v4775 = vsel %vm488, %v4770, 0
    %v4778 = vsel %vm488, %v4771, 0
    %v4781 = vsel %vm488, %v4772, 0
    %v4784 = vsel %vm661, %v4773, 0
    %4786 = vmatpush.bf16.msra.mxu0 0
    %4787 = vmatpush.bf16.msra.mxu0 0
    %4788 = vmatpush.bf16.msra.mxu0 0
    %4789 = vmatpush.bf16.msra.mxu0 0
    %4790 = vmatpush.bf16.msra.mxu0 0
    %4791 = vmatpush.bf16.msra.mxu0 0
    %4792 = vmatpush.bf16.msra.mxu0 0
    %4793 = vmatpush.bf16.msra.mxu0 %v4784
    %4794 = vmatmul.bf16.gmra.mxu0 %v4775
    %v4795 = vpop.f32.mrf.mxu0
    %v4796 = vadd.f32 0.0, %v4795
    %v4797 = vpop.f32.mrf.mxu0
    %v4798 = vadd.f32 0.0, %v4797
    %4799 = vmatmul.bf16.gmra.mxu0 %v4778
    %v4800 = vpop.f32.mrf.mxu0
    %v4801 = vadd.f32 0.0, %v4800
    %v4802 = vpop.f32.mrf.mxu0
    %v4803 = vadd.f32 0.0, %v4802
    %4804 = vmatmul.bf16.gmra.mxu0 %v4781
    %v4805 = vpop.f32.mrf.mxu0
    %v4806 = vadd.f32 0.0, %v4805
    %v4807 = vpop.f32.mrf.mxu0
    %v4808 = vadd.f32 0.0, %v4807
    %4809 = vdwg.mxu0
    %v4811 = vsel %vm488, %v4537, 0
    %v4814 = vsel %vm488, %v4538, 0
    %v4817 = vsel %vm488, %v4539, 0
    %v4820 = vsel %vm661, %v4541, 0
    %4822 = vmatpush.bf16.msra.mxu0 0
    %4823 = vmatpush.bf16.msra.mxu0 0
    %4824 = vmatpush.bf16.msra.mxu0 0
    %4825 = vmatpush.bf16.msra.mxu0 0
    %4826 = vmatpush.bf16.msra.mxu0 0
    %4827 = vmatpush.bf16.msra.mxu0 0
    %4828 = vmatpush.bf16.msra.mxu0 0
    %4829 = vmatpush.bf16.msra.mxu0 %v4820
    %4830 = vmatmul.bf16.gmra.mxu0 %v4811
    %v4831 = vpop.f32.mrf.mxu0
    %v4832 = vadd.f32 %v4796, %v4831
    %v4833 = vpop.f32.mrf.mxu0
    %v4834 = vadd.f32 %v4798, %v4833
    %4835 = vmatmul.bf16.gmra.mxu0 %v4814
    %v4836 = vpop.f32.mrf.mxu0
    %v4837 = vadd.f32 %v4801, %v4836
    %v4838 = vpop.f32.mrf.mxu0
    %v4839 = vadd.f32 %v4803, %v4838
    %4840 = vmatmul.bf16.gmra.mxu0 %v4817
    %v4841 = vpop.f32.mrf.mxu0
    %v4842 = vadd.f32 %v4806, %v4841
    %v4843 = vpop.f32.mrf.mxu0
    %v4844 = vadd.f32 %v4808, %v4843
    %4845 = vdwg.mxu0
    %4846 = vrot.lane.b32.xlu0 %v4291, 112
    %v4847 = vpop.permute.xlu0 %4846
    %4848 = vrot.lane.b32.xlu0 %v4292, 112
    %v4849 = vpop.permute.xlu0 %4848
    %4850 = vrot.lane.b32.xlu0 %v4299, 112
    %v4851 = vpop.permute.xlu0 %4850
    %4852 = vrot.lane.b32.xlu0 %v4300, 112
    %v4853 = vpop.permute.xlu0 %4852
    %v4855 = vsel %vm488, %v4847, 0
    %v4858 = vsel %vm488, %v4849, 0
    %v4861 = vsel %vm488, %v4851, 0
    %v4864 = vsel %vm488, %v4853, 0
    %4866 = vmatpush.bf16.xpose.msra.mxu0 0
    %4867 = vmatpush.bf16.xpose.msra.mxu0 0
    %4868 = vmatpush.bf16.xpose.msra.mxu0 0
    %4869 = vmatpush.bf16.xpose.msra.mxu0 0
    %4870 = vmatpush.bf16.xpose.msra.mxu0 0
    %4871 = vmatpush.bf16.xpose.msra.mxu0 0
    %4872 = vmatpush.bf16.xpose.msra.mxu0 %v4864
    %4873 = vmatpush.bf16.xpose.msra.mxu0 %v4861
    %4874 = vmatmul.bf16.gmra.mxu0 %v4855
    %v4875 = vpop.f32.mrf.mxu0
    %v4876 = vadd.f32 %v298, %v4875
    %v4877 = vpop.f32.mrf.mxu0
    %v4878 = vadd.f32 %v299, %v4877
    %4879 = vmatmul.bf16.gmra.mxu0 %v4858
    %v4880 = vpop.f32.mrf.mxu0
    %v4881 = vadd.f32 %v300, %v4880
    %v4882 = vpop.f32.mrf.mxu0
    %4883 = vdwg.mxu0
    %4884 = vrot.lane.b32.xlu0 %v4337, 112
    %v4885 = vpop.permute.xlu0 %4884
    %4886 = vrot.lane.b32.xlu0 %v4338, 112
    %v4887 = vpop.permute.xlu0 %4886
    %4888 = vrot.lane.b32.xlu0 %v4345, 112
    %v4889 = vpop.permute.xlu0 %4888
    %4890 = vrot.lane.b32.xlu0 %v4346, 112
    %v4891 = vpop.permute.xlu0 %4890
    %v4893 = vsel %vm488, %v4885, 0
    %v4896 = vsel %vm488, %v4887, 0
    %v4899 = vsel %vm488, %v4889, 0
    %v4902 = vsel %vm488, %v4891, 0
    %4904 = vmatpush.bf16.xpose.msra.mxu0 0
    %4905 = vmatpush.bf16.xpose.msra.mxu0 0
    %4906 = vmatpush.bf16.xpose.msra.mxu0 0
    %4907 = vmatpush.bf16.xpose.msra.mxu0 0
    %4908 = vmatpush.bf16.xpose.msra.mxu0 0
    %4909 = vmatpush.bf16.xpose.msra.mxu0 0
    %4910 = vmatpush.bf16.xpose.msra.mxu0 %v4902
    %4911 = vmatpush.bf16.xpose.msra.mxu0 %v4899
    %4912 = vmatmul.bf16.gmra.mxu0 %v4893
    %v4913 = vpop.f32.mrf.mxu0
    %v4914 = vadd.f32 %v301, %v4913
    %v4915 = vpop.f32.mrf.mxu0
    %v4916 = vadd.f32 %v302, %v4915
    %4917 = vmatmul.bf16.gmra.mxu0 %v4896
    %v4918 = vpop.f32.mrf.mxu0
    %v4919 = vadd.f32 %v303, %v4918
    %v4920 = vpop.f32.mrf.mxu0
    %4921 = vdwg.mxu0
    %v4922 = vsel %vm565, %v4876, -inf
    %4923 = vmax.xlane.f32.xlu0 %v4922
    %v4924 = vpop.xlane.xlu0 %4923
    %v4925 = vsel %vm565, %v4878, -inf
    %4926 = vmax.xlane.f32.xlu0 %v4925
    %v4927 = vpop.xlane.xlu0 %4926
    %v4928 = vsel %vm565, %v4881, -inf
    %4929 = vmax.xlane.f32.xlu0 %v4928
    %v4930 = vpop.xlane.xlu0 %4929
    %v4931 = vsel %vm565, %v4914, -inf
    %4932 = vmax.xlane.f32.xlu0 %v4931
    %v4933 = vpop.xlane.xlu0 %4932
    %v4934 = vsel %vm565, %v4916, -inf
    %4935 = vmax.xlane.f32.xlu0 %v4934
    %v4936 = vpop.xlane.xlu0 %4935
    %v4937 = vsel %vm565, %v4919, -inf
    %4938 = vmax.xlane.f32.xlu0 %v4937
    %v4939 = vpop.xlane.xlu0 %4938
    %v4940 = vsub.f32 %v4876, %v4924
    %v4941 = vsub.f32 %v4878, %v4927
    %v4942 = vsub.f32 %v4881, %v4930
    %v4943 = vsub.f32 %v4914, %v4933
    %v4944 = vsub.f32 %v4916, %v4936
    %v4945 = vsub.f32 %v4919, %v4939
    %v4946 = vmul.f32 %v4940, 1.442695
    %v4947 = vpow.pop %v4946
    %v4948 = vmul.f32 %v4941, 1.442695
    %v4949 = vpow.pop %v4948
    %v4950 = vmul.f32 %v4942, 1.442695
    %v4951 = vpow.pop %v4950
    %v4952 = vmul.f32 %v4943, 1.442695
    %v4953 = vpow.pop %v4952
    %v4954 = vmul.f32 %v4944, 1.442695
    %v4955 = vpow.pop %v4954
    %v4956 = vmul.f32 %v4945, 1.442695
    %v4957 = vpow.pop %v4956
    %v4958 = vsel %vm565, %v4947, 0.0
    %4959 = vadd.xlane.f32.xlu0 %v4958
    %v4960 = vpop.xlane.xlu0 %4959
    %v4961 = vsel %vm565, %v4949, 0.0
    %4962 = vadd.xlane.f32.xlu0 %v4961
    %v4963 = vpop.xlane.xlu0 %4962
    %v4964 = vsel %vm565, %v4951, 0.0
    %4965 = vadd.xlane.f32.xlu0 %v4964
    %v4966 = vpop.xlane.xlu0 %4965
    %v4967 = vsel %vm565, %v4953, 0.0
    %4968 = vadd.xlane.f32.xlu0 %v4967
    %v4969 = vpop.xlane.xlu0 %4968
    %v4970 = vsel %vm565, %v4955, 0.0
    %4971 = vadd.xlane.f32.xlu0 %v4970
    %v4972 = vpop.xlane.xlu0 %4971
    %v4973 = vsel %vm565, %v4957, 0.0
    %4974 = vadd.xlane.f32.xlu0 %v4973
    %v4975 = vpop.xlane.xlu0 %4974
    %v4976 = vrcp.pop %v4960
    %v4977 = vrcp.pop %v4963
    %v4978 = vrcp.pop %v4966
    %v4979 = vrcp.pop %v4969
    %v4980 = vrcp.pop %v4972
    %v4981 = vrcp.pop %v4975
    %v4982 = vmul.f32 %v4947, %v4976
    %v4983 = vmul.f32 %v4949, %v4977
    %v4984 = vmul.f32 %v4951, %v4978
    %v4985 = vmul.f32 %v4953, %v4979
    %v4986 = vmul.f32 %v4955, %v4980
    %v4987 = vmul.f32 %v4957, %v4981
    %v4988 = vpack.c.bf16 %v4982, %v4982
    %v4989 = vpack.c.bf16 %v4983, %v4983
    %v4990 = vpack.c.bf16 %v4984, %v4984
    %v4991 = vpack.c.bf16 %v4985, %v4985
    %v4992 = vpack.c.bf16 %v4986, %v4986
    %v4993 = vpack.c.bf16 %v4987, %v4987
    %v4997 = vunpack.c.l.b16 %v4988
    %v4998 = vunpack.c.l.b16 %v4989
    %v4999 = vunpack.c.l.b16 %v4990
    %v5000 = vpack.c.b16 %v4998, %v4997
    %v5001 = vpack.c.b16 %v4999, %v4999
    %5002 = vrot.lane.b32.xlu0 %v4463, 112
    %v5003 = vpop.permute.xlu0 %5002
    %5004 = vrot.lane.b32.xlu0 %v4464, 112
    %v5005 = vpop.permute.xlu0 %5004
    %v5008 = vsel %vm565, %v5000, 0
    %v5011 = vsel %vm565, %v5001, 0
    %v5014 = vsel %vm661, %v5005, 0
    %5016 = vmatpush.bf16.msra.mxu0 0
    %5017 = vmatpush.bf16.msra.mxu0 0
    %5018 = vmatpush.bf16.msra.mxu0 0
    %5019 = vmatpush.bf16.msra.mxu0 0
    %5020 = vmatpush.bf16.msra.mxu0 0
    %5021 = vmatpush.bf16.msra.mxu0 0
    %5022 = vmatpush.bf16.msra.mxu0 %v5014
    %5023 = vmatpush.bf16.msra.mxu0 %v5003
    %5024 = vmatmul.bf16.gmra.mxu0 %v5008
    %v5025 = vpop.f32.mrf.mxu0
    %v5026 = vadd.f32 0.0, %v5025
    %v5027 = vpop.f32.mrf.mxu0
    %v5028 = vadd.f32 0.0, %v5027
    %5029 = vmatmul.bf16.gmra.mxu0 %v5011
    %v5030 = vpop.f32.mrf.mxu0
    %v5031 = vadd.f32 0.0, %v5030
    %v5032 = vpop.f32.mrf.mxu0
    %5033 = vdwg.mxu0
    %v5037 = vunpack.c.l.b16 %v4991
    %v5038 = vunpack.c.l.b16 %v4992
    %v5039 = vunpack.c.l.b16 %v4993
    %v5040 = vpack.c.b16 %v5038, %v5037
    %v5041 = vpack.c.b16 %v5039, %v5039
    %5042 = vrot.lane.b32.xlu0 %v4507, 112
    %v5043 = vpop.permute.xlu0 %5042
    %5044 = vrot.lane.b32.xlu0 %v4508, 112
    %v5045 = vpop.permute.xlu0 %5044
    %v5048 = vsel %vm565, %v5040, 0
    %v5051 = vsel %vm565, %v5041, 0
    %v5054 = vsel %vm661, %v5045, 0
    %5056 = vmatpush.bf16.msra.mxu0 0
    %5057 = vmatpush.bf16.msra.mxu0 0
    %5058 = vmatpush.bf16.msra.mxu0 0
    %5059 = vmatpush.bf16.msra.mxu0 0
    %5060 = vmatpush.bf16.msra.mxu0 0
    %5061 = vmatpush.bf16.msra.mxu0 0
    %5062 = vmatpush.bf16.msra.mxu0 %v5054
    %5063 = vmatpush.bf16.msra.mxu0 %v5043
    %5064 = vmatmul.bf16.gmra.mxu0 %v5048
    %v5065 = vpop.f32.mrf.mxu0
    %v5066 = vadd.f32 0.0, %v5065
    %v5067 = vpop.f32.mrf.mxu0
    %v5068 = vadd.f32 0.0, %v5067
    %5069 = vmatmul.bf16.gmra.mxu0 %v5051
    %v5070 = vpop.f32.mrf.mxu0
    %v5071 = vadd.f32 0.0, %v5070
    %v5072 = vpop.f32.mrf.mxu0
    %5073 = vdwg.mxu0
    %v5074 = vpack.c.bf16 %v5028, %v5026
    %v5075 = vpack.c.bf16 %v5066, %v5031
    %v5076 = vpack.c.bf16 %v5071, %v5068
    %v5077 = vld [vmem:[%s4540 + $0x8] sm:$0xf]
    %v5079 = vsel %vm488, %v5074, 0
    %v5082 = vsel %vm488, %v5075, 0
    %v5085 = vsel %vm488, %v5076, 0
    %v5088 = vsel %vm661, %v5077, 0
    %5090 = vmatpush.bf16.msra.mxu0 0
    %5091 = vmatpush.bf16.msra.mxu0 0
    %5092 = vmatpush.bf16.msra.mxu0 0
    %5093 = vmatpush.bf16.msra.mxu0 0
    %5094 = vmatpush.bf16.msra.mxu0 0
    %5095 = vmatpush.bf16.msra.mxu0 0
    %5096 = vmatpush.bf16.msra.mxu0 0
    %5097 = vmatpush.bf16.msra.mxu0 %v5088
    %5098 = vmatmul.bf16.gmra.mxu0 %v5079
    %v5099 = vpop.f32.mrf.mxu0
    %v5100 = vadd.f32 0.0, %v5099
    %v5101 = vpop.f32.mrf.mxu0
    %v5102 = vadd.f32 0.0, %v5101
    %5103 = vmatmul.bf16.gmra.mxu0 %v5082
    %v5104 = vpop.f32.mrf.mxu0
    %v5105 = vadd.f32 0.0, %v5104
    %v5106 = vpop.f32.mrf.mxu0
    %v5107 = vadd.f32 0.0, %v5106
    %5108 = vmatmul.bf16.gmra.mxu0 %v5085
    %v5109 = vpop.f32.mrf.mxu0
    %v5110 = vadd.f32 0.0, %v5109
    %v5111 = vpop.f32.mrf.mxu0
    %v5112 = vadd.f32 0.0, %v5111
    %5113 = vdwg.mxu0
    %v5114 = vadd.f32 %v4832, %v5100
    %v5115 = vadd.f32 %v4834, %v5102
    %v5116 = vadd.f32 %v4837, %v5105
    %v5117 = vadd.f32 %v4839, %v5107
    %v5118 = vadd.f32 %v4842, %v5110
    %v5119 = vadd.f32 %v4844, %v5112
    %5120 = vrot.lane.b32.xlu0 %v4291, 104
    %v5121 = vpop.permute.xlu0 %5120
    %5122 = vrot.lane.b32.xlu0 %v4292, 104
    %v5123 = vpop.permute.xlu0 %5122
    %5124 = vrot.lane.b32.xlu0 %v4299, 104
    %v5125 = vpop.permute.xlu0 %5124
    %5126 = vrot.lane.b32.xlu0 %v4300, 104
    %v5127 = vpop.permute.xlu0 %5126
    %v5129 = vsel %vm488, %v5121, 0
    %v5132 = vsel %vm488, %v5123, 0
    %v5135 = vsel %vm488, %v5125, 0
    %v5138 = vsel %vm488, %v5127, 0
    %5140 = vmatpush.bf16.xpose.msra.mxu0 0
    %5141 = vmatpush.bf16.xpose.msra.mxu0 0
    %5142 = vmatpush.bf16.xpose.msra.mxu0 0
    %5143 = vmatpush.bf16.xpose.msra.mxu0 0
    %5144 = vmatpush.bf16.xpose.msra.mxu0 0
    %5145 = vmatpush.bf16.xpose.msra.mxu0 0
    %5146 = vmatpush.bf16.xpose.msra.mxu0 %v5138
    %5147 = vmatpush.bf16.xpose.msra.mxu0 %v5135
    %5148 = vmatmul.bf16.gmra.mxu0 %v5129
    %v5149 = vpop.f32.mrf.mxu0
    %v5150 = vadd.f32 %v298, %v5149
    %v5151 = vpop.f32.mrf.mxu0
    %v5152 = vadd.f32 %v299, %v5151
    %5153 = vmatmul.bf16.gmra.mxu0 %v5132
    %v5154 = vpop.f32.mrf.mxu0
    %v5155 = vadd.f32 %v300, %v5154
    %v5156 = vpop.f32.mrf.mxu0
    %5157 = vdwg.mxu0
    %5158 = vrot.lane.b32.xlu0 %v4337, 104
    %v5159 = vpop.permute.xlu0 %5158
    %5160 = vrot.lane.b32.xlu0 %v4338, 104
    %v5161 = vpop.permute.xlu0 %5160
    %5162 = vrot.lane.b32.xlu0 %v4345, 104
    %v5163 = vpop.permute.xlu0 %5162
    %5164 = vrot.lane.b32.xlu0 %v4346, 104
    %v5165 = vpop.permute.xlu0 %5164
    %v5167 = vsel %vm488, %v5159, 0
    %v5170 = vsel %vm488, %v5161, 0
    %v5173 = vsel %vm488, %v5163, 0
    %v5176 = vsel %vm488, %v5165, 0
    %5178 = vmatpush.bf16.xpose.msra.mxu0 0
    %5179 = vmatpush.bf16.xpose.msra.mxu0 0
    %5180 = vmatpush.bf16.xpose.msra.mxu0 0
    %5181 = vmatpush.bf16.xpose.msra.mxu0 0
    %5182 = vmatpush.bf16.xpose.msra.mxu0 0
    %5183 = vmatpush.bf16.xpose.msra.mxu0 0
    %5184 = vmatpush.bf16.xpose.msra.mxu0 %v5176
    %5185 = vmatpush.bf16.xpose.msra.mxu0 %v5173
    %5186 = vmatmul.bf16.gmra.mxu0 %v5167
    %v5187 = vpop.f32.mrf.mxu0
    %v5188 = vadd.f32 %v301, %v5187
    %v5189 = vpop.f32.mrf.mxu0
    %v5190 = vadd.f32 %v302, %v5189
    %5191 = vmatmul.bf16.gmra.mxu0 %v5170
    %v5192 = vpop.f32.mrf.mxu0
    %v5193 = vadd.f32 %v303, %v5192
    %v5194 = vpop.f32.mrf.mxu0
    %5195 = vdwg.mxu0
    %v5196 = vsel %vm565, %v5150, -inf
    %5197 = vmax.xlane.f32.xlu0 %v5196
    %v5198 = vpop.xlane.xlu0 %5197
    %v5199 = vsel %vm565, %v5152, -inf
    %5200 = vmax.xlane.f32.xlu0 %v5199
    %v5201 = vpop.xlane.xlu0 %5200
    %v5202 = vsel %vm565, %v5155, -inf
    %5203 = vmax.xlane.f32.xlu0 %v5202
    %v5204 = vpop.xlane.xlu0 %5203
    %v5205 = vsel %vm565, %v5188, -inf
    %5206 = vmax.xlane.f32.xlu0 %v5205
    %v5207 = vpop.xlane.xlu0 %5206
    %v5208 = vsel %vm565, %v5190, -inf
    %5209 = vmax.xlane.f32.xlu0 %v5208
    %v5210 = vpop.xlane.xlu0 %5209
    %v5211 = vsel %vm565, %v5193, -inf
    %5212 = vmax.xlane.f32.xlu0 %v5211
    %v5213 = vpop.xlane.xlu0 %5212
    %v5214 = vsub.f32 %v5150, %v5198
    %v5215 = vsub.f32 %v5152, %v5201
    %v5216 = vsub.f32 %v5155, %v5204
    %v5217 = vsub.f32 %v5188, %v5207
    %v5218 = vsub.f32 %v5190, %v5210
    %v5219 = vsub.f32 %v5193, %v5213
    %v5220 = vmul.f32 %v5214, 1.442695
    %v5221 = vpow.pop %v5220
    %v5222 = vmul.f32 %v5215, 1.442695
    %v5223 = vpow.pop %v5222
    %v5224 = vmul.f32 %v5216, 1.442695
    %v5225 = vpow.pop %v5224
    %v5226 = vmul.f32 %v5217, 1.442695
    %v5227 = vpow.pop %v5226
    %v5228 = vmul.f32 %v5218, 1.442695
    %v5229 = vpow.pop %v5228
    %v5230 = vmul.f32 %v5219, 1.442695
    %v5231 = vpow.pop %v5230
    %v5232 = vsel %vm565, %v5221, 0.0
    %5233 = vadd.xlane.f32.xlu0 %v5232
    %v5234 = vpop.xlane.xlu0 %5233
    %v5235 = vsel %vm565, %v5223, 0.0
    %5236 = vadd.xlane.f32.xlu0 %v5235
    %v5237 = vpop.xlane.xlu0 %5236
    %v5238 = vsel %vm565, %v5225, 0.0
    %5239 = vadd.xlane.f32.xlu0 %v5238
    %v5240 = vpop.xlane.xlu0 %5239
    %v5241 = vsel %vm565, %v5227, 0.0
    %5242 = vadd.xlane.f32.xlu0 %v5241
    %v5243 = vpop.xlane.xlu0 %5242
    %v5244 = vsel %vm565, %v5229, 0.0
    %5245 = vadd.xlane.f32.xlu0 %v5244
    %v5246 = vpop.xlane.xlu0 %5245
    %v5247 = vsel %vm565, %v5231, 0.0
    %5248 = vadd.xlane.f32.xlu0 %v5247
    %v5249 = vpop.xlane.xlu0 %5248
    %v5250 = vrcp.pop %v5234
    %v5251 = vrcp.pop %v5237
    %v5252 = vrcp.pop %v5240
    %v5253 = vrcp.pop %v5243
    %v5254 = vrcp.pop %v5246
    %v5255 = vrcp.pop %v5249
    %v5256 = vmul.f32 %v5221, %v5250
    %v5257 = vmul.f32 %v5223, %v5251
    %v5258 = vmul.f32 %v5225, %v5252
    %v5259 = vmul.f32 %v5227, %v5253
    %v5260 = vmul.f32 %v5229, %v5254
    %v5261 = vmul.f32 %v5231, %v5255
    %v5262 = vpack.c.bf16 %v5256, %v5256
    %v5263 = vpack.c.bf16 %v5257, %v5257
    %v5264 = vpack.c.bf16 %v5258, %v5258
    %v5265 = vpack.c.bf16 %v5259, %v5259
    %v5266 = vpack.c.bf16 %v5260, %v5260
    %v5267 = vpack.c.bf16 %v5261, %v5261
    %v5271 = vunpack.c.l.b16 %v5262
    %v5272 = vunpack.c.l.b16 %v5263
    %v5273 = vunpack.c.l.b16 %v5264
    %v5274 = vpack.c.b16 %v5272, %v5271
    %v5275 = vpack.c.b16 %v5273, %v5273
    %5276 = vrot.lane.b32.xlu0 %v4463, 104
    %v5277 = vpop.permute.xlu0 %5276
    %5278 = vrot.lane.b32.xlu0 %v4464, 104
    %v5279 = vpop.permute.xlu0 %5278
    %v5282 = vsel %vm565, %v5274, 0
    %v5285 = vsel %vm565, %v5275, 0
    %v5288 = vsel %vm661, %v5279, 0
    %5290 = vmatpush.bf16.msra.mxu0 0
    %5291 = vmatpush.bf16.msra.mxu0 0
    %5292 = vmatpush.bf16.msra.mxu0 0
    %5293 = vmatpush.bf16.msra.mxu0 0
    %5294 = vmatpush.bf16.msra.mxu0 0
    %5295 = vmatpush.bf16.msra.mxu0 0
    %5296 = vmatpush.bf16.msra.mxu0 %v5288
    %5297 = vmatpush.bf16.msra.mxu0 %v5277
    %5298 = vmatmul.bf16.gmra.mxu0 %v5282
    %v5299 = vpop.f32.mrf.mxu0
    %v5300 = vadd.f32 0.0, %v5299
    %v5301 = vpop.f32.mrf.mxu0
    %v5302 = vadd.f32 0.0, %v5301
    %5303 = vmatmul.bf16.gmra.mxu0 %v5285
    %v5304 = vpop.f32.mrf.mxu0
    %v5305 = vadd.f32 0.0, %v5304
    %v5306 = vpop.f32.mrf.mxu0
    %5307 = vdwg.mxu0
    %v5311 = vunpack.c.l.b16 %v5265
    %v5312 = vunpack.c.l.b16 %v5266
    %v5313 = vunpack.c.l.b16 %v5267
    %v5314 = vpack.c.b16 %v5312, %v5311
    %v5315 = vpack.c.b16 %v5313, %v5313
    %5316 = vrot.lane.b32.xlu0 %v4507, 104
    %v5317 = vpop.permute.xlu0 %5316
    %5318 = vrot.lane.b32.xlu0 %v4508, 104
    %v5319 = vpop.permute.xlu0 %5318
    %v5322 = vsel %vm565, %v5314, 0
    %v5325 = vsel %vm565, %v5315, 0
    %v5328 = vsel %vm661, %v5319, 0
    %5330 = vmatpush.bf16.msra.mxu0 0
    %5331 = vmatpush.bf16.msra.mxu0 0
    %5332 = vmatpush.bf16.msra.mxu0 0
    %5333 = vmatpush.bf16.msra.mxu0 0
    %5334 = vmatpush.bf16.msra.mxu0 0
    %5335 = vmatpush.bf16.msra.mxu0 0
    %5336 = vmatpush.bf16.msra.mxu0 %v5328
    %5337 = vmatpush.bf16.msra.mxu0 %v5317
    %5338 = vmatmul.bf16.gmra.mxu0 %v5322
    %v5339 = vpop.f32.mrf.mxu0
    %v5340 = vadd.f32 0.0, %v5339
    %v5341 = vpop.f32.mrf.mxu0
    %v5342 = vadd.f32 0.0, %v5341
    %5343 = vmatmul.bf16.gmra.mxu0 %v5325
    %v5344 = vpop.f32.mrf.mxu0
    %v5345 = vadd.f32 0.0, %v5344
    %v5346 = vpop.f32.mrf.mxu0
    %5347 = vdwg.mxu0
    %v5348 = vpack.c.bf16 %v5302, %v5300
    %v5349 = vpack.c.bf16 %v5340, %v5305
    %v5350 = vpack.c.bf16 %v5345, %v5342
    %v5351 = vld [vmem:[%s4540 + $0xc] sm:$0xf]
    %v5353 = vsel %vm488, %v5348, 0
    %v5356 = vsel %vm488, %v5349, 0
    %v5359 = vsel %vm488, %v5350, 0
    %v5362 = vsel %vm661, %v5351, 0
    %5364 = vmatpush.bf16.msra.mxu0 0
    %5365 = vmatpush.bf16.msra.mxu0 0
    %5366 = vmatpush.bf16.msra.mxu0 0
    %5367 = vmatpush.bf16.msra.mxu0 0
    %5368 = vmatpush.bf16.msra.mxu0 0
    %5369 = vmatpush.bf16.msra.mxu0 0
    %5370 = vmatpush.bf16.msra.mxu0 0
    %5371 = vmatpush.bf16.msra.mxu0 %v5362
    %5372 = vmatmul.bf16.gmra.mxu0 %v5353
    %v5373 = vpop.f32.mrf.mxu0
    %v5374 = vadd.f32 0.0, %v5373
    %v5375 = vpop.f32.mrf.mxu0
    %v5376 = vadd.f32 0.0, %v5375
    %5377 = vmatmul.bf16.gmra.mxu0 %v5356
    %v5378 = vpop.f32.mrf.mxu0
    %v5379 = vadd.f32 0.0, %v5378
    %v5380 = vpop.f32.mrf.mxu0
    %v5381 = vadd.f32 0.0, %v5380
    %5382 = vmatmul.bf16.gmra.mxu0 %v5359
    %v5383 = vpop.f32.mrf.mxu0
    %v5384 = vadd.f32 0.0, %v5383
    %v5385 = vpop.f32.mrf.mxu0
    %v5386 = vadd.f32 0.0, %v5385
    %5387 = vdwg.mxu0
    %v5388 = vadd.f32 %v5114, %v5374
    %v5389 = vadd.f32 %v5115, %v5376
    %v5390 = vadd.f32 %v5116, %v5379
    %v5391 = vadd.f32 %v5117, %v5381
    %v5392 = vadd.f32 %v5118, %v5384
    %v5393 = vadd.f32 %v5119, %v5386
    %v5394 = vadd.f32 %v4105, %v5388
    %v5395 = vadd.f32 %v4106, %v5389
    %v5396 = vadd.f32 %v4107, %v5390
    %v5397 = vadd.f32 %v4108, %v5391
    %v5398 = vadd.f32 %v4109, %v5392
    %v5399 = vadd.f32 %v4110, %v5393
    %s5400 = scalar_lea.vmem %s13, 1
    %v5401 = vld [vmem:[%s5400] sm:$0x1]
    %v5403 = vperm.slane %v5401, 0
    %v5405 = vadd.f32 %v5394, %v5403
    %v5406 = vadd.f32 %v5395, %v5403
    %v5407 = vadd.f32 %v5396, %v5403
    %v5408 = vadd.f32 %v5397, %v5403
    %v5409 = vadd.f32 %v5398, %v5403
    %v5410 = vadd.f32 %v5399, %v5403
    %s5411 = scalar_lea.vmem %s14, 1
    %v5412 = vld [vmem:[%s5411] sm:$0x1]
    %s5413 = scalar_lea.vmem %s15, 1
    %v5414 = vld [vmem:[%s5413] sm:$0x1]
    %v5415 = vsel %vm140, %v5405, 0.0
    %5416 = vadd.xlane.f32.xlu0 %v5415
    %v5417 = vpop.xlane.xlu0 %5416
    %v5418 = vsel %vm140, %v5406, 0.0
    %5419 = vadd.xlane.f32.xlu0 %v5418
    %v5420 = vpop.xlane.xlu0 %5419
    %v5421 = vsel %vm140, %v5407, 0.0
    %5422 = vadd.xlane.f32.xlu0 %v5421
    %v5423 = vpop.xlane.xlu0 %5422
    %v5424 = vsel %vm140, %v5408, 0.0
    %5425 = vadd.xlane.f32.xlu0 %v5424
    %v5426 = vpop.xlane.xlu0 %5425
    %v5427 = vsel %vm140, %v5409, 0.0
    %5428 = vadd.xlane.f32.xlu0 %v5427
    %v5429 = vpop.xlane.xlu0 %5428
    %v5430 = vsel %vm140, %v5410, 0.0
    %5431 = vadd.xlane.f32.xlu0 %v5430
    %v5432 = vpop.xlane.xlu0 %5431
    %v5433 = vmul.f32 %v5417, %v165
    %v5434 = vmul.f32 %v5420, %v165
    %v5435 = vmul.f32 %v5423, %v165
    %v5436 = vmul.f32 %v5426, %v165
    %v5437 = vmul.f32 %v5429, %v165
    %v5438 = vmul.f32 %v5432, %v165
    %v5439 = vsub.f32 %v5405, %v5433
    %v5440 = vsub.f32 %v5406, %v5434
    %v5441 = vsub.f32 %v5407, %v5435
    %v5442 = vsub.f32 %v5408, %v5436
    %v5443 = vsub.f32 %v5409, %v5437
    %v5444 = vsub.f32 %v5410, %v5438
    %v5445 = vmul.f32 %v5439, %v5439
    %v5446 = vmul.f32 %v5440, %v5440
    %v5447 = vmul.f32 %v5441, %v5441
    %v5448 = vmul.f32 %v5442, %v5442
    %v5449 = vmul.f32 %v5443, %v5443
    %v5450 = vmul.f32 %v5444, %v5444
    %v5451 = vsel %vm140, %v5445, 0.0
    %5452 = vadd.xlane.f32.xlu0 %v5451
    %v5453 = vpop.xlane.xlu0 %5452
    %v5454 = vsel %vm140, %v5446, 0.0
    %5455 = vadd.xlane.f32.xlu0 %v5454
    %v5456 = vpop.xlane.xlu0 %5455
    %v5457 = vsel %vm140, %v5447, 0.0
    %5458 = vadd.xlane.f32.xlu0 %v5457
    %v5459 = vpop.xlane.xlu0 %5458
    %v5460 = vsel %vm140, %v5448, 0.0
    %5461 = vadd.xlane.f32.xlu0 %v5460
    %v5462 = vpop.xlane.xlu0 %5461
    %v5463 = vsel %vm140, %v5449, 0.0
    %5464 = vadd.xlane.f32.xlu0 %v5463
    %v5465 = vpop.xlane.xlu0 %5464
    %v5466 = vsel %vm140, %v5450, 0.0
    %5467 = vadd.xlane.f32.xlu0 %v5466
    %v5468 = vpop.xlane.xlu0 %5467
    %v5469 = vmul.f32 %v5453, %v165
    %v5470 = vmul.f32 %v5456, %v165
    %v5471 = vmul.f32 %v5459, %v165
    %v5472 = vmul.f32 %v5462, %v165
    %v5473 = vmul.f32 %v5465, %v165
    %v5474 = vmul.f32 %v5468, %v165
    %v5475 = vadd.f32 %v5469, 1e-05
    %v5476 = vadd.f32 %v5470, 1e-05
    %v5477 = vadd.f32 %v5471, 1e-05
    %v5478 = vadd.f32 %v5472, 1e-05
    %v5479 = vadd.f32 %v5473, 1e-05
    %v5480 = vadd.f32 %v5474, 1e-05
    %v5481 = vrsqrt.pop %v5475
    %v5482 = vmul.f32 %v5481, %v5475
    %v5483 = vmul.f32 %v5482, %v5481
    %v5484 = vmul.f32 0.5, %v5483
    %v5485 = vsub.f32 1.5, %v5484
    %v5486 = vmul.f32 %v5481, %v5485
    %vm5487 = vweird.f32 %v5475
    %vm5488 = vweird.f32 %v5481
    %vm5489 = vmor %vm5487, %vm5488
    %v5490 = vsel %vm5489, %v5481, %v5486
    %v5491 = vrsqrt.pop %v5476
    %v5492 = vmul.f32 %v5491, %v5476
    %v5493 = vmul.f32 %v5492, %v5491
    %v5494 = vmul.f32 0.5, %v5493
    %v5495 = vsub.f32 1.5, %v5494
    %v5496 = vmul.f32 %v5491, %v5495
    %vm5497 = vweird.f32 %v5476
    %vm5498 = vweird.f32 %v5491
    %vm5499 = vmor %vm5497, %vm5498
    %v5500 = vsel %vm5499, %v5491, %v5496
    %v5501 = vrsqrt.pop %v5477
    %v5502 = vmul.f32 %v5501, %v5477
    %v5503 = vmul.f32 %v5502, %v5501
    %v5504 = vmul.f32 0.5, %v5503
    %v5505 = vsub.f32 1.5, %v5504
    %v5506 = vmul.f32 %v5501, %v5505
    %vm5507 = vweird.f32 %v5477
    %vm5508 = vweird.f32 %v5501
    %vm5509 = vmor %vm5507, %vm5508
    %v5510 = vsel %vm5509, %v5501, %v5506
    %v5511 = vrsqrt.pop %v5478
    %v5512 = vmul.f32 %v5511, %v5478
    %v5513 = vmul.f32 %v5512, %v5511
    %v5514 = vmul.f32 0.5, %v5513
    %v5515 = vsub.f32 1.5, %v5514
    %v5516 = vmul.f32 %v5511, %v5515
    %vm5517 = vweird.f32 %v5478
    %vm5518 = vweird.f32 %v5511
    %vm5519 = vmor %vm5517, %vm5518
    %v5520 = vsel %vm5519, %v5511, %v5516
    %v5521 = vrsqrt.pop %v5479
    %v5522 = vmul.f32 %v5521, %v5479
    %v5523 = vmul.f32 %v5522, %v5521
    %v5524 = vmul.f32 0.5, %v5523
    %v5525 = vsub.f32 1.5, %v5524
    %v5526 = vmul.f32 %v5521, %v5525
    %vm5527 = vweird.f32 %v5479
    %vm5528 = vweird.f32 %v5521
    %vm5529 = vmor %vm5527, %vm5528
    %v5530 = vsel %vm5529, %v5521, %v5526
    %v5531 = vrsqrt.pop %v5480
    %v5532 = vmul.f32 %v5531, %v5480
    %v5533 = vmul.f32 %v5532, %v5531
    %v5534 = vmul.f32 0.5, %v5533
    %v5535 = vsub.f32 1.5, %v5534
    %v5536 = vmul.f32 %v5531, %v5535
    %vm5537 = vweird.f32 %v5480
    %vm5538 = vweird.f32 %v5531
    %vm5539 = vmor %vm5537, %vm5538
    %v5540 = vsel %vm5539, %v5531, %v5536
    %v5541 = vmul.f32 %v5439, %v5490
    %v5542 = vmul.f32 %v5440, %v5500
    %v5543 = vmul.f32 %v5441, %v5510
    %v5544 = vmul.f32 %v5442, %v5520
    %v5545 = vmul.f32 %v5443, %v5530
    %v5546 = vmul.f32 %v5444, %v5540
    %v5548 = vperm.slane %v5412, 0
    %v5550 = vmul.f32 %v5541, %v5548
    %v5551 = vmul.f32 %v5542, %v5548
    %v5552 = vmul.f32 %v5543, %v5548
    %v5553 = vmul.f32 %v5544, %v5548
    %v5554 = vmul.f32 %v5545, %v5548
    %v5555 = vmul.f32 %v5546, %v5548
    %v5557 = vperm.slane %v5414, 0
    %v5559 = vadd.f32 %v5550, %v5557
    %v5560 = vadd.f32 %v5551, %v5557
    %v5561 = vadd.f32 %v5552, %v5557
    %v5562 = vadd.f32 %v5553, %v5557
    %v5563 = vadd.f32 %v5554, %v5557
    %v5564 = vadd.f32 %v5555, %v5557
    %v5565 = vpack.c.bf16 %v5560, %v5559
    %v5566 = vpack.c.bf16 %v5562, %v5561
    %v5567 = vpack.c.bf16 %v5564, %v5563
    %s5568 = scalar_lea.vmem %s16, 256
    %v5569 = vld [vmem:[%s5568] sm:$0xff]
    %v5570 = vld [vmem:[%s5568 + $0x8] sm:$0xff]
    %v5571 = vld [vmem:[%s5568 + $0x40] sm:$0xff]
    %v5572 = vld [vmem:[%s5568 + $0x48] sm:$0xff]
    %v5573 = vld [vmem:[%s5568 + $0x80] sm:$0xff]
    %v5574 = vld [vmem:[%s5568 + $0x88] sm:$0xff]
    %v5575 = vld [vmem:[%s5568 + $0xc0] sm:$0xff]
    %v5576 = vld [vmem:[%s5568 + $0xc8] sm:$0xff]
    %s5577 = scalar_lea.vmem %s17, 16
    %v5578 = vld [vmem:[%s5577] sm:$0xf]
    %v5580 = vperm.slane %v5578, 0
    %v5581 = vperm.slane %v5578, 1
    %v5582 = vperm.slane %v5578, 2
    %v5583 = vperm.slane %v5578, 3
    %v5596 = vunpack.c.l.b16 %v5569
    %v5597 = vunpack.c.h.b16 %v5569
    %v5598 = vunpack.c.l.b16 %v5570
    %v5599 = vunpack.c.h.b16 %v5570
    %v5600 = vunpack.c.l.b16 %v5571
    %v5601 = vunpack.c.h.b16 %v5571
    %v5602 = vunpack.c.l.b16 %v5572
    %v5603 = vunpack.c.h.b16 %v5572
    %v5604 = vunpack.c.l.b16 %v5573
    %v5605 = vunpack.c.h.b16 %v5573
    %v5606 = vunpack.c.l.b16 %v5574
    %v5607 = vunpack.c.h.b16 %v5574
    %v5608 = vunpack.c.l.b16 %v5575
    %v5609 = vunpack.c.h.b16 %v5575
    %v5610 = vunpack.c.l.b16 %v5576
    %v5611 = vunpack.c.h.b16 %v5576
    %v5612 = vpack.c.b16 %v5600, %v5596
    %v5613 = vpack.c.b16 %v5601, %v5597
    %v5614 = vpack.c.b16 %v5602, %v5598
    %v5615 = vpack.c.b16 %v5603, %v5599
    %v5616 = vpack.c.b16 %v5608, %v5604
    %v5617 = vpack.c.b16 %v5609, %v5605
    %v5618 = vpack.c.b16 %v5610, %v5606
    %v5619 = vpack.c.b16 %v5611, %v5607
    %v5629 = vsel %vm140, %v5565, 0
    %v5632 = vsel %vm140, %v5566, 0
    %v5635 = vsel %vm140, %v5567, 0
    %5637 = vmatpush.bf16.msra.mxu0 0
    %5638 = vmatpush.bf16.msra.mxu0 0
    %5639 = vmatpush.bf16.msra.mxu0 0
    %5640 = vmatpush.bf16.msra.mxu0 0
    %5641 = vmatpush.bf16.msra.mxu0 0
    %5642 = vmatpush.bf16.msra.mxu0 0
    %5643 = vmatpush.bf16.msra.mxu0 %v5616
    %5644 = vmatpush.bf16.msra.mxu0 %v5612
    %5645 = vmatmul.bf16.gmra.mxu0 %v5629
    %v5646 = vpop.f32.mrf.mxu0
    %v5647 = vadd.f32 %v5580, %v5646
    %v5648 = vpop.f32.mrf.mxu0
    %v5649 = vadd.f32 %v5580, %v5648
    %5650 = vmatmul.bf16.gmra.mxu0 %v5632
    %v5651 = vpop.f32.mrf.mxu0
    %v5652 = vadd.f32 %v5580, %v5651
    %v5653 = vpop.f32.mrf.mxu0
    %v5654 = vadd.f32 %v5580, %v5653
    %5655 = vmatmul.bf16.gmra.mxu0 %v5635
    %v5656 = vpop.f32.mrf.mxu0
    %v5657 = vadd.f32 %v5580, %v5656
    %v5658 = vpop.f32.mrf.mxu0
    %v5659 = vadd.f32 %v5580, %v5658
    %5660 = vdwg.mxu0
    %5661 = vmatpush.bf16.msra.mxu0 0
    %5662 = vmatpush.bf16.msra.mxu0 0
    %5663 = vmatpush.bf16.msra.mxu0 0
    %5664 = vmatpush.bf16.msra.mxu0 0
    %5665 = vmatpush.bf16.msra.mxu0 0
    %5666 = vmatpush.bf16.msra.mxu0 0
    %5667 = vmatpush.bf16.msra.mxu0 %v5617
    %5668 = vmatpush.bf16.msra.mxu0 %v5613
    %5669 = vmatmul.bf16.gmra.mxu0 %v5629
    %v5670 = vpop.f32.mrf.mxu0
    %v5671 = vadd.f32 %v5581, %v5670
    %v5672 = vpop.f32.mrf.mxu0
    %v5673 = vadd.f32 %v5581, %v5672
    %5674 = vmatmul.bf16.gmra.mxu0 %v5632
    %v5675 = vpop.f32.mrf.mxu0
    %v5676 = vadd.f32 %v5581, %v5675
    %v5677 = vpop.f32.mrf.mxu0
    %v5678 = vadd.f32 %v5581, %v5677
    %5679 = vmatmul.bf16.gmra.mxu0 %v5635
    %v5680 = vpop.f32.mrf.mxu0
    %v5681 = vadd.f32 %v5581, %v5680
    %v5682 = vpop.f32.mrf.mxu0
    %v5683 = vadd.f32 %v5581, %v5682
    %5684 = vdwg.mxu0
    %5685 = vmatpush.bf16.msra.mxu0 0
    %5686 = vmatpush.bf16.msra.mxu0 0
    %5687 = vmatpush.bf16.msra.mxu0 0
    %5688 = vmatpush.bf16.msra.mxu0 0
    %5689 = vmatpush.bf16.msra.mxu0 0
    %5690 = vmatpush.bf16.msra.mxu0 0
    %5691 = vmatpush.bf16.msra.mxu0 %v5618
    %5692 = vmatpush.bf16.msra.mxu0 %v5614
    %5693 = vmatmul.bf16.gmra.mxu0 %v5629
    %v5694 = vpop.f32.mrf.mxu0
    %v5695 = vadd.f32 %v5582, %v5694
    %v5696 = vpop.f32.mrf.mxu0
    %v5697 = vadd.f32 %v5582, %v5696
    %5698 = vmatmul.bf16.gmra.mxu0 %v5632
    %v5699 = vpop.f32.mrf.mxu0
    %v5700 = vadd.f32 %v5582, %v5699
    %v5701 = vpop.f32.mrf.mxu0
    %v5702 = vadd.f32 %v5582, %v5701
    %5703 = vmatmul.bf16.gmra.mxu0 %v5635
    %v5704 = vpop.f32.mrf.mxu0
    %v5705 = vadd.f32 %v5582, %v5704
    %v5706 = vpop.f32.mrf.mxu0
    %v5707 = vadd.f32 %v5582, %v5706
    %5708 = vdwg.mxu0
    %5709 = vmatpush.bf16.msra.mxu0 0
    %5710 = vmatpush.bf16.msra.mxu0 0
    %5711 = vmatpush.bf16.msra.mxu0 0
    %5712 = vmatpush.bf16.msra.mxu0 0
    %5713 = vmatpush.bf16.msra.mxu0 0
    %5714 = vmatpush.bf16.msra.mxu0 0
    %5715 = vmatpush.bf16.msra.mxu0 %v5619
    %5716 = vmatpush.bf16.msra.mxu0 %v5615
    %5717 = vmatmul.bf16.gmra.mxu0 %v5629
    %v5718 = vpop.f32.mrf.mxu0
    %v5719 = vadd.f32 %v5583, %v5718
    %v5720 = vpop.f32.mrf.mxu0
    %v5721 = vadd.f32 %v5583, %v5720
    %5722 = vmatmul.bf16.gmra.mxu0 %v5632
    %v5723 = vpop.f32.mrf.mxu0
    %v5724 = vadd.f32 %v5583, %v5723
    %v5725 = vpop.f32.mrf.mxu0
    %v5726 = vadd.f32 %v5583, %v5725
    %5727 = vmatmul.bf16.gmra.mxu0 %v5635
    %v5728 = vpop.f32.mrf.mxu0
    %v5729 = vadd.f32 %v5583, %v5728
    %v5730 = vpop.f32.mrf.mxu0
    %v5731 = vadd.f32 %v5583, %v5730
    %5732 = vdwg.mxu0
    %v5733 = vmax.f32 %v5647, 0.0
    %v5734 = vmax.f32 %v5671, 0.0
    %v5735 = vmax.f32 %v5695, 0.0
    %v5736 = vmax.f32 %v5719, 0.0
    %v5737 = vmax.f32 %v5649, 0.0
    %v5738 = vmax.f32 %v5673, 0.0
    %v5739 = vmax.f32 %v5697, 0.0
    %v5740 = vmax.f32 %v5721, 0.0
    %v5741 = vmax.f32 %v5652, 0.0
    %v5742 = vmax.f32 %v5676, 0.0
    %v5743 = vmax.f32 %v5700, 0.0
    %v5744 = vmax.f32 %v5724, 0.0
    %v5745 = vmax.f32 %v5654, 0.0
    %v5746 = vmax.f32 %v5678, 0.0
    %v5747 = vmax.f32 %v5702, 0.0
    %v5748 = vmax.f32 %v5726, 0.0
    %v5749 = vmax.f32 %v5657, 0.0
    %v5750 = vmax.f32 %v5681, 0.0
    %v5751 = vmax.f32 %v5705, 0.0
    %v5752 = vmax.f32 %v5729, 0.0
    %v5753 = vmax.f32 %v5659, 0.0
    %v5754 = vmax.f32 %v5683, 0.0
    %v5755 = vmax.f32 %v5707, 0.0
    %v5756 = vmax.f32 %v5731, 0.0
    %v5757 = vpack.c.bf16 %v5737, %v5733
    %v5758 = vpack.c.bf16 %v5738, %v5734
    %v5759 = vpack.c.bf16 %v5739, %v5735
    %v5760 = vpack.c.bf16 %v5740, %v5736
    %v5761 = vpack.c.bf16 %v5745, %v5741
    %v5762 = vpack.c.bf16 %v5746, %v5742
    %v5763 = vpack.c.bf16 %v5747, %v5743
    %v5764 = vpack.c.bf16 %v5748, %v5744
    %v5765 = vpack.c.bf16 %v5753, %v5749
    %v5766 = vpack.c.bf16 %v5754, %v5750
    %v5767 = vpack.c.bf16 %v5755, %v5751
    %v5768 = vpack.c.bf16 %v5756, %v5752
    %s5769 = scalar_lea.vmem %s18, 1024
    %v5770 = vld [vmem:[%s5769] sm:$0xf]
    %v5771 = vld [vmem:[%s5769 + $0x4] sm:$0xf]
    %v5772 = vld [vmem:[%s5769 + $0x8] sm:$0xf]
    %v5773 = vld [vmem:[%s5769 + $0xc] sm:$0xf]
    %v5774 = vld [vmem:[%s5769 + $0x10] sm:$0xf]
    %v5775 = vld [vmem:[%s5769 + $0x14] sm:$0xf]
    %v5776 = vld [vmem:[%s5769 + $0x18] sm:$0xf]
    %v5777 = vld [vmem:[%s5769 + $0x1c] sm:$0xf]
    %v5778 = vld [vmem:[%s5769 + $0x20] sm:$0xf]
    %v5779 = vld [vmem:[%s5769 + $0x24] sm:$0xf]
    %v5780 = vld [vmem:[%s5769 + $0x28] sm:$0xf]
    %v5781 = vld [vmem:[%s5769 + $0x2c] sm:$0xf]
    %v5782 = vld [vmem:[%s5769 + $0x30] sm:$0xf]
    %v5783 = vld [vmem:[%s5769 + $0x34] sm:$0xf]
    %v5784 = vld [vmem:[%s5769 + $0x38] sm:$0xf]
    %v5785 = vld [vmem:[%s5769 + $0x3c] sm:$0xf]
    %v5786 = vld [vmem:[%s5769 + $0x40] sm:$0xf]
    %v5787 = vld [vmem:[%s5769 + $0x44] sm:$0xf]
    %v5788 = vld [vmem:[%s5769 + $0x48] sm:$0xf]
    %v5789 = vld [vmem:[%s5769 + $0x4c] sm:$0xf]
    %v5790 = vld [vmem:[%s5769 + $0x50] sm:$0xf]
    %v5791 = vld [vmem:[%s5769 + $0x54] sm:$0xf]
    %v5792 = vld [vmem:[%s5769 + $0x58] sm:$0xf]
    %v5793 = vld [vmem:[%s5769 + $0x5c] sm:$0xf]
    %v5794 = vld [vmem:[%s5769 + $0x60] sm:$0xf]
    %v5795 = vld [vmem:[%s5769 + $0x64] sm:$0xf]
    %v5796 = vld [vmem:[%s5769 + $0x68] sm:$0xf]
    %v5797 = vld [vmem:[%s5769 + $0x6c] sm:$0xf]
    %v5798 = vld [vmem:[%s5769 + $0x70] sm:$0xf]
    %v5799 = vld [vmem:[%s5769 + $0x74] sm:$0xf]
    %v5800 = vld [vmem:[%s5769 + $0x78] sm:$0xf]
    %v5801 = vld [vmem:[%s5769 + $0x7c] sm:$0xf]
    %v5802 = vld [vmem:[%s5769 + $0x80] sm:$0xf]
    %v5803 = vld [vmem:[%s5769 + $0x84] sm:$0xf]
    %v5804 = vld [vmem:[%s5769 + $0x88] sm:$0xf]
    %v5805 = vld [vmem:[%s5769 + $0x8c] sm:$0xf]
    %v5806 = vld [vmem:[%s5769 + $0x90] sm:$0xf]
    %v5807 = vld [vmem:[%s5769 + $0x94] sm:$0xf]
    %v5808 = vld [vmem:[%s5769 + $0x98] sm:$0xf]
    %v5809 = vld [vmem:[%s5769 + $0x9c] sm:$0xf]
    %v5810 = vld [vmem:[%s5769 + $0xa0] sm:$0xf]
    %v5811 = vld [vmem:[%s5769 + $0xa4] sm:$0xf]
    %v5812 = vld [vmem:[%s5769 + $0xa8] sm:$0xf]
    %v5813 = vld [vmem:[%s5769 + $0xac] sm:$0xf]
    %v5814 = vld [vmem:[%s5769 + $0xb0] sm:$0xf]
    %v5815 = vld [vmem:[%s5769 + $0xb4] sm:$0xf]
    %v5816 = vld [vmem:[%s5769 + $0xb8] sm:$0xf]
    %v5817 = vld [vmem:[%s5769 + $0xbc] sm:$0xf]
    %v5818 = vld [vmem:[%s5769 + $0xc0] sm:$0xf]
    %v5819 = vld [vmem:[%s5769 + $0xc4] sm:$0xf]
    %v5820 = vld [vmem:[%s5769 + $0xc8] sm:$0xf]
    %v5821 = vld [vmem:[%s5769 + $0xcc] sm:$0xf]
    %v5822 = vld [vmem:[%s5769 + $0xd0] sm:$0xf]
    %v5823 = vld [vmem:[%s5769 + $0xd4] sm:$0xf]
    %v5824 = vld [vmem:[%s5769 + $0xd8] sm:$0xf]
    %v5825 = vld [vmem:[%s5769 + $0xdc] sm:$0xf]
    %v5826 = vld [vmem:[%s5769 + $0xe0] sm:$0xf]
    %v5827 = vld [vmem:[%s5769 + $0xe4] sm:$0xf]
    %v5828 = vld [vmem:[%s5769 + $0xe8] sm:$0xf]
    %v5829 = vld [vmem:[%s5769 + $0xec] sm:$0xf]
    %v5830 = vld [vmem:[%s5769 + $0xf0] sm:$0xf]
    %v5831 = vld [vmem:[%s5769 + $0xf4] sm:$0xf]
    %v5832 = vld [vmem:[%s5769 + $0xf8] sm:$0xf]
    %v5833 = vld [vmem:[%s5769 + $0xfc] sm:$0xf]
    %v5834 = vld [vmem:[%s5568 + $0x10] sm:$0xff]
    %v5835 = vld [vmem:[%s5568 + $0x18] sm:$0xff]
    %v5836 = vld [vmem:[%s5568 + $0x50] sm:$0xff]
    %v5837 = vld [vmem:[%s5568 + $0x58] sm:$0xff]
    %v5838 = vld [vmem:[%s5568 + $0x90] sm:$0xff]
    %v5839 = vld [vmem:[%s5568 + $0x98] sm:$0xff]
    %v5840 = vld [vmem:[%s5568 + $0xd0] sm:$0xff]
    %v5841 = vld [vmem:[%s5568 + $0xd8] sm:$0xff]
    %v5842 = vld [vmem:[%s5577 + $0x4] sm:$0xf]
    %v5844 = vperm.slane %v5842, 0
    %v5845 = vperm.slane %v5842, 1
    %v5846 = vperm.slane %v5842, 2
    %v5847 = vperm.slane %v5842, 3
    %v5860 = vunpack.c.l.b16 %v5834
    %v5861 = vunpack.c.h.b16 %v5834
    %v5862 = vunpack.c.l.b16 %v5835
    %v5863 = vunpack.c.h.b16 %v5835
    %v5864 = vunpack.c.l.b16 %v5836
    %v5865 = vunpack.c.h.b16 %v5836
    %v5866 = vunpack.c.l.b16 %v5837
    %v5867 = vunpack.c.h.b16 %v5837
    %v5868 = vunpack.c.l.b16 %v5838
    %v5869 = vunpack.c.h.b16 %v5838
    %v5870 = vunpack.c.l.b16 %v5839
    %v5871 = vunpack.c.h.b16 %v5839
    %v5872 = vunpack.c.l.b16 %v5840
    %v5873 = vunpack.c.h.b16 %v5840
    %v5874 = vunpack.c.l.b16 %v5841
    %v5875 = vunpack.c.h.b16 %v5841
    %v5876 = vpack.c.b16 %v5864, %v5860
    %v5877 = vpack.c.b16 %v5865, %v5861
    %v5878 = vpack.c.b16 %v5866, %v5862
    %v5879 = vpack.c.b16 %v5867, %v5863
    %v5880 = vpack.c.b16 %v5872, %v5868
    %v5881 = vpack.c.b16 %v5873, %v5869
    %v5882 = vpack.c.b16 %v5874, %v5870
    %v5883 = vpack.c.b16 %v5875, %v5871
    %5892 = vmatpush.bf16.msra.mxu0 0
    %5893 = vmatpush.bf16.msra.mxu0 0
    %5894 = vmatpush.bf16.msra.mxu0 0
    %5895 = vmatpush.bf16.msra.mxu0 0
    %5896 = vmatpush.bf16.msra.mxu0 0
    %5897 = vmatpush.bf16.msra.mxu0 0
    %5898 = vmatpush.bf16.msra.mxu0 %v5880
    %5899 = vmatpush.bf16.msra.mxu0 %v5876
    %5900 = vmatmul.bf16.gmra.mxu0 %v5629
    %v5901 = vpop.f32.mrf.mxu0
    %v5902 = vadd.f32 %v5844, %v5901
    %v5903 = vpop.f32.mrf.mxu0
    %v5904 = vadd.f32 %v5844, %v5903
    %5905 = vmatmul.bf16.gmra.mxu0 %v5632
    %v5906 = vpop.f32.mrf.mxu0
    %v5907 = vadd.f32 %v5844, %v5906
    %v5908 = vpop.f32.mrf.mxu0
    %v5909 = vadd.f32 %v5844, %v5908
    %5910 = vmatmul.bf16.gmra.mxu0 %v5635
    %v5911 = vpop.f32.mrf.mxu0
    %v5912 = vadd.f32 %v5844, %v5911
    %v5913 = vpop.f32.mrf.mxu0
    %v5914 = vadd.f32 %v5844, %v5913
    %5915 = vdwg.mxu0
    %5916 = vmatpush.bf16.msra.mxu0 0
    %5917 = vmatpush.bf16.msra.mxu0 0
    %5918 = vmatpush.bf16.msra.mxu0 0
    %5919 = vmatpush.bf16.msra.mxu0 0
    %5920 = vmatpush.bf16.msra.mxu0 0
    %5921 = vmatpush.bf16.msra.mxu0 0
    %5922 = vmatpush.bf16.msra.mxu0 %v5881
    %5923 = vmatpush.bf16.msra.mxu0 %v5877
    %5924 = vmatmul.bf16.gmra.mxu0 %v5629
    %v5925 = vpop.f32.mrf.mxu0
    %v5926 = vadd.f32 %v5845, %v5925
    %v5927 = vpop.f32.mrf.mxu0
    %v5928 = vadd.f32 %v5845, %v5927
    %5929 = vmatmul.bf16.gmra.mxu0 %v5632
    %v5930 = vpop.f32.mrf.mxu0
    %v5931 = vadd.f32 %v5845, %v5930
    %v5932 = vpop.f32.mrf.mxu0
    %v5933 = vadd.f32 %v5845, %v5932
    %5934 = vmatmul.bf16.gmra.mxu0 %v5635
    %v5935 = vpop.f32.mrf.mxu0
    %v5936 = vadd.f32 %v5845, %v5935
    %v5937 = vpop.f32.mrf.mxu0
    %v5938 = vadd.f32 %v5845, %v5937
    %5939 = vdwg.mxu0
    %5940 = vmatpush.bf16.msra.mxu0 0
    %5941 = vmatpush.bf16.msra.mxu0 0
    %5942 = vmatpush.bf16.msra.mxu0 0
    %5943 = vmatpush.bf16.msra.mxu0 0
    %5944 = vmatpush.bf16.msra.mxu0 0
    %5945 = vmatpush.bf16.msra.mxu0 0
    %5946 = vmatpush.bf16.msra.mxu0 %v5882
    %5947 = vmatpush.bf16.msra.mxu0 %v5878
    %5948 = vmatmul.bf16.gmra.mxu0 %v5629
    %v5949 = vpop.f32.mrf.mxu0
    %v5950 = vadd.f32 %v5846, %v5949
    %v5951 = vpop.f32.mrf.mxu0
    %v5952 = vadd.f32 %v5846, %v5951
    %5953 = vmatmul.bf16.gmra.mxu0 %v5632
    %v5954 = vpop.f32.mrf.mxu0
    %v5955 = vadd.f32 %v5846, %v5954
    %v5956 = vpop.f32.mrf.mxu0
    %v5957 = vadd.f32 %v5846, %v5956
    %5958 = vmatmul.bf16.gmra.mxu0 %v5635
    %v5959 = vpop.f32.mrf.mxu0
    %v5960 = vadd.f32 %v5846, %v5959
    %v5961 = vpop.f32.mrf.mxu0
    %v5962 = vadd.f32 %v5846, %v5961
    %5963 = vdwg.mxu0
    %5964 = vmatpush.bf16.msra.mxu0 0
    %5965 = vmatpush.bf16.msra.mxu0 0
    %5966 = vmatpush.bf16.msra.mxu0 0
    %5967 = vmatpush.bf16.msra.mxu0 0
    %5968 = vmatpush.bf16.msra.mxu0 0
    %5969 = vmatpush.bf16.msra.mxu0 0
    %5970 = vmatpush.bf16.msra.mxu0 %v5883
    %5971 = vmatpush.bf16.msra.mxu0 %v5879
    %5972 = vmatmul.bf16.gmra.mxu0 %v5629
    %v5973 = vpop.f32.mrf.mxu0
    %v5974 = vadd.f32 %v5847, %v5973
    %v5975 = vpop.f32.mrf.mxu0
    %v5976 = vadd.f32 %v5847, %v5975
    %5977 = vmatmul.bf16.gmra.mxu0 %v5632
    %v5978 = vpop.f32.mrf.mxu0
    %v5979 = vadd.f32 %v5847, %v5978
    %v5980 = vpop.f32.mrf.mxu0
    %v5981 = vadd.f32 %v5847, %v5980
    %5982 = vmatmul.bf16.gmra.mxu0 %v5635
    %v5983 = vpop.f32.mrf.mxu0
    %v5984 = vadd.f32 %v5847, %v5983
    %v5985 = vpop.f32.mrf.mxu0
    %v5986 = vadd.f32 %v5847, %v5985
    %5987 = vdwg.mxu0
    %v5988 = vmax.f32 %v5902, 0.0
    %v5989 = vmax.f32 %v5926, 0.0
    %v5990 = vmax.f32 %v5950, 0.0
    %v5991 = vmax.f32 %v5974, 0.0
    %v5992 = vmax.f32 %v5904, 0.0
    %v5993 = vmax.f32 %v5928, 0.0
    %v5994 = vmax.f32 %v5952, 0.0
    %v5995 = vmax.f32 %v5976, 0.0
    %v5996 = vmax.f32 %v5907, 0.0
    %v5997 = vmax.f32 %v5931, 0.0
    %v5998 = vmax.f32 %v5955, 0.0
    %v5999 = vmax.f32 %v5979, 0.0
    %v6000 = vmax.f32 %v5909, 0.0
    %v6001 = vmax.f32 %v5933, 0.0
    %v6002 = vmax.f32 %v5957, 0.0
    %v6003 = vmax.f32 %v5981, 0.0
    %v6004 = vmax.f32 %v5912, 0.0
    %v6005 = vmax.f32 %v5936, 0.0
    %v6006 = vmax.f32 %v5960, 0.0
    %v6007 = vmax.f32 %v5984, 0.0
    %v6008 = vmax.f32 %v5914, 0.0
    %v6009 = vmax.f32 %v5938, 0.0
    %v6010 = vmax.f32 %v5962, 0.0
    %v6011 = vmax.f32 %v5986, 0.0
    %v6012 = vpack.c.bf16 %v5992, %v5988
    %v6013 = vpack.c.bf16 %v5993, %v5989
    %v6014 = vpack.c.bf16 %v5994, %v5990
    %v6015 = vpack.c.bf16 %v5995, %v5991
    %v6016 = vpack.c.bf16 %v6000, %v5996
    %v6017 = vpack.c.bf16 %v6001, %v5997
    %v6018 = vpack.c.bf16 %v6002, %v5998
    %v6019 = vpack.c.bf16 %v6003, %v5999
    %v6020 = vpack.c.bf16 %v6008, %v6004
    %v6021 = vpack.c.bf16 %v6009, %v6005
    %v6022 = vpack.c.bf16 %v6010, %v6006
    %v6023 = vpack.c.bf16 %v6011, %v6007
    %v6024 = vld [vmem:[%s5769 + $0x100] sm:$0xf]
    %v6025 = vld [vmem:[%s5769 + $0x104] sm:$0xf]
    %v6026 = vld [vmem:[%s5769 + $0x108] sm:$0xf]
    %v6027 = vld [vmem:[%s5769 + $0x10c] sm:$0xf]
    %v6028 = vld [vmem:[%s5769 + $0x110] sm:$0xf]
    %v6029 = vld [vmem:[%s5769 + $0x114] sm:$0xf]
    %v6030 = vld [vmem:[%s5769 + $0x118] sm:$0xf]
    %v6031 = vld [vmem:[%s5769 + $0x11c] sm:$0xf]
    %v6032 = vld [vmem:[%s5769 + $0x120] sm:$0xf]
    %v6033 = vld [vmem:[%s5769 + $0x124] sm:$0xf]
    %v6034 = vld [vmem:[%s5769 + $0x128] sm:$0xf]
    %v6035 = vld [vmem:[%s5769 + $0x12c] sm:$0xf]
    %v6036 = vld [vmem:[%s5769 + $0x130] sm:$0xf]
    %v6037 = vld [vmem:[%s5769 + $0x134] sm:$0xf]
    %v6038 = vld [vmem:[%s5769 + $0x138] sm:$0xf]
    %v6039 = vld [vmem:[%s5769 + $0x13c] sm:$0xf]
    %v6040 = vld [vmem:[%s5769 + $0x140] sm:$0xf]
    %v6041 = vld [vmem:[%s5769 + $0x144] sm:$0xf]
    %v6042 = vld [vmem:[%s5769 + $0x148] sm:$0xf]
    %v6043 = vld [vmem:[%s5769 + $0x14c] sm:$0xf]
    %v6044 = vld [vmem:[%s5769 + $0x150] sm:$0xf]
    %v6045 = vld [vmem:[%s5769 + $0x154] sm:$0xf]
    %v6046 = vld [vmem:[%s5769 + $0x158] sm:$0xf]
    %v6047 = vld [vmem:[%s5769 + $0x15c] sm:$0xf]
    %v6048 = vld [vmem:[%s5769 + $0x160] sm:$0xf]
    %v6049 = vld [vmem:[%s5769 + $0x164] sm:$0xf]
    %v6050 = vld [vmem:[%s5769 + $0x168] sm:$0xf]
    %v6051 = vld [vmem:[%s5769 + $0x16c] sm:$0xf]
    %v6052 = vld [vmem:[%s5769 + $0x170] sm:$0xf]
    %v6053 = vld [vmem:[%s5769 + $0x174] sm:$0xf]
    %v6054 = vld [vmem:[%s5769 + $0x178] sm:$0xf]
    %v6055 = vld [vmem:[%s5769 + $0x17c] sm:$0xf]
    %v6056 = vld [vmem:[%s5769 + $0x180] sm:$0xf]
    %v6057 = vld [vmem:[%s5769 + $0x184] sm:$0xf]
    %v6058 = vld [vmem:[%s5769 + $0x188] sm:$0xf]
    %v6059 = vld [vmem:[%s5769 + $0x18c] sm:$0xf]
    %v6060 = vld [vmem:[%s5769 + $0x190] sm:$0xf]
    %v6061 = vld [vmem:[%s5769 + $0x194] sm:$0xf]
    %v6062 = vld [vmem:[%s5769 + $0x198] sm:$0xf]
    %v6063 = vld [vmem:[%s5769 + $0x19c] sm:$0xf]
    %v6064 = vld [vmem:[%s5769 + $0x1a0] sm:$0xf]
    %v6065 = vld [vmem:[%s5769 + $0x1a4] sm:$0xf]
    %v6066 = vld [vmem:[%s5769 + $0x1a8] sm:$0xf]
    %v6067 = vld [vmem:[%s5769 + $0x1ac] sm:$0xf]
    %v6068 = vld [vmem:[%s5769 + $0x1b0] sm:$0xf]
    %v6069 = vld [vmem:[%s5769 + $0x1b4] sm:$0xf]
    %v6070 = vld [vmem:[%s5769 + $0x1b8] sm:$0xf]
    %v6071 = vld [vmem:[%s5769 + $0x1bc] sm:$0xf]
    %v6072 = vld [vmem:[%s5769 + $0x1c0] sm:$0xf]
    %v6073 = vld [vmem:[%s5769 + $0x1c4] sm:$0xf]
    %v6074 = vld [vmem:[%s5769 + $0x1c8] sm:$0xf]
    %v6075 = vld [vmem:[%s5769 + $0x1cc] sm:$0xf]
    %v6076 = vld [vmem:[%s5769 + $0x1d0] sm:$0xf]
    %v6077 = vld [vmem:[%s5769 + $0x1d4] sm:$0xf]
    %v6078 = vld [vmem:[%s5769 + $0x1d8] sm:$0xf]
    %v6079 = vld [vmem:[%s5769 + $0x1dc] sm:$0xf]
    %v6080 = vld [vmem:[%s5769 + $0x1e0] sm:$0xf]
    %v6081 = vld [vmem:[%s5769 + $0x1e4] sm:$0xf]
    %v6082 = vld [vmem:[%s5769 + $0x1e8] sm:$0xf]
    %v6083 = vld [vmem:[%s5769 + $0x1ec] sm:$0xf]
    %v6084 = vld [vmem:[%s5769 + $0x1f0] sm:$0xf]
    %v6085 = vld [vmem:[%s5769 + $0x1f4] sm:$0xf]
    %v6086 = vld [vmem:[%s5769 + $0x1f8] sm:$0xf]
    %v6087 = vld [vmem:[%s5769 + $0x1fc] sm:$0xf]
    %v6152 = vunpack.c.l.b16 %v6024
    %v6153 = vunpack.c.l.b16 %v6025
    %v6154 = vunpack.c.l.b16 %v6026
    %v6155 = vunpack.c.l.b16 %v6027
    %v6156 = vunpack.c.l.b16 %v6028
    %v6157 = vunpack.c.l.b16 %v6029
    %v6158 = vunpack.c.l.b16 %v6030
    %v6159 = vunpack.c.l.b16 %v6031
    %v6160 = vunpack.c.l.b16 %v6032
    %v6161 = vunpack.c.l.b16 %v6033
    %v6162 = vunpack.c.l.b16 %v6034
    %v6163 = vunpack.c.l.b16 %v6035
    %v6164 = vunpack.c.l.b16 %v6036
    %v6165 = vunpack.c.l.b16 %v6037
    %v6166 = vunpack.c.l.b16 %v6038
    %v6167 = vunpack.c.l.b16 %v6039
    %v6168 = vunpack.c.l.b16 %v6040
    %v6169 = vunpack.c.l.b16 %v6041
    %v6170 = vunpack.c.l.b16 %v6042
    %v6171 = vunpack.c.l.b16 %v6043
    %v6172 = vunpack.c.l.b16 %v6044
    %v6173 = vunpack.c.l.b16 %v6045
    %v6174 = vunpack.c.l.b16 %v6046
    %v6175 = vunpack.c.l.b16 %v6047
    %v6176 = vunpack.c.l.b16 %v6048
    %v6177 = vunpack.c.l.b16 %v6049
    %v6178 = vunpack.c.l.b16 %v6050
    %v6179 = vunpack.c.l.b16 %v6051
    %v6180 = vunpack.c.l.b16 %v6052
    %v6181 = vunpack.c.l.b16 %v6053
    %v6182 = vunpack.c.l.b16 %v6054
    %v6183 = vunpack.c.l.b16 %v6055
    %v6184 = vunpack.c.l.b16 %v6056
    %v6185 = vunpack.c.l.b16 %v6057
    %v6186 = vunpack.c.l.b16 %v6058
    %v6187 = vunpack.c.l.b16 %v6059
    %v6188 = vunpack.c.l.b16 %v6060
    %v6189 = vunpack.c.l.b16 %v6061
    %v6190 = vunpack.c.l.b16 %v6062
    %v6191 = vunpack.c.l.b16 %v6063
    %v6192 = vunpack.c.l.b16 %v6064
    %v6193 = vunpack.c.l.b16 %v6065
    %v6194 = vunpack.c.l.b16 %v6066
    %v6195 = vunpack.c.l.b16 %v6067
    %v6196 = vunpack.c.l.b16 %v6068
    %v6197 = vunpack.c.l.b16 %v6069
    %v6198 = vunpack.c.l.b16 %v6070
    %v6199 = vunpack.c.l.b16 %v6071
    %v6200 = vunpack.c.l.b16 %v6072
    %v6201 = vunpack.c.l.b16 %v6073
    %v6202 = vunpack.c.l.b16 %v6074
    %v6203 = vunpack.c.l.b16 %v6075
    %v6204 = vunpack.c.l.b16 %v6076
    %v6205 = vunpack.c.l.b16 %v6077
    %v6206 = vunpack.c.l.b16 %v6078
    %v6207 = vunpack.c.l.b16 %v6079
    %v6208 = vunpack.c.l.b16 %v6080
    %v6209 = vunpack.c.l.b16 %v6081
    %v6210 = vunpack.c.l.b16 %v6082
    %v6211 = vunpack.c.l.b16 %v6083
    %v6212 = vunpack.c.l.b16 %v6084
    %v6213 = vunpack.c.l.b16 %v6085
    %v6214 = vunpack.c.l.b16 %v6086
    %v6215 = vunpack.c.l.b16 %v6087
    %v6216 = vpack.c.b16 %v6153, %v6152
    %v6217 = vpack.c.b16 %v6155, %v6154
    %v6218 = vpack.c.b16 %v6157, %v6156
    %v6219 = vpack.c.b16 %v6159, %v6158
    %v6220 = vpack.c.b16 %v6161, %v6160
    %v6221 = vpack.c.b16 %v6163, %v6162
    %v6222 = vpack.c.b16 %v6165, %v6164
    %v6223 = vpack.c.b16 %v6167, %v6166
    %v6224 = vpack.c.b16 %v6169, %v6168
    %v6225 = vpack.c.b16 %v6171, %v6170
    %v6226 = vpack.c.b16 %v6173, %v6172
    %v6227 = vpack.c.b16 %v6175, %v6174
    %v6228 = vpack.c.b16 %v6177, %v6176
    %v6229 = vpack.c.b16 %v6179, %v6178
    %v6230 = vpack.c.b16 %v6181, %v6180
    %v6231 = vpack.c.b16 %v6183, %v6182
    %v6232 = vpack.c.b16 %v6185, %v6184
    %v6233 = vpack.c.b16 %v6187, %v6186
    %v6234 = vpack.c.b16 %v6189, %v6188
    %v6235 = vpack.c.b16 %v6191, %v6190
    %v6236 = vpack.c.b16 %v6193, %v6192
    %v6237 = vpack.c.b16 %v6195, %v6194
    %v6238 = vpack.c.b16 %v6197, %v6196
    %v6239 = vpack.c.b16 %v6199, %v6198
    %v6240 = vpack.c.b16 %v6201, %v6200
    %v6241 = vpack.c.b16 %v6203, %v6202
    %v6242 = vpack.c.b16 %v6205, %v6204
    %v6243 = vpack.c.b16 %v6207, %v6206
    %v6244 = vpack.c.b16 %v6209, %v6208
    %v6245 = vpack.c.b16 %v6211, %v6210
    %v6246 = vpack.c.b16 %v6213, %v6212
    %v6247 = vpack.c.b16 %v6215, %v6214
    %6280 = vmatpush.bf16.msra.mxu0 %v6223
    %6281 = vmatpush.bf16.msra.mxu0 %v6222
    %6282 = vmatpush.bf16.msra.mxu0 %v6221
    %6283 = vmatpush.bf16.msra.mxu0 %v6220
    %6284 = vmatpush.bf16.msra.mxu0 %v6219
    %6285 = vmatpush.bf16.msra.mxu0 %v6218
    %6286 = vmatpush.bf16.msra.mxu0 %v6217
    %6287 = vmatpush.bf16.msra.mxu0 %v6216
    %6288 = vmatmul.bf16.gmra.mxu0 %v6012
    %v6289 = vpop.f32.mrf.mxu0
    %v6290 = vadd.f32 0.0, %v6289
    %v6291 = vpop.f32.mrf.mxu0
    %v6292 = vadd.f32 0.0, %v6291
    %6293 = vmatmul.bf16.gmra.mxu0 %v6016
    %v6294 = vpop.f32.mrf.mxu0
    %v6295 = vadd.f32 0.0, %v6294
    %v6296 = vpop.f32.mrf.mxu0
    %v6297 = vadd.f32 0.0, %v6296
    %6298 = vmatmul.bf16.gmra.mxu0 %v6020
    %v6299 = vpop.f32.mrf.mxu0
    %v6300 = vadd.f32 0.0, %v6299
    %v6301 = vpop.f32.mrf.mxu0
    %v6302 = vadd.f32 0.0, %v6301
    %6303 = vdwg.mxu0
    %6304 = vmatpush.bf16.msra.mxu0 %v6231
    %6305 = vmatpush.bf16.msra.mxu0 %v6230
    %6306 = vmatpush.bf16.msra.mxu0 %v6229
    %6307 = vmatpush.bf16.msra.mxu0 %v6228
    %6308 = vmatpush.bf16.msra.mxu0 %v6227
    %6309 = vmatpush.bf16.msra.mxu0 %v6226
    %6310 = vmatpush.bf16.msra.mxu0 %v6225
    %6311 = vmatpush.bf16.msra.mxu0 %v6224
    %6312 = vmatmul.bf16.gmra.mxu0 %v6013
    %v6313 = vpop.f32.mrf.mxu0
    %v6314 = vadd.f32 %v6290, %v6313
    %v6315 = vpop.f32.mrf.mxu0
    %v6316 = vadd.f32 %v6292, %v6315
    %6317 = vmatmul.bf16.gmra.mxu0 %v6017
    %v6318 = vpop.f32.mrf.mxu0
    %v6319 = vadd.f32 %v6295, %v6318
    %v6320 = vpop.f32.mrf.mxu0
    %v6321 = vadd.f32 %v6297, %v6320
    %6322 = vmatmul.bf16.gmra.mxu0 %v6021
    %v6323 = vpop.f32.mrf.mxu0
    %v6324 = vadd.f32 %v6300, %v6323
    %v6325 = vpop.f32.mrf.mxu0
    %v6326 = vadd.f32 %v6302, %v6325
    %6327 = vdwg.mxu0
    %6328 = vmatpush.bf16.msra.mxu0 %v6239
    %6329 = vmatpush.bf16.msra.mxu0 %v6238
    %6330 = vmatpush.bf16.msra.mxu0 %v6237
    %6331 = vmatpush.bf16.msra.mxu0 %v6236
    %6332 = vmatpush.bf16.msra.mxu0 %v6235
    %6333 = vmatpush.bf16.msra.mxu0 %v6234
    %6334 = vmatpush.bf16.msra.mxu0 %v6233
    %6335 = vmatpush.bf16.msra.mxu0 %v6232
    %6336 = vmatmul.bf16.gmra.mxu0 %v6014
    %v6337 = vpop.f32.mrf.mxu0
    %v6338 = vadd.f32 %v6314, %v6337
    %v6339 = vpop.f32.mrf.mxu0
    %v6340 = vadd.f32 %v6316, %v6339
    %6341 = vmatmul.bf16.gmra.mxu0 %v6018
    %v6342 = vpop.f32.mrf.mxu0
    %v6343 = vadd.f32 %v6319, %v6342
    %v6344 = vpop.f32.mrf.mxu0
    %v6345 = vadd.f32 %v6321, %v6344
    %6346 = vmatmul.bf16.gmra.mxu0 %v6022
    %v6347 = vpop.f32.mrf.mxu0
    %v6348 = vadd.f32 %v6324, %v6347
    %v6349 = vpop.f32.mrf.mxu0
    %v6350 = vadd.f32 %v6326, %v6349
    %6351 = vdwg.mxu0
    %6352 = vmatpush.bf16.msra.mxu0 %v6247
    %6353 = vmatpush.bf16.msra.mxu0 %v6246
    %6354 = vmatpush.bf16.msra.mxu0 %v6245
    %6355 = vmatpush.bf16.msra.mxu0 %v6244
    %6356 = vmatpush.bf16.msra.mxu0 %v6243
    %6357 = vmatpush.bf16.msra.mxu0 %v6242
    %6358 = vmatpush.bf16.msra.mxu0 %v6241
    %6359 = vmatpush.bf16.msra.mxu0 %v6240
    %6360 = vmatmul.bf16.gmra.mxu0 %v6015
    %v6361 = vpop.f32.mrf.mxu0
    %v6362 = vadd.f32 %v6338, %v6361
    %v6363 = vpop.f32.mrf.mxu0
    %v6364 = vadd.f32 %v6340, %v6363
    %6365 = vmatmul.bf16.gmra.mxu0 %v6019
    %v6366 = vpop.f32.mrf.mxu0
    %v6367 = vadd.f32 %v6343, %v6366
    %v6368 = vpop.f32.mrf.mxu0
    %v6369 = vadd.f32 %v6345, %v6368
    %6370 = vmatmul.bf16.gmra.mxu0 %v6023
    %v6371 = vpop.f32.mrf.mxu0
    %v6372 = vadd.f32 %v6348, %v6371
    %v6373 = vpop.f32.mrf.mxu0
    %v6374 = vadd.f32 %v6350, %v6373
    %6375 = vdwg.mxu0
    %v6440 = vunpack.c.l.b16 %v5770
    %v6441 = vunpack.c.l.b16 %v5771
    %v6442 = vunpack.c.l.b16 %v5772
    %v6443 = vunpack.c.l.b16 %v5773
    %v6444 = vunpack.c.l.b16 %v5774
    %v6445 = vunpack.c.l.b16 %v5775
    %v6446 = vunpack.c.l.b16 %v5776
    %v6447 = vunpack.c.l.b16 %v5777
    %v6448 = vunpack.c.l.b16 %v5778
    %v6449 = vunpack.c.l.b16 %v5779
    %v6450 = vunpack.c.l.b16 %v5780
    %v6451 = vunpack.c.l.b16 %v5781
    %v6452 = vunpack.c.l.b16 %v5782
    %v6453 = vunpack.c.l.b16 %v5783
    %v6454 = vunpack.c.l.b16 %v5784
    %v6455 = vunpack.c.l.b16 %v5785
    %v6456 = vunpack.c.l.b16 %v5786
    %v6457 = vunpack.c.l.b16 %v5787
    %v6458 = vunpack.c.l.b16 %v5788
    %v6459 = vunpack.c.l.b16 %v5789
    %v6460 = vunpack.c.l.b16 %v5790
    %v6461 = vunpack.c.l.b16 %v5791
    %v6462 = vunpack.c.l.b16 %v5792
    %v6463 = vunpack.c.l.b16 %v5793
    %v6464 = vunpack.c.l.b16 %v5794
    %v6465 = vunpack.c.l.b16 %v5795
    %v6466 = vunpack.c.l.b16 %v5796
    %v6467 = vunpack.c.l.b16 %v5797
    %v6468 = vunpack.c.l.b16 %v5798
    %v6469 = vunpack.c.l.b16 %v5799
    %v6470 = vunpack.c.l.b16 %v5800
    %v6471 = vunpack.c.l.b16 %v5801
    %v6472 = vunpack.c.l.b16 %v5802
    %v6473 = vunpack.c.l.b16 %v5803
    %v6474 = vunpack.c.l.b16 %v5804
    %v6475 = vunpack.c.l.b16 %v5805
    %v6476 = vunpack.c.l.b16 %v5806
    %v6477 = vunpack.c.l.b16 %v5807
    %v6478 = vunpack.c.l.b16 %v5808
    %v6479 = vunpack.c.l.b16 %v5809
    %v6480 = vunpack.c.l.b16 %v5810
    %v6481 = vunpack.c.l.b16 %v5811
    %v6482 = vunpack.c.l.b16 %v5812
    %v6483 = vunpack.c.l.b16 %v5813
    %v6484 = vunpack.c.l.b16 %v5814
    %v6485 = vunpack.c.l.b16 %v5815
    %v6486 = vunpack.c.l.b16 %v5816
    %v6487 = vunpack.c.l.b16 %v5817
    %v6488 = vunpack.c.l.b16 %v5818
    %v6489 = vunpack.c.l.b16 %v5819
    %v6490 = vunpack.c.l.b16 %v5820
    %v6491 = vunpack.c.l.b16 %v5821
    %v6492 = vunpack.c.l.b16 %v5822
    %v6493 = vunpack.c.l.b16 %v5823
    %v6494 = vunpack.c.l.b16 %v5824
    %v6495 = vunpack.c.l.b16 %v5825
    %v6496 = vunpack.c.l.b16 %v5826
    %v6497 = vunpack.c.l.b16 %v5827
    %v6498 = vunpack.c.l.b16 %v5828
    %v6499 = vunpack.c.l.b16 %v5829
    %v6500 = vunpack.c.l.b16 %v5830
    %v6501 = vunpack.c.l.b16 %v5831
    %v6502 = vunpack.c.l.b16 %v5832
    %v6503 = vunpack.c.l.b16 %v5833
    %v6504 = vpack.c.b16 %v6441, %v6440
    %v6505 = vpack.c.b16 %v6443, %v6442
    %v6506 = vpack.c.b16 %v6445, %v6444
    %v6507 = vpack.c.b16 %v6447, %v6446
    %v6508 = vpack.c.b16 %v6449, %v6448
    %v6509 = vpack.c.b16 %v6451, %v6450
    %v6510 = vpack.c.b16 %v6453, %v6452
    %v6511 = vpack.c.b16 %v6455, %v6454
    %v6512 = vpack.c.b16 %v6457, %v6456
    %v6513 = vpack.c.b16 %v6459, %v6458
    %v6514 = vpack.c.b16 %v6461, %v6460
    %v6515 = vpack.c.b16 %v6463, %v6462
    %v6516 = vpack.c.b16 %v6465, %v6464
    %v6517 = vpack.c.b16 %v6467, %v6466
    %v6518 = vpack.c.b16 %v6469, %v6468
    %v6519 = vpack.c.b16 %v6471, %v6470
    %v6520 = vpack.c.b16 %v6473, %v6472
    %v6521 = vpack.c.b16 %v6475, %v6474
    %v6522 = vpack.c.b16 %v6477, %v6476
    %v6523 = vpack.c.b16 %v6479, %v6478
    %v6524 = vpack.c.b16 %v6481, %v6480
    %v6525 = vpack.c.b16 %v6483, %v6482
    %v6526 = vpack.c.b16 %v6485, %v6484
    %v6527 = vpack.c.b16 %v6487, %v6486
    %v6528 = vpack.c.b16 %v6489, %v6488
    %v6529 = vpack.c.b16 %v6491, %v6490
    %v6530 = vpack.c.b16 %v6493, %v6492
    %v6531 = vpack.c.b16 %v6495, %v6494
    %v6532 = vpack.c.b16 %v6497, %v6496
    %v6533 = vpack.c.b16 %v6499, %v6498
    %v6534 = vpack.c.b16 %v6501, %v6500
    %v6535 = vpack.c.b16 %v6503, %v6502
    %6568 = vmatpush.bf16.msra.mxu0 %v6511
    %6569 = vmatpush.bf16.msra.mxu0 %v6510
    %6570 = vmatpush.bf16.msra.mxu0 %v6509
    %6571 = vmatpush.bf16.msra.mxu0 %v6508
    %6572 = vmatpush.bf16.msra.mxu0 %v6507
    %6573 = vmatpush.bf16.msra.mxu0 %v6506
    %6574 = vmatpush.bf16.msra.mxu0 %v6505
    %6575 = vmatpush.bf16.msra.mxu0 %v6504
    %6576 = vmatmul.bf16.gmra.mxu0 %v5757
    %v6577 = vpop.f32.mrf.mxu0
    %v6578 = vadd.f32 %v6362, %v6577
    %v6579 = vpop.f32.mrf.mxu0
    %v6580 = vadd.f32 %v6364, %v6579
    %6581 = vmatmul.bf16.gmra.mxu0 %v5761
    %v6582 = vpop.f32.mrf.mxu0
    %v6583 = vadd.f32 %v6367, %v6582
    %v6584 = vpop.f32.mrf.mxu0
    %v6585 = vadd.f32 %v6369, %v6584
    %6586 = vmatmul.bf16.gmra.mxu0 %v5765
    %v6587 = vpop.f32.mrf.mxu0
    %v6588 = vadd.f32 %v6372, %v6587
    %v6589 = vpop.f32.mrf.mxu0
    %v6590 = vadd.f32 %v6374, %v6589
    %6591 = vdwg.mxu0
    %6592 = vmatpush.bf16.msra.mxu0 %v6519
    %6593 = vmatpush.bf16.msra.mxu0 %v6518
    %6594 = vmatpush.bf16.msra.mxu0 %v6517
    %6595 = vmatpush.bf16.msra.mxu0 %v6516
    %6596 = vmatpush.bf16.msra.mxu0 %v6515
    %6597 = vmatpush.bf16.msra.mxu0 %v6514
    %6598 = vmatpush.bf16.msra.mxu0 %v6513
    %6599 = vmatpush.bf16.msra.mxu0 %v6512
    %6600 = vmatmul.bf16.gmra.mxu0 %v5758
    %v6601 = vpop.f32.mrf.mxu0
    %v6602 = vadd.f32 %v6578, %v6601
    %v6603 = vpop.f32.mrf.mxu0
    %v6604 = vadd.f32 %v6580, %v6603
    %6605 = vmatmul.bf16.gmra.mxu0 %v5762
    %v6606 = vpop.f32.mrf.mxu0
    %v6607 = vadd.f32 %v6583, %v6606
    %v6608 = vpop.f32.mrf.mxu0
    %v6609 = vadd.f32 %v6585, %v6608
    %6610 = vmatmul.bf16.gmra.mxu0 %v5766
    %v6611 = vpop.f32.mrf.mxu0
    %v6612 = vadd.f32 %v6588, %v6611
    %v6613 = vpop.f32.mrf.mxu0
    %v6614 = vadd.f32 %v6590, %v6613
    %6615 = vdwg.mxu0
    %6616 = vmatpush.bf16.msra.mxu0 %v6527
    %6617 = vmatpush.bf16.msra.mxu0 %v6526
    %6618 = vmatpush.bf16.msra.mxu0 %v6525
    %6619 = vmatpush.bf16.msra.mxu0 %v6524
    %6620 = vmatpush.bf16.msra.mxu0 %v6523
    %6621 = vmatpush.bf16.msra.mxu0 %v6522
    %6622 = vmatpush.bf16.msra.mxu0 %v6521
    %6623 = vmatpush.bf16.msra.mxu0 %v6520
    %6624 = vmatmul.bf16.gmra.mxu0 %v5759
    %v6625 = vpop.f32.mrf.mxu0
    %v6626 = vadd.f32 %v6602, %v6625
    %v6627 = vpop.f32.mrf.mxu0
    %v6628 = vadd.f32 %v6604, %v6627
    %6629 = vmatmul.bf16.gmra.mxu0 %v5763
    %v6630 = vpop.f32.mrf.mxu0
    %v6631 = vadd.f32 %v6607, %v6630
    %v6632 = vpop.f32.mrf.mxu0
    %v6633 = vadd.f32 %v6609, %v6632
    %6634 = vmatmul.bf16.gmra.mxu0 %v5767
    %v6635 = vpop.f32.mrf.mxu0
    %v6636 = vadd.f32 %v6612, %v6635
    %v6637 = vpop.f32.mrf.mxu0
    %v6638 = vadd.f32 %v6614, %v6637
    %6639 = vdwg.mxu0
    %6640 = vmatpush.bf16.msra.mxu0 %v6535
    %6641 = vmatpush.bf16.msra.mxu0 %v6534
    %6642 = vmatpush.bf16.msra.mxu0 %v6533
    %6643 = vmatpush.bf16.msra.mxu0 %v6532
    %6644 = vmatpush.bf16.msra.mxu0 %v6531
    %6645 = vmatpush.bf16.msra.mxu0 %v6530
    %6646 = vmatpush.bf16.msra.mxu0 %v6529
    %6647 = vmatpush.bf16.msra.mxu0 %v6528
    %6648 = vmatmul.bf16.gmra.mxu0 %v5760
    %v6649 = vpop.f32.mrf.mxu0
    %v6650 = vadd.f32 %v6626, %v6649
    %v6651 = vpop.f32.mrf.mxu0
    %v6652 = vadd.f32 %v6628, %v6651
    %6653 = vmatmul.bf16.gmra.mxu0 %v5764
    %v6654 = vpop.f32.mrf.mxu0
    %v6655 = vadd.f32 %v6631, %v6654
    %v6656 = vpop.f32.mrf.mxu0
    %v6657 = vadd.f32 %v6633, %v6656
    %6658 = vmatmul.bf16.gmra.mxu0 %v5768
    %v6659 = vpop.f32.mrf.mxu0
    %v6660 = vadd.f32 %v6636, %v6659
    %v6661 = vpop.f32.mrf.mxu0
    %v6662 = vadd.f32 %v6638, %v6661
    %6663 = vdwg.mxu0
    %v6664 = vld [vmem:[%s5568 + $0x20] sm:$0xff]
    %v6665 = vld [vmem:[%s5568 + $0x28] sm:$0xff]
    %v6666 = vld [vmem:[%s5568 + $0x60] sm:$0xff]
    %v6667 = vld [vmem:[%s5568 + $0x68] sm:$0xff]
    %v6668 = vld [vmem:[%s5568 + $0xa0] sm:$0xff]
    %v6669 = vld [vmem:[%s5568 + $0xa8] sm:$0xff]
    %v6670 = vld [vmem:[%s5568 + $0xe0] sm:$0xff]
    %v6671 = vld [vmem:[%s5568 + $0xe8] sm:$0xff]
    %v6672 = vld [vmem:[%s5577 + $0x8] sm:$0xf]
    %v6674 = vperm.slane %v6672, 0
    %v6675 = vperm.slane %v6672, 1
    %v6676 = vperm.slane %v6672, 2
    %v6677 = vperm.slane %v6672, 3
    %v6690 = vunpack.c.l.b16 %v6664
    %v6691 = vunpack.c.h.b16 %v6664
    %v6692 = vunpack.c.l.b16 %v6665
    %v6693 = vunpack.c.h.b16 %v6665
    %v6694 = vunpack.c.l.b16 %v6666
    %v6695 = vunpack.c.h.b16 %v6666
    %v6696 = vunpack.c.l.b16 %v6667
    %v6697 = vunpack.c.h.b16 %v6667
    %v6698 = vunpack.c.l.b16 %v6668
    %v6699 = vunpack.c.h.b16 %v6668
    %v6700 = vunpack.c.l.b16 %v6669
    %v6701 = vunpack.c.h.b16 %v6669
    %v6702 = vunpack.c.l.b16 %v6670
    %v6703 = vunpack.c.h.b16 %v6670
    %v6704 = vunpack.c.l.b16 %v6671
    %v6705 = vunpack.c.h.b16 %v6671
    %v6706 = vpack.c.b16 %v6694, %v6690
    %v6707 = vpack.c.b16 %v6695, %v6691
    %v6708 = vpack.c.b16 %v6696, %v6692
    %v6709 = vpack.c.b16 %v6697, %v6693
    %v6710 = vpack.c.b16 %v6702, %v6698
    %v6711 = vpack.c.b16 %v6703, %v6699
    %v6712 = vpack.c.b16 %v6704, %v6700
    %v6713 = vpack.c.b16 %v6705, %v6701
    %6722 = vmatpush.bf16.msra.mxu0 0
    %6723 = vmatpush.bf16.msra.mxu0 0
    %6724 = vmatpush.bf16.msra.mxu0 0
    %6725 = vmatpush.bf16.msra.mxu0 0
    %6726 = vmatpush.bf16.msra.mxu0 0
    %6727 = vmatpush.bf16.msra.mxu0 0
    %6728 = vmatpush.bf16.msra.mxu0 %v6710
    %6729 = vmatpush.bf16.msra.mxu0 %v6706
    %6730 = vmatmul.bf16.gmra.mxu0 %v5629
    %v6731 = vpop.f32.mrf.mxu0
    %v6732 = vadd.f32 %v6674, %v6731
    %v6733 = vpop.f32.mrf.mxu0
    %v6734 = vadd.f32 %v6674, %v6733
    %6735 = vmatmul.bf16.gmra.mxu0 %v5632
    %v6736 = vpop.f32.mrf.mxu0
    %v6737 = vadd.f32 %v6674, %v6736
    %v6738 = vpop.f32.mrf.mxu0
    %v6739 = vadd.f32 %v6674, %v6738
    %6740 = vmatmul.bf16.gmra.mxu0 %v5635
    %v6741 = vpop.f32.mrf.mxu0
    %v6742 = vadd.f32 %v6674, %v6741
    %v6743 = vpop.f32.mrf.mxu0
    %v6744 = vadd.f32 %v6674, %v6743
    %6745 = vdwg.mxu0
    %6746 = vmatpush.bf16.msra.mxu0 0
    %6747 = vmatpush.bf16.msra.mxu0 0
    %6748 = vmatpush.bf16.msra.mxu0 0
    %6749 = vmatpush.bf16.msra.mxu0 0
    %6750 = vmatpush.bf16.msra.mxu0 0
    %6751 = vmatpush.bf16.msra.mxu0 0
    %6752 = vmatpush.bf16.msra.mxu0 %v6711
    %6753 = vmatpush.bf16.msra.mxu0 %v6707
    %6754 = vmatmul.bf16.gmra.mxu0 %v5629
    %v6755 = vpop.f32.mrf.mxu0
    %v6756 = vadd.f32 %v6675, %v6755
    %v6757 = vpop.f32.mrf.mxu0
    %v6758 = vadd.f32 %v6675, %v6757
    %6759 = vmatmul.bf16.gmra.mxu0 %v5632
    %v6760 = vpop.f32.mrf.mxu0
    %v6761 = vadd.f32 %v6675, %v6760
    %v6762 = vpop.f32.mrf.mxu0
    %v6763 = vadd.f32 %v6675, %v6762
    %6764 = vmatmul.bf16.gmra.mxu0 %v5635
    %v6765 = vpop.f32.mrf.mxu0
    %v6766 = vadd.f32 %v6675, %v6765
    %v6767 = vpop.f32.mrf.mxu0
    %v6768 = vadd.f32 %v6675, %v6767
    %6769 = vdwg.mxu0
    %6770 = vmatpush.bf16.msra.mxu0 0
    %6771 = vmatpush.bf16.msra.mxu0 0
    %6772 = vmatpush.bf16.msra.mxu0 0
    %6773 = vmatpush.bf16.msra.mxu0 0
    %6774 = vmatpush.bf16.msra.mxu0 0
    %6775 = vmatpush.bf16.msra.mxu0 0
    %6776 = vmatpush.bf16.msra.mxu0 %v6712
    %6777 = vmatpush.bf16.msra.mxu0 %v6708
    %6778 = vmatmul.bf16.gmra.mxu0 %v5629
    %v6779 = vpop.f32.mrf.mxu0
    %v6780 = vadd.f32 %v6676, %v6779
    %v6781 = vpop.f32.mrf.mxu0
    %v6782 = vadd.f32 %v6676, %v6781
    %6783 = vmatmul.bf16.gmra.mxu0 %v5632
    %v6784 = vpop.f32.mrf.mxu0
    %v6785 = vadd.f32 %v6676, %v6784
    %v6786 = vpop.f32.mrf.mxu0
    %v6787 = vadd.f32 %v6676, %v6786
    %6788 = vmatmul.bf16.gmra.mxu0 %v5635
    %v6789 = vpop.f32.mrf.mxu0
    %v6790 = vadd.f32 %v6676, %v6789
    %v6791 = vpop.f32.mrf.mxu0
    %v6792 = vadd.f32 %v6676, %v6791
    %6793 = vdwg.mxu0
    %6794 = vmatpush.bf16.msra.mxu0 0
    %6795 = vmatpush.bf16.msra.mxu0 0
    %6796 = vmatpush.bf16.msra.mxu0 0
    %6797 = vmatpush.bf16.msra.mxu0 0
    %6798 = vmatpush.bf16.msra.mxu0 0
    %6799 = vmatpush.bf16.msra.mxu0 0
    %6800 = vmatpush.bf16.msra.mxu0 %v6713
    %6801 = vmatpush.bf16.msra.mxu0 %v6709
    %6802 = vmatmul.bf16.gmra.mxu0 %v5629
    %v6803 = vpop.f32.mrf.mxu0
    %v6804 = vadd.f32 %v6677, %v6803
    %v6805 = vpop.f32.mrf.mxu0
    %v6806 = vadd.f32 %v6677, %v6805
    %6807 = vmatmul.bf16.gmra.mxu0 %v5632
    %v6808 = vpop.f32.mrf.mxu0
    %v6809 = vadd.f32 %v6677, %v6808
    %v6810 = vpop.f32.mrf.mxu0
    %v6811 = vadd.f32 %v6677, %v6810
    %6812 = vmatmul.bf16.gmra.mxu0 %v5635
    %v6813 = vpop.f32.mrf.mxu0
    %v6814 = vadd.f32 %v6677, %v6813
    %v6815 = vpop.f32.mrf.mxu0
    %v6816 = vadd.f32 %v6677, %v6815
    %6817 = vdwg.mxu0
    %v6818 = vmax.f32 %v6732, 0.0
    %v6819 = vmax.f32 %v6756, 0.0
    %v6820 = vmax.f32 %v6780, 0.0
    %v6821 = vmax.f32 %v6804, 0.0
    %v6822 = vmax.f32 %v6734, 0.0
    %v6823 = vmax.f32 %v6758, 0.0
    %v6824 = vmax.f32 %v6782, 0.0
    %v6825 = vmax.f32 %v6806, 0.0
    %v6826 = vmax.f32 %v6737, 0.0
    %v6827 = vmax.f32 %v6761, 0.0
    %v6828 = vmax.f32 %v6785, 0.0
    %v6829 = vmax.f32 %v6809, 0.0
    %v6830 = vmax.f32 %v6739, 0.0
    %v6831 = vmax.f32 %v6763, 0.0
    %v6832 = vmax.f32 %v6787, 0.0
    %v6833 = vmax.f32 %v6811, 0.0
    %v6834 = vmax.f32 %v6742, 0.0
    %v6835 = vmax.f32 %v6766, 0.0
    %v6836 = vmax.f32 %v6790, 0.0
    %v6837 = vmax.f32 %v6814, 0.0
    %v6838 = vmax.f32 %v6744, 0.0
    %v6839 = vmax.f32 %v6768, 0.0
    %v6840 = vmax.f32 %v6792, 0.0
    %v6841 = vmax.f32 %v6816, 0.0
    %v6842 = vpack.c.bf16 %v6822, %v6818
    %v6843 = vpack.c.bf16 %v6823, %v6819
    %v6844 = vpack.c.bf16 %v6824, %v6820
    %v6845 = vpack.c.bf16 %v6825, %v6821
    %v6846 = vpack.c.bf16 %v6830, %v6826
    %v6847 = vpack.c.bf16 %v6831, %v6827
    %v6848 = vpack.c.bf16 %v6832, %v6828
    %v6849 = vpack.c.bf16 %v6833, %v6829
    %v6850 = vpack.c.bf16 %v6838, %v6834
    %v6851 = vpack.c.bf16 %v6839, %v6835
    %v6852 = vpack.c.bf16 %v6840, %v6836
    %v6853 = vpack.c.bf16 %v6841, %v6837
    %v6854 = vld [vmem:[%s5769 + $0x200] sm:$0xf]
    %v6855 = vld [vmem:[%s5769 + $0x204] sm:$0xf]
    %v6856 = vld [vmem:[%s5769 + $0x208] sm:$0xf]
    %v6857 = vld [vmem:[%s5769 + $0x20c] sm:$0xf]
    %v6858 = vld [vmem:[%s5769 + $0x210] sm:$0xf]
    %v6859 = vld [vmem:[%s5769 + $0x214] sm:$0xf]
    %v6860 = vld [vmem:[%s5769 + $0x218] sm:$0xf]
    %v6861 = vld [vmem:[%s5769 + $0x21c] sm:$0xf]
    %v6862 = vld [vmem:[%s5769 + $0x220] sm:$0xf]
    %v6863 = vld [vmem:[%s5769 + $0x224] sm:$0xf]
    %v6864 = vld [vmem:[%s5769 + $0x228] sm:$0xf]
    %v6865 = vld [vmem:[%s5769 + $0x22c] sm:$0xf]
    %v6866 = vld [vmem:[%s5769 + $0x230] sm:$0xf]
    %v6867 = vld [vmem:[%s5769 + $0x234] sm:$0xf]
    %v6868 = vld [vmem:[%s5769 + $0x238] sm:$0xf]
    %v6869 = vld [vmem:[%s5769 + $0x23c] sm:$0xf]
    %v6870 = vld [vmem:[%s5769 + $0x240] sm:$0xf]
    %v6871 = vld [vmem:[%s5769 + $0x244] sm:$0xf]
    %v6872 = vld [vmem:[%s5769 + $0x248] sm:$0xf]
    %v6873 = vld [vmem:[%s5769 + $0x24c] sm:$0xf]
    %v6874 = vld [vmem:[%s5769 + $0x250] sm:$0xf]
    %v6875 = vld [vmem:[%s5769 + $0x254] sm:$0xf]
    %v6876 = vld [vmem:[%s5769 + $0x258] sm:$0xf]
    %v6877 = vld [vmem:[%s5769 + $0x25c] sm:$0xf]
    %v6878 = vld [vmem:[%s5769 + $0x260] sm:$0xf]
    %v6879 = vld [vmem:[%s5769 + $0x264] sm:$0xf]
    %v6880 = vld [vmem:[%s5769 + $0x268] sm:$0xf]
    %v6881 = vld [vmem:[%s5769 + $0x26c] sm:$0xf]
    %v6882 = vld [vmem:[%s5769 + $0x270] sm:$0xf]
    %v6883 = vld [vmem:[%s5769 + $0x274] sm:$0xf]
    %v6884 = vld [vmem:[%s5769 + $0x278] sm:$0xf]
    %v6885 = vld [vmem:[%s5769 + $0x27c] sm:$0xf]
    %v6886 = vld [vmem:[%s5769 + $0x280] sm:$0xf]
    %v6887 = vld [vmem:[%s5769 + $0x284] sm:$0xf]
    %v6888 = vld [vmem:[%s5769 + $0x288] sm:$0xf]
    %v6889 = vld [vmem:[%s5769 + $0x28c] sm:$0xf]
    %v6890 = vld [vmem:[%s5769 + $0x290] sm:$0xf]
    %v6891 = vld [vmem:[%s5769 + $0x294] sm:$0xf]
    %v6892 = vld [vmem:[%s5769 + $0x298] sm:$0xf]
    %v6893 = vld [vmem:[%s5769 + $0x29c] sm:$0xf]
    %v6894 = vld [vmem:[%s5769 + $0x2a0] sm:$0xf]
    %v6895 = vld [vmem:[%s5769 + $0x2a4] sm:$0xf]
    %v6896 = vld [vmem:[%s5769 + $0x2a8] sm:$0xf]
    %v6897 = vld [vmem:[%s5769 + $0x2ac] sm:$0xf]
    %v6898 = vld [vmem:[%s5769 + $0x2b0] sm:$0xf]
    %v6899 = vld [vmem:[%s5769 + $0x2b4] sm:$0xf]
    %v6900 = vld [vmem:[%s5769 + $0x2b8] sm:$0xf]
    %v6901 = vld [vmem:[%s5769 + $0x2bc] sm:$0xf]
    %v6902 = vld [vmem:[%s5769 + $0x2c0] sm:$0xf]
    %v6903 = vld [vmem:[%s5769 + $0x2c4] sm:$0xf]
    %v6904 = vld [vmem:[%s5769 + $0x2c8] sm:$0xf]
    %v6905 = vld [vmem:[%s5769 + $0x2cc] sm:$0xf]
    %v6906 = vld [vmem:[%s5769 + $0x2d0] sm:$0xf]
    %v6907 = vld [vmem:[%s5769 + $0x2d4] sm:$0xf]
    %v6908 = vld [vmem:[%s5769 + $0x2d8] sm:$0xf]
    %v6909 = vld [vmem:[%s5769 + $0x2dc] sm:$0xf]
    %v6910 = vld [vmem:[%s5769 + $0x2e0] sm:$0xf]
    %v6911 = vld [vmem:[%s5769 + $0x2e4] sm:$0xf]
    %v6912 = vld [vmem:[%s5769 + $0x2e8] sm:$0xf]
    %v6913 = vld [vmem:[%s5769 + $0x2ec] sm:$0xf]
    %v6914 = vld [vmem:[%s5769 + $0x2f0] sm:$0xf]
    %v6915 = vld [vmem:[%s5769 + $0x2f4] sm:$0xf]
    %v6916 = vld [vmem:[%s5769 + $0x2f8] sm:$0xf]
    %v6917 = vld [vmem:[%s5769 + $0x2fc] sm:$0xf]
    %v6982 = vunpack.c.l.b16 %v6854
    %v6983 = vunpack.c.l.b16 %v6855
    %v6984 = vunpack.c.l.b16 %v6856
    %v6985 = vunpack.c.l.b16 %v6857
    %v6986 = vunpack.c.l.b16 %v6858
    %v6987 = vunpack.c.l.b16 %v6859
    %v6988 = vunpack.c.l.b16 %v6860
    %v6989 = vunpack.c.l.b16 %v6861
    %v6990 = vunpack.c.l.b16 %v6862
    %v6991 = vunpack.c.l.b16 %v6863
    %v6992 = vunpack.c.l.b16 %v6864
    %v6993 = vunpack.c.l.b16 %v6865
    %v6994 = vunpack.c.l.b16 %v6866
    %v6995 = vunpack.c.l.b16 %v6867
    %v6996 = vunpack.c.l.b16 %v6868
    %v6997 = vunpack.c.l.b16 %v6869
    %v6998 = vunpack.c.l.b16 %v6870
    %v6999 = vunpack.c.l.b16 %v6871
    %v7000 = vunpack.c.l.b16 %v6872
    %v7001 = vunpack.c.l.b16 %v6873
    %v7002 = vunpack.c.l.b16 %v6874
    %v7003 = vunpack.c.l.b16 %v6875
    %v7004 = vunpack.c.l.b16 %v6876
    %v7005 = vunpack.c.l.b16 %v6877
    %v7006 = vunpack.c.l.b16 %v6878
    %v7007 = vunpack.c.l.b16 %v6879
    %v7008 = vunpack.c.l.b16 %v6880
    %v7009 = vunpack.c.l.b16 %v6881
    %v7010 = vunpack.c.l.b16 %v6882
    %v7011 = vunpack.c.l.b16 %v6883
    %v7012 = vunpack.c.l.b16 %v6884
    %v7013 = vunpack.c.l.b16 %v6885
    %v7014 = vunpack.c.l.b16 %v6886
    %v7015 = vunpack.c.l.b16 %v6887
    %v7016 = vunpack.c.l.b16 %v6888
    %v7017 = vunpack.c.l.b16 %v6889
    %v7018 = vunpack.c.l.b16 %v6890
    %v7019 = vunpack.c.l.b16 %v6891
    %v7020 = vunpack.c.l.b16 %v6892
    %v7021 = vunpack.c.l.b16 %v6893
    %v7022 = vunpack.c.l.b16 %v6894
    %v7023 = vunpack.c.l.b16 %v6895
    %v7024 = vunpack.c.l.b16 %v6896
    %v7025 = vunpack.c.l.b16 %v6897
    %v7026 = vunpack.c.l.b16 %v6898
    %v7027 = vunpack.c.l.b16 %v6899
    %v7028 = vunpack.c.l.b16 %v6900
    %v7029 = vunpack.c.l.b16 %v6901
    %v7030 = vunpack.c.l.b16 %v6902
    %v7031 = vunpack.c.l.b16 %v6903
    %v7032 = vunpack.c.l.b16 %v6904
    %v7033 = vunpack.c.l.b16 %v6905
    %v7034 = vunpack.c.l.b16 %v6906
    %v7035 = vunpack.c.l.b16 %v6907
    %v7036 = vunpack.c.l.b16 %v6908
    %v7037 = vunpack.c.l.b16 %v6909
    %v7038 = vunpack.c.l.b16 %v6910
    %v7039 = vunpack.c.l.b16 %v6911
    %v7040 = vunpack.c.l.b16 %v6912
    %v7041 = vunpack.c.l.b16 %v6913
    %v7042 = vunpack.c.l.b16 %v6914
    %v7043 = vunpack.c.l.b16 %v6915
    %v7044 = vunpack.c.l.b16 %v6916
    %v7045 = vunpack.c.l.b16 %v6917
    %v7046 = vpack.c.b16 %v6983, %v6982
    %v7047 = vpack.c.b16 %v6985, %v6984
    %v7048 = vpack.c.b16 %v6987, %v6986
    %v7049 = vpack.c.b16 %v6989, %v6988
    %v7050 = vpack.c.b16 %v6991, %v6990
    %v7051 = vpack.c.b16 %v6993, %v6992
    %v7052 = vpack.c.b16 %v6995, %v6994
    %v7053 = vpack.c.b16 %v6997, %v6996
    %v7054 = vpack.c.b16 %v6999, %v6998
    %v7055 = vpack.c.b16 %v7001, %v7000
    %v7056 = vpack.c.b16 %v7003, %v7002
    %v7057 = vpack.c.b16 %v7005, %v7004
    %v7058 = vpack.c.b16 %v7007, %v7006
    %v7059 = vpack.c.b16 %v7009, %v7008
    %v7060 = vpack.c.b16 %v7011, %v7010
    %v7061 = vpack.c.b16 %v7013, %v7012
    %v7062 = vpack.c.b16 %v7015, %v7014
    %v7063 = vpack.c.b16 %v7017, %v7016
    %v7064 = vpack.c.b16 %v7019, %v7018
    %v7065 = vpack.c.b16 %v7021, %v7020
    %v7066 = vpack.c.b16 %v7023, %v7022
    %v7067 = vpack.c.b16 %v7025, %v7024
    %v7068 = vpack.c.b16 %v7027, %v7026
    %v7069 = vpack.c.b16 %v7029, %v7028
    %v7070 = vpack.c.b16 %v7031, %v7030
    %v7071 = vpack.c.b16 %v7033, %v7032
    %v7072 = vpack.c.b16 %v7035, %v7034
    %v7073 = vpack.c.b16 %v7037, %v7036
    %v7074 = vpack.c.b16 %v7039, %v7038
    %v7075 = vpack.c.b16 %v7041, %v7040
    %v7076 = vpack.c.b16 %v7043, %v7042
    %v7077 = vpack.c.b16 %v7045, %v7044
    %7110 = vmatpush.bf16.msra.mxu0 %v7053
    %7111 = vmatpush.bf16.msra.mxu0 %v7052
    %7112 = vmatpush.bf16.msra.mxu0 %v7051
    %7113 = vmatpush.bf16.msra.mxu0 %v7050
    %7114 = vmatpush.bf16.msra.mxu0 %v7049
    %7115 = vmatpush.bf16.msra.mxu0 %v7048
    %7116 = vmatpush.bf16.msra.mxu0 %v7047
    %7117 = vmatpush.bf16.msra.mxu0 %v7046
    %7118 = vmatmul.bf16.gmra.mxu0 %v6842
    %v7119 = vpop.f32.mrf.mxu0
    %v7120 = vadd.f32 0.0, %v7119
    %v7121 = vpop.f32.mrf.mxu0
    %v7122 = vadd.f32 0.0, %v7121
    %7123 = vmatmul.bf16.gmra.mxu0 %v6846
    %v7124 = vpop.f32.mrf.mxu0
    %v7125 = vadd.f32 0.0, %v7124
    %v7126 = vpop.f32.mrf.mxu0
    %v7127 = vadd.f32 0.0, %v7126
    %7128 = vmatmul.bf16.gmra.mxu0 %v6850
    %v7129 = vpop.f32.mrf.mxu0
    %v7130 = vadd.f32 0.0, %v7129
    %v7131 = vpop.f32.mrf.mxu0
    %v7132 = vadd.f32 0.0, %v7131
    %7133 = vdwg.mxu0
    %7134 = vmatpush.bf16.msra.mxu0 %v7061
    %7135 = vmatpush.bf16.msra.mxu0 %v7060
    %7136 = vmatpush.bf16.msra.mxu0 %v7059
    %7137 = vmatpush.bf16.msra.mxu0 %v7058
    %7138 = vmatpush.bf16.msra.mxu0 %v7057
    %7139 = vmatpush.bf16.msra.mxu0 %v7056
    %7140 = vmatpush.bf16.msra.mxu0 %v7055
    %7141 = vmatpush.bf16.msra.mxu0 %v7054
    %7142 = vmatmul.bf16.gmra.mxu0 %v6843
    %v7143 = vpop.f32.mrf.mxu0
    %v7144 = vadd.f32 %v7120, %v7143
    %v7145 = vpop.f32.mrf.mxu0
    %v7146 = vadd.f32 %v7122, %v7145
    %7147 = vmatmul.bf16.gmra.mxu0 %v6847
    %v7148 = vpop.f32.mrf.mxu0
    %v7149 = vadd.f32 %v7125, %v7148
    %v7150 = vpop.f32.mrf.mxu0
    %v7151 = vadd.f32 %v7127, %v7150
    %7152 = vmatmul.bf16.gmra.mxu0 %v6851
    %v7153 = vpop.f32.mrf.mxu0
    %v7154 = vadd.f32 %v7130, %v7153
    %v7155 = vpop.f32.mrf.mxu0
    %v7156 = vadd.f32 %v7132, %v7155
    %7157 = vdwg.mxu0
    %7158 = vmatpush.bf16.msra.mxu0 %v7069
    %7159 = vmatpush.bf16.msra.mxu0 %v7068
    %7160 = vmatpush.bf16.msra.mxu0 %v7067
    %7161 = vmatpush.bf16.msra.mxu0 %v7066
    %7162 = vmatpush.bf16.msra.mxu0 %v7065
    %7163 = vmatpush.bf16.msra.mxu0 %v7064
    %7164 = vmatpush.bf16.msra.mxu0 %v7063
    %7165 = vmatpush.bf16.msra.mxu0 %v7062
    %7166 = vmatmul.bf16.gmra.mxu0 %v6844
    %v7167 = vpop.f32.mrf.mxu0
    %v7168 = vadd.f32 %v7144, %v7167
    %v7169 = vpop.f32.mrf.mxu0
    %v7170 = vadd.f32 %v7146, %v7169
    %7171 = vmatmul.bf16.gmra.mxu0 %v6848
    %v7172 = vpop.f32.mrf.mxu0
    %v7173 = vadd.f32 %v7149, %v7172
    %v7174 = vpop.f32.mrf.mxu0
    %v7175 = vadd.f32 %v7151, %v7174
    %7176 = vmatmul.bf16.gmra.mxu0 %v6852
    %v7177 = vpop.f32.mrf.mxu0
    %v7178 = vadd.f32 %v7154, %v7177
    %v7179 = vpop.f32.mrf.mxu0
    %v7180 = vadd.f32 %v7156, %v7179
    %7181 = vdwg.mxu0
    %7182 = vmatpush.bf16.msra.mxu0 %v7077
    %7183 = vmatpush.bf16.msra.mxu0 %v7076
    %7184 = vmatpush.bf16.msra.mxu0 %v7075
    %7185 = vmatpush.bf16.msra.mxu0 %v7074
    %7186 = vmatpush.bf16.msra.mxu0 %v7073
    %7187 = vmatpush.bf16.msra.mxu0 %v7072
    %7188 = vmatpush.bf16.msra.mxu0 %v7071
    %7189 = vmatpush.bf16.msra.mxu0 %v7070
    %7190 = vmatmul.bf16.gmra.mxu0 %v6845
    %v7191 = vpop.f32.mrf.mxu0
    %v7192 = vadd.f32 %v7168, %v7191
    %v7193 = vpop.f32.mrf.mxu0
    %v7194 = vadd.f32 %v7170, %v7193
    %7195 = vmatmul.bf16.gmra.mxu0 %v6849
    %v7196 = vpop.f32.mrf.mxu0
    %v7197 = vadd.f32 %v7173, %v7196
    %v7198 = vpop.f32.mrf.mxu0
    %v7199 = vadd.f32 %v7175, %v7198
    %7200 = vmatmul.bf16.gmra.mxu0 %v6853
    %v7201 = vpop.f32.mrf.mxu0
    %v7202 = vadd.f32 %v7178, %v7201
    %v7203 = vpop.f32.mrf.mxu0
    %v7204 = vadd.f32 %v7180, %v7203
    %7205 = vdwg.mxu0
    %v7206 = vadd.f32 %v6650, %v7192
    %v7207 = vadd.f32 %v6652, %v7194
    %v7208 = vadd.f32 %v6655, %v7197
    %v7209 = vadd.f32 %v6657, %v7199
    %v7210 = vadd.f32 %v6660, %v7202
    %v7211 = vadd.f32 %v6662, %v7204
    %v7212 = vld [vmem:[%s5568 + $0x30] sm:$0xff]
    %v7213 = vld [vmem:[%s5568 + $0x38] sm:$0xff]
    %v7214 = vld [vmem:[%s5568 + $0x70] sm:$0xff]
    %v7215 = vld [vmem:[%s5568 + $0x78] sm:$0xff]
    %v7216 = vld [vmem:[%s5568 + $0xb0] sm:$0xff]
    %v7217 = vld [vmem:[%s5568 + $0xb8] sm:$0xff]
    %v7218 = vld [vmem:[%s5568 + $0xf0] sm:$0xff]
    %v7219 = vld [vmem:[%s5568 + $0xf8] sm:$0xff]
    %v7220 = vld [vmem:[%s5577 + $0xc] sm:$0xf]
    %v7222 = vperm.slane %v7220, 0
    %v7223 = vperm.slane %v7220, 1
    %v7224 = vperm.slane %v7220, 2
    %v7225 = vperm.slane %v7220, 3
    %v7238 = vunpack.c.l.b16 %v7212
    %v7239 = vunpack.c.h.b16 %v7212
    %v7240 = vunpack.c.l.b16 %v7213
    %v7241 = vunpack.c.h.b16 %v7213
    %v7242 = vunpack.c.l.b16 %v7214
    %v7243 = vunpack.c.h.b16 %v7214
    %v7244 = vunpack.c.l.b16 %v7215
    %v7245 = vunpack.c.h.b16 %v7215
    %v7246 = vunpack.c.l.b16 %v7216
    %v7247 = vunpack.c.h.b16 %v7216
    %v7248 = vunpack.c.l.b16 %v7217
    %v7249 = vunpack.c.h.b16 %v7217
    %v7250 = vunpack.c.l.b16 %v7218
    %v7251 = vunpack.c.h.b16 %v7218
    %v7252 = vunpack.c.l.b16 %v7219
    %v7253 = vunpack.c.h.b16 %v7219
    %v7254 = vpack.c.b16 %v7242, %v7238
    %v7255 = vpack.c.b16 %v7243, %v7239
    %v7256 = vpack.c.b16 %v7244, %v7240
    %v7257 = vpack.c.b16 %v7245, %v7241
    %v7258 = vpack.c.b16 %v7250, %v7246
    %v7259 = vpack.c.b16 %v7251, %v7247
    %v7260 = vpack.c.b16 %v7252, %v7248
    %v7261 = vpack.c.b16 %v7253, %v7249
    %7270 = vmatpush.bf16.msra.mxu0 0
    %7271 = vmatpush.bf16.msra.mxu0 0
    %7272 = vmatpush.bf16.msra.mxu0 0
    %7273 = vmatpush.bf16.msra.mxu0 0
    %7274 = vmatpush.bf16.msra.mxu0 0
    %7275 = vmatpush.bf16.msra.mxu0 0
    %7276 = vmatpush.bf16.msra.mxu0 %v7258
    %7277 = vmatpush.bf16.msra.mxu0 %v7254
    %7278 = vmatmul.bf16.gmra.mxu0 %v5629
    %v7279 = vpop.f32.mrf.mxu0
    %v7280 = vadd.f32 %v7222, %v7279
    %v7281 = vpop.f32.mrf.mxu0
    %v7282 = vadd.f32 %v7222, %v7281
    %7283 = vmatmul.bf16.gmra.mxu0 %v5632
    %v7284 = vpop.f32.mrf.mxu0
    %v7285 = vadd.f32 %v7222, %v7284
    %v7286 = vpop.f32.mrf.mxu0
    %v7287 = vadd.f32 %v7222, %v7286
    %7288 = vmatmul.bf16.gmra.mxu0 %v5635
    %v7289 = vpop.f32.mrf.mxu0
    %v7290 = vadd.f32 %v7222, %v7289
    %v7291 = vpop.f32.mrf.mxu0
    %v7292 = vadd.f32 %v7222, %v7291
    %7293 = vdwg.mxu0
    %7294 = vmatpush.bf16.msra.mxu0 0
    %7295 = vmatpush.bf16.msra.mxu0 0
    %7296 = vmatpush.bf16.msra.mxu0 0
    %7297 = vmatpush.bf16.msra.mxu0 0
    %7298 = vmatpush.bf16.msra.mxu0 0
    %7299 = vmatpush.bf16.msra.mxu0 0
    %7300 = vmatpush.bf16.msra.mxu0 %v7259
    %7301 = vmatpush.bf16.msra.mxu0 %v7255
    %7302 = vmatmul.bf16.gmra.mxu0 %v5629
    %v7303 = vpop.f32.mrf.mxu0
    %v7304 = vadd.f32 %v7223, %v7303
    %v7305 = vpop.f32.mrf.mxu0
    %v7306 = vadd.f32 %v7223, %v7305
    %7307 = vmatmul.bf16.gmra.mxu0 %v5632
    %v7308 = vpop.f32.mrf.mxu0
    %v7309 = vadd.f32 %v7223, %v7308
    %v7310 = vpop.f32.mrf.mxu0
    %v7311 = vadd.f32 %v7223, %v7310
    %7312 = vmatmul.bf16.gmra.mxu0 %v5635
    %v7313 = vpop.f32.mrf.mxu0
    %v7314 = vadd.f32 %v7223, %v7313
    %v7315 = vpop.f32.mrf.mxu0
    %v7316 = vadd.f32 %v7223, %v7315
    %7317 = vdwg.mxu0
    %7318 = vmatpush.bf16.msra.mxu0 0
    %7319 = vmatpush.bf16.msra.mxu0 0
    %7320 = vmatpush.bf16.msra.mxu0 0
    %7321 = vmatpush.bf16.msra.mxu0 0
    %7322 = vmatpush.bf16.msra.mxu0 0
    %7323 = vmatpush.bf16.msra.mxu0 0
    %7324 = vmatpush.bf16.msra.mxu0 %v7260
    %7325 = vmatpush.bf16.msra.mxu0 %v7256
    %7326 = vmatmul.bf16.gmra.mxu0 %v5629
    %v7327 = vpop.f32.mrf.mxu0
    %v7328 = vadd.f32 %v7224, %v7327
    %v7329 = vpop.f32.mrf.mxu0
    %v7330 = vadd.f32 %v7224, %v7329
    %7331 = vmatmul.bf16.gmra.mxu0 %v5632
    %v7332 = vpop.f32.mrf.mxu0
    %v7333 = vadd.f32 %v7224, %v7332
    %v7334 = vpop.f32.mrf.mxu0
    %v7335 = vadd.f32 %v7224, %v7334
    %7336 = vmatmul.bf16.gmra.mxu0 %v5635
    %v7337 = vpop.f32.mrf.mxu0
    %v7338 = vadd.f32 %v7224, %v7337
    %v7339 = vpop.f32.mrf.mxu0
    %v7340 = vadd.f32 %v7224, %v7339
    %7341 = vdwg.mxu0
    %7342 = vmatpush.bf16.msra.mxu0 0
    %7343 = vmatpush.bf16.msra.mxu0 0
    %7344 = vmatpush.bf16.msra.mxu0 0
    %7345 = vmatpush.bf16.msra.mxu0 0
    %7346 = vmatpush.bf16.msra.mxu0 0
    %7347 = vmatpush.bf16.msra.mxu0 0
    %7348 = vmatpush.bf16.msra.mxu0 %v7261
    %7349 = vmatpush.bf16.msra.mxu0 %v7257
    %7350 = vmatmul.bf16.gmra.mxu0 %v5629
    %v7351 = vpop.f32.mrf.mxu0
    %v7352 = vadd.f32 %v7225, %v7351
    %v7353 = vpop.f32.mrf.mxu0
    %v7354 = vadd.f32 %v7225, %v7353
    %7355 = vmatmul.bf16.gmra.mxu0 %v5632
    %v7356 = vpop.f32.mrf.mxu0
    %v7357 = vadd.f32 %v7225, %v7356
    %v7358 = vpop.f32.mrf.mxu0
    %v7359 = vadd.f32 %v7225, %v7358
    %7360 = vmatmul.bf16.gmra.mxu0 %v5635
    %v7361 = vpop.f32.mrf.mxu0
    %v7362 = vadd.f32 %v7225, %v7361
    %v7363 = vpop.f32.mrf.mxu0
    %v7364 = vadd.f32 %v7225, %v7363
    %7365 = vdwg.mxu0
    %v7366 = vmax.f32 %v7280, 0.0
    %v7367 = vmax.f32 %v7304, 0.0
    %v7368 = vmax.f32 %v7328, 0.0
    %v7369 = vmax.f32 %v7352, 0.0
    %v7370 = vmax.f32 %v7282, 0.0
    %v7371 = vmax.f32 %v7306, 0.0
    %v7372 = vmax.f32 %v7330, 0.0
    %v7373 = vmax.f32 %v7354, 0.0
    %v7374 = vmax.f32 %v7285, 0.0
    %v7375 = vmax.f32 %v7309, 0.0
    %v7376 = vmax.f32 %v7333, 0.0
    %v7377 = vmax.f32 %v7357, 0.0
    %v7378 = vmax.f32 %v7287, 0.0
    %v7379 = vmax.f32 %v7311, 0.0
    %v7380 = vmax.f32 %v7335, 0.0
    %v7381 = vmax.f32 %v7359, 0.0
    %v7382 = vmax.f32 %v7290, 0.0
    %v7383 = vmax.f32 %v7314, 0.0
    %v7384 = vmax.f32 %v7338, 0.0
    %v7385 = vmax.f32 %v7362, 0.0
    %v7386 = vmax.f32 %v7292, 0.0
    %v7387 = vmax.f32 %v7316, 0.0
    %v7388 = vmax.f32 %v7340, 0.0
    %v7389 = vmax.f32 %v7364, 0.0
    %v7390 = vpack.c.bf16 %v7370, %v7366
    %v7391 = vpack.c.bf16 %v7371, %v7367
    %v7392 = vpack.c.bf16 %v7372, %v7368
    %v7393 = vpack.c.bf16 %v7373, %v7369
    %v7394 = vpack.c.bf16 %v7378, %v7374
    %v7395 = vpack.c.bf16 %v7379, %v7375
    %v7396 = vpack.c.bf16 %v7380, %v7376
    %v7397 = vpack.c.bf16 %v7381, %v7377
    %v7398 = vpack.c.bf16 %v7386, %v7382
    %v7399 = vpack.c.bf16 %v7387, %v7383
    %v7400 = vpack.c.bf16 %v7388, %v7384
    %v7401 = vpack.c.bf16 %v7389, %v7385
    %v7402 = vld [vmem:[%s5769 + $0x300] sm:$0xf]
    %v7403 = vld [vmem:[%s5769 + $0x304] sm:$0xf]
    %v7404 = vld [vmem:[%s5769 + $0x308] sm:$0xf]
    %v7405 = vld [vmem:[%s5769 + $0x30c] sm:$0xf]
    %v7406 = vld [vmem:[%s5769 + $0x310] sm:$0xf]
    %v7407 = vld [vmem:[%s5769 + $0x314] sm:$0xf]
    %v7408 = vld [vmem:[%s5769 + $0x318] sm:$0xf]
    %v7409 = vld [vmem:[%s5769 + $0x31c] sm:$0xf]
    %v7410 = vld [vmem:[%s5769 + $0x320] sm:$0xf]
    %v7411 = vld [vmem:[%s5769 + $0x324] sm:$0xf]
    %v7412 = vld [vmem:[%s5769 + $0x328] sm:$0xf]
    %v7413 = vld [vmem:[%s5769 + $0x32c] sm:$0xf]
    %v7414 = vld [vmem:[%s5769 + $0x330] sm:$0xf]
    %v7415 = vld [vmem:[%s5769 + $0x334] sm:$0xf]
    %v7416 = vld [vmem:[%s5769 + $0x338] sm:$0xf]
    %v7417 = vld [vmem:[%s5769 + $0x33c] sm:$0xf]
    %v7418 = vld [vmem:[%s5769 + $0x340] sm:$0xf]
    %v7419 = vld [vmem:[%s5769 + $0x344] sm:$0xf]
    %v7420 = vld [vmem:[%s5769 + $0x348] sm:$0xf]
    %v7421 = vld [vmem:[%s5769 + $0x34c] sm:$0xf]
    %v7422 = vld [vmem:[%s5769 + $0x350] sm:$0xf]
    %v7423 = vld [vmem:[%s5769 + $0x354] sm:$0xf]
    %v7424 = vld [vmem:[%s5769 + $0x358] sm:$0xf]
    %v7425 = vld [vmem:[%s5769 + $0x35c] sm:$0xf]
    %v7426 = vld [vmem:[%s5769 + $0x360] sm:$0xf]
    %v7427 = vld [vmem:[%s5769 + $0x364] sm:$0xf]
    %v7428 = vld [vmem:[%s5769 + $0x368] sm:$0xf]
    %v7429 = vld [vmem:[%s5769 + $0x36c] sm:$0xf]
    %v7430 = vld [vmem:[%s5769 + $0x370] sm:$0xf]
    %v7431 = vld [vmem:[%s5769 + $0x374] sm:$0xf]
    %v7432 = vld [vmem:[%s5769 + $0x378] sm:$0xf]
    %v7433 = vld [vmem:[%s5769 + $0x37c] sm:$0xf]
    %v7434 = vld [vmem:[%s5769 + $0x380] sm:$0xf]
    %v7435 = vld [vmem:[%s5769 + $0x384] sm:$0xf]
    %v7436 = vld [vmem:[%s5769 + $0x388] sm:$0xf]
    %v7437 = vld [vmem:[%s5769 + $0x38c] sm:$0xf]
    %v7438 = vld [vmem:[%s5769 + $0x390] sm:$0xf]
    %v7439 = vld [vmem:[%s5769 + $0x394] sm:$0xf]
    %v7440 = vld [vmem:[%s5769 + $0x398] sm:$0xf]
    %v7441 = vld [vmem:[%s5769 + $0x39c] sm:$0xf]
    %v7442 = vld [vmem:[%s5769 + $0x3a0] sm:$0xf]
    %v7443 = vld [vmem:[%s5769 + $0x3a4] sm:$0xf]
    %v7444 = vld [vmem:[%s5769 + $0x3a8] sm:$0xf]
    %v7445 = vld [vmem:[%s5769 + $0x3ac] sm:$0xf]
    %v7446 = vld [vmem:[%s5769 + $0x3b0] sm:$0xf]
    %v7447 = vld [vmem:[%s5769 + $0x3b4] sm:$0xf]
    %v7448 = vld [vmem:[%s5769 + $0x3b8] sm:$0xf]
    %v7449 = vld [vmem:[%s5769 + $0x3bc] sm:$0xf]
    %v7450 = vld [vmem:[%s5769 + $0x3c0] sm:$0xf]
    %v7451 = vld [vmem:[%s5769 + $0x3c4] sm:$0xf]
    %v7452 = vld [vmem:[%s5769 + $0x3c8] sm:$0xf]
    %v7453 = vld [vmem:[%s5769 + $0x3cc] sm:$0xf]
    %v7454 = vld [vmem:[%s5769 + $0x3d0] sm:$0xf]
    %v7455 = vld [vmem:[%s5769 + $0x3d4] sm:$0xf]
    %v7456 = vld [vmem:[%s5769 + $0x3d8] sm:$0xf]
    %v7457 = vld [vmem:[%s5769 + $0x3dc] sm:$0xf]
    %v7458 = vld [vmem:[%s5769 + $0x3e0] sm:$0xf]
    %v7459 = vld [vmem:[%s5769 + $0x3e4] sm:$0xf]
    %v7460 = vld [vmem:[%s5769 + $0x3e8] sm:$0xf]
    %v7461 = vld [vmem:[%s5769 + $0x3ec] sm:$0xf]
    %v7462 = vld [vmem:[%s5769 + $0x3f0] sm:$0xf]
    %v7463 = vld [vmem:[%s5769 + $0x3f4] sm:$0xf]
    %v7464 = vld [vmem:[%s5769 + $0x3f8] sm:$0xf]
    %v7465 = vld [vmem:[%s5769 + $0x3fc] sm:$0xf]
    %v7530 = vunpack.c.l.b16 %v7402
    %v7531 = vunpack.c.l.b16 %v7403
    %v7532 = vunpack.c.l.b16 %v7404
    %v7533 = vunpack.c.l.b16 %v7405
    %v7534 = vunpack.c.l.b16 %v7406
    %v7535 = vunpack.c.l.b16 %v7407
    %v7536 = vunpack.c.l.b16 %v7408
    %v7537 = vunpack.c.l.b16 %v7409
    %v7538 = vunpack.c.l.b16 %v7410
    %v7539 = vunpack.c.l.b16 %v7411
    %v7540 = vunpack.c.l.b16 %v7412
    %v7541 = vunpack.c.l.b16 %v7413
    %v7542 = vunpack.c.l.b16 %v7414
    %v7543 = vunpack.c.l.b16 %v7415
    %v7544 = vunpack.c.l.b16 %v7416
    %v7545 = vunpack.c.l.b16 %v7417
    %v7546 = vunpack.c.l.b16 %v7418
    %v7547 = vunpack.c.l.b16 %v7419
    %v7548 = vunpack.c.l.b16 %v7420
    %v7549 = vunpack.c.l.b16 %v7421
    %v7550 = vunpack.c.l.b16 %v7422
    %v7551 = vunpack.c.l.b16 %v7423
    %v7552 = vunpack.c.l.b16 %v7424
    %v7553 = vunpack.c.l.b16 %v7425
    %v7554 = vunpack.c.l.b16 %v7426
    %v7555 = vunpack.c.l.b16 %v7427
    %v7556 = vunpack.c.l.b16 %v7428
    %v7557 = vunpack.c.l.b16 %v7429
    %v7558 = vunpack.c.l.b16 %v7430
    %v7559 = vunpack.c.l.b16 %v7431
    %v7560 = vunpack.c.l.b16 %v7432
    %v7561 = vunpack.c.l.b16 %v7433
    %v7562 = vunpack.c.l.b16 %v7434
    %v7563 = vunpack.c.l.b16 %v7435
    %v7564 = vunpack.c.l.b16 %v7436
    %v7565 = vunpack.c.l.b16 %v7437
    %v7566 = vunpack.c.l.b16 %v7438
    %v7567 = vunpack.c.l.b16 %v7439
    %v7568 = vunpack.c.l.b16 %v7440
    %v7569 = vunpack.c.l.b16 %v7441
    %v7570 = vunpack.c.l.b16 %v7442
    %v7571 = vunpack.c.l.b16 %v7443
    %v7572 = vunpack.c.l.b16 %v7444
    %v7573 = vunpack.c.l.b16 %v7445
    %v7574 = vunpack.c.l.b16 %v7446
    %v7575 = vunpack.c.l.b16 %v7447
    %v7576 = vunpack.c.l.b16 %v7448
    %v7577 = vunpack.c.l.b16 %v7449
    %v7578 = vunpack.c.l.b16 %v7450
    %v7579 = vunpack.c.l.b16 %v7451
    %v7580 = vunpack.c.l.b16 %v7452
    %v7581 = vunpack.c.l.b16 %v7453
    %v7582 = vunpack.c.l.b16 %v7454
    %v7583 = vunpack.c.l.b16 %v7455
    %v7584 = vunpack.c.l.b16 %v7456
    %v7585 = vunpack.c.l.b16 %v7457
    %v7586 = vunpack.c.l.b16 %v7458
    %v7587 = vunpack.c.l.b16 %v7459
    %v7588 = vunpack.c.l.b16 %v7460
    %v7589 = vunpack.c.l.b16 %v7461
    %v7590 = vunpack.c.l.b16 %v7462
    %v7591 = vunpack.c.l.b16 %v7463
    %v7592 = vunpack.c.l.b16 %v7464
    %v7593 = vunpack.c.l.b16 %v7465
    %v7594 = vpack.c.b16 %v7531, %v7530
    %v7595 = vpack.c.b16 %v7533, %v7532
    %v7596 = vpack.c.b16 %v7535, %v7534
    %v7597 = vpack.c.b16 %v7537, %v7536
    %v7598 = vpack.c.b16 %v7539, %v7538
    %v7599 = vpack.c.b16 %v7541, %v7540
    %v7600 = vpack.c.b16 %v7543, %v7542
    %v7601 = vpack.c.b16 %v7545, %v7544
    %v7602 = vpack.c.b16 %v7547, %v7546
    %v7603 = vpack.c.b16 %v7549, %v7548
    %v7604 = vpack.c.b16 %v7551, %v7550
    %v7605 = vpack.c.b16 %v7553, %v7552
    %v7606 = vpack.c.b16 %v7555, %v7554
    %v7607 = vpack.c.b16 %v7557, %v7556
    %v7608 = vpack.c.b16 %v7559, %v7558
    %v7609 = vpack.c.b16 %v7561, %v7560
    %v7610 = vpack.c.b16 %v7563, %v7562
    %v7611 = vpack.c.b16 %v7565, %v7564
    %v7612 = vpack.c.b16 %v7567, %v7566
    %v7613 = vpack.c.b16 %v7569, %v7568
    %v7614 = vpack.c.b16 %v7571, %v7570
    %v7615 = vpack.c.b16 %v7573, %v7572
    %v7616 = vpack.c.b16 %v7575, %v7574
    %v7617 = vpack.c.b16 %v7577, %v7576
    %v7618 = vpack.c.b16 %v7579, %v7578
    %v7619 = vpack.c.b16 %v7581, %v7580
    %v7620 = vpack.c.b16 %v7583, %v7582
    %v7621 = vpack.c.b16 %v7585, %v7584
    %v7622 = vpack.c.b16 %v7587, %v7586
    %v7623 = vpack.c.b16 %v7589, %v7588
    %v7624 = vpack.c.b16 %v7591, %v7590
    %v7625 = vpack.c.b16 %v7593, %v7592
    %7658 = vmatpush.bf16.msra.mxu0 %v7601
    %7659 = vmatpush.bf16.msra.mxu0 %v7600
    %7660 = vmatpush.bf16.msra.mxu0 %v7599
    %7661 = vmatpush.bf16.msra.mxu0 %v7598
    %7662 = vmatpush.bf16.msra.mxu0 %v7597
    %7663 = vmatpush.bf16.msra.mxu0 %v7596
    %7664 = vmatpush.bf16.msra.mxu0 %v7595
    %7665 = vmatpush.bf16.msra.mxu0 %v7594
    %7666 = vmatmul.bf16.gmra.mxu0 %v7390
    %v7667 = vpop.f32.mrf.mxu0
    %v7668 = vadd.f32 0.0, %v7667
    %v7669 = vpop.f32.mrf.mxu0
    %v7670 = vadd.f32 0.0, %v7669
    %7671 = vmatmul.bf16.gmra.mxu0 %v7394
    %v7672 = vpop.f32.mrf.mxu0
    %v7673 = vadd.f32 0.0, %v7672
    %v7674 = vpop.f32.mrf.mxu0
    %v7675 = vadd.f32 0.0, %v7674
    %7676 = vmatmul.bf16.gmra.mxu0 %v7398
    %v7677 = vpop.f32.mrf.mxu0
    %v7678 = vadd.f32 0.0, %v7677
    %v7679 = vpop.f32.mrf.mxu0
    %v7680 = vadd.f32 0.0, %v7679
    %7681 = vdwg.mxu0
    %7682 = vmatpush.bf16.msra.mxu0 %v7609
    %7683 = vmatpush.bf16.msra.mxu0 %v7608
    %7684 = vmatpush.bf16.msra.mxu0 %v7607
    %7685 = vmatpush.bf16.msra.mxu0 %v7606
    %7686 = vmatpush.bf16.msra.mxu0 %v7605
    %7687 = vmatpush.bf16.msra.mxu0 %v7604
    %7688 = vmatpush.bf16.msra.mxu0 %v7603
    %7689 = vmatpush.bf16.msra.mxu0 %v7602
    %7690 = vmatmul.bf16.gmra.mxu0 %v7391
    %v7691 = vpop.f32.mrf.mxu0
    %v7692 = vadd.f32 %v7668, %v7691
    %v7693 = vpop.f32.mrf.mxu0
    %v7694 = vadd.f32 %v7670, %v7693
    %7695 = vmatmul.bf16.gmra.mxu0 %v7395
    %v7696 = vpop.f32.mrf.mxu0
    %v7697 = vadd.f32 %v7673, %v7696
    %v7698 = vpop.f32.mrf.mxu0
    %v7699 = vadd.f32 %v7675, %v7698
    %7700 = vmatmul.bf16.gmra.mxu0 %v7399
    %v7701 = vpop.f32.mrf.mxu0
    %v7702 = vadd.f32 %v7678, %v7701
    %v7703 = vpop.f32.mrf.mxu0
    %v7704 = vadd.f32 %v7680, %v7703
    %7705 = vdwg.mxu0
    %7706 = vmatpush.bf16.msra.mxu0 %v7617
    %7707 = vmatpush.bf16.msra.mxu0 %v7616
    %7708 = vmatpush.bf16.msra.mxu0 %v7615
    %7709 = vmatpush.bf16.msra.mxu0 %v7614
    %7710 = vmatpush.bf16.msra.mxu0 %v7613
    %7711 = vmatpush.bf16.msra.mxu0 %v7612
    %7712 = vmatpush.bf16.msra.mxu0 %v7611
    %7713 = vmatpush.bf16.msra.mxu0 %v7610
    %7714 = vmatmul.bf16.gmra.mxu0 %v7392
    %v7715 = vpop.f32.mrf.mxu0
    %v7716 = vadd.f32 %v7692, %v7715
    %v7717 = vpop.f32.mrf.mxu0
    %v7718 = vadd.f32 %v7694, %v7717
    %7719 = vmatmul.bf16.gmra.mxu0 %v7396
    %v7720 = vpop.f32.mrf.mxu0
    %v7721 = vadd.f32 %v7697, %v7720
    %v7722 = vpop.f32.mrf.mxu0
    %v7723 = vadd.f32 %v7699, %v7722
    %7724 = vmatmul.bf16.gmra.mxu0 %v7400
    %v7725 = vpop.f32.mrf.mxu0
    %v7726 = vadd.f32 %v7702, %v7725
    %v7727 = vpop.f32.mrf.mxu0
    %v7728 = vadd.f32 %v7704, %v7727
    %7729 = vdwg.mxu0
    %7730 = vmatpush.bf16.msra.mxu0 %v7625
    %7731 = vmatpush.bf16.msra.mxu0 %v7624
    %7732 = vmatpush.bf16.msra.mxu0 %v7623
    %7733 = vmatpush.bf16.msra.mxu0 %v7622
    %7734 = vmatpush.bf16.msra.mxu0 %v7621
    %7735 = vmatpush.bf16.msra.mxu0 %v7620
    %7736 = vmatpush.bf16.msra.mxu0 %v7619
    %7737 = vmatpush.bf16.msra.mxu0 %v7618
    %7738 = vmatmul.bf16.gmra.mxu0 %v7393
    %v7739 = vpop.f32.mrf.mxu0
    %v7740 = vadd.f32 %v7716, %v7739
    %v7741 = vpop.f32.mrf.mxu0
    %v7742 = vadd.f32 %v7718, %v7741
    %7743 = vmatmul.bf16.gmra.mxu0 %v7397
    %v7744 = vpop.f32.mrf.mxu0
    %v7745 = vadd.f32 %v7721, %v7744
    %v7746 = vpop.f32.mrf.mxu0
    %v7747 = vadd.f32 %v7723, %v7746
    %7748 = vmatmul.bf16.gmra.mxu0 %v7401
    %v7749 = vpop.f32.mrf.mxu0
    %v7750 = vadd.f32 %v7726, %v7749
    %v7751 = vpop.f32.mrf.mxu0
    %v7752 = vadd.f32 %v7728, %v7751
    %7753 = vdwg.mxu0
    %v7754 = vadd.f32 %v7206, %v7740
    %v7755 = vadd.f32 %v7207, %v7742
    %v7756 = vadd.f32 %v7208, %v7745
    %v7757 = vadd.f32 %v7209, %v7747
    %v7758 = vadd.f32 %v7210, %v7750
    %v7759 = vadd.f32 %v7211, %v7752
    %v7760 = vadd.f32 %v5559, %v7754
    %v7761 = vadd.f32 %v5560, %v7755
    %v7762 = vadd.f32 %v5561, %v7756
    %v7763 = vadd.f32 %v5562, %v7757
    %v7764 = vadd.f32 %v5563, %v7758
    %v7765 = vadd.f32 %v5564, %v7759
    %s7766 = scalar_lea.vmem %s19, 1
    %v7767 = vld [vmem:[%s7766] sm:$0x1]
    %v7769 = vperm.slane %v7767, 0
    %v7771 = vadd.f32 %v7760, %v7769
    %v7772 = vadd.f32 %v7761, %v7769
    %v7773 = vadd.f32 %v7762, %v7769
    %v7774 = vadd.f32 %v7763, %v7769
    %v7775 = vadd.f32 %v7764, %v7769
    %v7776 = vadd.f32 %v7765, %v7769
    %s7777 = scalar_lea.vmem %s20, 1
    %v7778 = vld [vmem:[%s7777] sm:$0x1]
    %s7779 = scalar_lea.vmem %s21, 1
    %v7780 = vld [vmem:[%s7779] sm:$0x1]
    %v7781 = vsel %vm140, %v7771, 0.0
    %7782 = vadd.xlane.f32.xlu0 %v7781
    %v7783 = vpop.xlane.xlu0 %7782
    %v7784 = vsel %vm140, %v7772, 0.0
    %7785 = vadd.xlane.f32.xlu0 %v7784
    %v7786 = vpop.xlane.xlu0 %7785
    %v7787 = vsel %vm140, %v7773, 0.0
    %7788 = vadd.xlane.f32.xlu0 %v7787
    %v7789 = vpop.xlane.xlu0 %7788
    %v7790 = vsel %vm140, %v7774, 0.0
    %7791 = vadd.xlane.f32.xlu0 %v7790
    %v7792 = vpop.xlane.xlu0 %7791
    %v7793 = vsel %vm140, %v7775, 0.0
    %7794 = vadd.xlane.f32.xlu0 %v7793
    %v7795 = vpop.xlane.xlu0 %7794
    %v7796 = vsel %vm140, %v7776, 0.0
    %7797 = vadd.xlane.f32.xlu0 %v7796
    %v7798 = vpop.xlane.xlu0 %7797
    %v7799 = vmul.f32 %v7783, %v165
    %v7800 = vmul.f32 %v7786, %v165
    %v7801 = vmul.f32 %v7789, %v165
    %v7802 = vmul.f32 %v7792, %v165
    %v7803 = vmul.f32 %v7795, %v165
    %v7804 = vmul.f32 %v7798, %v165
    %v7805 = vsub.f32 %v7771, %v7799
    %v7806 = vsub.f32 %v7772, %v7800
    %v7807 = vsub.f32 %v7773, %v7801
    %v7808 = vsub.f32 %v7774, %v7802
    %v7809 = vsub.f32 %v7775, %v7803
    %v7810 = vsub.f32 %v7776, %v7804
    %v7811 = vmul.f32 %v7805, %v7805
    %v7812 = vmul.f32 %v7806, %v7806
    %v7813 = vmul.f32 %v7807, %v7807
    %v7814 = vmul.f32 %v7808, %v7808
    %v7815 = vmul.f32 %v7809, %v7809
    %v7816 = vmul.f32 %v7810, %v7810
    %v7817 = vsel %vm140, %v7811, 0.0
    %7818 = vadd.xlane.f32.xlu0 %v7817
    %v7819 = vpop.xlane.xlu0 %7818
    %v7820 = vsel %vm140, %v7812, 0.0
    %7821 = vadd.xlane.f32.xlu0 %v7820
    %v7822 = vpop.xlane.xlu0 %7821
    %v7823 = vsel %vm140, %v7813, 0.0
    %7824 = vadd.xlane.f32.xlu0 %v7823
    %v7825 = vpop.xlane.xlu0 %7824
    %v7826 = vsel %vm140, %v7814, 0.0
    %7827 = vadd.xlane.f32.xlu0 %v7826
    %v7828 = vpop.xlane.xlu0 %7827
    %v7829 = vsel %vm140, %v7815, 0.0
    %7830 = vadd.xlane.f32.xlu0 %v7829
    %v7831 = vpop.xlane.xlu0 %7830
    %v7832 = vsel %vm140, %v7816, 0.0
    %7833 = vadd.xlane.f32.xlu0 %v7832
    %v7834 = vpop.xlane.xlu0 %7833
    %v7835 = vmul.f32 %v7819, %v165
    %v7836 = vmul.f32 %v7822, %v165
    %v7837 = vmul.f32 %v7825, %v165
    %v7838 = vmul.f32 %v7828, %v165
    %v7839 = vmul.f32 %v7831, %v165
    %v7840 = vmul.f32 %v7834, %v165
    %v7841 = vadd.f32 %v7835, 1e-05
    %v7842 = vadd.f32 %v7836, 1e-05
    %v7843 = vadd.f32 %v7837, 1e-05
    %v7844 = vadd.f32 %v7838, 1e-05
    %v7845 = vadd.f32 %v7839, 1e-05
    %v7846 = vadd.f32 %v7840, 1e-05
    %v7847 = vrsqrt.pop %v7841
    %v7848 = vmul.f32 %v7847, %v7841
    %v7849 = vmul.f32 %v7848, %v7847
    %v7850 = vmul.f32 0.5, %v7849
    %v7851 = vsub.f32 1.5, %v7850
    %v7852 = vmul.f32 %v7847, %v7851
    %vm7853 = vweird.f32 %v7841
    %vm7854 = vweird.f32 %v7847
    %vm7855 = vmor %vm7853, %vm7854
    %v7856 = vsel %vm7855, %v7847, %v7852
    %v7857 = vrsqrt.pop %v7842
    %v7858 = vmul.f32 %v7857, %v7842
    %v7859 = vmul.f32 %v7858, %v7857
    %v7860 = vmul.f32 0.5, %v7859
    %v7861 = vsub.f32 1.5, %v7860
    %v7862 = vmul.f32 %v7857, %v7861
    %vm7863 = vweird.f32 %v7842
    %vm7864 = vweird.f32 %v7857
    %vm7865 = vmor %vm7863, %vm7864
    %v7866 = vsel %vm7865, %v7857, %v7862
    %v7867 = vrsqrt.pop %v7843
    %v7868 = vmul.f32 %v7867, %v7843
    %v7869 = vmul.f32 %v7868, %v7867
    %v7870 = vmul.f32 0.5, %v7869
    %v7871 = vsub.f32 1.5, %v7870
    %v7872 = vmul.f32 %v7867, %v7871
    %vm7873 = vweird.f32 %v7843
    %vm7874 = vweird.f32 %v7867
    %vm7875 = vmor %vm7873, %vm7874
    %v7876 = vsel %vm7875, %v7867, %v7872
    %v7877 = vrsqrt.pop %v7844
    %v7878 = vmul.f32 %v7877, %v7844
    %v7879 = vmul.f32 %v7878, %v7877
    %v7880 = vmul.f32 0.5, %v7879
    %v7881 = vsub.f32 1.5, %v7880
    %v7882 = vmul.f32 %v7877, %v7881
    %vm7883 = vweird.f32 %v7844
    %vm7884 = vweird.f32 %v7877
    %vm7885 = vmor %vm7883, %vm7884
    %v7886 = vsel %vm7885, %v7877, %v7882
    %v7887 = vrsqrt.pop %v7845
    %v7888 = vmul.f32 %v7887, %v7845
    %v7889 = vmul.f32 %v7888, %v7887
    %v7890 = vmul.f32 0.5, %v7889
    %v7891 = vsub.f32 1.5, %v7890
    %v7892 = vmul.f32 %v7887, %v7891
    %vm7893 = vweird.f32 %v7845
    %vm7894 = vweird.f32 %v7887
    %vm7895 = vmor %vm7893, %vm7894
    %v7896 = vsel %vm7895, %v7887, %v7892
    %v7897 = vrsqrt.pop %v7846
    %v7898 = vmul.f32 %v7897, %v7846
    %v7899 = vmul.f32 %v7898, %v7897
    %v7900 = vmul.f32 0.5, %v7899
    %v7901 = vsub.f32 1.5, %v7900
    %v7902 = vmul.f32 %v7897, %v7901
    %vm7903 = vweird.f32 %v7846
    %vm7904 = vweird.f32 %v7897
    %vm7905 = vmor %vm7903, %vm7904
    %v7906 = vsel %vm7905, %v7897, %v7902
    %v7907 = vmul.f32 %v7805, %v7856
    %v7908 = vmul.f32 %v7806, %v7866
    %v7909 = vmul.f32 %v7807, %v7876
    %v7910 = vmul.f32 %v7808, %v7886
    %v7911 = vmul.f32 %v7809, %v7896
    %v7912 = vmul.f32 %v7810, %v7906
    %v7914 = vperm.slane %v7778, 0
    %v7916 = vmul.f32 %v7907, %v7914
    %v7917 = vmul.f32 %v7908, %v7914
    %v7918 = vmul.f32 %v7909, %v7914
    %v7919 = vmul.f32 %v7910, %v7914
    %v7920 = vmul.f32 %v7911, %v7914
    %v7921 = vmul.f32 %v7912, %v7914
    %v7923 = vperm.slane %v7780, 0
    %v7925 = vadd.f32 %v7916, %v7923
    %v7926 = vadd.f32 %v7917, %v7923
    %v7927 = vadd.f32 %v7918, %v7923
    %v7928 = vadd.f32 %v7919, %v7923
    %v7929 = vadd.f32 %v7920, %v7923
    %v7930 = vadd.f32 %v7921, %v7923
    %v7931 = vlaneseq
    %v7932 = vshrl.u32 %v7931, 7
    %v7933 = vadd.s32 %v7932, 8
    %v7934 = vlaneseq
    %v7935 = vand.u32 %v7934, 127
    %v7936 = vmul.u32 %v7932, 3
    %v7937 = vmul.u32 %v7933, 3
    %v7938 = vadd.s32 %v7936, 2
    %v7939 = vadd.s32 %v7937, 2
    %vm7940 = vcmp.eq.s32.totalorder %v7935, %v7938
    %vm7941 = vcmp.eq.s32.totalorder %v7935, %v7939
    %v7942 = vsel %vm7940, 1, 0
    %v7943 = vsel %vm7941, 1, 0
    %v7944 = vcvt.s32.f32 %v7942
    %v7945 = vcvt.s32.f32 %v7943
    %vm7946 = vcmask 392192
    %v7948 = vsel %vm7946, %v7944, 0
    %v7951 = vsel %vm7946, %v7945, 0
    %7953 = vmatpush.msra.mxu0 0.0
    %7954 = vmatpush.msra.mxu0 0.0
    %7955 = vmatpush.msra.mxu0 0.0
    %7956 = vmatpush.msra.mxu0 0.0
    %7957 = vmatpush.msra.mxu0 0.0
    %7958 = vmatpush.msra.mxu0 0.0
    %7959 = vmatpush.msra.mxu0 0.0
    %7960 = vmatpush.msra.mxu0 0.0
    %7961 = vmatpush.msra.mxu0 0.0
    %7962 = vmatpush.msra.mxu0 0.0
    %7963 = vmatpush.msra.mxu0 %v7930
    %7964 = vmatpush.msra.mxu0 %v7929
    %7965 = vmatpush.msra.mxu0 %v7928
    %7966 = vmatpush.msra.mxu0 %v7927
    %7967 = vmatpush.msra.mxu0 %v7926
    %7968 = vmatpush.msra.mxu0 %v7925
    %7969 = vmatmul.f32.gmra.mxu0 %v7948
    %v7970 = vpop.f32.mrf.mxu0
    %v7971 = vadd.f32 0.0, %v7970
    %7972 = vmatmul.f32.gmra.mxu0 %v7951
    %v7973 = vpop.f32.mrf.mxu0
    %v7974 = vadd.f32 0.0, %v7973
    %7975 = vdwg.mxu0
    %7976 = vst.msk [vmem:[#allocation2] sm:$0xff] %vm140, %v7971
    %7977 = vst.msk [vmem:[#allocation2 + $0x8] sm:$0xff] %vm140, %v7974
    // Predicated region
    $region90: #{tpu_custom_call.1} parent=1 // pred_check
      _
    $region91: #{tpu_custom_call.1} parent=1 // pred_check_branch
      %7979 = sbr.rel (0) target = $region93
    $region92: #{tpu_custom_call.1} parent=1 // pred_region
      %7981 = vsyncadd [#allocation3], 0
      %s7982 = sshll.u32 [#allocation2], 4
      %s7983 = int_to_ptr.vmem [resolvable:$true] %s7982
      %s7984 = sshll.u32 %s22, 4
      %s7985 = int_to_ptr.hbm [resolvable:$true] %s7984
      %7990 = dma.vmem_to_hbm [thread:$0]  %s7983, 256, %s7985, [#allocation3], 128, 128, 8
    $region93: #{tpu_custom_call.1} parent=1 // pred_fallthru
      _
    // Predicated region
    $region94: #{tpu_custom_call.1} parent=1 // pred_check
      _
    $region95: #{tpu_custom_call.1} parent=1 // pred_check_branch
      %7992 = sbr.rel (0) target = $region97
    $region96: #{tpu_custom_call.1} parent=1 // pred_region
      %7994 = dma.done [#allocation3], 256
    $region97: #{tpu_custom_call.1} parent=1 // pred_fallthru
      _
    %7995 = vsyncpa [#allocation3], 1

</llo_original>
